<compile_context>
chip_gen: v7x
topology: tpu7x:2x2x1
jax: 0.10.0
libtpu: 0.0.40
codegen_flags: <defaults>
</compile_context>

<pallas_src>
import functools

import jax
import jax.numpy as jnp
from jax.experimental import pallas as pl
from jax.experimental.pallas import tpu as pltpu

LANE = 128
K1, S1 = 8, 4
K2, S2 = 4, 2
K3, S3 = 3, 1


def _round_up(n, m):
    return ((n + m - 1) // m) * m


def _conv_dim(h, k, s):
    return (h - k) // s + 1


def conv_out_size(in_shape):
    """Replicates DQN._get_conv_out for (C, H, W) with k8s4, k4s2, k3s1."""
    _, H, W = in_shape
    h = _conv_dim(_conv_dim(_conv_dim(H, K1, S1), K2, S2), K3, S3)
    w = _conv_dim(_conv_dim(_conv_dim(W, K1, S1), K2, S2), K3, S3)
    return 64 * h * w


def _vmem_limit_bytes():
    """Generation-aware scoped VMEM request: 64 MiB on v5e/v6e (128 MiB
    physical), 32 MiB on v7x (64 MiB physical)."""
    try:
        cap = pltpu.get_tpu_info().vmem_capacity_bytes
    except Exception:
        return 32 * 1024 * 1024
    return 64 * 1024 * 1024 if cap >= 128 * 1024 * 1024 else 32 * 1024 * 1024


# ---------------------------------------------------------------------------
# Fused DQN kernel: conv1 -> conv2 -> conv3 -> fc1 -> fc2 for ONE sample.
#
# Layouts:
#   x_ref  : (1, H//S1, S1, W//S1, S1*C)  bf16   (phase-decomposed NHWC input)
#   a1_ref : (oh1//S2, S2, ow1//S2, S2, 32) bf16 VMEM scratch (conv1 output,
#            phase-decomposed for conv2's stride)
#   a2_ref : (oh2, ow2, 64) bf16 VMEM scratch (conv2 output, stride-1 conv3)
#   q_ref  : (1, 1, n_pad) f32 lane-dense output block (n_pad multiple of 128)
#
# Every conv is an accumulation of small MXU matmuls over kernel offsets; all
# slices are static and contiguous (the stride is absorbed by the phase
# layout), so no strided loads and no HBM patch tensors are ever built.
# ---------------------------------------------------------------------------
def _dqn_fused_kernel(x_ref, w1_ref, b1_ref, w2_ref, b2_ref, w3_ref, b3_ref,
                      fw1_ref, fb1_ref, fw2_ref, fb2_ref,
                      q_ref, a1_ref, a2_ref, *,
                      c_in, oh1, ow1, c1, oh2, ow2, c2, oh3, ow3, c3):
    f32 = jnp.float32

    # ---- conv1 (K1 x K1, stride S1) + ReLU ------------------------------
    # For a fixed (qh, rh, qw) the slice below holds, for every receptive
    # field, the (rw, c)-contiguous chunk of S1*c_in input values, matching
    # S1*c_in consecutive rows of the (kh, kw, c)-ordered w1 matrix.
    r1 = K1 // S1
    cw1 = S1 * c_in
    acc = jnp.zeros((oh1 * ow1, c1), f32)
    for qh in range(r1):
        for rh in range(S1):
            dh = qh * S1 + rh
            for qw in range(r1):
                sl = x_ref[0, qh:qh + oh1, rh, qw:qw + ow1, :]
                sl = sl.reshape(oh1 * ow1, cw1)
                row0 = (dh * K1 + qw * S1) * c_in
                acc = acc + jnp.dot(sl, w1_ref[row0:row0 + cw1, :],
                                    preferred_element_type=f32)
    a1 = jnp.maximum(acc + b1_ref[...], 0.0).astype(jnp.bfloat16)
    # Stash in VMEM, phase-decomposed for conv2's stride-2 access.
    a1_ref[...] = a1.reshape(oh1 // S2, S2, ow1 // S2, S2, c1)

    # ---- conv2 (K2 x K2, stride S2) + ReLU ------------------------------
    r2 = K2 // S2
    acc = jnp.zeros((oh2 * ow2, c2), f32)
    for qh in range(r2):
        for rh in range(S2):
            dh = qh * S2 + rh
            for qw in range(r2):
                for rw in range(S2):
                    dw = qw * S2 + rw
                    sl = a1_ref[qh:qh + oh2, rh, qw:qw + ow2, rw, :]
                    sl = sl.reshape(oh2 * ow2, c1)
                    row0 = (dh * K2 + dw) * c1
                    acc = acc + jnp.dot(sl, w2_ref[row0:row0 + c1, :],
                                        preferred_element_type=f32)
    a2 = jnp.maximum(acc + b2_ref[...], 0.0).astype(jnp.bfloat16)
    a2_ref[...] = a2.reshape(oh2, ow2, c2)

    # ---- conv3 (K3 x K3, stride 1) + ReLU -------------------------------
    acc = jnp.zeros((oh3 * ow3, c3), f32)
    for dh in range(K3):
        for dw in range(K3):
            sl = a2_ref[dh:dh + oh3, dw:dw + ow3, :]
            sl = sl.reshape(oh3 * ow3, c2)
            row0 = (dh * K3 + dw) * c2
            acc = acc + jnp.dot(sl, w3_ref[row0:row0 + c2, :],
                                preferred_element_type=f32)
    a3 = jnp.maximum(acc + b3_ref[...], 0.0).astype(jnp.bfloat16)
    # a3: (oh3*ow3, c3) bf16, rows in NHWC-flatten (h, w) order.

    # ---- fc1 (+ReLU) -----------------------------------------------------
    # The flatten is folded into a per-position K-sum (fw1 rows were
    # pre-permuted to (h, w, c) order at prep time), so the activation never
    # needs a lane-dim reshape and never leaves VMEM.
    h = fb1_ref[...]
    for p in range(oh3 * ow3):
        h = h + jnp.dot(a3[p:p + 1, :], fw1_ref[p * c3:(p + 1) * c3, :],
                        preferred_element_type=f32)
    h = jnp.maximum(h, 0.0).astype(jnp.bfloat16)

    # ---- fc2 (lane-dense padded head) ------------------------------------
    q = jnp.dot(h, fw2_ref[...], preferred_element_type=f32) + fb2_ref[...]
    q_ref[0] = q


# ---------------------------------------------------------------------------
# DQN parameters (PyTorch layout) + one-time kernel-ready preparation
# ---------------------------------------------------------------------------
def init_dqn_params(key, in_channels, conv_out, num_actions):
    ks = jax.random.split(key, 10)
    scale = 0.05
    return {
        "c1_w": jax.random.normal(ks[0], (32, in_channels, K1, K1), jnp.float32) * scale,
        "c1_b": jax.random.normal(ks[1], (32,), jnp.float32) * scale,
        "c2_w": jax.random.normal(ks[2], (64, 32, K2, K2), jnp.float32) * scale,
        "c2_b": jax.random.normal(ks[3], (64,), jnp.float32) * scale,
        "c3_w": jax.random.normal(ks[4], (64, 64, K3, K3), jnp.float32) * scale,
        "c3_b": jax.random.normal(ks[5], (64,), jnp.float32) * scale,
        "fc1_w": jax.random.normal(ks[6], (conv_out, 512), jnp.float32) * scale,
        "fc1_b": jax.random.normal(ks[7], (512,), jnp.float32) * scale,
        "fc2_w": jax.random.normal(ks[8], (512, num_actions), jnp.float32) * scale,
        "fc2_b": jax.random.normal(ks[9], (num_actions,), jnp.float32) * scale,
    }


def prepare_params(params, input_shape):
    """One-time transform of PyTorch-layout params into kernel-ready form:
    bf16 (kh, kw, c)-ordered conv matrices, fc1 rows permuted to NHWC flatten
    order, fc2 out-dim padded to a lane-dense multiple of 128."""
    _, H, W = input_shape
    h1, w1 = _conv_dim(H, K1, S1), _conv_dim(W, K1, S1)
    h2, w2 = _conv_dim(h1, K2, S2), _conv_dim(w1, K2, S2)
    h3, w3 = _conv_dim(h2, K3, S3), _conv_dim(w2, K3, S3)

    def prep_conv(w_oihw, b):
        out_c, in_c, kh, kw = w_oihw.shape
        # (out_c, in_c, kh, kw) -> (kh, kw, in_c, out_c) -> (kh*kw*in_c, out_c)
        w_mat = jnp.transpose(w_oihw, (2, 3, 1, 0)).reshape(kh * kw * in_c, out_c)
        return w_mat.astype(jnp.bfloat16), b.reshape(1, out_c).astype(jnp.float32)

    c1w, c1b = prep_conv(params["c1_w"], params["c1_b"])
    c2w, c2b = prep_conv(params["c2_w"], params["c2_b"])
    c3w, c3b = prep_conv(params["c3_w"], params["c3_b"])

    # fc1: permute rows from NCHW-flatten (c, h, w) to NHWC-flatten (h, w, c).
    c3_out = params["c3_w"].shape[0]
    hidden = params["fc1_w"].shape[1]
    fc1_w = params["fc1_w"].reshape(c3_out, h3, w3, hidden)
    fc1_w = jnp.transpose(fc1_w, (1, 2, 0, 3)).reshape(h3 * w3 * c3_out, hidden)
    fc1_w = fc1_w.astype(jnp.bfloat16)
    fc1_b = params["fc1_b"].reshape(1, hidden).astype(jnp.float32)

    # fc2: pad num_actions to the next multiple of 128 (lane-dense store).
    num_actions = params["fc2_w"].shape[1]
    n_pad = _round_up(num_actions, LANE)
    fc2_w = jnp.pad(params["fc2_w"],
                    ((0, 0), (0, n_pad - num_actions))).astype(jnp.bfloat16)
    fc2_b = jnp.pad(params["fc2_b"],
                    (0, n_pad - num_actions)).reshape(1, n_pad).astype(jnp.float32)

    return {
        "c1_w": c1w, "c1_b": c1b,
        "c2_w": c2w, "c2_b": c2b,
        "c3_w": c3w, "c3_b": c3b,
        "fc1_w": fc1_w, "fc1_b": fc1_b,
        "fc2_w": fc2_w, "fc2_b": fc2_b,
    }


# ---------------------------------------------------------------------------
# Forward pass: one fused pallas_call over a per-sample parallel grid.
# ---------------------------------------------------------------------------
def dqn_forward(prep, x_nchw, *, num_actions):
    """x_nchw: (B, C, H, W) float32 -> Q-values (B, num_actions) float32."""
    B, C, H, W = x_nchw.shape
    assert H % S1 == 0 and W % S1 == 0, (
        "spatial dims must be divisible by conv1's stride "
        "(TODO(synk): general strides via masked in-kernel gathers)")
    oh1, ow1 = _conv_dim(H, K1, S1), _conv_dim(W, K1, S1)
    assert oh1 % S2 == 0 and ow1 % S2 == 0, (
        "conv1 output must be divisible by conv2's stride")
    oh2, ow2 = _conv_dim(oh1, K2, S2), _conv_dim(ow1, K2, S2)
    oh3, ow3 = _conv_dim(oh2, K3, S3), _conv_dim(ow2, K3, S3)

    c1 = prep["c1_b"].shape[1]
    c2 = prep["c2_b"].shape[1]
    c3 = prep["c3_b"].shape[1]
    hid = prep["fc1_b"].shape[1]
    n_pad = prep["fc2_b"].shape[1]
    assert prep["c1_w"].shape[0] == K1 * K1 * C
    assert prep["fc1_w"].shape[0] == oh3 * ow3 * c3

    # Single wrapper-side XLA op: NCHW -> NHWC, f32 -> bf16, and the
    # phase-decomposition of (H, W) by conv1's stride (free reshape).
    xph = jnp.transpose(x_nchw, (0, 2, 3, 1)).astype(jnp.bfloat16)
    xph = xph.reshape(B, H // S1, S1, W // S1, S1 * C)

    kernel = functools.partial(
        _dqn_fused_kernel,
        c_in=C, oh1=oh1, ow1=ow1, c1=c1,
        oh2=oh2, ow2=ow2, c2=c2, oh3=oh3, ow3=ow3, c3=c3)

    def _full_spec(a):
        return pl.BlockSpec(a.shape, lambda b, _nd=a.ndim: (0,) * _nd)

    flops = 2 * B * (oh1 * ow1 * K1 * K1 * C * c1
                     + oh2 * ow2 * K2 * K2 * c1 * c2
                     + oh3 * ow3 * K3 * K3 * c2 * c3
                     + oh3 * ow3 * c3 * hid
                     + hid * n_pad)
    weight_bytes = sum(int(prep[k].size) * prep[k].dtype.itemsize for k in prep)
    cost = pl.CostEstimate(
        flops=int(flops),
        transcendentals=0,
        bytes_accessed=int(xph.size * 2 + weight_bytes + B * n_pad * 4),
    )

    out = pl.pallas_call(
        kernel,
        out_shape=jax.ShapeDtypeStruct((B, 1, n_pad), jnp.float32),
        grid=(B,),
        in_specs=[
            pl.BlockSpec((1,) + xph.shape[1:], lambda b: (b, 0, 0, 0, 0)),
            _full_spec(prep["c1_w"]), _full_spec(prep["c1_b"]),
            _full_spec(prep["c2_w"]), _full_spec(prep["c2_b"]),
            _full_spec(prep["c3_w"]), _full_spec(prep["c3_b"]),
            _full_spec(prep["fc1_w"]), _full_spec(prep["fc1_b"]),
            _full_spec(prep["fc2_w"]), _full_spec(prep["fc2_b"]),
        ],
        out_specs=pl.BlockSpec((1, 1, n_pad), lambda b: (b, 0, 0)),
        scratch_shapes=[
            pltpu.VMEM((oh1 // S2, S2, ow1 // S2, S2, c1), jnp.bfloat16),
            pltpu.VMEM((oh2, ow2, c2), jnp.bfloat16),
        ],
        compiler_params=pltpu.CompilerParams(
            dimension_semantics=("parallel",),
            vmem_limit_bytes=_vmem_limit_bytes(),
        ),
        cost_estimate=cost,
    )(xph, prep["c1_w"], prep["c1_b"], prep["c2_w"], prep["c2_b"],
      prep["c3_w"], prep["c3_b"], prep["fc1_w"], prep["fc1_b"],
      prep["fc2_w"], prep["fc2_b"])

    return out[:, 0, :num_actions]


# ---------------------------------------------------------------------------
# Pure-JAX float32 reference (PyTorch semantics) for a correctness check.
# ---------------------------------------------------------------------------
def dqn_reference(params, x):
    def conv(y, w, b, s):
        y = jax.lax.conv_general_dilated(
            y, w, (s, s), "VALID", dimension_numbers=("NCHW", "OIHW", "NCHW"))
        return jax.nn.relu(y + b[None, :, None, None])

    y = conv(x, params["c1_w"], params["c1_b"], S1)
    y = conv(y, params["c2_w"], params["c2_b"], S2)
    y = conv(y, params["c3_w"], params["c3_b"], S3)
    flat = y.reshape(y.shape[0], -1)                      # (c, h, w) order
    h = jax.nn.relu(flat @ params["fc1_w"] + params["fc1_b"])
    return h @ params["fc2_w"] + params["fc2_b"]


if __name__ == "__main__":
    # Small shapes consistent with the module: (C=4, H=W=36) -> conv chain
    # 8x8x32 -> 3x3x64 -> 1x1x64 -> fc(64, 512) -> fc(512, 6).
    batch, in_channels, H, W = 2, 4, 36, 36
    num_actions = 6
    input_shape = (in_channels, H, W)

    key = jax.random.PRNGKey(0)
    k_params, k_x = jax.random.split(key)
    params = init_dqn_params(k_params, in_channels,
                             conv_out_size(input_shape), num_actions)
    prep = prepare_params(params, input_shape)            # one-time weight prep
    x = jax.random.normal(k_x, (batch, in_channels, H, W), jnp.float32)

    fwd = jax.jit(functools.partial(dqn_forward, num_actions=num_actions))
    q = jax.block_until_ready(fwd(prep, x))

    assert q.shape == (batch, num_actions)
    assert q.dtype == jnp.float32
    assert bool(jnp.all(jnp.isfinite(q)))

    # bf16 operands (f32 accumulation) vs a pure-f32 reference.
    q_ref = dqn_reference(params, x)
    err = float(jnp.max(jnp.abs(q - q_ref)))
    assert err < 5e-2, f"max abs error vs f32 reference: {err}"

    print("KERNEL_OK")
</pallas_src>

<mosaic_0001>
module attributes {stable_mosaic.version = 11 : i64} {
  func.func @_dqn_fused_kernel(%arg0: i32, %arg1: memref<1x9x4x9x16xbf16, #tpu.memory_space<vmem>>, %arg2: memref<256x32xbf16, #tpu.memory_space<vmem>>, %arg3: memref<1x32xf32, #tpu.memory_space<vmem>>, %arg4: memref<512x64xbf16, #tpu.memory_space<vmem>>, %arg5: memref<1x64xf32, #tpu.memory_space<vmem>>, %arg6: memref<576x64xbf16, #tpu.memory_space<vmem>>, %arg7: memref<1x64xf32, #tpu.memory_space<vmem>>, %arg8: memref<64x512xbf16, #tpu.memory_space<vmem>>, %arg9: memref<1x512xf32, #tpu.memory_space<vmem>>, %arg10: memref<512x128xbf16, #tpu.memory_space<vmem>>, %arg11: memref<1x128xf32, #tpu.memory_space<vmem>>, %arg12: memref<1x1x128xf32, #tpu.memory_space<vmem>>, %arg13: memref<4x2x4x2x32xbf16, #tpu.memory_space<vmem>>, %arg14: memref<3x3x64xbf16, #tpu.memory_space<vmem>>) attributes {dimension_semantics = [#tpu.dimension_semantics<parallel>], iteration_bounds = array<i64: 2>, scalar_prefetch = 0 : i64, scratch_operands = 2 : i64, tpu.core_type = #tpu.core_type<tc>, window_params = [{transform_indices = @transform_0, window_bounds = array<i64: 1, 9, 4, 9, 16>}, {pipeline_mode = #tpu.pipeline_mode<synchronous>, transform_indices = @transform_1, window_bounds = array<i64: 256, 32>}, {pipeline_mode = #tpu.pipeline_mode<synchronous>, transform_indices = @transform_2, window_bounds = array<i64: 1, 32>}, {pipeline_mode = #tpu.pipeline_mode<synchronous>, transform_indices = @transform_3, window_bounds = array<i64: 512, 64>}, {pipeline_mode = #tpu.pipeline_mode<synchronous>, transform_indices = @transform_4, window_bounds = array<i64: 1, 64>}, {pipeline_mode = #tpu.pipeline_mode<synchronous>, transform_indices = @transform_5, window_bounds = array<i64: 576, 64>}, {pipeline_mode = #tpu.pipeline_mode<synchronous>, transform_indices = @transform_6, window_bounds = array<i64: 1, 64>}, {pipeline_mode = #tpu.pipeline_mode<synchronous>, transform_indices = @transform_7, window_bounds = array<i64: 64, 512>}, {pipeline_mode = #tpu.pipeline_mode<synchronous>, transform_indices = @transform_8, window_bounds = array<i64: 1, 512>}, {pipeline_mode = #tpu.pipeline_mode<synchronous>, transform_indices = @transform_9, window_bounds = array<i64: 512, 128>}, {pipeline_mode = #tpu.pipeline_mode<synchronous>, transform_indices = @transform_10, window_bounds = array<i64: 1, 128>}, {transform_indices = @transform_11, window_bounds = array<i64: 1, 1, 128>}]} {
    %cst = arith.constant 0.000000e+00 : f32
    %0 = vector.broadcast %cst : f32 to vector<64x32xf32>
    %c0 = arith.constant 0 : index
    %c0_0 = arith.constant 0 : index
    %c0_1 = arith.constant 0 : index
    %c0_2 = arith.constant 0 : index
    %c0_3 = arith.constant 0 : index
    %1 = vector.load %arg1[%c0, %c0_0, %c0_1, %c0_2, %c0_3] : memref<1x9x4x9x16xbf16, #tpu.memory_space<vmem>>, vector<1x8x1x8x16xbf16>
    %2 = vector.shape_cast %1 : vector<1x8x1x8x16xbf16> to vector<8x8x16xbf16>
    %3 = vector.shape_cast %2 : vector<8x8x16xbf16> to vector<64x16xbf16>
    %c0_4 = arith.constant 0 : index
    %c0_5 = arith.constant 0 : index
    %4 = vector.load %arg2[%c0_4, %c0_5] : memref<256x32xbf16, #tpu.memory_space<vmem>>, vector<16x32xbf16>
    %cst_6 = arith.constant dense<0.000000e+00> : vector<64x32xf32>
    %5 = tpu.matmul %3, %4, %cst_6 {dimension_numbers = #tpu.dot_dimension_numbers<[1], [0], [0], [1], [0, 0, 1, 1], [], []>} : vector<64x16xbf16>, vector<16x32xbf16>, vector<64x32xf32> -> vector<64x32xf32>
    %6 = arith.addf %0, %5 : vector<64x32xf32>
    %c0_7 = arith.constant 0 : index
    %c0_8 = arith.constant 0 : index
    %c0_9 = arith.constant 0 : index
    %c1 = arith.constant 1 : index
    %c0_10 = arith.constant 0 : index
    %7 = vector.load %arg1[%c0_7, %c0_8, %c0_9, %c1, %c0_10] : memref<1x9x4x9x16xbf16, #tpu.memory_space<vmem>>, vector<1x8x1x8x16xbf16>
    %8 = vector.shape_cast %7 : vector<1x8x1x8x16xbf16> to vector<8x8x16xbf16>
    %9 = vector.shape_cast %8 : vector<8x8x16xbf16> to vector<64x16xbf16>
    %c16 = arith.constant 16 : index
    %c0_11 = arith.constant 0 : index
    %10 = vector.load %arg2[%c16, %c0_11] : memref<256x32xbf16, #tpu.memory_space<vmem>>, vector<16x32xbf16>
    %cst_12 = arith.constant dense<0.000000e+00> : vector<64x32xf32>
    %11 = tpu.matmul %9, %10, %cst_12 {dimension_numbers = #tpu.dot_dimension_numbers<[1], [0], [0], [1], [0, 0, 1, 1], [], []>} : vector<64x16xbf16>, vector<16x32xbf16>, vector<64x32xf32> -> vector<64x32xf32>
    %12 = arith.addf %6, %11 : vector<64x32xf32>
    %c0_13 = arith.constant 0 : index
    %c0_14 = arith.constant 0 : index
    %c1_15 = arith.constant 1 : index
    %c0_16 = arith.constant 0 : index
    %c0_17 = arith.constant 0 : index
    %13 = vector.load %arg1[%c0_13, %c0_14, %c1_15, %c0_16, %c0_17] : memref<1x9x4x9x16xbf16, #tpu.memory_space<vmem>>, vector<1x8x1x8x16xbf16>
    %14 = vector.shape_cast %13 : vector<1x8x1x8x16xbf16> to vector<8x8x16xbf16>
    %15 = vector.shape_cast %14 : vector<8x8x16xbf16> to vector<64x16xbf16>
    %c32 = arith.constant 32 : index
    %c0_18 = arith.constant 0 : index
    %16 = vector.load %arg2[%c32, %c0_18] : memref<256x32xbf16, #tpu.memory_space<vmem>>, vector<16x32xbf16>
    %cst_19 = arith.constant dense<0.000000e+00> : vector<64x32xf32>
    %17 = tpu.matmul %15, %16, %cst_19 {dimension_numbers = #tpu.dot_dimension_numbers<[1], [0], [0], [1], [0, 0, 1, 1], [], []>} : vector<64x16xbf16>, vector<16x32xbf16>, vector<64x32xf32> -> vector<64x32xf32>
    %18 = arith.addf %12, %17 : vector<64x32xf32>
    %c0_20 = arith.constant 0 : index
    %c0_21 = arith.constant 0 : index
    %c1_22 = arith.constant 1 : index
    %c1_23 = arith.constant 1 : index
    %c0_24 = arith.constant 0 : index
    %19 = vector.load %arg1[%c0_20, %c0_21, %c1_22, %c1_23, %c0_24] : memref<1x9x4x9x16xbf16, #tpu.memory_space<vmem>>, vector<1x8x1x8x16xbf16>
    %20 = vector.shape_cast %19 : vector<1x8x1x8x16xbf16> to vector<8x8x16xbf16>
    %21 = vector.shape_cast %20 : vector<8x8x16xbf16> to vector<64x16xbf16>
    %c48 = arith.constant 48 : index
    %c0_25 = arith.constant 0 : index
    %22 = vector.load %arg2[%c48, %c0_25] : memref<256x32xbf16, #tpu.memory_space<vmem>>, vector<16x32xbf16>
    %cst_26 = arith.constant dense<0.000000e+00> : vector<64x32xf32>
    %23 = tpu.matmul %21, %22, %cst_26 {dimension_numbers = #tpu.dot_dimension_numbers<[1], [0], [0], [1], [0, 0, 1, 1], [], []>} : vector<64x16xbf16>, vector<16x32xbf16>, vector<64x32xf32> -> vector<64x32xf32>
    %24 = arith.addf %18, %23 : vector<64x32xf32>
    %c0_27 = arith.constant 0 : index
    %c0_28 = arith.constant 0 : index
    %c2 = arith.constant 2 : index
    %c0_29 = arith.constant 0 : index
    %c0_30 = arith.constant 0 : index
    %25 = vector.load %arg1[%c0_27, %c0_28, %c2, %c0_29, %c0_30] : memref<1x9x4x9x16xbf16, #tpu.memory_space<vmem>>, vector<1x8x1x8x16xbf16>
    %26 = vector.shape_cast %25 : vector<1x8x1x8x16xbf16> to vector<8x8x16xbf16>
    %27 = vector.shape_cast %26 : vector<8x8x16xbf16> to vector<64x16xbf16>
    %c64 = arith.constant 64 : index
    %c0_31 = arith.constant 0 : index
    %28 = vector.load %arg2[%c64, %c0_31] : memref<256x32xbf16, #tpu.memory_space<vmem>>, vector<16x32xbf16>
    %cst_32 = arith.constant dense<0.000000e+00> : vector<64x32xf32>
    %29 = tpu.matmul %27, %28, %cst_32 {dimension_numbers = #tpu.dot_dimension_numbers<[1], [0], [0], [1], [0, 0, 1, 1], [], []>} : vector<64x16xbf16>, vector<16x32xbf16>, vector<64x32xf32> -> vector<64x32xf32>
    %30 = arith.addf %24, %29 : vector<64x32xf32>
    %c0_33 = arith.constant 0 : index
    %c0_34 = arith.constant 0 : index
    %c2_35 = arith.constant 2 : index
    %c1_36 = arith.constant 1 : index
    %c0_37 = arith.constant 0 : index
    %31 = vector.load %arg1[%c0_33, %c0_34, %c2_35, %c1_36, %c0_37] : memref<1x9x4x9x16xbf16, #tpu.memory_space<vmem>>, vector<1x8x1x8x16xbf16>
    %32 = vector.shape_cast %31 : vector<1x8x1x8x16xbf16> to vector<8x8x16xbf16>
    %33 = vector.shape_cast %32 : vector<8x8x16xbf16> to vector<64x16xbf16>
    %c80 = arith.constant 80 : index
    %c0_38 = arith.constant 0 : index
    %34 = vector.load %arg2[%c80, %c0_38] : memref<256x32xbf16, #tpu.memory_space<vmem>>, vector<16x32xbf16>
    %cst_39 = arith.constant dense<0.000000e+00> : vector<64x32xf32>
    %35 = tpu.matmul %33, %34, %cst_39 {dimension_numbers = #tpu.dot_dimension_numbers<[1], [0], [0], [1], [0, 0, 1, 1], [], []>} : vector<64x16xbf16>, vector<16x32xbf16>, vector<64x32xf32> -> vector<64x32xf32>
    %36 = arith.addf %30, %35 : vector<64x32xf32>
    %c0_40 = arith.constant 0 : index
    %c0_41 = arith.constant 0 : index
    %c3 = arith.constant 3 : index
    %c0_42 = arith.constant 0 : index
    %c0_43 = arith.constant 0 : index
    %37 = vector.load %arg1[%c0_40, %c0_41, %c3, %c0_42, %c0_43] : memref<1x9x4x9x16xbf16, #tpu.memory_space<vmem>>, vector<1x8x1x8x16xbf16>
    %38 = vector.shape_cast %37 : vector<1x8x1x8x16xbf16> to vector<8x8x16xbf16>
    %39 = vector.shape_cast %38 : vector<8x8x16xbf16> to vector<64x16xbf16>
    %c96 = arith.constant 96 : index
    %c0_44 = arith.constant 0 : index
    %40 = vector.load %arg2[%c96, %c0_44] : memref<256x32xbf16, #tpu.memory_space<vmem>>, vector<16x32xbf16>
    %cst_45 = arith.constant dense<0.000000e+00> : vector<64x32xf32>
    %41 = tpu.matmul %39, %40, %cst_45 {dimension_numbers = #tpu.dot_dimension_numbers<[1], [0], [0], [1], [0, 0, 1, 1], [], []>} : vector<64x16xbf16>, vector<16x32xbf16>, vector<64x32xf32> -> vector<64x32xf32>
    %42 = arith.addf %36, %41 : vector<64x32xf32>
    %c0_46 = arith.constant 0 : index
    %c0_47 = arith.constant 0 : index
    %c3_48 = arith.constant 3 : index
    %c1_49 = arith.constant 1 : index
    %c0_50 = arith.constant 0 : index
    %43 = vector.load %arg1[%c0_46, %c0_47, %c3_48, %c1_49, %c0_50] : memref<1x9x4x9x16xbf16, #tpu.memory_space<vmem>>, vector<1x8x1x8x16xbf16>
    %44 = vector.shape_cast %43 : vector<1x8x1x8x16xbf16> to vector<8x8x16xbf16>
    %45 = vector.shape_cast %44 : vector<8x8x16xbf16> to vector<64x16xbf16>
    %c112 = arith.constant 112 : index
    %c0_51 = arith.constant 0 : index
    %46 = vector.load %arg2[%c112, %c0_51] : memref<256x32xbf16, #tpu.memory_space<vmem>>, vector<16x32xbf16>
    %cst_52 = arith.constant dense<0.000000e+00> : vector<64x32xf32>
    %47 = tpu.matmul %45, %46, %cst_52 {dimension_numbers = #tpu.dot_dimension_numbers<[1], [0], [0], [1], [0, 0, 1, 1], [], []>} : vector<64x16xbf16>, vector<16x32xbf16>, vector<64x32xf32> -> vector<64x32xf32>
    %48 = arith.addf %42, %47 : vector<64x32xf32>
    %c0_53 = arith.constant 0 : index
    %c1_54 = arith.constant 1 : index
    %c0_55 = arith.constant 0 : index
    %c0_56 = arith.constant 0 : index
    %c0_57 = arith.constant 0 : index
    %49 = vector.load %arg1[%c0_53, %c1_54, %c0_55, %c0_56, %c0_57] : memref<1x9x4x9x16xbf16, #tpu.memory_space<vmem>>, vector<1x8x1x8x16xbf16>
    %50 = vector.shape_cast %49 : vector<1x8x1x8x16xbf16> to vector<8x8x16xbf16>
    %51 = vector.shape_cast %50 : vector<8x8x16xbf16> to vector<64x16xbf16>
    %c128 = arith.constant 128 : index
    %c0_58 = arith.constant 0 : index
    %52 = vector.load %arg2[%c128, %c0_58] : memref<256x32xbf16, #tpu.memory_space<vmem>>, vector<16x32xbf16>
    %cst_59 = arith.constant dense<0.000000e+00> : vector<64x32xf32>
    %53 = tpu.matmul %51, %52, %cst_59 {dimension_numbers = #tpu.dot_dimension_numbers<[1], [0], [0], [1], [0, 0, 1, 1], [], []>} : vector<64x16xbf16>, vector<16x32xbf16>, vector<64x32xf32> -> vector<64x32xf32>
    %54 = arith.addf %48, %53 : vector<64x32xf32>
    %c0_60 = arith.constant 0 : index
    %c1_61 = arith.constant 1 : index
    %c0_62 = arith.constant 0 : index
    %c1_63 = arith.constant 1 : index
    %c0_64 = arith.constant 0 : index
    %55 = vector.load %arg1[%c0_60, %c1_61, %c0_62, %c1_63, %c0_64] : memref<1x9x4x9x16xbf16, #tpu.memory_space<vmem>>, vector<1x8x1x8x16xbf16>
    %56 = vector.shape_cast %55 : vector<1x8x1x8x16xbf16> to vector<8x8x16xbf16>
    %57 = vector.shape_cast %56 : vector<8x8x16xbf16> to vector<64x16xbf16>
    %c144 = arith.constant 144 : index
    %c0_65 = arith.constant 0 : index
    %58 = vector.load %arg2[%c144, %c0_65] : memref<256x32xbf16, #tpu.memory_space<vmem>>, vector<16x32xbf16>
    %cst_66 = arith.constant dense<0.000000e+00> : vector<64x32xf32>
    %59 = tpu.matmul %57, %58, %cst_66 {dimension_numbers = #tpu.dot_dimension_numbers<[1], [0], [0], [1], [0, 0, 1, 1], [], []>} : vector<64x16xbf16>, vector<16x32xbf16>, vector<64x32xf32> -> vector<64x32xf32>
    %60 = arith.addf %54, %59 : vector<64x32xf32>
    %c0_67 = arith.constant 0 : index
    %c1_68 = arith.constant 1 : index
    %c1_69 = arith.constant 1 : index
    %c0_70 = arith.constant 0 : index
    %c0_71 = arith.constant 0 : index
    %61 = vector.load %arg1[%c0_67, %c1_68, %c1_69, %c0_70, %c0_71] : memref<1x9x4x9x16xbf16, #tpu.memory_space<vmem>>, vector<1x8x1x8x16xbf16>
    %62 = vector.shape_cast %61 : vector<1x8x1x8x16xbf16> to vector<8x8x16xbf16>
    %63 = vector.shape_cast %62 : vector<8x8x16xbf16> to vector<64x16xbf16>
    %c160 = arith.constant 160 : index
    %c0_72 = arith.constant 0 : index
    %64 = vector.load %arg2[%c160, %c0_72] : memref<256x32xbf16, #tpu.memory_space<vmem>>, vector<16x32xbf16>
    %cst_73 = arith.constant dense<0.000000e+00> : vector<64x32xf32>
    %65 = tpu.matmul %63, %64, %cst_73 {dimension_numbers = #tpu.dot_dimension_numbers<[1], [0], [0], [1], [0, 0, 1, 1], [], []>} : vector<64x16xbf16>, vector<16x32xbf16>, vector<64x32xf32> -> vector<64x32xf32>
    %66 = arith.addf %60, %65 : vector<64x32xf32>
    %c0_74 = arith.constant 0 : index
    %c1_75 = arith.constant 1 : index
    %c1_76 = arith.constant 1 : index
    %c1_77 = arith.constant 1 : index
    %c0_78 = arith.constant 0 : index
    %67 = vector.load %arg1[%c0_74, %c1_75, %c1_76, %c1_77, %c0_78] : memref<1x9x4x9x16xbf16, #tpu.memory_space<vmem>>, vector<1x8x1x8x16xbf16>
    %68 = vector.shape_cast %67 : vector<1x8x1x8x16xbf16> to vector<8x8x16xbf16>
    %69 = vector.shape_cast %68 : vector<8x8x16xbf16> to vector<64x16xbf16>
    %c176 = arith.constant 176 : index
    %c0_79 = arith.constant 0 : index
    %70 = vector.load %arg2[%c176, %c0_79] : memref<256x32xbf16, #tpu.memory_space<vmem>>, vector<16x32xbf16>
    %cst_80 = arith.constant dense<0.000000e+00> : vector<64x32xf32>
    %71 = tpu.matmul %69, %70, %cst_80 {dimension_numbers = #tpu.dot_dimension_numbers<[1], [0], [0], [1], [0, 0, 1, 1], [], []>} : vector<64x16xbf16>, vector<16x32xbf16>, vector<64x32xf32> -> vector<64x32xf32>
    %72 = arith.addf %66, %71 : vector<64x32xf32>
    %c0_81 = arith.constant 0 : index
    %c1_82 = arith.constant 1 : index
    %c2_83 = arith.constant 2 : index
    %c0_84 = arith.constant 0 : index
    %c0_85 = arith.constant 0 : index
    %73 = vector.load %arg1[%c0_81, %c1_82, %c2_83, %c0_84, %c0_85] : memref<1x9x4x9x16xbf16, #tpu.memory_space<vmem>>, vector<1x8x1x8x16xbf16>
    %74 = vector.shape_cast %73 : vector<1x8x1x8x16xbf16> to vector<8x8x16xbf16>
    %75 = vector.shape_cast %74 : vector<8x8x16xbf16> to vector<64x16xbf16>
    %c192 = arith.constant 192 : index
    %c0_86 = arith.constant 0 : index
    %76 = vector.load %arg2[%c192, %c0_86] : memref<256x32xbf16, #tpu.memory_space<vmem>>, vector<16x32xbf16>
    %cst_87 = arith.constant dense<0.000000e+00> : vector<64x32xf32>
    %77 = tpu.matmul %75, %76, %cst_87 {dimension_numbers = #tpu.dot_dimension_numbers<[1], [0], [0], [1], [0, 0, 1, 1], [], []>} : vector<64x16xbf16>, vector<16x32xbf16>, vector<64x32xf32> -> vector<64x32xf32>
    %78 = arith.addf %72, %77 : vector<64x32xf32>
    %c0_88 = arith.constant 0 : index
    %c1_89 = arith.constant 1 : index
    %c2_90 = arith.constant 2 : index
    %c1_91 = arith.constant 1 : index
    %c0_92 = arith.constant 0 : index
    %79 = vector.load %arg1[%c0_88, %c1_89, %c2_90, %c1_91, %c0_92] : memref<1x9x4x9x16xbf16, #tpu.memory_space<vmem>>, vector<1x8x1x8x16xbf16>
    %80 = vector.shape_cast %79 : vector<1x8x1x8x16xbf16> to vector<8x8x16xbf16>
    %81 = vector.shape_cast %80 : vector<8x8x16xbf16> to vector<64x16xbf16>
    %c208 = arith.constant 208 : index
    %c0_93 = arith.constant 0 : index
    %82 = vector.load %arg2[%c208, %c0_93] : memref<256x32xbf16, #tpu.memory_space<vmem>>, vector<16x32xbf16>
    %cst_94 = arith.constant dense<0.000000e+00> : vector<64x32xf32>
    %83 = tpu.matmul %81, %82, %cst_94 {dimension_numbers = #tpu.dot_dimension_numbers<[1], [0], [0], [1], [0, 0, 1, 1], [], []>} : vector<64x16xbf16>, vector<16x32xbf16>, vector<64x32xf32> -> vector<64x32xf32>
    %84 = arith.addf %78, %83 : vector<64x32xf32>
    %c0_95 = arith.constant 0 : index
    %c1_96 = arith.constant 1 : index
    %c3_97 = arith.constant 3 : index
    %c0_98 = arith.constant 0 : index
    %c0_99 = arith.constant 0 : index
    %85 = vector.load %arg1[%c0_95, %c1_96, %c3_97, %c0_98, %c0_99] : memref<1x9x4x9x16xbf16, #tpu.memory_space<vmem>>, vector<1x8x1x8x16xbf16>
    %86 = vector.shape_cast %85 : vector<1x8x1x8x16xbf16> to vector<8x8x16xbf16>
    %87 = vector.shape_cast %86 : vector<8x8x16xbf16> to vector<64x16xbf16>
    %c224 = arith.constant 224 : index
    %c0_100 = arith.constant 0 : index
    %88 = vector.load %arg2[%c224, %c0_100] : memref<256x32xbf16, #tpu.memory_space<vmem>>, vector<16x32xbf16>
    %cst_101 = arith.constant dense<0.000000e+00> : vector<64x32xf32>
    %89 = tpu.matmul %87, %88, %cst_101 {dimension_numbers = #tpu.dot_dimension_numbers<[1], [0], [0], [1], [0, 0, 1, 1], [], []>} : vector<64x16xbf16>, vector<16x32xbf16>, vector<64x32xf32> -> vector<64x32xf32>
    %90 = arith.addf %84, %89 : vector<64x32xf32>
    %c0_102 = arith.constant 0 : index
    %c1_103 = arith.constant 1 : index
    %c3_104 = arith.constant 3 : index
    %c1_105 = arith.constant 1 : index
    %c0_106 = arith.constant 0 : index
    %91 = vector.load %arg1[%c0_102, %c1_103, %c3_104, %c1_105, %c0_106] : memref<1x9x4x9x16xbf16, #tpu.memory_space<vmem>>, vector<1x8x1x8x16xbf16>
    %92 = vector.shape_cast %91 : vector<1x8x1x8x16xbf16> to vector<8x8x16xbf16>
    %93 = vector.shape_cast %92 : vector<8x8x16xbf16> to vector<64x16xbf16>
    %c240 = arith.constant 240 : index
    %c0_107 = arith.constant 0 : index
    %94 = vector.load %arg2[%c240, %c0_107] : memref<256x32xbf16, #tpu.memory_space<vmem>>, vector<16x32xbf16>
    %cst_108 = arith.constant dense<0.000000e+00> : vector<64x32xf32>
    %95 = tpu.matmul %93, %94, %cst_108 {dimension_numbers = #tpu.dot_dimension_numbers<[1], [0], [0], [1], [0, 0, 1, 1], [], []>} : vector<64x16xbf16>, vector<16x32xbf16>, vector<64x32xf32> -> vector<64x32xf32>
    %96 = arith.addf %90, %95 : vector<64x32xf32>
    %c0_109 = arith.constant 0 : index
    %c0_110 = arith.constant 0 : index
    %97 = vector.load %arg3[%c0_109, %c0_110] : memref<1x32xf32, #tpu.memory_space<vmem>>, vector<1x32xf32>
    %98 = vector.broadcast %97 : vector<1x32xf32> to vector<64x32xf32>
    %99 = arith.addf %96, %98 : vector<64x32xf32>
    %cst_111 = arith.constant 0.000000e+00 : f32
    %100 = vector.broadcast %cst_111 : f32 to vector<64x32xf32>
    %101 = arith.maximumf %99, %100 : vector<64x32xf32>
    %102 = arith.truncf %101 : vector<64x32xf32> to vector<64x32xbf16>
    %103 = vector.shape_cast %102 : vector<64x32xbf16> to vector<4x2x4x2x32xbf16>
    %c0_112 = arith.constant 0 : index
    %c0_113 = arith.constant 0 : index
    %c0_114 = arith.constant 0 : index
    %c0_115 = arith.constant 0 : index
    %c0_116 = arith.constant 0 : index
    %104 = vector.load %arg13[%c0_112, %c0_113, %c0_114, %c0_115, %c0_116] : memref<4x2x4x2x32xbf16, #tpu.memory_space<vmem>>, vector<4x2x4x2x32xbf16>
    tpu.vector_store %arg13[%c0_112, %c0_113, %c0_114, %c0_115, %c0_116], %103 {strides = array<i32>} : memref<4x2x4x2x32xbf16, #tpu.memory_space<vmem>>, vector<4x2x4x2x32xbf16>,
    %cst_117 = arith.constant 0.000000e+00 : f32
    %105 = vector.broadcast %cst_117 : f32 to vector<9x64xf32>
    %c0_118 = arith.constant 0 : index
    %c0_119 = arith.constant 0 : index
    %c0_120 = arith.constant 0 : index
    %c0_121 = arith.constant 0 : index
    %c0_122 = arith.constant 0 : index
    %106 = vector.load %arg13[%c0_118, %c0_119, %c0_120, %c0_121, %c0_122] : memref<4x2x4x2x32xbf16, #tpu.memory_space<vmem>>, vector<3x1x3x1x32xbf16>
    %107 = vector.shape_cast %106 : vector<3x1x3x1x32xbf16> to vector<3x3x32xbf16>
    %108 = vector.shape_cast %107 : vector<3x3x32xbf16> to vector<9x32xbf16>
    %c0_123 = arith.constant 0 : index
    %c0_124 = arith.constant 0 : index
    %109 = vector.load %arg4[%c0_123, %c0_124] : memref<512x64xbf16, #tpu.memory_space<vmem>>, vector<32x64xbf16>
    %cst_125 = arith.constant dense<0.000000e+00> : vector<9x64xf32>
    %110 = tpu.matmul %108, %109, %cst_125 {dimension_numbers = #tpu.dot_dimension_numbers<[1], [0], [0], [1], [0, 0, 1, 1], [], []>} : vector<9x32xbf16>, vector<32x64xbf16>, vector<9x64xf32> -> vector<9x64xf32>
    %111 = arith.addf %105, %110 : vector<9x64xf32>
    %c0_126 = arith.constant 0 : index
    %c0_127 = arith.constant 0 : index
    %c0_128 = arith.constant 0 : index
    %c1_129 = arith.constant 1 : index
    %c0_130 = arith.constant 0 : index
    %112 = vector.load %arg13[%c0_126, %c0_127, %c0_128, %c1_129, %c0_130] : memref<4x2x4x2x32xbf16, #tpu.memory_space<vmem>>, vector<3x1x3x1x32xbf16>
    %113 = vector.shape_cast %112 : vector<3x1x3x1x32xbf16> to vector<3x3x32xbf16>
    %114 = vector.shape_cast %113 : vector<3x3x32xbf16> to vector<9x32xbf16>
    %c32_131 = arith.constant 32 : index
    %c0_132 = arith.constant 0 : index
    %115 = vector.load %arg4[%c32_131, %c0_132] : memref<512x64xbf16, #tpu.memory_space<vmem>>, vector<32x64xbf16>
    %cst_133 = arith.constant dense<0.000000e+00> : vector<9x64xf32>
    %116 = tpu.matmul %114, %115, %cst_133 {dimension_numbers = #tpu.dot_dimension_numbers<[1], [0], [0], [1], [0, 0, 1, 1], [], []>} : vector<9x32xbf16>, vector<32x64xbf16>, vector<9x64xf32> -> vector<9x64xf32>
    %117 = arith.addf %111, %116 : vector<9x64xf32>
    %c0_134 = arith.constant 0 : index
    %c0_135 = arith.constant 0 : index
    %c1_136 = arith.constant 1 : index
    %c0_137 = arith.constant 0 : index
    %c0_138 = arith.constant 0 : index
    %118 = vector.load %arg13[%c0_134, %c0_135, %c1_136, %c0_137, %c0_138] : memref<4x2x4x2x32xbf16, #tpu.memory_space<vmem>>, vector<3x1x3x1x32xbf16>
    %119 = vector.shape_cast %118 : vector<3x1x3x1x32xbf16> to vector<3x3x32xbf16>
    %120 = vector.shape_cast %119 : vector<3x3x32xbf16> to vector<9x32xbf16>
    %c64_139 = arith.constant 64 : index
    %c0_140 = arith.constant 0 : index
    %121 = vector.load %arg4[%c64_139, %c0_140] : memref<512x64xbf16, #tpu.memory_space<vmem>>, vector<32x64xbf16>
    %cst_141 = arith.constant dense<0.000000e+00> : vector<9x64xf32>
    %122 = tpu.matmul %120, %121, %cst_141 {dimension_numbers = #tpu.dot_dimension_numbers<[1], [0], [0], [1], [0, 0, 1, 1], [], []>} : vector<9x32xbf16>, vector<32x64xbf16>, vector<9x64xf32> -> vector<9x64xf32>
    %123 = arith.addf %117, %122 : vector<9x64xf32>
    %c0_142 = arith.constant 0 : index
    %c0_143 = arith.constant 0 : index
    %c1_144 = arith.constant 1 : index
    %c1_145 = arith.constant 1 : index
    %c0_146 = arith.constant 0 : index
    %124 = vector.load %arg13[%c0_142, %c0_143, %c1_144, %c1_145, %c0_146] : memref<4x2x4x2x32xbf16, #tpu.memory_space<vmem>>, vector<3x1x3x1x32xbf16>
    %125 = vector.shape_cast %124 : vector<3x1x3x1x32xbf16> to vector<3x3x32xbf16>
    %126 = vector.shape_cast %125 : vector<3x3x32xbf16> to vector<9x32xbf16>
    %c96_147 = arith.constant 96 : index
    %c0_148 = arith.constant 0 : index
    %127 = vector.load %arg4[%c96_147, %c0_148] : memref<512x64xbf16, #tpu.memory_space<vmem>>, vector<32x64xbf16>
    %cst_149 = arith.constant dense<0.000000e+00> : vector<9x64xf32>
    %128 = tpu.matmul %126, %127, %cst_149 {dimension_numbers = #tpu.dot_dimension_numbers<[1], [0], [0], [1], [0, 0, 1, 1], [], []>} : vector<9x32xbf16>, vector<32x64xbf16>, vector<9x64xf32> -> vector<9x64xf32>
    %129 = arith.addf %123, %128 : vector<9x64xf32>
    %c0_150 = arith.constant 0 : index
    %c1_151 = arith.constant 1 : index
    %c0_152 = arith.constant 0 : index
    %c0_153 = arith.constant 0 : index
    %c0_154 = arith.constant 0 : index
    %130 = vector.load %arg13[%c0_150, %c1_151, %c0_152, %c0_153, %c0_154] : memref<4x2x4x2x32xbf16, #tpu.memory_space<vmem>>, vector<3x1x3x1x32xbf16>
    %131 = vector.shape_cast %130 : vector<3x1x3x1x32xbf16> to vector<3x3x32xbf16>
    %132 = vector.shape_cast %131 : vector<3x3x32xbf16> to vector<9x32xbf16>
    %c128_155 = arith.constant 128 : index
    %c0_156 = arith.constant 0 : index
    %133 = vector.load %arg4[%c128_155, %c0_156] : memref<512x64xbf16, #tpu.memory_space<vmem>>, vector<32x64xbf16>
    %cst_157 = arith.constant dense<0.000000e+00> : vector<9x64xf32>
    %134 = tpu.matmul %132, %133, %cst_157 {dimension_numbers = #tpu.dot_dimension_numbers<[1], [0], [0], [1], [0, 0, 1, 1], [], []>} : vector<9x32xbf16>, vector<32x64xbf16>, vector<9x64xf32> -> vector<9x64xf32>
    %135 = arith.addf %129, %134 : vector<9x64xf32>
    %c0_158 = arith.constant 0 : index
    %c1_159 = arith.constant 1 : index
    %c0_160 = arith.constant 0 : index
    %c1_161 = arith.constant 1 : index
    %c0_162 = arith.constant 0 : index
    %136 = vector.load %arg13[%c0_158, %c1_159, %c0_160, %c1_161, %c0_162] : memref<4x2x4x2x32xbf16, #tpu.memory_space<vmem>>, vector<3x1x3x1x32xbf16>
    %137 = vector.shape_cast %136 : vector<3x1x3x1x32xbf16> to vector<3x3x32xbf16>
    %138 = vector.shape_cast %137 : vector<3x3x32xbf16> to vector<9x32xbf16>
    %c160_163 = arith.constant 160 : index
    %c0_164 = arith.constant 0 : index
    %139 = vector.load %arg4[%c160_163, %c0_164] : memref<512x64xbf16, #tpu.memory_space<vmem>>, vector<32x64xbf16>
    %cst_165 = arith.constant dense<0.000000e+00> : vector<9x64xf32>
    %140 = tpu.matmul %138, %139, %cst_165 {dimension_numbers = #tpu.dot_dimension_numbers<[1], [0], [0], [1], [0, 0, 1, 1], [], []>} : vector<9x32xbf16>, vector<32x64xbf16>, vector<9x64xf32> -> vector<9x64xf32>
    %141 = arith.addf %135, %140 : vector<9x64xf32>
    %c0_166 = arith.constant 0 : index
    %c1_167 = arith.constant 1 : index
    %c1_168 = arith.constant 1 : index
    %c0_169 = arith.constant 0 : index
    %c0_170 = arith.constant 0 : index
    %142 = vector.load %arg13[%c0_166, %c1_167, %c1_168, %c0_169, %c0_170] : memref<4x2x4x2x32xbf16, #tpu.memory_space<vmem>>, vector<3x1x3x1x32xbf16>
    %143 = vector.shape_cast %142 : vector<3x1x3x1x32xbf16> to vector<3x3x32xbf16>
    %144 = vector.shape_cast %143 : vector<3x3x32xbf16> to vector<9x32xbf16>
    %c192_171 = arith.constant 192 : index
    %c0_172 = arith.constant 0 : index
    %145 = vector.load %arg4[%c192_171, %c0_172] : memref<512x64xbf16, #tpu.memory_space<vmem>>, vector<32x64xbf16>
    %cst_173 = arith.constant dense<0.000000e+00> : vector<9x64xf32>
    %146 = tpu.matmul %144, %145, %cst_173 {dimension_numbers = #tpu.dot_dimension_numbers<[1], [0], [0], [1], [0, 0, 1, 1], [], []>} : vector<9x32xbf16>, vector<32x64xbf16>, vector<9x64xf32> -> vector<9x64xf32>
    %147 = arith.addf %141, %146 : vector<9x64xf32>
    %c0_174 = arith.constant 0 : index
    %c1_175 = arith.constant 1 : index
    %c1_176 = arith.constant 1 : index
    %c1_177 = arith.constant 1 : index
    %c0_178 = arith.constant 0 : index
    %148 = vector.load %arg13[%c0_174, %c1_175, %c1_176, %c1_177, %c0_178] : memref<4x2x4x2x32xbf16, #tpu.memory_space<vmem>>, vector<3x1x3x1x32xbf16>
    %149 = vector.shape_cast %148 : vector<3x1x3x1x32xbf16> to vector<3x3x32xbf16>
    %150 = vector.shape_cast %149 : vector<3x3x32xbf16> to vector<9x32xbf16>
    %c224_179 = arith.constant 224 : index
    %c0_180 = arith.constant 0 : index
    %151 = vector.load %arg4[%c224_179, %c0_180] : memref<512x64xbf16, #tpu.memory_space<vmem>>, vector<32x64xbf16>
    %cst_181 = arith.constant dense<0.000000e+00> : vector<9x64xf32>
    %152 = tpu.matmul %150, %151, %cst_181 {dimension_numbers = #tpu.dot_dimension_numbers<[1], [0], [0], [1], [0, 0, 1, 1], [], []>} : vector<9x32xbf16>, vector<32x64xbf16>, vector<9x64xf32> -> vector<9x64xf32>
    %153 = arith.addf %147, %152 : vector<9x64xf32>
    %c1_182 = arith.constant 1 : index
    %c0_183 = arith.constant 0 : index
    %c0_184 = arith.constant 0 : index
    %c0_185 = arith.constant 0 : index
    %c0_186 = arith.constant 0 : index
    %154 = vector.load %arg13[%c1_182, %c0_183, %c0_184, %c0_185, %c0_186] : memref<4x2x4x2x32xbf16, #tpu.memory_space<vmem>>, vector<3x1x3x1x32xbf16>
    %155 = vector.shape_cast %154 : vector<3x1x3x1x32xbf16> to vector<3x3x32xbf16>
    %156 = vector.shape_cast %155 : vector<3x3x32xbf16> to vector<9x32xbf16>
    %c256 = arith.constant 256 : index
    %c0_187 = arith.constant 0 : index
    %157 = vector.load %arg4[%c256, %c0_187] : memref<512x64xbf16, #tpu.memory_space<vmem>>, vector<32x64xbf16>
    %cst_188 = arith.constant dense<0.000000e+00> : vector<9x64xf32>
    %158 = tpu.matmul %156, %157, %cst_188 {dimension_numbers = #tpu.dot_dimension_numbers<[1], [0], [0], [1], [0, 0, 1, 1], [], []>} : vector<9x32xbf16>, vector<32x64xbf16>, vector<9x64xf32> -> vector<9x64xf32>
    %159 = arith.addf %153, %158 : vector<9x64xf32>
    %c1_189 = arith.constant 1 : index
    %c0_190 = arith.constant 0 : index
    %c0_191 = arith.constant 0 : index
    %c1_192 = arith.constant 1 : index
    %c0_193 = arith.constant 0 : index
    %160 = vector.load %arg13[%c1_189, %c0_190, %c0_191, %c1_192, %c0_193] : memref<4x2x4x2x32xbf16, #tpu.memory_space<vmem>>, vector<3x1x3x1x32xbf16>
    %161 = vector.shape_cast %160 : vector<3x1x3x1x32xbf16> to vector<3x3x32xbf16>
    %162 = vector.shape_cast %161 : vector<3x3x32xbf16> to vector<9x32xbf16>
    %c288 = arith.constant 288 : index
    %c0_194 = arith.constant 0 : index
    %163 = vector.load %arg4[%c288, %c0_194] : memref<512x64xbf16, #tpu.memory_space<vmem>>, vector<32x64xbf16>
    %cst_195 = arith.constant dense<0.000000e+00> : vector<9x64xf32>
    %164 = tpu.matmul %162, %163, %cst_195 {dimension_numbers = #tpu.dot_dimension_numbers<[1], [0], [0], [1], [0, 0, 1, 1], [], []>} : vector<9x32xbf16>, vector<32x64xbf16>, vector<9x64xf32> -> vector<9x64xf32>
    %165 = arith.addf %159, %164 : vector<9x64xf32>
    %c1_196 = arith.constant 1 : index
    %c0_197 = arith.constant 0 : index
    %c1_198 = arith.constant 1 : index
    %c0_199 = arith.constant 0 : index
    %c0_200 = arith.constant 0 : index
    %166 = vector.load %arg13[%c1_196, %c0_197, %c1_198, %c0_199, %c0_200] : memref<4x2x4x2x32xbf16, #tpu.memory_space<vmem>>, vector<3x1x3x1x32xbf16>
    %167 = vector.shape_cast %166 : vector<3x1x3x1x32xbf16> to vector<3x3x32xbf16>
    %168 = vector.shape_cast %167 : vector<3x3x32xbf16> to vector<9x32xbf16>
    %c320 = arith.constant 320 : index
    %c0_201 = arith.constant 0 : index
    %169 = vector.load %arg4[%c320, %c0_201] : memref<512x64xbf16, #tpu.memory_space<vmem>>, vector<32x64xbf16>
    %cst_202 = arith.constant dense<0.000000e+00> : vector<9x64xf32>
    %170 = tpu.matmul %168, %169, %cst_202 {dimension_numbers = #tpu.dot_dimension_numbers<[1], [0], [0], [1], [0, 0, 1, 1], [], []>} : vector<9x32xbf16>, vector<32x64xbf16>, vector<9x64xf32> -> vector<9x64xf32>
    %171 = arith.addf %165, %170 : vector<9x64xf32>
    %c1_203 = arith.constant 1 : index
    %c0_204 = arith.constant 0 : index
    %c1_205 = arith.constant 1 : index
    %c1_206 = arith.constant 1 : index
    %c0_207 = arith.constant 0 : index
    %172 = vector.load %arg13[%c1_203, %c0_204, %c1_205, %c1_206, %c0_207] : memref<4x2x4x2x32xbf16, #tpu.memory_space<vmem>>, vector<3x1x3x1x32xbf16>
    %173 = vector.shape_cast %172 : vector<3x1x3x1x32xbf16> to vector<3x3x32xbf16>
    %174 = vector.shape_cast %173 : vector<3x3x32xbf16> to vector<9x32xbf16>
    %c352 = arith.constant 352 : index
    %c0_208 = arith.constant 0 : index
    %175 = vector.load %arg4[%c352, %c0_208] : memref<512x64xbf16, #tpu.memory_space<vmem>>, vector<32x64xbf16>
    %cst_209 = arith.constant dense<0.000000e+00> : vector<9x64xf32>
    %176 = tpu.matmul %174, %175, %cst_209 {dimension_numbers = #tpu.dot_dimension_numbers<[1], [0], [0], [1], [0, 0, 1, 1], [], []>} : vector<9x32xbf16>, vector<32x64xbf16>, vector<9x64xf32> -> vector<9x64xf32>
    %177 = arith.addf %171, %176 : vector<9x64xf32>
    %c1_210 = arith.constant 1 : index
    %c1_211 = arith.constant 1 : index
    %c0_212 = arith.constant 0 : index
    %c0_213 = arith.constant 0 : index
    %c0_214 = arith.constant 0 : index
    %178 = vector.load %arg13[%c1_210, %c1_211, %c0_212, %c0_213, %c0_214] : memref<4x2x4x2x32xbf16, #tpu.memory_space<vmem>>, vector<3x1x3x1x32xbf16>
    %179 = vector.shape_cast %178 : vector<3x1x3x1x32xbf16> to vector<3x3x32xbf16>
    %180 = vector.shape_cast %179 : vector<3x3x32xbf16> to vector<9x32xbf16>
    %c384 = arith.constant 384 : index
    %c0_215 = arith.constant 0 : index
    %181 = vector.load %arg4[%c384, %c0_215] : memref<512x64xbf16, #tpu.memory_space<vmem>>, vector<32x64xbf16>
    %cst_216 = arith.constant dense<0.000000e+00> : vector<9x64xf32>
    %182 = tpu.matmul %180, %181, %cst_216 {dimension_numbers = #tpu.dot_dimension_numbers<[1], [0], [0], [1], [0, 0, 1, 1], [], []>} : vector<9x32xbf16>, vector<32x64xbf16>, vector<9x64xf32> -> vector<9x64xf32>
    %183 = arith.addf %177, %182 : vector<9x64xf32>
    %c1_217 = arith.constant 1 : index
    %c1_218 = arith.constant 1 : index
    %c0_219 = arith.constant 0 : index
    %c1_220 = arith.constant 1 : index
    %c0_221 = arith.constant 0 : index
    %184 = vector.load %arg13[%c1_217, %c1_218, %c0_219, %c1_220, %c0_221] : memref<4x2x4x2x32xbf16, #tpu.memory_space<vmem>>, vector<3x1x3x1x32xbf16>
    %185 = vector.shape_cast %184 : vector<3x1x3x1x32xbf16> to vector<3x3x32xbf16>
    %186 = vector.shape_cast %185 : vector<3x3x32xbf16> to vector<9x32xbf16>
    %c416 = arith.constant 416 : index
    %c0_222 = arith.constant 0 : index
    %187 = vector.load %arg4[%c416, %c0_222] : memref<512x64xbf16, #tpu.memory_space<vmem>>, vector<32x64xbf16>
    %cst_223 = arith.constant dense<0.000000e+00> : vector<9x64xf32>
    %188 = tpu.matmul %186, %187, %cst_223 {dimension_numbers = #tpu.dot_dimension_numbers<[1], [0], [0], [1], [0, 0, 1, 1], [], []>} : vector<9x32xbf16>, vector<32x64xbf16>, vector<9x64xf32> -> vector<9x64xf32>
    %189 = arith.addf %183, %188 : vector<9x64xf32>
    %c1_224 = arith.constant 1 : index
    %c1_225 = arith.constant 1 : index
    %c1_226 = arith.constant 1 : index
    %c0_227 = arith.constant 0 : index
    %c0_228 = arith.constant 0 : index
    %190 = vector.load %arg13[%c1_224, %c1_225, %c1_226, %c0_227, %c0_228] : memref<4x2x4x2x32xbf16, #tpu.memory_space<vmem>>, vector<3x1x3x1x32xbf16>
    %191 = vector.shape_cast %190 : vector<3x1x3x1x32xbf16> to vector<3x3x32xbf16>
    %192 = vector.shape_cast %191 : vector<3x3x32xbf16> to vector<9x32xbf16>
    %c448 = arith.constant 448 : index
    %c0_229 = arith.constant 0 : index
    %193 = vector.load %arg4[%c448, %c0_229] : memref<512x64xbf16, #tpu.memory_space<vmem>>, vector<32x64xbf16>
    %cst_230 = arith.constant dense<0.000000e+00> : vector<9x64xf32>
    %194 = tpu.matmul %192, %193, %cst_230 {dimension_numbers = #tpu.dot_dimension_numbers<[1], [0], [0], [1], [0, 0, 1, 1], [], []>} : vector<9x32xbf16>, vector<32x64xbf16>, vector<9x64xf32> -> vector<9x64xf32>
    %195 = arith.addf %189, %194 : vector<9x64xf32>
    %c1_231 = arith.constant 1 : index
    %c1_232 = arith.constant 1 : index
    %c1_233 = arith.constant 1 : index
    %c1_234 = arith.constant 1 : index
    %c0_235 = arith.constant 0 : index
    %196 = vector.load %arg13[%c1_231, %c1_232, %c1_233, %c1_234, %c0_235] : memref<4x2x4x2x32xbf16, #tpu.memory_space<vmem>>, vector<3x1x3x1x32xbf16>
    %197 = vector.shape_cast %196 : vector<3x1x3x1x32xbf16> to vector<3x3x32xbf16>
    %198 = vector.shape_cast %197 : vector<3x3x32xbf16> to vector<9x32xbf16>
    %c480 = arith.constant 480 : index
    %c0_236 = arith.constant 0 : index
    %199 = vector.load %arg4[%c480, %c0_236] : memref<512x64xbf16, #tpu.memory_space<vmem>>, vector<32x64xbf16>
    %cst_237 = arith.constant dense<0.000000e+00> : vector<9x64xf32>
    %200 = tpu.matmul %198, %199, %cst_237 {dimension_numbers = #tpu.dot_dimension_numbers<[1], [0], [0], [1], [0, 0, 1, 1], [], []>} : vector<9x32xbf16>, vector<32x64xbf16>, vector<9x64xf32> -> vector<9x64xf32>
    %201 = arith.addf %195, %200 : vector<9x64xf32>
    %c0_238 = arith.constant 0 : index
    %c0_239 = arith.constant 0 : index
    %202 = vector.load %arg5[%c0_238, %c0_239] : memref<1x64xf32, #tpu.memory_space<vmem>>, vector<1x64xf32>
    %203 = vector.broadcast %202 : vector<1x64xf32> to vector<9x64xf32>
    %204 = arith.addf %201, %203 : vector<9x64xf32>
    %cst_240 = arith.constant 0.000000e+00 : f32
    %205 = vector.broadcast %cst_240 : f32 to vector<9x64xf32>
    %206 = arith.maximumf %204, %205 : vector<9x64xf32>
    %207 = arith.truncf %206 : vector<9x64xf32> to vector<9x64xbf16>
    %208 = vector.shape_cast %207 : vector<9x64xbf16> to vector<3x3x64xbf16>
    %c0_241 = arith.constant 0 : index
    %c0_242 = arith.constant 0 : index
    %c0_243 = arith.constant 0 : index
    %209 = vector.load %arg14[%c0_241, %c0_242, %c0_243] : memref<3x3x64xbf16, #tpu.memory_space<vmem>>, vector<3x3x64xbf16>
    tpu.vector_store %arg14[%c0_241, %c0_242, %c0_243], %208 {strides = array<i32>} : memref<3x3x64xbf16, #tpu.memory_space<vmem>>, vector<3x3x64xbf16>,
    %cst_244 = arith.constant 0.000000e+00 : f32
    %210 = vector.broadcast %cst_244 : f32 to vector<1x64xf32>
    %c0_245 = arith.constant 0 : index
    %c0_246 = arith.constant 0 : index
    %c0_247 = arith.constant 0 : index
    %211 = vector.load %arg14[%c0_245, %c0_246, %c0_247] : memref<3x3x64xbf16, #tpu.memory_space<vmem>>, vector<1x1x64xbf16>
    %212 = vector.shape_cast %211 : vector<1x1x64xbf16> to vector<1x64xbf16>
    %c0_248 = arith.constant 0 : index
    %c0_249 = arith.constant 0 : index
    %213 = vector.load %arg6[%c0_248, %c0_249] : memref<576x64xbf16, #tpu.memory_space<vmem>>, vector<64x64xbf16>
    %cst_250 = arith.constant dense<0.000000e+00> : vector<1x64xf32>
    %214 = tpu.matmul %212, %213, %cst_250 {dimension_numbers = #tpu.dot_dimension_numbers<[1], [0], [0], [1], [0, 0, 1, 1], [], []>} : vector<1x64xbf16>, vector<64x64xbf16>, vector<1x64xf32> -> vector<1x64xf32>
    %215 = arith.addf %210, %214 : vector<1x64xf32>
    %c0_251 = arith.constant 0 : index
    %c1_252 = arith.constant 1 : index
    %c0_253 = arith.constant 0 : index
    %216 = vector.load %arg14[%c0_251, %c1_252, %c0_253] : memref<3x3x64xbf16, #tpu.memory_space<vmem>>, vector<1x1x64xbf16>
    %217 = vector.shape_cast %216 : vector<1x1x64xbf16> to vector<1x64xbf16>
    %c64_254 = arith.constant 64 : index
    %c0_255 = arith.constant 0 : index
    %218 = vector.load %arg6[%c64_254, %c0_255] : memref<576x64xbf16, #tpu.memory_space<vmem>>, vector<64x64xbf16>
    %cst_256 = arith.constant dense<0.000000e+00> : vector<1x64xf32>
    %219 = tpu.matmul %217, %218, %cst_256 {dimension_numbers = #tpu.dot_dimension_numbers<[1], [0], [0], [1], [0, 0, 1, 1], [], []>} : vector<1x64xbf16>, vector<64x64xbf16>, vector<1x64xf32> -> vector<1x64xf32>
    %220 = arith.addf %215, %219 : vector<1x64xf32>
    %c0_257 = arith.constant 0 : index
    %c2_258 = arith.constant 2 : index
    %c0_259 = arith.constant 0 : index
    %221 = vector.load %arg14[%c0_257, %c2_258, %c0_259] : memref<3x3x64xbf16, #tpu.memory_space<vmem>>, vector<1x1x64xbf16>
    %222 = vector.shape_cast %221 : vector<1x1x64xbf16> to vector<1x64xbf16>
    %c128_260 = arith.constant 128 : index
    %c0_261 = arith.constant 0 : index
    %223 = vector.load %arg6[%c128_260, %c0_261] : memref<576x64xbf16, #tpu.memory_space<vmem>>, vector<64x64xbf16>
    %cst_262 = arith.constant dense<0.000000e+00> : vector<1x64xf32>
    %224 = tpu.matmul %222, %223, %cst_262 {dimension_numbers = #tpu.dot_dimension_numbers<[1], [0], [0], [1], [0, 0, 1, 1], [], []>} : vector<1x64xbf16>, vector<64x64xbf16>, vector<1x64xf32> -> vector<1x64xf32>
    %225 = arith.addf %220, %224 : vector<1x64xf32>
    %c1_263 = arith.constant 1 : index
    %c0_264 = arith.constant 0 : index
    %c0_265 = arith.constant 0 : index
    %226 = vector.load %arg14[%c1_263, %c0_264, %c0_265] : memref<3x3x64xbf16, #tpu.memory_space<vmem>>, vector<1x1x64xbf16>
    %227 = vector.shape_cast %226 : vector<1x1x64xbf16> to vector<1x64xbf16>
    %c192_266 = arith.constant 192 : index
    %c0_267 = arith.constant 0 : index
    %228 = vector.load %arg6[%c192_266, %c0_267] : memref<576x64xbf16, #tpu.memory_space<vmem>>, vector<64x64xbf16>
    %cst_268 = arith.constant dense<0.000000e+00> : vector<1x64xf32>
    %229 = tpu.matmul %227, %228, %cst_268 {dimension_numbers = #tpu.dot_dimension_numbers<[1], [0], [0], [1], [0, 0, 1, 1], [], []>} : vector<1x64xbf16>, vector<64x64xbf16>, vector<1x64xf32> -> vector<1x64xf32>
    %230 = arith.addf %225, %229 : vector<1x64xf32>
    %c1_269 = arith.constant 1 : index
    %c1_270 = arith.constant 1 : index
    %c0_271 = arith.constant 0 : index
    %231 = vector.load %arg14[%c1_269, %c1_270, %c0_271] : memref<3x3x64xbf16, #tpu.memory_space<vmem>>, vector<1x1x64xbf16>
    %232 = vector.shape_cast %231 : vector<1x1x64xbf16> to vector<1x64xbf16>
    %c256_272 = arith.constant 256 : index
    %c0_273 = arith.constant 0 : index
    %233 = vector.load %arg6[%c256_272, %c0_273] : memref<576x64xbf16, #tpu.memory_space<vmem>>, vector<64x64xbf16>
    %cst_274 = arith.constant dense<0.000000e+00> : vector<1x64xf32>
    %234 = tpu.matmul %232, %233, %cst_274 {dimension_numbers = #tpu.dot_dimension_numbers<[1], [0], [0], [1], [0, 0, 1, 1], [], []>} : vector<1x64xbf16>, vector<64x64xbf16>, vector<1x64xf32> -> vector<1x64xf32>
    %235 = arith.addf %230, %234 : vector<1x64xf32>
    %c1_275 = arith.constant 1 : index
    %c2_276 = arith.constant 2 : index
    %c0_277 = arith.constant 0 : index
    %236 = vector.load %arg14[%c1_275, %c2_276, %c0_277] : memref<3x3x64xbf16, #tpu.memory_space<vmem>>, vector<1x1x64xbf16>
    %237 = vector.shape_cast %236 : vector<1x1x64xbf16> to vector<1x64xbf16>
    %c320_278 = arith.constant 320 : index
    %c0_279 = arith.constant 0 : index
    %238 = vector.load %arg6[%c320_278, %c0_279] : memref<576x64xbf16, #tpu.memory_space<vmem>>, vector<64x64xbf16>
    %cst_280 = arith.constant dense<0.000000e+00> : vector<1x64xf32>
    %239 = tpu.matmul %237, %238, %cst_280 {dimension_numbers = #tpu.dot_dimension_numbers<[1], [0], [0], [1], [0, 0, 1, 1], [], []>} : vector<1x64xbf16>, vector<64x64xbf16>, vector<1x64xf32> -> vector<1x64xf32>
    %240 = arith.addf %235, %239 : vector<1x64xf32>
    %c2_281 = arith.constant 2 : index
    %c0_282 = arith.constant 0 : index
    %c0_283 = arith.constant 0 : index
    %241 = vector.load %arg14[%c2_281, %c0_282, %c0_283] : memref<3x3x64xbf16, #tpu.memory_space<vmem>>, vector<1x1x64xbf16>
    %242 = vector.shape_cast %241 : vector<1x1x64xbf16> to vector<1x64xbf16>
    %c384_284 = arith.constant 384 : index
    %c0_285 = arith.constant 0 : index
    %243 = vector.load %arg6[%c384_284, %c0_285] : memref<576x64xbf16, #tpu.memory_space<vmem>>, vector<64x64xbf16>
    %cst_286 = arith.constant dense<0.000000e+00> : vector<1x64xf32>
    %244 = tpu.matmul %242, %243, %cst_286 {dimension_numbers = #tpu.dot_dimension_numbers<[1], [0], [0], [1], [0, 0, 1, 1], [], []>} : vector<1x64xbf16>, vector<64x64xbf16>, vector<1x64xf32> -> vector<1x64xf32>
    %245 = arith.addf %240, %244 : vector<1x64xf32>
    %c2_287 = arith.constant 2 : index
    %c1_288 = arith.constant 1 : index
    %c0_289 = arith.constant 0 : index
    %246 = vector.load %arg14[%c2_287, %c1_288, %c0_289] : memref<3x3x64xbf16, #tpu.memory_space<vmem>>, vector<1x1x64xbf16>
    %247 = vector.shape_cast %246 : vector<1x1x64xbf16> to vector<1x64xbf16>
    %c448_290 = arith.constant 448 : index
    %c0_291 = arith.constant 0 : index
    %248 = vector.load %arg6[%c448_290, %c0_291] : memref<576x64xbf16, #tpu.memory_space<vmem>>, vector<64x64xbf16>
    %cst_292 = arith.constant dense<0.000000e+00> : vector<1x64xf32>
    %249 = tpu.matmul %247, %248, %cst_292 {dimension_numbers = #tpu.dot_dimension_numbers<[1], [0], [0], [1], [0, 0, 1, 1], [], []>} : vector<1x64xbf16>, vector<64x64xbf16>, vector<1x64xf32> -> vector<1x64xf32>
    %250 = arith.addf %245, %249 : vector<1x64xf32>
    %c2_293 = arith.constant 2 : index
    %c2_294 = arith.constant 2 : index
    %c0_295 = arith.constant 0 : index
    %251 = vector.load %arg14[%c2_293, %c2_294, %c0_295] : memref<3x3x64xbf16, #tpu.memory_space<vmem>>, vector<1x1x64xbf16>
    %252 = vector.shape_cast %251 : vector<1x1x64xbf16> to vector<1x64xbf16>
    %c512 = arith.constant 512 : index
    %c0_296 = arith.constant 0 : index
    %253 = vector.load %arg6[%c512, %c0_296] : memref<576x64xbf16, #tpu.memory_space<vmem>>, vector<64x64xbf16>
    %cst_297 = arith.constant dense<0.000000e+00> : vector<1x64xf32>
    %254 = tpu.matmul %252, %253, %cst_297 {dimension_numbers = #tpu.dot_dimension_numbers<[1], [0], [0], [1], [0, 0, 1, 1], [], []>} : vector<1x64xbf16>, vector<64x64xbf16>, vector<1x64xf32> -> vector<1x64xf32>
    %255 = arith.addf %250, %254 : vector<1x64xf32>
    %c0_298 = arith.constant 0 : index
    %c0_299 = arith.constant 0 : index
    %256 = vector.load %arg7[%c0_298, %c0_299] : memref<1x64xf32, #tpu.memory_space<vmem>>, vector<1x64xf32>
    %257 = arith.addf %255, %256 : vector<1x64xf32>
    %cst_300 = arith.constant 0.000000e+00 : f32
    %258 = vector.broadcast %cst_300 : f32 to vector<1x64xf32>
    %259 = arith.maximumf %257, %258 : vector<1x64xf32>
    %260 = arith.truncf %259 : vector<1x64xf32> to vector<1x64xbf16>
    %c0_301 = arith.constant 0 : index
    %c0_302 = arith.constant 0 : index
    %261 = vector.load %arg9[%c0_301, %c0_302] : memref<1x512xf32, #tpu.memory_space<vmem>>, vector<1x512xf32>
    %c0_303 = arith.constant 0 : index
    %c0_304 = arith.constant 0 : index
    %262 = vector.load %arg8[%c0_303, %c0_304] : memref<64x512xbf16, #tpu.memory_space<vmem>>, vector<64x512xbf16>
    %cst_305 = arith.constant dense<0.000000e+00> : vector<1x512xf32>
    %263 = tpu.matmul %260, %262, %cst_305 {dimension_numbers = #tpu.dot_dimension_numbers<[1], [0], [0], [1], [0, 0, 1, 1], [], []>} : vector<1x64xbf16>, vector<64x512xbf16>, vector<1x512xf32> -> vector<1x512xf32>
    %264 = arith.addf %261, %263 : vector<1x512xf32>
    %cst_306 = arith.constant 0.000000e+00 : f32
    %265 = vector.broadcast %cst_306 : f32 to vector<1x512xf32>
    %266 = arith.maximumf %264, %265 : vector<1x512xf32>
    %267 = arith.truncf %266 : vector<1x512xf32> to vector<1x512xbf16>
    %c0_307 = arith.constant 0 : index
    %c0_308 = arith.constant 0 : index
    %268 = vector.load %arg10[%c0_307, %c0_308] : memref<512x128xbf16, #tpu.memory_space<vmem>>, vector<512x128xbf16>
    %cst_309 = arith.constant dense<0.000000e+00> : vector<1x128xf32>
    %269 = tpu.matmul %267, %268, %cst_309 {dimension_numbers = #tpu.dot_dimension_numbers<[1], [0], [0], [1], [0, 0, 1, 1], [], []>} : vector<1x512xbf16>, vector<512x128xbf16>, vector<1x128xf32> -> vector<1x128xf32>
    %c0_310 = arith.constant 0 : index
    %c0_311 = arith.constant 0 : index
    %270 = vector.load %arg11[%c0_310, %c0_311] : memref<1x128xf32, #tpu.memory_space<vmem>>, vector<1x128xf32>
    %271 = arith.addf %269, %270 : vector<1x128xf32>
    %c0_312 = arith.constant 0 : index
    %c0_313 = arith.constant 0 : index
    %c0_314 = arith.constant 0 : index
    %272 = vector.load %arg12[%c0_312, %c0_313, %c0_314] : memref<1x1x128xf32, #tpu.memory_space<vmem>>, vector<1x1x128xf32>
    %273 = vector.shape_cast %272 : vector<1x1x128xf32> to vector<1x128xf32>
    %274 = vector.shape_cast %271 : vector<1x128xf32> to vector<1x1x128xf32>
    tpu.vector_store %arg12[%c0_312, %c0_313, %c0_314], %274 {strides = array<i32>} : memref<1x1x128xf32, #tpu.memory_space<vmem>>, vector<1x1x128xf32>,
    return
  }
  func.func @transform_0(%arg0: i32) -> (i32, i32, i32, i32, i32) {
    %c0_i32 = arith.constant 0 : i32
    %c0_i32_0 = arith.constant 0 : i32
    %c0_i32_1 = arith.constant 0 : i32
    %c0_i32_2 = arith.constant 0 : i32
    %c0_i32_3 = arith.constant 0 : i32
    return %arg0, %c0_i32, %c0_i32_0, %c0_i32_1, %c0_i32_2 : i32, i32, i32, i32, i32
  }
  func.func @transform_1(%arg0: i32) -> (i32, i32) {
    %c0_i32 = arith.constant 0 : i32
    %c0_i32_0 = arith.constant 0 : i32
    %c0_i32_1 = arith.constant 0 : i32
    return %c0_i32, %c0_i32_0 : i32, i32
  }
  func.func @transform_2(%arg0: i32) -> (i32, i32) {
    %c0_i32 = arith.constant 0 : i32
    %c0_i32_0 = arith.constant 0 : i32
    %c0_i32_1 = arith.constant 0 : i32
    return %c0_i32, %c0_i32_0 : i32, i32
  }
  func.func @transform_3(%arg0: i32) -> (i32, i32) {
    %c0_i32 = arith.constant 0 : i32
    %c0_i32_0 = arith.constant 0 : i32
    %c0_i32_1 = arith.constant 0 : i32
    return %c0_i32, %c0_i32_0 : i32, i32
  }
  func.func @transform_4(%arg0: i32) -> (i32, i32) {
    %c0_i32 = arith.constant 0 : i32
    %c0_i32_0 = arith.constant 0 : i32
    %c0_i32_1 = arith.constant 0 : i32
    return %c0_i32, %c0_i32_0 : i32, i32
  }
  func.func @transform_5(%arg0: i32) -> (i32, i32) {
    %c0_i32 = arith.constant 0 : i32
    %c0_i32_0 = arith.constant 0 : i32
    %c0_i32_1 = arith.constant 0 : i32
    return %c0_i32, %c0_i32_0 : i32, i32
  }
  func.func @transform_6(%arg0: i32) -> (i32, i32) {
    %c0_i32 = arith.constant 0 : i32
    %c0_i32_0 = arith.constant 0 : i32
    %c0_i32_1 = arith.constant 0 : i32
    return %c0_i32, %c0_i32_0 : i32, i32
  }
  func.func @transform_7(%arg0: i32) -> (i32, i32) {
    %c0_i32 = arith.constant 0 : i32
    %c0_i32_0 = arith.constant 0 : i32
    %c0_i32_1 = arith.constant 0 : i32
    return %c0_i32, %c0_i32_0 : i32, i32
  }
  func.func @transform_8(%arg0: i32) -> (i32, i32) {
    %c0_i32 = arith.constant 0 : i32
    %c0_i32_0 = arith.constant 0 : i32
    %c0_i32_1 = arith.constant 0 : i32
    return %c0_i32, %c0_i32_0 : i32, i32
  }
  func.func @transform_9(%arg0: i32) -> (i32, i32) {
    %c0_i32 = arith.constant 0 : i32
    %c0_i32_0 = arith.constant 0 : i32
    %c0_i32_1 = arith.constant 0 : i32
    return %c0_i32, %c0_i32_0 : i32, i32
  }
  func.func @transform_10(%arg0: i32) -> (i32, i32) {
    %c0_i32 = arith.constant 0 : i32
    %c0_i32_0 = arith.constant 0 : i32
    %c0_i32_1 = arith.constant 0 : i32
    return %c0_i32, %c0_i32_0 : i32, i32
  }
  func.func @transform_11(%arg0: i32) -> (i32, i32, i32) {
    %c0_i32 = arith.constant 0 : i32
    %c0_i32_0 = arith.constant 0 : i32
    %c0_i32_1 = arith.constant 0 : i32
    return %arg0, %c0_i32, %c0_i32_0 : i32, i32, i32
  }
}

</mosaic_0001>

<llo_original>
// kernel: dqn_forward.1
$region0: #{dqn_forward.1}
  #allocation0 [shape = 'u32[]', space=smem, size = 0x4, offset = 0x4, fixed_abs, tag = 'smem constant byte address 0x4 - core index']
  #allocation1 [shape = 'u32[144,128]{1,0:T(1,128)}', space=vmem, size = 0x12000, scoped, tag = 'internal scratch']
  #allocation2 [shape = 'bf16[4,2,4,2,32]{4,3,2,1,0:T(2,128)(2,1)}', space=vmem, size = 0x4000, scoped, tag = 'scratch operand']
  #allocation3 [shape = 'bf16[3,3,64]{2,1,0:T(4,128)(2,1)}', space=vmem, size = 0xc00, scoped, tag = 'scratch operand']
  %s0 = inlined_call_operand.vmem [shape: bf16[2,9,4,9,16], index: 0, kind: input, shape index: {}]
  %s1 = inlined_call_operand.vmem [shape: bf16[256,32], index: 1, kind: input, shape index: {}]
  %s2 = inlined_call_operand.vmem [shape: f32[1,32], index: 2, kind: input, shape index: {}]
  %s3 = inlined_call_operand.vmem [shape: bf16[512,64], index: 3, kind: input, shape index: {}]
  %s4 = inlined_call_operand.vmem [shape: f32[1,64], index: 4, kind: input, shape index: {}]
  %s5 = inlined_call_operand.vmem [shape: bf16[576,64], index: 5, kind: input, shape index: {}]
  %s6 = inlined_call_operand.vmem [shape: f32[1,64], index: 6, kind: input, shape index: {}]
  %s7 = inlined_call_operand.vmem [shape: bf16[64,512], index: 7, kind: input, shape index: {}]
  %s8 = inlined_call_operand.vmem [shape: f32[1,512], index: 8, kind: input, shape index: {}]
  %s9 = inlined_call_operand.vmem [shape: bf16[512,128], index: 9, kind: input, shape index: {}]
  %s10 = inlined_call_operand.vmem [shape: f32[1,128], index: 10, kind: input, shape index: {}]
  %s11 = inlined_call_operand.hbm [shape: f32[2,1,128], index: 11, kind: output, shape index: {}]
  %s12 = sld [smem:[#allocation0]]
  $region77: #{dqn_forward.1} parent=0
    _
  %s14 = ssub.s32 1, %s12
  %s15 = scalar_select 0, %s14, %s12
  $region1: #{dqn_forward.1} parent=0
    #allocation4 [shape = 'u8[1024]{0}', space=vmem, size = 0x400, scoped, tag = 'output window, operand 0']
    #allocation5 [shape = 's32[2]{0}', space=sflag, size = 0x8, scoped, tag = 'scoped memory for dqn_forward.1']
    %16 = vsyncpa [#allocation5], 0
    %s17 = scalar_lea.sflag [#allocation5], 1
    %18 = vsyncpa %s17, 0
    loop: start=0, step=1, limit=4
    $region2: #{dqn_forward.1} parent=1 // loop_pre_header
      _
    $region3: #{dqn_forward.1} parent=1 // loop_header
      %s20 = sphi 0, %s24
      %p21 = scmp.ge.s32.totalorder %s20, 4
      %s30 = sphi 0, %s32
      %s33 = sphi 0, %s30
      %s34 = sphi 0, %s33
      %s50 = sphi 0, %s34
      %s54 = sphi 0, %s54
      %s56 = sphi 0, %s54
      %s57 = sphi 0, %s56
      %s71 = sphi 0, %s57
      %s75 = sphi 0, %s75
      %s77 = sphi 0, %s75
      %s78 = sphi 0, %s77
      %s92 = sphi 0, %s78
      %s96 = sphi 0, %s96
      %s98 = sphi 0, %s96
      %s99 = sphi 0, %s98
      %s113 = sphi 0, %s99
      %s117 = sphi 0, %s117
      %s119 = sphi 0, %s117
      %s120 = sphi 0, %s119
      %s134 = sphi 0, %s120
      %s138 = sphi 0, %s138
      %s140 = sphi 0, %s138
      %s141 = sphi 0, %s140
      %s155 = sphi 0, %s141
      %s159 = sphi 0, %s159
      %s161 = sphi 0, %s159
      %s162 = sphi 0, %s161
      %s176 = sphi 0, %s162
      %s180 = sphi 0, %s180
      %s182 = sphi 0, %s180
      %s183 = sphi 0, %s182
      %s197 = sphi 0, %s183
      %s201 = sphi 0, %s201
      %s203 = sphi 0, %s201
      %s204 = sphi 0, %s203
      %s218 = sphi 0, %s204
      %s222 = sphi 0, %s222
      %s224 = sphi 0, %s222
      %s225 = sphi 0, %s224
      %s239 = sphi 0, %s225
      %s243 = sphi 0, %s243
      %s245 = sphi 0, %s243
      %s246 = sphi 0, %s245
      %s260 = sphi 0, %s246
      %s266 = sphi 0, %s268
      %s269 = sphi 0, %s266
      %s270 = sphi 0, %s269
      %s286 = sphi 0, %s270
    $region4: #{dqn_forward.1} parent=1 // loop_header_branch
      %23 = sbr.rel (%p21) target = $region8
    $region5: #{dqn_forward.1} parent=1 // loop_body
      %s25 = ssub.s32 %s20, 1
      %s26 = ssub.s32 %s20, 2
      %s27 = sadd.s32 %s20, 1
      %s28 = ssub.s32 %s20, %s27
      %p29 = scmp.eq.s32.totalorder %s28, 0
      %s31 = sadd.s32 %s30, 1
      %s32 = scalar_select %p29, %s30, %s31
      %p35 = pneg %p29
      %p36 = scmp.eq.s32.totalorder %s20, 1
      %p37 = por %p35, %p36
      %p38 = scmp.ne.s32.totalorder %s30, %s33
      %p39 = scmp.eq.s32.totalorder %s20, 0
      %p40 = por %p38, %p39
      %p41 = scmp.ne.s32.totalorder %s30, %s33
      %p42 = scmp.eq.s32.totalorder %s25, 1
      %p43 = por %p41, %p42
      %p44 = scmp.ne.s32.totalorder %s33, %s34
      %p45 = scmp.eq.s32.totalorder %s25, 0
      %p46 = por %p44, %p45
      %p47 = scmp.ne.s32.totalorder %s33, %s34
      %p48 = scmp.eq.s32.totalorder %s26, 1
      %p49 = por %p47, %p48
      %p51 = scmp.ne.s32.totalorder %s34, %s50
      %p52 = scmp.eq.s32.totalorder %s26, 0
      %p53 = por %p51, %p52
      %s55 = sadd.s32 %s54, 1
      %p58 = scmp.eq.s32.totalorder %s20, 1
      %p59 = scmp.ne.s32.totalorder %s54, %s56
      %p60 = scmp.eq.s32.totalorder %s20, 0
      %p61 = por %p59, %p60
      %p62 = scmp.ne.s32.totalorder %s54, %s56
      %p63 = scmp.eq.s32.totalorder %s25, 1
      %p64 = por %p62, %p63
      %p65 = scmp.ne.s32.totalorder %s56, %s57
      %p66 = scmp.eq.s32.totalorder %s25, 0
      %p67 = por %p65, %p66
      %p68 = scmp.ne.s32.totalorder %s56, %s57
      %p69 = scmp.eq.s32.totalorder %s26, 1
      %p70 = por %p68, %p69
      %p72 = scmp.ne.s32.totalorder %s57, %s71
      %p73 = scmp.eq.s32.totalorder %s26, 0
      %p74 = por %p72, %p73
      %s76 = sadd.s32 %s75, 1
      %p79 = scmp.eq.s32.totalorder %s20, 1
      %p80 = scmp.ne.s32.totalorder %s75, %s77
      %p81 = scmp.eq.s32.totalorder %s20, 0
      %p82 = por %p80, %p81
      %p83 = scmp.ne.s32.totalorder %s75, %s77
      %p84 = scmp.eq.s32.totalorder %s25, 1
      %p85 = por %p83, %p84
      %p86 = scmp.ne.s32.totalorder %s77, %s78
      %p87 = scmp.eq.s32.totalorder %s25, 0
      %p88 = por %p86, %p87
      %p89 = scmp.ne.s32.totalorder %s77, %s78
      %p90 = scmp.eq.s32.totalorder %s26, 1
      %p91 = por %p89, %p90
      %p93 = scmp.ne.s32.totalorder %s78, %s92
      %p94 = scmp.eq.s32.totalorder %s26, 0
      %p95 = por %p93, %p94
      %s97 = sadd.s32 %s96, 1
      %p100 = scmp.eq.s32.totalorder %s20, 1
      %p101 = scmp.ne.s32.totalorder %s96, %s98
      %p102 = scmp.eq.s32.totalorder %s20, 0
      %p103 = por %p101, %p102
      %p104 = scmp.ne.s32.totalorder %s96, %s98
      %p105 = scmp.eq.s32.totalorder %s25, 1
      %p106 = por %p104, %p105
      %p107 = scmp.ne.s32.totalorder %s98, %s99
      %p108 = scmp.eq.s32.totalorder %s25, 0
      %p109 = por %p107, %p108
      %p110 = scmp.ne.s32.totalorder %s98, %s99
      %p111 = scmp.eq.s32.totalorder %s26, 1
      %p112 = por %p110, %p111
      %p114 = scmp.ne.s32.totalorder %s99, %s113
      %p115 = scmp.eq.s32.totalorder %s26, 0
      %p116 = por %p114, %p115
      %s118 = sadd.s32 %s117, 1
      %p121 = scmp.eq.s32.totalorder %s20, 1
      %p122 = scmp.ne.s32.totalorder %s117, %s119
      %p123 = scmp.eq.s32.totalorder %s20, 0
      %p124 = por %p122, %p123
      %p125 = scmp.ne.s32.totalorder %s117, %s119
      %p126 = scmp.eq.s32.totalorder %s25, 1
      %p127 = por %p125, %p126
      %p128 = scmp.ne.s32.totalorder %s119, %s120
      %p129 = scmp.eq.s32.totalorder %s25, 0
      %p130 = por %p128, %p129
      %p131 = scmp.ne.s32.totalorder %s119, %s120
      %p132 = scmp.eq.s32.totalorder %s26, 1
      %p133 = por %p131, %p132
      %p135 = scmp.ne.s32.totalorder %s120, %s134
      %p136 = scmp.eq.s32.totalorder %s26, 0
      %p137 = por %p135, %p136
      %s139 = sadd.s32 %s138, 1
      %p142 = scmp.eq.s32.totalorder %s20, 1
      %p143 = scmp.ne.s32.totalorder %s138, %s140
      %p144 = scmp.eq.s32.totalorder %s20, 0
      %p145 = por %p143, %p144
      %p146 = scmp.ne.s32.totalorder %s138, %s140
      %p147 = scmp.eq.s32.totalorder %s25, 1
      %p148 = por %p146, %p147
      %p149 = scmp.ne.s32.totalorder %s140, %s141
      %p150 = scmp.eq.s32.totalorder %s25, 0
      %p151 = por %p149, %p150
      %p152 = scmp.ne.s32.totalorder %s140, %s141
      %p153 = scmp.eq.s32.totalorder %s26, 1
      %p154 = por %p152, %p153
      %p156 = scmp.ne.s32.totalorder %s141, %s155
      %p157 = scmp.eq.s32.totalorder %s26, 0
      %p158 = por %p156, %p157
      %s160 = sadd.s32 %s159, 1
      %p163 = scmp.eq.s32.totalorder %s20, 1
      %p164 = scmp.ne.s32.totalorder %s159, %s161
      %p165 = scmp.eq.s32.totalorder %s20, 0
      %p166 = por %p164, %p165
      %p167 = scmp.ne.s32.totalorder %s159, %s161
      %p168 = scmp.eq.s32.totalorder %s25, 1
      %p169 = por %p167, %p168
      %p170 = scmp.ne.s32.totalorder %s161, %s162
      %p171 = scmp.eq.s32.totalorder %s25, 0
      %p172 = por %p170, %p171
      %p173 = scmp.ne.s32.totalorder %s161, %s162
      %p174 = scmp.eq.s32.totalorder %s26, 1
      %p175 = por %p173, %p174
      %p177 = scmp.ne.s32.totalorder %s162, %s176
      %p178 = scmp.eq.s32.totalorder %s26, 0
      %p179 = por %p177, %p178
      %s181 = sadd.s32 %s180, 1
      %p184 = scmp.eq.s32.totalorder %s20, 1
      %p185 = scmp.ne.s32.totalorder %s180, %s182
      %p186 = scmp.eq.s32.totalorder %s20, 0
      %p187 = por %p185, %p186
      %p188 = scmp.ne.s32.totalorder %s180, %s182
      %p189 = scmp.eq.s32.totalorder %s25, 1
      %p190 = por %p188, %p189
      %p191 = scmp.ne.s32.totalorder %s182, %s183
      %p192 = scmp.eq.s32.totalorder %s25, 0
      %p193 = por %p191, %p192
      %p194 = scmp.ne.s32.totalorder %s182, %s183
      %p195 = scmp.eq.s32.totalorder %s26, 1
      %p196 = por %p194, %p195
      %p198 = scmp.ne.s32.totalorder %s183, %s197
      %p199 = scmp.eq.s32.totalorder %s26, 0
      %p200 = por %p198, %p199
      %s202 = sadd.s32 %s201, 1
      %p205 = scmp.eq.s32.totalorder %s20, 1
      %p206 = scmp.ne.s32.totalorder %s201, %s203
      %p207 = scmp.eq.s32.totalorder %s20, 0
      %p208 = por %p206, %p207
      %p209 = scmp.ne.s32.totalorder %s201, %s203
      %p210 = scmp.eq.s32.totalorder %s25, 1
      %p211 = por %p209, %p210
      %p212 = scmp.ne.s32.totalorder %s203, %s204
      %p213 = scmp.eq.s32.totalorder %s25, 0
      %p214 = por %p212, %p213
      %p215 = scmp.ne.s32.totalorder %s203, %s204
      %p216 = scmp.eq.s32.totalorder %s26, 1
      %p217 = por %p215, %p216
      %p219 = scmp.ne.s32.totalorder %s204, %s218
      %p220 = scmp.eq.s32.totalorder %s26, 0
      %p221 = por %p219, %p220
      %s223 = sadd.s32 %s222, 1
      %p226 = scmp.eq.s32.totalorder %s20, 1
      %p227 = scmp.ne.s32.totalorder %s222, %s224
      %p228 = scmp.eq.s32.totalorder %s20, 0
      %p229 = por %p227, %p228
      %p230 = scmp.ne.s32.totalorder %s222, %s224
      %p231 = scmp.eq.s32.totalorder %s25, 1
      %p232 = por %p230, %p231
      %p233 = scmp.ne.s32.totalorder %s224, %s225
      %p234 = scmp.eq.s32.totalorder %s25, 0
      %p235 = por %p233, %p234
      %p236 = scmp.ne.s32.totalorder %s224, %s225
      %p237 = scmp.eq.s32.totalorder %s26, 1
      %p238 = por %p236, %p237
      %p240 = scmp.ne.s32.totalorder %s225, %s239
      %p241 = scmp.eq.s32.totalorder %s26, 0
      %p242 = por %p240, %p241
      %s244 = sadd.s32 %s243, 1
      %p247 = scmp.eq.s32.totalorder %s20, 1
      %p248 = scmp.ne.s32.totalorder %s243, %s245
      %p249 = scmp.eq.s32.totalorder %s20, 0
      %p250 = por %p248, %p249
      %p251 = scmp.ne.s32.totalorder %s243, %s245
      %p252 = scmp.eq.s32.totalorder %s25, 1
      %p253 = por %p251, %p252
      %p254 = scmp.ne.s32.totalorder %s245, %s246
      %p255 = scmp.eq.s32.totalorder %s25, 0
      %p256 = por %p254, %p255
      %p257 = scmp.ne.s32.totalorder %s245, %s246
      %p258 = scmp.eq.s32.totalorder %s26, 1
      %p259 = por %p257, %p258
      %p261 = scmp.ne.s32.totalorder %s246, %s260
      %p262 = scmp.eq.s32.totalorder %s26, 0
      %p263 = por %p261, %p262
      %s264 = ssub.s32 %s20, %s27
      %p265 = scmp.eq.s32.totalorder %s264, 0
      %s267 = sadd.s32 %s266, 1
      %s268 = scalar_select %p265, %s266, %s267
      %p271 = pneg %p265
      %p272 = scmp.eq.s32.totalorder %s20, 1
      %p273 = por %p271, %p272
      %p274 = scmp.ne.s32.totalorder %s266, %s269
      %p275 = scmp.eq.s32.totalorder %s20, 0
      %p276 = por %p274, %p275
      %p277 = scmp.ne.s32.totalorder %s266, %s269
      %p278 = scmp.eq.s32.totalorder %s25, 1
      %p279 = por %p277, %p278
      %p280 = scmp.ne.s32.totalorder %s269, %s270
      %p281 = scmp.eq.s32.totalorder %s25, 0
      %p282 = por %p280, %p281
      %p283 = scmp.ne.s32.totalorder %s269, %s270
      %p284 = scmp.eq.s32.totalorder %s26, 1
      %p285 = por %p283, %p284
      %p287 = scmp.ne.s32.totalorder %s270, %s286
      %p288 = scmp.eq.s32.totalorder %s26, 0
      %p289 = por %p287, %p288
      %p290 = scmp.le.s32.totalorder 1, %s20
      %p291 = scmp.lt.s32.totalorder %s20, 3
      %p292 = pnand %p290, %p291
      %p293 = pneg %p292
      // Predicated region
      $region9: #{dqn_forward.1} parent=5 // pred_check
        _
      $region10: #{dqn_forward.1} parent=5 // pred_check_branch
        %295 = sbr.rel (%p292) target = $region12
      $region11: #{dqn_forward.1} parent=5 // pred_region
        %s296 = ssub.s32 %s20, 1
        // Predicated region
        $region13: #{dqn_forward.1} parent=11 // pred_check
          %p297 = pneg %p67
        $region14: #{dqn_forward.1} parent=11 // pred_check_branch
          %299 = sbr.rel (%p297) target = $region16
        $region15: #{dqn_forward.1} parent=11 // pred_region
          _
        $region16: #{dqn_forward.1} parent=11 // pred_fallthru
          _
        // Predicated region
        $region17: #{dqn_forward.1} parent=11 // pred_check
          %p300 = pneg %p88
        $region18: #{dqn_forward.1} parent=11 // pred_check_branch
          %302 = sbr.rel (%p300) target = $region20
        $region19: #{dqn_forward.1} parent=11 // pred_region
          _
        $region20: #{dqn_forward.1} parent=11 // pred_fallthru
          _
        // Predicated region
        $region21: #{dqn_forward.1} parent=11 // pred_check
          %p303 = pneg %p109
        $region22: #{dqn_forward.1} parent=11 // pred_check_branch
          %305 = sbr.rel (%p303) target = $region24
        $region23: #{dqn_forward.1} parent=11 // pred_region
          _
        $region24: #{dqn_forward.1} parent=11 // pred_fallthru
          _
        // Predicated region
        $region25: #{dqn_forward.1} parent=11 // pred_check
          %p306 = pneg %p130
        $region26: #{dqn_forward.1} parent=11 // pred_check_branch
          %308 = sbr.rel (%p306) target = $region28
        $region27: #{dqn_forward.1} parent=11 // pred_region
          _
        $region28: #{dqn_forward.1} parent=11 // pred_fallthru
          _
        // Predicated region
        $region29: #{dqn_forward.1} parent=11 // pred_check
          %p309 = pneg %p151
        $region30: #{dqn_forward.1} parent=11 // pred_check_branch
          %311 = sbr.rel (%p309) target = $region32
        $region31: #{dqn_forward.1} parent=11 // pred_region
          _
        $region32: #{dqn_forward.1} parent=11 // pred_fallthru
          _
        // Predicated region
        $region33: #{dqn_forward.1} parent=11 // pred_check
          %p312 = pneg %p172
        $region34: #{dqn_forward.1} parent=11 // pred_check_branch
          %314 = sbr.rel (%p312) target = $region36
        $region35: #{dqn_forward.1} parent=11 // pred_region
          _
        $region36: #{dqn_forward.1} parent=11 // pred_fallthru
          _
        // Predicated region
        $region37: #{dqn_forward.1} parent=11 // pred_check
          %p315 = pneg %p193
        $region38: #{dqn_forward.1} parent=11 // pred_check_branch
          %317 = sbr.rel (%p315) target = $region40
        $region39: #{dqn_forward.1} parent=11 // pred_region
          _
        $region40: #{dqn_forward.1} parent=11 // pred_fallthru
          _
        // Predicated region
        $region41: #{dqn_forward.1} parent=11 // pred_check
          %p318 = pneg %p214
        $region42: #{dqn_forward.1} parent=11 // pred_check_branch
          %320 = sbr.rel (%p318) target = $region44
        $region43: #{dqn_forward.1} parent=11 // pred_region
          _
        $region44: #{dqn_forward.1} parent=11 // pred_fallthru
          _
        // Predicated region
        $region45: #{dqn_forward.1} parent=11 // pred_check
          %p321 = pneg %p235
        $region46: #{dqn_forward.1} parent=11 // pred_check_branch
          %323 = sbr.rel (%p321) target = $region48
        $region47: #{dqn_forward.1} parent=11 // pred_region
          _
        $region48: #{dqn_forward.1} parent=11 // pred_fallthru
          _
        // Predicated region
        $region49: #{dqn_forward.1} parent=11 // pred_check
          %p324 = pneg %p256
        $region50: #{dqn_forward.1} parent=11 // pred_check_branch
          %326 = sbr.rel (%p324) target = $region52
        $region51: #{dqn_forward.1} parent=11 // pred_region
          _
        $region52: #{dqn_forward.1} parent=11 // pred_fallthru
          _
      $region12: #{dqn_forward.1} parent=5 // pred_fallthru
        _
      %p327 = scmp.lt.s32.totalorder %s20, 2
      // Predicated region
      $region53: #{dqn_forward.1} parent=5 // pred_check
        %p328 = pneg %p327
      $region54: #{dqn_forward.1} parent=5 // pred_check_branch
        %330 = sbr.rel (%p328) target = $region56
      $region55: #{dqn_forward.1} parent=5 // pred_region
        // Predicated region
        $region57: #{dqn_forward.1} parent=55 // pred_check
          %p331 = pneg %p40
        $region58: #{dqn_forward.1} parent=55 // pred_check_branch
          %333 = sbr.rel (%p331) target = $region60
        $region59: #{dqn_forward.1} parent=55 // pred_region
          %p334 = scmp.lt.s32.totalorder %s20, 1
          %s335 = scalar_select %p334, %s20, 1
          %s336 = smul.addr %s335, 72
          %s337 = smul.addr %s336, 4
          %s338 = scalar_lea.vmem %s0, %s337
        $region60: #{dqn_forward.1} parent=55 // pred_fallthru
          _
      $region56: #{dqn_forward.1} parent=5 // pred_fallthru
        _
      %p339 = scmp.le.s32.totalorder 1, %s20
      %p340 = scmp.lt.s32.totalorder %s20, 3
      %p341 = pnand %p339, %p340
      %p342 = pneg %p341
      // Predicated region
      $region61: #{dqn_forward.1} parent=5 // pred_check
        _
      $region62: #{dqn_forward.1} parent=5 // pred_check_branch
        %344 = sbr.rel (%p341) target = $region64
      $region63: #{dqn_forward.1} parent=5 // pred_region
        %s345 = ssub.s32 %s20, 1
        %p346 = scmp.lt.s32.totalorder %s25, 1
        %s347 = scalar_select %p346, %s25, 1
        %s348 = smul.addr %s347, 72
        %s349 = smul.addr %s348, 4
        %s350 = scalar_lea.vmem %s0, %s349
        %p351 = pneg %p46
        %p352 = pneg %p43
        %p353 = pneg %p67
        %p354 = pneg %p64
        %p355 = pneg %p88
        %p356 = pneg %p85
        %p357 = pneg %p109
        %p358 = pneg %p106
        %p359 = pneg %p130
        %p360 = pneg %p127
        %p361 = pneg %p151
        %p362 = pneg %p148
        %p363 = pneg %p172
        %p364 = pneg %p169
        %p365 = pneg %p193
        %p366 = pneg %p190
        %p367 = pneg %p214
        %p368 = pneg %p211
        %p369 = pneg %p235
        %p370 = pneg %p232
        %p371 = pneg %p256
        %p372 = pneg %p253
        %p373 = pneg %p282
        %p374 = pneg %p279
        %s375 = sand.u32 %s269, 1
        %s376 = scalar_lea.sflag [#allocation5], %s375
        %s377 = sand.u32 %s269, 1
        %s378 = scalar_lea.vmem [#allocation4], %s377
        %p379 = scmp.lt.s32.totalorder %s25, 1
        %s380 = scalar_select %p379, %s25, 1
        %s381 = smul.addr %s380, 72
        %s382 = smul.addr %s381, 4
        %s383 = scalar_lea.vmem %s0, %s382
        %v385 = vld [vmem:[%s383] sm:$0xf]
        %v386 = vld [vmem:[%s383 + $0x20] sm:$0xf]
        %v387 = vld [vmem:[%s383 + $0x40] sm:$0xf]
        %v388 = vld [vmem:[%s383 + $0x60] sm:$0xf]
        %v389 = vld [vmem:[%s383 + $0x80] sm:$0xf]
        %v390 = vld [vmem:[%s383 + $0xa0] sm:$0xf]
        %v391 = vld [vmem:[%s383 + $0xc0] sm:$0xf]
        %v392 = vld [vmem:[%s383 + $0xe0] sm:$0xf]
        %v393 = vld [vmem:[%s1] sm:$0xf]
        %v394 = vld [vmem:[%s1 + $0x4] sm:$0xf]
        %v395 = vld [vmem:[%s383 + $0x4] sm:$0x1]
        %v396 = vld [vmem:[%s383 + $0x24] sm:$0x1]
        %v397 = vld [vmem:[%s383 + $0x44] sm:$0x1]
        %v398 = vld [vmem:[%s383 + $0x64] sm:$0x1]
        %v399 = vld [vmem:[%s383 + $0x84] sm:$0x1]
        %v400 = vld [vmem:[%s383 + $0xa4] sm:$0x1]
        %v401 = vld [vmem:[%s383 + $0xc4] sm:$0x1]
        %v402 = vld [vmem:[%s383 + $0xe4] sm:$0x1]
        %vm403 = vsmask.f32 3328
        %vm404 = vsmask.f32 7440
        %vm405 = vmor %vm403, %vm404
        %v407 = vshrl.u32 %v385, 16
        %v409 = vrot.slane %v407, 4
        %v410 = vshll.u32 %v385, 16
        %v412 = vrot.slane %v410, 5
        %v413 = vor.u32 %v409, %v412
        %v414 = vrot.slane %v413, 4
        %v416 = vshll.u32 %v395, 16
        %v418 = vrot.slane %v416, 5
        %v419 = vsel %vm405, %v414, %v418
        %v421 = vshrl.u32 %v386, 16
        %v423 = vrot.slane %v421, 4
        %v424 = vshll.u32 %v386, 16
        %v426 = vrot.slane %v424, 5
        %v427 = vor.u32 %v423, %v426
        %v428 = vrot.slane %v427, 4
        %v430 = vshll.u32 %v396, 16
        %v432 = vrot.slane %v430, 5
        %v433 = vsel %vm405, %v428, %v432
        %v435 = vshrl.u32 %v387, 16
        %v437 = vrot.slane %v435, 4
        %v438 = vshll.u32 %v387, 16
        %v440 = vrot.slane %v438, 5
        %v441 = vor.u32 %v437, %v440
        %v442 = vrot.slane %v441, 4
        %v444 = vshll.u32 %v397, 16
        %v446 = vrot.slane %v444, 5
        %v447 = vsel %vm405, %v442, %v446
        %v449 = vshrl.u32 %v388, 16
        %v451 = vrot.slane %v449, 4
        %v452 = vshll.u32 %v388, 16
        %v454 = vrot.slane %v452, 5
        %v455 = vor.u32 %v451, %v454
        %v456 = vrot.slane %v455, 4
        %v458 = vshll.u32 %v398, 16
        %v460 = vrot.slane %v458, 5
        %v461 = vsel %vm405, %v456, %v460
        %v463 = vshrl.u32 %v389, 16
        %v465 = vrot.slane %v463, 4
        %v466 = vshll.u32 %v389, 16
        %v468 = vrot.slane %v466, 5
        %v469 = vor.u32 %v465, %v468
        %v470 = vrot.slane %v469, 4
        %v472 = vshll.u32 %v399, 16
        %v474 = vrot.slane %v472, 5
        %v475 = vsel %vm405, %v470, %v474
        %v477 = vshrl.u32 %v390, 16
        %v479 = vrot.slane %v477, 4
        %v480 = vshll.u32 %v390, 16
        %v482 = vrot.slane %v480, 5
        %v483 = vor.u32 %v479, %v482
        %v484 = vrot.slane %v483, 4
        %v486 = vshll.u32 %v400, 16
        %v488 = vrot.slane %v486, 5
        %v489 = vsel %vm405, %v484, %v488
        %v491 = vshrl.u32 %v391, 16
        %v493 = vrot.slane %v491, 4
        %v494 = vshll.u32 %v391, 16
        %v496 = vrot.slane %v494, 5
        %v497 = vor.u32 %v493, %v496
        %v498 = vrot.slane %v497, 4
        %v500 = vshll.u32 %v401, 16
        %v502 = vrot.slane %v500, 5
        %v503 = vsel %vm405, %v498, %v502
        %v505 = vshrl.u32 %v392, 16
        %v507 = vrot.slane %v505, 4
        %v508 = vshll.u32 %v392, 16
        %v510 = vrot.slane %v508, 5
        %v511 = vor.u32 %v507, %v510
        %v512 = vrot.slane %v511, 4
        %v514 = vshll.u32 %v402, 16
        %v516 = vrot.slane %v514, 5
        %v517 = vsel %vm405, %v512, %v516
        %v518 = vld [vmem:[%s1 + $0x8] sm:$0xf]
        %v519 = vld [vmem:[%s1 + $0xc] sm:$0xf]
        %v520 = vunpack.c.l.b16 %v419
        %v521 = vunpack.c.l.b16 %v433
        %v522 = vunpack.c.l.b16 %v447
        %v523 = vunpack.c.l.b16 %v461
        %v524 = vunpack.c.l.b16 %v475
        %v525 = vunpack.c.l.b16 %v489
        %v526 = vunpack.c.l.b16 %v503
        %v527 = vunpack.c.l.b16 %v517
        %v528 = vpack.c.b16 %v521, %v520
        %v529 = vpack.c.b16 %v523, %v522
        %v530 = vpack.c.b16 %v525, %v524
        %v531 = vpack.c.b16 %v527, %v526
        %v534 = vunpack.c.l.b16 %v518
        %v535 = vunpack.c.l.b16 %v519
        %v536 = vpack.c.b16 %v535, %v534
        %vm538 = vcmask 130048
        %v540 = vsel %vm538, %v528, 0
        %v543 = vsel %vm538, %v529, 0
        %v546 = vsel %vm538, %v530, 0
        %v549 = vsel %vm538, %v531, 0
        %551 = vmatprep.subr.bf16.mxu0 0
        %552 = vmatpush1.bf16.msra.mxu0 %v536
        %553 = vmatprep.subr.bf16.mxu0 0
        %554 = vmatpush1.bf16.msra.mxu0 0
        %555 = vmatprep.subr.bf16.mxu0 0
        %556 = vmatpush1.bf16.msra.mxu0 0
        %557 = vmatprep.subr.bf16.mxu0 0
        %558 = vmatpush1.bf16.msra.mxu0 0
        %559 = vmatprep.subr.bf16.mxu0 0
        %560 = vmatpush1.bf16.msra.mxu0 0
        %561 = vmatprep.subr.bf16.mxu0 0
        %562 = vmatpush1.bf16.msra.mxu0 0
        %563 = vmatprep.subr.bf16.mxu0 0
        %564 = vmatpush1.bf16.msra.mxu0 0
        %565 = vmatprep.subr.bf16.mxu0 0
        %566 = vmatpush1.bf16.msra.mxu0 0
        %567 = vmatprep.subr.bf16.mxu0 0
        %568 = vmatpush1.bf16.msra.mxu0 0
        %569 = vmatprep.subr.bf16.mxu0 0
        %570 = vmatpush1.bf16.msra.mxu0 0
        %571 = vmatprep.subr.bf16.mxu0 0
        %572 = vmatpush1.bf16.msra.mxu0 0
        %573 = vmatprep.subr.bf16.mxu0 0
        %574 = vmatpush1.bf16.msra.mxu0 0
        %575 = vmatprep.subr.bf16.mxu0 0
        %576 = vmatpush1.bf16.msra.mxu0 0
        %577 = vmatprep.subr.bf16.mxu0 0
        %578 = vmatpush1.bf16.msra.mxu0 0
        %579 = vmatprep.subr.bf16.mxu0 0
        %580 = vmatpush1.bf16.msra.mxu0 0
        %581 = vmatprep.subr.bf16.mxu0 0
        %582 = vmatpush1.bf16.msra.mxu0 0
        %583 = vmatprep.mubr.bf16.mxu0 0
        %584 = vmatmul.mubr.bf16.gmra.mrb[0].mxu0 %v540
        %v585 = vpop.f32.mrb[0].mxu0
        %v586 = vadd.f32 0.0, %v585
        %v587 = vpop.f32.mrb[0].mxu0
        %v588 = vpop.f32.mrb[0].mxu0
        %v589 = vadd.f32 0.0, %v588
        %v590 = vpop.f32.mrb[0].mxu0
        %591 = vmatprep.mubr.bf16.mxu0 0
        %592 = vmatmul.mubr.bf16.gmra.mrb[0].mxu0 %v543
        %v593 = vpop.f32.mrb[0].mxu0
        %v594 = vadd.f32 0.0, %v593
        %v595 = vpop.f32.mrb[0].mxu0
        %v596 = vpop.f32.mrb[0].mxu0
        %v597 = vadd.f32 0.0, %v596
        %v598 = vpop.f32.mrb[0].mxu0
        %599 = vmatprep.mubr.bf16.mxu0 0
        %600 = vmatmul.mubr.bf16.gmra.mrb[0].mxu0 %v546
        %v601 = vpop.f32.mrb[0].mxu0
        %v602 = vadd.f32 0.0, %v601
        %v603 = vpop.f32.mrb[0].mxu0
        %v604 = vpop.f32.mrb[0].mxu0
        %v605 = vadd.f32 0.0, %v604
        %v606 = vpop.f32.mrb[0].mxu0
        %607 = vmatprep.mubr.bf16.mxu0 0
        %608 = vmatmul.mubr.bf16.gmra.mrb[0].mxu0 %v549
        %v609 = vpop.f32.mrb[0].mxu0
        %v610 = vadd.f32 0.0, %v609
        %v611 = vpop.f32.mrb[0].mxu0
        %v612 = vpop.f32.mrb[0].mxu0
        %v613 = vadd.f32 0.0, %v612
        %v614 = vpop.f32.mrb[0].mxu0
        %615 = vdwg.mxu0
        %v624 = vunpack.c.l.b16 %v385
        %v625 = vunpack.c.l.b16 %v386
        %v626 = vunpack.c.l.b16 %v387
        %v627 = vunpack.c.l.b16 %v388
        %v628 = vunpack.c.l.b16 %v389
        %v629 = vunpack.c.l.b16 %v390
        %v630 = vunpack.c.l.b16 %v391
        %v631 = vunpack.c.l.b16 %v392
        %v632 = vpack.c.b16 %v625, %v624
        %v633 = vpack.c.b16 %v627, %v626
        %v634 = vpack.c.b16 %v629, %v628
        %v635 = vpack.c.b16 %v631, %v630
        %v638 = vunpack.c.l.b16 %v393
        %v639 = vunpack.c.l.b16 %v394
        %v640 = vpack.c.b16 %v639, %v638
        %v643 = vsel %vm538, %v632, 0
        %v646 = vsel %vm538, %v633, 0
        %v649 = vsel %vm538, %v634, 0
        %v652 = vsel %vm538, %v635, 0
        %654 = vmatprep.subr.bf16.mxu0 0
        %655 = vmatpush1.bf16.msra.mxu0 %v640
        %656 = vmatprep.subr.bf16.mxu0 0
        %657 = vmatpush1.bf16.msra.mxu0 0
        %658 = vmatprep.subr.bf16.mxu0 0
        %659 = vmatpush1.bf16.msra.mxu0 0
        %660 = vmatprep.subr.bf16.mxu0 0
        %661 = vmatpush1.bf16.msra.mxu0 0
        %662 = vmatprep.subr.bf16.mxu0 0
        %663 = vmatpush1.bf16.msra.mxu0 0
        %664 = vmatprep.subr.bf16.mxu0 0
        %665 = vmatpush1.bf16.msra.mxu0 0
        %666 = vmatprep.subr.bf16.mxu0 0
        %667 = vmatpush1.bf16.msra.mxu0 0
        %668 = vmatprep.subr.bf16.mxu0 0
        %669 = vmatpush1.bf16.msra.mxu0 0
        %670 = vmatprep.subr.bf16.mxu0 0
        %671 = vmatpush1.bf16.msra.mxu0 0
        %672 = vmatprep.subr.bf16.mxu0 0
        %673 = vmatpush1.bf16.msra.mxu0 0
        %674 = vmatprep.subr.bf16.mxu0 0
        %675 = vmatpush1.bf16.msra.mxu0 0
        %676 = vmatprep.subr.bf16.mxu0 0
        %677 = vmatpush1.bf16.msra.mxu0 0
        %678 = vmatprep.subr.bf16.mxu0 0
        %679 = vmatpush1.bf16.msra.mxu0 0
        %680 = vmatprep.subr.bf16.mxu0 0
        %681 = vmatpush1.bf16.msra.mxu0 0
        %682 = vmatprep.subr.bf16.mxu0 0
        %683 = vmatpush1.bf16.msra.mxu0 0
        %684 = vmatprep.subr.bf16.mxu0 0
        %685 = vmatpush1.bf16.msra.mxu0 0
        %686 = vmatprep.mubr.bf16.mxu0 0
        %687 = vmatmul.mubr.bf16.gmra.mrb[0].mxu0 %v643
        %v688 = vpop.f32.mrb[0].mxu0
        %v689 = vadd.f32 %v586, %v688
        %v690 = vpop.f32.mrb[0].mxu0
        %v691 = vpop.f32.mrb[0].mxu0
        %v692 = vadd.f32 %v589, %v691
        %v693 = vpop.f32.mrb[0].mxu0
        %694 = vmatprep.mubr.bf16.mxu0 0
        %695 = vmatmul.mubr.bf16.gmra.mrb[0].mxu0 %v646
        %v696 = vpop.f32.mrb[0].mxu0
        %v697 = vadd.f32 %v594, %v696
        %v698 = vpop.f32.mrb[0].mxu0
        %v699 = vpop.f32.mrb[0].mxu0
        %v700 = vadd.f32 %v597, %v699
        %v701 = vpop.f32.mrb[0].mxu0
        %702 = vmatprep.mubr.bf16.mxu0 0
        %703 = vmatmul.mubr.bf16.gmra.mrb[0].mxu0 %v649
        %v704 = vpop.f32.mrb[0].mxu0
        %v705 = vadd.f32 %v602, %v704
        %v706 = vpop.f32.mrb[0].mxu0
        %v707 = vpop.f32.mrb[0].mxu0
        %v708 = vadd.f32 %v605, %v707
        %v709 = vpop.f32.mrb[0].mxu0
        %710 = vmatprep.mubr.bf16.mxu0 0
        %711 = vmatmul.mubr.bf16.gmra.mrb[0].mxu0 %v652
        %v712 = vpop.f32.mrb[0].mxu0
        %v713 = vadd.f32 %v610, %v712
        %v714 = vpop.f32.mrb[0].mxu0
        %v715 = vpop.f32.mrb[0].mxu0
        %v716 = vadd.f32 %v613, %v715
        %v717 = vpop.f32.mrb[0].mxu0
        %718 = vdwg.mxu0
        %s719 = scalar_lea.vmem %s383, 8
        %v720 = vld [vmem:[%s719] sm:$0xf]
        %v721 = vld [vmem:[%s719 + $0x20] sm:$0xf]
        %v722 = vld [vmem:[%s719 + $0x40] sm:$0xf]
        %v723 = vld [vmem:[%s719 + $0x60] sm:$0xf]
        %v724 = vld [vmem:[%s719 + $0x80] sm:$0xf]
        %v725 = vld [vmem:[%s719 + $0xa0] sm:$0xf]
        %v726 = vld [vmem:[%s719 + $0xc0] sm:$0xf]
        %v727 = vld [vmem:[%s719 + $0xe0] sm:$0xf]
        %v728 = vld [vmem:[%s1 + $0x10] sm:$0xf]
        %v729 = vld [vmem:[%s1 + $0x14] sm:$0xf]
        %v738 = vunpack.c.l.b16 %v720
        %v739 = vunpack.c.l.b16 %v721
        %v740 = vunpack.c.l.b16 %v722
        %v741 = vunpack.c.l.b16 %v723
        %v742 = vunpack.c.l.b16 %v724
        %v743 = vunpack.c.l.b16 %v725
        %v744 = vunpack.c.l.b16 %v726
        %v745 = vunpack.c.l.b16 %v727
        %v746 = vpack.c.b16 %v739, %v738
        %v747 = vpack.c.b16 %v741, %v740
        %v748 = vpack.c.b16 %v743, %v742
        %v749 = vpack.c.b16 %v745, %v744
        %v752 = vunpack.c.l.b16 %v728
        %v753 = vunpack.c.l.b16 %v729
        %v754 = vpack.c.b16 %v753, %v752
        %v757 = vsel %vm538, %v746, 0
        %v760 = vsel %vm538, %v747, 0
        %v763 = vsel %vm538, %v748, 0
        %v766 = vsel %vm538, %v749, 0
        %768 = vmatprep.subr.bf16.mxu0 0
        %769 = vmatpush1.bf16.msra.mxu0 %v754
        %770 = vmatprep.subr.bf16.mxu0 0
        %771 = vmatpush1.bf16.msra.mxu0 0
        %772 = vmatprep.subr.bf16.mxu0 0
        %773 = vmatpush1.bf16.msra.mxu0 0
        %774 = vmatprep.subr.bf16.mxu0 0
        %775 = vmatpush1.bf16.msra.mxu0 0
        %776 = vmatprep.subr.bf16.mxu0 0
        %777 = vmatpush1.bf16.msra.mxu0 0
        %778 = vmatprep.subr.bf16.mxu0 0
        %779 = vmatpush1.bf16.msra.mxu0 0
        %780 = vmatprep.subr.bf16.mxu0 0
        %781 = vmatpush1.bf16.msra.mxu0 0
        %782 = vmatprep.subr.bf16.mxu0 0
        %783 = vmatpush1.bf16.msra.mxu0 0
        %784 = vmatprep.subr.bf16.mxu0 0
        %785 = vmatpush1.bf16.msra.mxu0 0
        %786 = vmatprep.subr.bf16.mxu0 0
        %787 = vmatpush1.bf16.msra.mxu0 0
        %788 = vmatprep.subr.bf16.mxu0 0
        %789 = vmatpush1.bf16.msra.mxu0 0
        %790 = vmatprep.subr.bf16.mxu0 0
        %791 = vmatpush1.bf16.msra.mxu0 0
        %792 = vmatprep.subr.bf16.mxu0 0
        %793 = vmatpush1.bf16.msra.mxu0 0
        %794 = vmatprep.subr.bf16.mxu0 0
        %795 = vmatpush1.bf16.msra.mxu0 0
        %796 = vmatprep.subr.bf16.mxu0 0
        %797 = vmatpush1.bf16.msra.mxu0 0
        %798 = vmatprep.subr.bf16.mxu0 0
        %799 = vmatpush1.bf16.msra.mxu0 0
        %800 = vmatprep.mubr.bf16.mxu0 0
        %801 = vmatmul.mubr.bf16.gmra.mrb[0].mxu0 %v757
        %v802 = vpop.f32.mrb[0].mxu0
        %v803 = vadd.f32 0.0, %v802
        %v804 = vpop.f32.mrb[0].mxu0
        %v805 = vpop.f32.mrb[0].mxu0
        %v806 = vadd.f32 0.0, %v805
        %v807 = vpop.f32.mrb[0].mxu0
        %808 = vmatprep.mubr.bf16.mxu0 0
        %809 = vmatmul.mubr.bf16.gmra.mrb[0].mxu0 %v760
        %v810 = vpop.f32.mrb[0].mxu0
        %v811 = vadd.f32 0.0, %v810
        %v812 = vpop.f32.mrb[0].mxu0
        %v813 = vpop.f32.mrb[0].mxu0
        %v814 = vadd.f32 0.0, %v813
        %v815 = vpop.f32.mrb[0].mxu0
        %816 = vmatprep.mubr.bf16.mxu0 0
        %817 = vmatmul.mubr.bf16.gmra.mrb[0].mxu0 %v763
        %v818 = vpop.f32.mrb[0].mxu0
        %v819 = vadd.f32 0.0, %v818
        %v820 = vpop.f32.mrb[0].mxu0
        %v821 = vpop.f32.mrb[0].mxu0
        %v822 = vadd.f32 0.0, %v821
        %v823 = vpop.f32.mrb[0].mxu0
        %824 = vmatprep.mubr.bf16.mxu0 0
        %825 = vmatmul.mubr.bf16.gmra.mrb[0].mxu0 %v766
        %v826 = vpop.f32.mrb[0].mxu0
        %v827 = vadd.f32 0.0, %v826
        %v828 = vpop.f32.mrb[0].mxu0
        %v829 = vpop.f32.mrb[0].mxu0
        %v830 = vadd.f32 0.0, %v829
        %v831 = vpop.f32.mrb[0].mxu0
        %832 = vdwg.mxu0
        %v833 = vadd.f32 %v689, %v803
        %v834 = vadd.f32 %v692, %v806
        %v835 = vadd.f32 %v697, %v811
        %v836 = vadd.f32 %v700, %v814
        %v837 = vadd.f32 %v705, %v819
        %v838 = vadd.f32 %v708, %v822
        %v839 = vadd.f32 %v713, %v827
        %v840 = vadd.f32 %v716, %v830
        %v841 = vld [vmem:[%s719] sm:$0xf]
        %v842 = vld [vmem:[%s719 + $0x4] sm:$0x1]
        %v843 = vld [vmem:[%s719 + $0x20] sm:$0xf]
        %v844 = vld [vmem:[%s719 + $0x24] sm:$0x1]
        %v845 = vld [vmem:[%s719 + $0x40] sm:$0xf]
        %v846 = vld [vmem:[%s719 + $0x44] sm:$0x1]
        %v847 = vld [vmem:[%s719 + $0x60] sm:$0xf]
        %v848 = vld [vmem:[%s719 + $0x64] sm:$0x1]
        %v849 = vld [vmem:[%s719 + $0x80] sm:$0xf]
        %v850 = vld [vmem:[%s719 + $0x84] sm:$0x1]
        %v851 = vld [vmem:[%s719 + $0xa0] sm:$0xf]
        %v852 = vld [vmem:[%s719 + $0xa4] sm:$0x1]
        %v853 = vld [vmem:[%s719 + $0xc0] sm:$0xf]
        %v854 = vld [vmem:[%s719 + $0xc4] sm:$0x1]
        %v855 = vld [vmem:[%s719 + $0xe0] sm:$0xf]
        %v856 = vld [vmem:[%s719 + $0xe4] sm:$0x1]
        %v858 = vshrl.u32 %v841, 16
        %v860 = vrot.slane %v858, 4
        %v861 = vshll.u32 %v841, 16
        %v863 = vrot.slane %v861, 5
        %v864 = vor.u32 %v860, %v863
        %v865 = vrot.slane %v864, 4
        %v867 = vshll.u32 %v842, 16
        %v869 = vrot.slane %v867, 5
        %v870 = vsel %vm405, %v865, %v869
        %v872 = vshrl.u32 %v843, 16
        %v874 = vrot.slane %v872, 4
        %v875 = vshll.u32 %v843, 16
        %v877 = vrot.slane %v875, 5
        %v878 = vor.u32 %v874, %v877
        %v879 = vrot.slane %v878, 4
        %v881 = vshll.u32 %v844, 16
        %v883 = vrot.slane %v881, 5
        %v884 = vsel %vm405, %v879, %v883
        %v886 = vshrl.u32 %v845, 16
        %v888 = vrot.slane %v886, 4
        %v889 = vshll.u32 %v845, 16
        %v891 = vrot.slane %v889, 5
        %v892 = vor.u32 %v888, %v891
        %v893 = vrot.slane %v892, 4
        %v895 = vshll.u32 %v846, 16
        %v897 = vrot.slane %v895, 5
        %v898 = vsel %vm405, %v893, %v897
        %v900 = vshrl.u32 %v847, 16
        %v902 = vrot.slane %v900, 4
        %v903 = vshll.u32 %v847, 16
        %v905 = vrot.slane %v903, 5
        %v906 = vor.u32 %v902, %v905
        %v907 = vrot.slane %v906, 4
        %v909 = vshll.u32 %v848, 16
        %v911 = vrot.slane %v909, 5
        %v912 = vsel %vm405, %v907, %v911
        %v914 = vshrl.u32 %v849, 16
        %v916 = vrot.slane %v914, 4
        %v917 = vshll.u32 %v849, 16
        %v919 = vrot.slane %v917, 5
        %v920 = vor.u32 %v916, %v919
        %v921 = vrot.slane %v920, 4
        %v923 = vshll.u32 %v850, 16
        %v925 = vrot.slane %v923, 5
        %v926 = vsel %vm405, %v921, %v925
        %v928 = vshrl.u32 %v851, 16
        %v930 = vrot.slane %v928, 4
        %v931 = vshll.u32 %v851, 16
        %v933 = vrot.slane %v931, 5
        %v934 = vor.u32 %v930, %v933
        %v935 = vrot.slane %v934, 4
        %v937 = vshll.u32 %v852, 16
        %v939 = vrot.slane %v937, 5
        %v940 = vsel %vm405, %v935, %v939
        %v942 = vshrl.u32 %v853, 16
        %v944 = vrot.slane %v942, 4
        %v945 = vshll.u32 %v853, 16
        %v947 = vrot.slane %v945, 5
        %v948 = vor.u32 %v944, %v947
        %v949 = vrot.slane %v948, 4
        %v951 = vshll.u32 %v854, 16
        %v953 = vrot.slane %v951, 5
        %v954 = vsel %vm405, %v949, %v953
        %v956 = vshrl.u32 %v855, 16
        %v958 = vrot.slane %v956, 4
        %v959 = vshll.u32 %v855, 16
        %v961 = vrot.slane %v959, 5
        %v962 = vor.u32 %v958, %v961
        %v963 = vrot.slane %v962, 4
        %v965 = vshll.u32 %v856, 16
        %v967 = vrot.slane %v965, 5
        %v968 = vsel %vm405, %v963, %v967
        %v969 = vld [vmem:[%s1 + $0x18] sm:$0xf]
        %v970 = vld [vmem:[%s1 + $0x1c] sm:$0xf]
        %v971 = vunpack.c.l.b16 %v870
        %v972 = vunpack.c.l.b16 %v884
        %v973 = vunpack.c.l.b16 %v898
        %v974 = vunpack.c.l.b16 %v912
        %v975 = vunpack.c.l.b16 %v926
        %v976 = vunpack.c.l.b16 %v940
        %v977 = vunpack.c.l.b16 %v954
        %v978 = vunpack.c.l.b16 %v968
        %v979 = vpack.c.b16 %v972, %v971
        %v980 = vpack.c.b16 %v974, %v973
        %v981 = vpack.c.b16 %v976, %v975
        %v982 = vpack.c.b16 %v978, %v977
        %v985 = vunpack.c.l.b16 %v969
        %v986 = vunpack.c.l.b16 %v970
        %v987 = vpack.c.b16 %v986, %v985
        %v990 = vsel %vm538, %v979, 0
        %v993 = vsel %vm538, %v980, 0
        %v996 = vsel %vm538, %v981, 0
        %v999 = vsel %vm538, %v982, 0
        %1001 = vmatprep.subr.bf16.mxu0 0
        %1002 = vmatpush1.bf16.msra.mxu0 %v987
        %1003 = vmatprep.subr.bf16.mxu0 0
        %1004 = vmatpush1.bf16.msra.mxu0 0
        %1005 = vmatprep.subr.bf16.mxu0 0
        %1006 = vmatpush1.bf16.msra.mxu0 0
        %1007 = vmatprep.subr.bf16.mxu0 0
        %1008 = vmatpush1.bf16.msra.mxu0 0
        %1009 = vmatprep.subr.bf16.mxu0 0
        %1010 = vmatpush1.bf16.msra.mxu0 0
        %1011 = vmatprep.subr.bf16.mxu0 0
        %1012 = vmatpush1.bf16.msra.mxu0 0
        %1013 = vmatprep.subr.bf16.mxu0 0
        %1014 = vmatpush1.bf16.msra.mxu0 0
        %1015 = vmatprep.subr.bf16.mxu0 0
        %1016 = vmatpush1.bf16.msra.mxu0 0
        %1017 = vmatprep.subr.bf16.mxu0 0
        %1018 = vmatpush1.bf16.msra.mxu0 0
        %1019 = vmatprep.subr.bf16.mxu0 0
        %1020 = vmatpush1.bf16.msra.mxu0 0
        %1021 = vmatprep.subr.bf16.mxu0 0
        %1022 = vmatpush1.bf16.msra.mxu0 0
        %1023 = vmatprep.subr.bf16.mxu0 0
        %1024 = vmatpush1.bf16.msra.mxu0 0
        %1025 = vmatprep.subr.bf16.mxu0 0
        %1026 = vmatpush1.bf16.msra.mxu0 0
        %1027 = vmatprep.subr.bf16.mxu0 0
        %1028 = vmatpush1.bf16.msra.mxu0 0
        %1029 = vmatprep.subr.bf16.mxu0 0
        %1030 = vmatpush1.bf16.msra.mxu0 0
        %1031 = vmatprep.subr.bf16.mxu0 0
        %1032 = vmatpush1.bf16.msra.mxu0 0
        %1033 = vmatprep.mubr.bf16.mxu0 0
        %1034 = vmatmul.mubr.bf16.gmra.mrb[0].mxu0 %v990
        %v1035 = vpop.f32.mrb[0].mxu0
        %v1036 = vadd.f32 0.0, %v1035
        %v1037 = vpop.f32.mrb[0].mxu0
        %v1038 = vpop.f32.mrb[0].mxu0
        %v1039 = vadd.f32 0.0, %v1038
        %v1040 = vpop.f32.mrb[0].mxu0
        %1041 = vmatprep.mubr.bf16.mxu0 0
        %1042 = vmatmul.mubr.bf16.gmra.mrb[0].mxu0 %v993
        %v1043 = vpop.f32.mrb[0].mxu0
        %v1044 = vadd.f32 0.0, %v1043
        %v1045 = vpop.f32.mrb[0].mxu0
        %v1046 = vpop.f32.mrb[0].mxu0
        %v1047 = vadd.f32 0.0, %v1046
        %v1048 = vpop.f32.mrb[0].mxu0
        %1049 = vmatprep.mubr.bf16.mxu0 0
        %1050 = vmatmul.mubr.bf16.gmra.mrb[0].mxu0 %v996
        %v1051 = vpop.f32.mrb[0].mxu0
        %v1052 = vadd.f32 0.0, %v1051
        %v1053 = vpop.f32.mrb[0].mxu0
        %v1054 = vpop.f32.mrb[0].mxu0
        %v1055 = vadd.f32 0.0, %v1054
        %v1056 = vpop.f32.mrb[0].mxu0
        %1057 = vmatprep.mubr.bf16.mxu0 0
        %1058 = vmatmul.mubr.bf16.gmra.mrb[0].mxu0 %v999
        %v1059 = vpop.f32.mrb[0].mxu0
        %v1060 = vadd.f32 0.0, %v1059
        %v1061 = vpop.f32.mrb[0].mxu0
        %v1062 = vpop.f32.mrb[0].mxu0
        %v1063 = vadd.f32 0.0, %v1062
        %v1064 = vpop.f32.mrb[0].mxu0
        %1065 = vdwg.mxu0
        %v1066 = vadd.f32 %v833, %v1036
        %v1067 = vadd.f32 %v834, %v1039
        %v1068 = vadd.f32 %v835, %v1044
        %v1069 = vadd.f32 %v836, %v1047
        %v1070 = vadd.f32 %v837, %v1052
        %v1071 = vadd.f32 %v838, %v1055
        %v1072 = vadd.f32 %v839, %v1060
        %v1073 = vadd.f32 %v840, %v1063
        %s1074 = scalar_lea.vmem %s383, 16
        %v1075 = vld [vmem:[%s1074] sm:$0xf]
        %v1076 = vld [vmem:[%s1074 + $0x20] sm:$0xf]
        %v1077 = vld [vmem:[%s1074 + $0x40] sm:$0xf]
        %v1078 = vld [vmem:[%s1074 + $0x60] sm:$0xf]
        %v1079 = vld [vmem:[%s1074 + $0x80] sm:$0xf]
        %v1080 = vld [vmem:[%s1074 + $0xa0] sm:$0xf]
        %v1081 = vld [vmem:[%s1074 + $0xc0] sm:$0xf]
        %v1082 = vld [vmem:[%s1074 + $0xe0] sm:$0xf]
        %v1083 = vld [vmem:[%s1 + $0x20] sm:$0xf]
        %v1084 = vld [vmem:[%s1 + $0x24] sm:$0xf]
        %v1093 = vunpack.c.l.b16 %v1075
        %v1094 = vunpack.c.l.b16 %v1076
        %v1095 = vunpack.c.l.b16 %v1077
        %v1096 = vunpack.c.l.b16 %v1078
        %v1097 = vunpack.c.l.b16 %v1079
        %v1098 = vunpack.c.l.b16 %v1080
        %v1099 = vunpack.c.l.b16 %v1081
        %v1100 = vunpack.c.l.b16 %v1082
        %v1101 = vpack.c.b16 %v1094, %v1093
        %v1102 = vpack.c.b16 %v1096, %v1095
        %v1103 = vpack.c.b16 %v1098, %v1097
        %v1104 = vpack.c.b16 %v1100, %v1099
        %v1107 = vunpack.c.l.b16 %v1083
        %v1108 = vunpack.c.l.b16 %v1084
        %v1109 = vpack.c.b16 %v1108, %v1107
        %v1112 = vsel %vm538, %v1101, 0
        %v1115 = vsel %vm538, %v1102, 0
        %v1118 = vsel %vm538, %v1103, 0
        %v1121 = vsel %vm538, %v1104, 0
        %1123 = vmatprep.subr.bf16.mxu0 0
        %1124 = vmatpush1.bf16.msra.mxu0 %v1109
        %1125 = vmatprep.subr.bf16.mxu0 0
        %1126 = vmatpush1.bf16.msra.mxu0 0
        %1127 = vmatprep.subr.bf16.mxu0 0
        %1128 = vmatpush1.bf16.msra.mxu0 0
        %1129 = vmatprep.subr.bf16.mxu0 0
        %1130 = vmatpush1.bf16.msra.mxu0 0
        %1131 = vmatprep.subr.bf16.mxu0 0
        %1132 = vmatpush1.bf16.msra.mxu0 0
        %1133 = vmatprep.subr.bf16.mxu0 0
        %1134 = vmatpush1.bf16.msra.mxu0 0
        %1135 = vmatprep.subr.bf16.mxu0 0
        %1136 = vmatpush1.bf16.msra.mxu0 0
        %1137 = vmatprep.subr.bf16.mxu0 0
        %1138 = vmatpush1.bf16.msra.mxu0 0
        %1139 = vmatprep.subr.bf16.mxu0 0
        %1140 = vmatpush1.bf16.msra.mxu0 0
        %1141 = vmatprep.subr.bf16.mxu0 0
        %1142 = vmatpush1.bf16.msra.mxu0 0
        %1143 = vmatprep.subr.bf16.mxu0 0
        %1144 = vmatpush1.bf16.msra.mxu0 0
        %1145 = vmatprep.subr.bf16.mxu0 0
        %1146 = vmatpush1.bf16.msra.mxu0 0
        %1147 = vmatprep.subr.bf16.mxu0 0
        %1148 = vmatpush1.bf16.msra.mxu0 0
        %1149 = vmatprep.subr.bf16.mxu0 0
        %1150 = vmatpush1.bf16.msra.mxu0 0
        %1151 = vmatprep.subr.bf16.mxu0 0
        %1152 = vmatpush1.bf16.msra.mxu0 0
        %1153 = vmatprep.subr.bf16.mxu0 0
        %1154 = vmatpush1.bf16.msra.mxu0 0
        %1155 = vmatprep.mubr.bf16.mxu0 0
        %1156 = vmatmul.mubr.bf16.gmra.mrb[0].mxu0 %v1112
        %v1157 = vpop.f32.mrb[0].mxu0
        %v1158 = vadd.f32 0.0, %v1157
        %v1159 = vpop.f32.mrb[0].mxu0
        %v1160 = vpop.f32.mrb[0].mxu0
        %v1161 = vadd.f32 0.0, %v1160
        %v1162 = vpop.f32.mrb[0].mxu0
        %1163 = vmatprep.mubr.bf16.mxu0 0
        %1164 = vmatmul.mubr.bf16.gmra.mrb[0].mxu0 %v1115
        %v1165 = vpop.f32.mrb[0].mxu0
        %v1166 = vadd.f32 0.0, %v1165
        %v1167 = vpop.f32.mrb[0].mxu0
        %v1168 = vpop.f32.mrb[0].mxu0
        %v1169 = vadd.f32 0.0, %v1168
        %v1170 = vpop.f32.mrb[0].mxu0
        %1171 = vmatprep.mubr.bf16.mxu0 0
        %1172 = vmatmul.mubr.bf16.gmra.mrb[0].mxu0 %v1118
        %v1173 = vpop.f32.mrb[0].mxu0
        %v1174 = vadd.f32 0.0, %v1173
        %v1175 = vpop.f32.mrb[0].mxu0
        %v1176 = vpop.f32.mrb[0].mxu0
        %v1177 = vadd.f32 0.0, %v1176
        %v1178 = vpop.f32.mrb[0].mxu0
        %1179 = vmatprep.mubr.bf16.mxu0 0
        %1180 = vmatmul.mubr.bf16.gmra.mrb[0].mxu0 %v1121
        %v1181 = vpop.f32.mrb[0].mxu0
        %v1182 = vadd.f32 0.0, %v1181
        %v1183 = vpop.f32.mrb[0].mxu0
        %v1184 = vpop.f32.mrb[0].mxu0
        %v1185 = vadd.f32 0.0, %v1184
        %v1186 = vpop.f32.mrb[0].mxu0
        %1187 = vdwg.mxu0
        %v1188 = vadd.f32 %v1066, %v1158
        %v1189 = vadd.f32 %v1067, %v1161
        %v1190 = vadd.f32 %v1068, %v1166
        %v1191 = vadd.f32 %v1069, %v1169
        %v1192 = vadd.f32 %v1070, %v1174
        %v1193 = vadd.f32 %v1071, %v1177
        %v1194 = vadd.f32 %v1072, %v1182
        %v1195 = vadd.f32 %v1073, %v1185
        %v1196 = vld [vmem:[%s1074] sm:$0xf]
        %v1197 = vld [vmem:[%s1074 + $0x4] sm:$0x1]
        %v1198 = vld [vmem:[%s1074 + $0x20] sm:$0xf]
        %v1199 = vld [vmem:[%s1074 + $0x24] sm:$0x1]
        %v1200 = vld [vmem:[%s1074 + $0x40] sm:$0xf]
        %v1201 = vld [vmem:[%s1074 + $0x44] sm:$0x1]
        %v1202 = vld [vmem:[%s1074 + $0x60] sm:$0xf]
        %v1203 = vld [vmem:[%s1074 + $0x64] sm:$0x1]
        %v1204 = vld [vmem:[%s1074 + $0x80] sm:$0xf]
        %v1205 = vld [vmem:[%s1074 + $0x84] sm:$0x1]
        %v1206 = vld [vmem:[%s1074 + $0xa0] sm:$0xf]
        %v1207 = vld [vmem:[%s1074 + $0xa4] sm:$0x1]
        %v1208 = vld [vmem:[%s1074 + $0xc0] sm:$0xf]
        %v1209 = vld [vmem:[%s1074 + $0xc4] sm:$0x1]
        %v1210 = vld [vmem:[%s1074 + $0xe0] sm:$0xf]
        %v1211 = vld [vmem:[%s1074 + $0xe4] sm:$0x1]
        %v1213 = vshrl.u32 %v1196, 16
        %v1215 = vrot.slane %v1213, 4
        %v1216 = vshll.u32 %v1196, 16
        %v1218 = vrot.slane %v1216, 5
        %v1219 = vor.u32 %v1215, %v1218
        %v1220 = vrot.slane %v1219, 4
        %v1222 = vshll.u32 %v1197, 16
        %v1224 = vrot.slane %v1222, 5
        %v1225 = vsel %vm405, %v1220, %v1224
        %v1227 = vshrl.u32 %v1198, 16
        %v1229 = vrot.slane %v1227, 4
        %v1230 = vshll.u32 %v1198, 16
        %v1232 = vrot.slane %v1230, 5
        %v1233 = vor.u32 %v1229, %v1232
        %v1234 = vrot.slane %v1233, 4
        %v1236 = vshll.u32 %v1199, 16
        %v1238 = vrot.slane %v1236, 5
        %v1239 = vsel %vm405, %v1234, %v1238
        %v1241 = vshrl.u32 %v1200, 16
        %v1243 = vrot.slane %v1241, 4
        %v1244 = vshll.u32 %v1200, 16
        %v1246 = vrot.slane %v1244, 5
        %v1247 = vor.u32 %v1243, %v1246
        %v1248 = vrot.slane %v1247, 4
        %v1250 = vshll.u32 %v1201, 16
        %v1252 = vrot.slane %v1250, 5
        %v1253 = vsel %vm405, %v1248, %v1252
        %v1255 = vshrl.u32 %v1202, 16
        %v1257 = vrot.slane %v1255, 4
        %v1258 = vshll.u32 %v1202, 16
        %v1260 = vrot.slane %v1258, 5
        %v1261 = vor.u32 %v1257, %v1260
        %v1262 = vrot.slane %v1261, 4
        %v1264 = vshll.u32 %v1203, 16
        %v1266 = vrot.slane %v1264, 5
        %v1267 = vsel %vm405, %v1262, %v1266
        %v1269 = vshrl.u32 %v1204, 16
        %v1271 = vrot.slane %v1269, 4
        %v1272 = vshll.u32 %v1204, 16
        %v1274 = vrot.slane %v1272, 5
        %v1275 = vor.u32 %v1271, %v1274
        %v1276 = vrot.slane %v1275, 4
        %v1278 = vshll.u32 %v1205, 16
        %v1280 = vrot.slane %v1278, 5
        %v1281 = vsel %vm405, %v1276, %v1280
        %v1283 = vshrl.u32 %v1206, 16
        %v1285 = vrot.slane %v1283, 4
        %v1286 = vshll.u32 %v1206, 16
        %v1288 = vrot.slane %v1286, 5
        %v1289 = vor.u32 %v1285, %v1288
        %v1290 = vrot.slane %v1289, 4
        %v1292 = vshll.u32 %v1207, 16
        %v1294 = vrot.slane %v1292, 5
        %v1295 = vsel %vm405, %v1290, %v1294
        %v1297 = vshrl.u32 %v1208, 16
        %v1299 = vrot.slane %v1297, 4
        %v1300 = vshll.u32 %v1208, 16
        %v1302 = vrot.slane %v1300, 5
        %v1303 = vor.u32 %v1299, %v1302
        %v1304 = vrot.slane %v1303, 4
        %v1306 = vshll.u32 %v1209, 16
        %v1308 = vrot.slane %v1306, 5
        %v1309 = vsel %vm405, %v1304, %v1308
        %v1311 = vshrl.u32 %v1210, 16
        %v1313 = vrot.slane %v1311, 4
        %v1314 = vshll.u32 %v1210, 16
        %v1316 = vrot.slane %v1314, 5
        %v1317 = vor.u32 %v1313, %v1316
        %v1318 = vrot.slane %v1317, 4
        %v1320 = vshll.u32 %v1211, 16
        %v1322 = vrot.slane %v1320, 5
        %v1323 = vsel %vm405, %v1318, %v1322
        %v1324 = vld [vmem:[%s1 + $0x28] sm:$0xf]
        %v1325 = vld [vmem:[%s1 + $0x2c] sm:$0xf]
        %v1326 = vunpack.c.l.b16 %v1225
        %v1327 = vunpack.c.l.b16 %v1239
        %v1328 = vunpack.c.l.b16 %v1253
        %v1329 = vunpack.c.l.b16 %v1267
        %v1330 = vunpack.c.l.b16 %v1281
        %v1331 = vunpack.c.l.b16 %v1295
        %v1332 = vunpack.c.l.b16 %v1309
        %v1333 = vunpack.c.l.b16 %v1323
        %v1334 = vpack.c.b16 %v1327, %v1326
        %v1335 = vpack.c.b16 %v1329, %v1328
        %v1336 = vpack.c.b16 %v1331, %v1330
        %v1337 = vpack.c.b16 %v1333, %v1332
        %v1340 = vunpack.c.l.b16 %v1324
        %v1341 = vunpack.c.l.b16 %v1325
        %v1342 = vpack.c.b16 %v1341, %v1340
        %v1345 = vsel %vm538, %v1334, 0
        %v1348 = vsel %vm538, %v1335, 0
        %v1351 = vsel %vm538, %v1336, 0
        %v1354 = vsel %vm538, %v1337, 0
        %1356 = vmatprep.subr.bf16.mxu0 0
        %1357 = vmatpush1.bf16.msra.mxu0 %v1342
        %1358 = vmatprep.subr.bf16.mxu0 0
        %1359 = vmatpush1.bf16.msra.mxu0 0
        %1360 = vmatprep.subr.bf16.mxu0 0
        %1361 = vmatpush1.bf16.msra.mxu0 0
        %1362 = vmatprep.subr.bf16.mxu0 0
        %1363 = vmatpush1.bf16.msra.mxu0 0
        %1364 = vmatprep.subr.bf16.mxu0 0
        %1365 = vmatpush1.bf16.msra.mxu0 0
        %1366 = vmatprep.subr.bf16.mxu0 0
        %1367 = vmatpush1.bf16.msra.mxu0 0
        %1368 = vmatprep.subr.bf16.mxu0 0
        %1369 = vmatpush1.bf16.msra.mxu0 0
        %1370 = vmatprep.subr.bf16.mxu0 0
        %1371 = vmatpush1.bf16.msra.mxu0 0
        %1372 = vmatprep.subr.bf16.mxu0 0
        %1373 = vmatpush1.bf16.msra.mxu0 0
        %1374 = vmatprep.subr.bf16.mxu0 0
        %1375 = vmatpush1.bf16.msra.mxu0 0
        %1376 = vmatprep.subr.bf16.mxu0 0
        %1377 = vmatpush1.bf16.msra.mxu0 0
        %1378 = vmatprep.subr.bf16.mxu0 0
        %1379 = vmatpush1.bf16.msra.mxu0 0
        %1380 = vmatprep.subr.bf16.mxu0 0
        %1381 = vmatpush1.bf16.msra.mxu0 0
        %1382 = vmatprep.subr.bf16.mxu0 0
        %1383 = vmatpush1.bf16.msra.mxu0 0
        %1384 = vmatprep.subr.bf16.mxu0 0
        %1385 = vmatpush1.bf16.msra.mxu0 0
        %1386 = vmatprep.subr.bf16.mxu0 0
        %1387 = vmatpush1.bf16.msra.mxu0 0
        %1388 = vmatprep.mubr.bf16.mxu0 0
        %1389 = vmatmul.mubr.bf16.gmra.mrb[0].mxu0 %v1345
        %v1390 = vpop.f32.mrb[0].mxu0
        %v1391 = vadd.f32 0.0, %v1390
        %v1392 = vpop.f32.mrb[0].mxu0
        %v1393 = vpop.f32.mrb[0].mxu0
        %v1394 = vadd.f32 0.0, %v1393
        %v1395 = vpop.f32.mrb[0].mxu0
        %1396 = vmatprep.mubr.bf16.mxu0 0
        %1397 = vmatmul.mubr.bf16.gmra.mrb[0].mxu0 %v1348
        %v1398 = vpop.f32.mrb[0].mxu0
        %v1399 = vadd.f32 0.0, %v1398
        %v1400 = vpop.f32.mrb[0].mxu0
        %v1401 = vpop.f32.mrb[0].mxu0
        %v1402 = vadd.f32 0.0, %v1401
        %v1403 = vpop.f32.mrb[0].mxu0
        %1404 = vmatprep.mubr.bf16.mxu0 0
        %1405 = vmatmul.mubr.bf16.gmra.mrb[0].mxu0 %v1351
        %v1406 = vpop.f32.mrb[0].mxu0
        %v1407 = vadd.f32 0.0, %v1406
        %v1408 = vpop.f32.mrb[0].mxu0
        %v1409 = vpop.f32.mrb[0].mxu0
        %v1410 = vadd.f32 0.0, %v1409
        %v1411 = vpop.f32.mrb[0].mxu0
        %1412 = vmatprep.mubr.bf16.mxu0 0
        %1413 = vmatmul.mubr.bf16.gmra.mrb[0].mxu0 %v1354
        %v1414 = vpop.f32.mrb[0].mxu0
        %v1415 = vadd.f32 0.0, %v1414
        %v1416 = vpop.f32.mrb[0].mxu0
        %v1417 = vpop.f32.mrb[0].mxu0
        %v1418 = vadd.f32 0.0, %v1417
        %v1419 = vpop.f32.mrb[0].mxu0
        %1420 = vdwg.mxu0
        %v1421 = vadd.f32 %v1188, %v1391
        %v1422 = vadd.f32 %v1189, %v1394
        %v1423 = vadd.f32 %v1190, %v1399
        %v1424 = vadd.f32 %v1191, %v1402
        %v1425 = vadd.f32 %v1192, %v1407
        %v1426 = vadd.f32 %v1193, %v1410
        %v1427 = vadd.f32 %v1194, %v1415
        %v1428 = vadd.f32 %v1195, %v1418
        %s1429 = scalar_lea.vmem %s383, 24
        %v1430 = vld [vmem:[%s1429] sm:$0xf]
        %v1431 = vld [vmem:[%s1429 + $0x20] sm:$0xf]
        %v1432 = vld [vmem:[%s1429 + $0x40] sm:$0xf]
        %v1433 = vld [vmem:[%s1429 + $0x60] sm:$0xf]
        %v1434 = vld [vmem:[%s1429 + $0x80] sm:$0xf]
        %v1435 = vld [vmem:[%s1429 + $0xa0] sm:$0xf]
        %v1436 = vld [vmem:[%s1429 + $0xc0] sm:$0xf]
        %v1437 = vld [vmem:[%s1429 + $0xe0] sm:$0xf]
        %v1438 = vld [vmem:[%s1 + $0x30] sm:$0xf]
        %v1439 = vld [vmem:[%s1 + $0x34] sm:$0xf]
        %v1448 = vunpack.c.l.b16 %v1430
        %v1449 = vunpack.c.l.b16 %v1431
        %v1450 = vunpack.c.l.b16 %v1432
        %v1451 = vunpack.c.l.b16 %v1433
        %v1452 = vunpack.c.l.b16 %v1434
        %v1453 = vunpack.c.l.b16 %v1435
        %v1454 = vunpack.c.l.b16 %v1436
        %v1455 = vunpack.c.l.b16 %v1437
        %v1456 = vpack.c.b16 %v1449, %v1448
        %v1457 = vpack.c.b16 %v1451, %v1450
        %v1458 = vpack.c.b16 %v1453, %v1452
        %v1459 = vpack.c.b16 %v1455, %v1454
        %v1462 = vunpack.c.l.b16 %v1438
        %v1463 = vunpack.c.l.b16 %v1439
        %v1464 = vpack.c.b16 %v1463, %v1462
        %v1467 = vsel %vm538, %v1456, 0
        %v1470 = vsel %vm538, %v1457, 0
        %v1473 = vsel %vm538, %v1458, 0
        %v1476 = vsel %vm538, %v1459, 0
        %1478 = vmatprep.subr.bf16.mxu0 0
        %1479 = vmatpush1.bf16.msra.mxu0 %v1464
        %1480 = vmatprep.subr.bf16.mxu0 0
        %1481 = vmatpush1.bf16.msra.mxu0 0
        %1482 = vmatprep.subr.bf16.mxu0 0
        %1483 = vmatpush1.bf16.msra.mxu0 0
        %1484 = vmatprep.subr.bf16.mxu0 0
        %1485 = vmatpush1.bf16.msra.mxu0 0
        %1486 = vmatprep.subr.bf16.mxu0 0
        %1487 = vmatpush1.bf16.msra.mxu0 0
        %1488 = vmatprep.subr.bf16.mxu0 0
        %1489 = vmatpush1.bf16.msra.mxu0 0
        %1490 = vmatprep.subr.bf16.mxu0 0
        %1491 = vmatpush1.bf16.msra.mxu0 0
        %1492 = vmatprep.subr.bf16.mxu0 0
        %1493 = vmatpush1.bf16.msra.mxu0 0
        %1494 = vmatprep.subr.bf16.mxu0 0
        %1495 = vmatpush1.bf16.msra.mxu0 0
        %1496 = vmatprep.subr.bf16.mxu0 0
        %1497 = vmatpush1.bf16.msra.mxu0 0
        %1498 = vmatprep.subr.bf16.mxu0 0
        %1499 = vmatpush1.bf16.msra.mxu0 0
        %1500 = vmatprep.subr.bf16.mxu0 0
        %1501 = vmatpush1.bf16.msra.mxu0 0
        %1502 = vmatprep.subr.bf16.mxu0 0
        %1503 = vmatpush1.bf16.msra.mxu0 0
        %1504 = vmatprep.subr.bf16.mxu0 0
        %1505 = vmatpush1.bf16.msra.mxu0 0
        %1506 = vmatprep.subr.bf16.mxu0 0
        %1507 = vmatpush1.bf16.msra.mxu0 0
        %1508 = vmatprep.subr.bf16.mxu0 0
        %1509 = vmatpush1.bf16.msra.mxu0 0
        %1510 = vmatprep.mubr.bf16.mxu0 0
        %1511 = vmatmul.mubr.bf16.gmra.mrb[0].mxu0 %v1467
        %v1512 = vpop.f32.mrb[0].mxu0
        %v1513 = vadd.f32 0.0, %v1512
        %v1514 = vpop.f32.mrb[0].mxu0
        %v1515 = vpop.f32.mrb[0].mxu0
        %v1516 = vadd.f32 0.0, %v1515
        %v1517 = vpop.f32.mrb[0].mxu0
        %1518 = vmatprep.mubr.bf16.mxu0 0
        %1519 = vmatmul.mubr.bf16.gmra.mrb[0].mxu0 %v1470
        %v1520 = vpop.f32.mrb[0].mxu0
        %v1521 = vadd.f32 0.0, %v1520
        %v1522 = vpop.f32.mrb[0].mxu0
        %v1523 = vpop.f32.mrb[0].mxu0
        %v1524 = vadd.f32 0.0, %v1523
        %v1525 = vpop.f32.mrb[0].mxu0
        %1526 = vmatprep.mubr.bf16.mxu0 0
        %1527 = vmatmul.mubr.bf16.gmra.mrb[0].mxu0 %v1473
        %v1528 = vpop.f32.mrb[0].mxu0
        %v1529 = vadd.f32 0.0, %v1528
        %v1530 = vpop.f32.mrb[0].mxu0
        %v1531 = vpop.f32.mrb[0].mxu0
        %v1532 = vadd.f32 0.0, %v1531
        %v1533 = vpop.f32.mrb[0].mxu0
        %1534 = vmatprep.mubr.bf16.mxu0 0
        %1535 = vmatmul.mubr.bf16.gmra.mrb[0].mxu0 %v1476
        %v1536 = vpop.f32.mrb[0].mxu0
        %v1537 = vadd.f32 0.0, %v1536
        %v1538 = vpop.f32.mrb[0].mxu0
        %v1539 = vpop.f32.mrb[0].mxu0
        %v1540 = vadd.f32 0.0, %v1539
        %v1541 = vpop.f32.mrb[0].mxu0
        %1542 = vdwg.mxu0
        %v1543 = vadd.f32 %v1421, %v1513
        %v1544 = vadd.f32 %v1422, %v1516
        %v1545 = vadd.f32 %v1423, %v1521
        %v1546 = vadd.f32 %v1424, %v1524
        %v1547 = vadd.f32 %v1425, %v1529
        %v1548 = vadd.f32 %v1426, %v1532
        %v1549 = vadd.f32 %v1427, %v1537
        %v1550 = vadd.f32 %v1428, %v1540
        %v1551 = vld [vmem:[%s1429] sm:$0xf]
        %v1552 = vld [vmem:[%s1429 + $0x4] sm:$0x1]
        %v1553 = vld [vmem:[%s1429 + $0x20] sm:$0xf]
        %v1554 = vld [vmem:[%s1429 + $0x24] sm:$0x1]
        %v1555 = vld [vmem:[%s1429 + $0x40] sm:$0xf]
        %v1556 = vld [vmem:[%s1429 + $0x44] sm:$0x1]
        %v1557 = vld [vmem:[%s1429 + $0x60] sm:$0xf]
        %v1558 = vld [vmem:[%s1429 + $0x64] sm:$0x1]
        %v1559 = vld [vmem:[%s1429 + $0x80] sm:$0xf]
        %v1560 = vld [vmem:[%s1429 + $0x84] sm:$0x1]
        %v1561 = vld [vmem:[%s1429 + $0xa0] sm:$0xf]
        %v1562 = vld [vmem:[%s1429 + $0xa4] sm:$0x1]
        %v1563 = vld [vmem:[%s1429 + $0xc0] sm:$0xf]
        %v1564 = vld [vmem:[%s1429 + $0xc4] sm:$0x1]
        %v1565 = vld [vmem:[%s1429 + $0xe0] sm:$0xf]
        %v1566 = vld [vmem:[%s1429 + $0xe4] sm:$0x1]
        %v1568 = vshrl.u32 %v1551, 16
        %v1570 = vrot.slane %v1568, 4
        %v1571 = vshll.u32 %v1551, 16
        %v1573 = vrot.slane %v1571, 5
        %v1574 = vor.u32 %v1570, %v1573
        %v1575 = vrot.slane %v1574, 4
        %v1577 = vshll.u32 %v1552, 16
        %v1579 = vrot.slane %v1577, 5
        %v1580 = vsel %vm405, %v1575, %v1579
        %v1582 = vshrl.u32 %v1553, 16
        %v1584 = vrot.slane %v1582, 4
        %v1585 = vshll.u32 %v1553, 16
        %v1587 = vrot.slane %v1585, 5
        %v1588 = vor.u32 %v1584, %v1587
        %v1589 = vrot.slane %v1588, 4
        %v1591 = vshll.u32 %v1554, 16
        %v1593 = vrot.slane %v1591, 5
        %v1594 = vsel %vm405, %v1589, %v1593
        %v1596 = vshrl.u32 %v1555, 16
        %v1598 = vrot.slane %v1596, 4
        %v1599 = vshll.u32 %v1555, 16
        %v1601 = vrot.slane %v1599, 5
        %v1602 = vor.u32 %v1598, %v1601
        %v1603 = vrot.slane %v1602, 4
        %v1605 = vshll.u32 %v1556, 16
        %v1607 = vrot.slane %v1605, 5
        %v1608 = vsel %vm405, %v1603, %v1607
        %v1610 = vshrl.u32 %v1557, 16
        %v1612 = vrot.slane %v1610, 4
        %v1613 = vshll.u32 %v1557, 16
        %v1615 = vrot.slane %v1613, 5
        %v1616 = vor.u32 %v1612, %v1615
        %v1617 = vrot.slane %v1616, 4
        %v1619 = vshll.u32 %v1558, 16
        %v1621 = vrot.slane %v1619, 5
        %v1622 = vsel %vm405, %v1617, %v1621
        %v1624 = vshrl.u32 %v1559, 16
        %v1626 = vrot.slane %v1624, 4
        %v1627 = vshll.u32 %v1559, 16
        %v1629 = vrot.slane %v1627, 5
        %v1630 = vor.u32 %v1626, %v1629
        %v1631 = vrot.slane %v1630, 4
        %v1633 = vshll.u32 %v1560, 16
        %v1635 = vrot.slane %v1633, 5
        %v1636 = vsel %vm405, %v1631, %v1635
        %v1638 = vshrl.u32 %v1561, 16
        %v1640 = vrot.slane %v1638, 4
        %v1641 = vshll.u32 %v1561, 16
        %v1643 = vrot.slane %v1641, 5
        %v1644 = vor.u32 %v1640, %v1643
        %v1645 = vrot.slane %v1644, 4
        %v1647 = vshll.u32 %v1562, 16
        %v1649 = vrot.slane %v1647, 5
        %v1650 = vsel %vm405, %v1645, %v1649
        %v1652 = vshrl.u32 %v1563, 16
        %v1654 = vrot.slane %v1652, 4
        %v1655 = vshll.u32 %v1563, 16
        %v1657 = vrot.slane %v1655, 5
        %v1658 = vor.u32 %v1654, %v1657
        %v1659 = vrot.slane %v1658, 4
        %v1661 = vshll.u32 %v1564, 16
        %v1663 = vrot.slane %v1661, 5
        %v1664 = vsel %vm405, %v1659, %v1663
        %v1666 = vshrl.u32 %v1565, 16
        %v1668 = vrot.slane %v1666, 4
        %v1669 = vshll.u32 %v1565, 16
        %v1671 = vrot.slane %v1669, 5
        %v1672 = vor.u32 %v1668, %v1671
        %v1673 = vrot.slane %v1672, 4
        %v1675 = vshll.u32 %v1566, 16
        %v1677 = vrot.slane %v1675, 5
        %v1678 = vsel %vm405, %v1673, %v1677
        %v1679 = vld [vmem:[%s1 + $0x38] sm:$0xf]
        %v1680 = vld [vmem:[%s1 + $0x3c] sm:$0xf]
        %v1681 = vunpack.c.l.b16 %v1580
        %v1682 = vunpack.c.l.b16 %v1594
        %v1683 = vunpack.c.l.b16 %v1608
        %v1684 = vunpack.c.l.b16 %v1622
        %v1685 = vunpack.c.l.b16 %v1636
        %v1686 = vunpack.c.l.b16 %v1650
        %v1687 = vunpack.c.l.b16 %v1664
        %v1688 = vunpack.c.l.b16 %v1678
        %v1689 = vpack.c.b16 %v1682, %v1681
        %v1690 = vpack.c.b16 %v1684, %v1683
        %v1691 = vpack.c.b16 %v1686, %v1685
        %v1692 = vpack.c.b16 %v1688, %v1687
        %v1695 = vunpack.c.l.b16 %v1679
        %v1696 = vunpack.c.l.b16 %v1680
        %v1697 = vpack.c.b16 %v1696, %v1695
        %v1700 = vsel %vm538, %v1689, 0
        %v1703 = vsel %vm538, %v1690, 0
        %v1706 = vsel %vm538, %v1691, 0
        %v1709 = vsel %vm538, %v1692, 0
        %1711 = vmatprep.subr.bf16.mxu0 0
        %1712 = vmatpush1.bf16.msra.mxu0 %v1697
        %1713 = vmatprep.subr.bf16.mxu0 0
        %1714 = vmatpush1.bf16.msra.mxu0 0
        %1715 = vmatprep.subr.bf16.mxu0 0
        %1716 = vmatpush1.bf16.msra.mxu0 0
        %1717 = vmatprep.subr.bf16.mxu0 0
        %1718 = vmatpush1.bf16.msra.mxu0 0
        %1719 = vmatprep.subr.bf16.mxu0 0
        %1720 = vmatpush1.bf16.msra.mxu0 0
        %1721 = vmatprep.subr.bf16.mxu0 0
        %1722 = vmatpush1.bf16.msra.mxu0 0
        %1723 = vmatprep.subr.bf16.mxu0 0
        %1724 = vmatpush1.bf16.msra.mxu0 0
        %1725 = vmatprep.subr.bf16.mxu0 0
        %1726 = vmatpush1.bf16.msra.mxu0 0
        %1727 = vmatprep.subr.bf16.mxu0 0
        %1728 = vmatpush1.bf16.msra.mxu0 0
        %1729 = vmatprep.subr.bf16.mxu0 0
        %1730 = vmatpush1.bf16.msra.mxu0 0
        %1731 = vmatprep.subr.bf16.mxu0 0
        %1732 = vmatpush1.bf16.msra.mxu0 0
        %1733 = vmatprep.subr.bf16.mxu0 0
        %1734 = vmatpush1.bf16.msra.mxu0 0
        %1735 = vmatprep.subr.bf16.mxu0 0
        %1736 = vmatpush1.bf16.msra.mxu0 0
        %1737 = vmatprep.subr.bf16.mxu0 0
        %1738 = vmatpush1.bf16.msra.mxu0 0
        %1739 = vmatprep.subr.bf16.mxu0 0
        %1740 = vmatpush1.bf16.msra.mxu0 0
        %1741 = vmatprep.subr.bf16.mxu0 0
        %1742 = vmatpush1.bf16.msra.mxu0 0
        %1743 = vmatprep.mubr.bf16.mxu0 0
        %1744 = vmatmul.mubr.bf16.gmra.mrb[0].mxu0 %v1700
        %v1745 = vpop.f32.mrb[0].mxu0
        %v1746 = vadd.f32 0.0, %v1745
        %v1747 = vpop.f32.mrb[0].mxu0
        %v1748 = vpop.f32.mrb[0].mxu0
        %v1749 = vadd.f32 0.0, %v1748
        %v1750 = vpop.f32.mrb[0].mxu0
        %1751 = vmatprep.mubr.bf16.mxu0 0
        %1752 = vmatmul.mubr.bf16.gmra.mrb[0].mxu0 %v1703
        %v1753 = vpop.f32.mrb[0].mxu0
        %v1754 = vadd.f32 0.0, %v1753
        %v1755 = vpop.f32.mrb[0].mxu0
        %v1756 = vpop.f32.mrb[0].mxu0
        %v1757 = vadd.f32 0.0, %v1756
        %v1758 = vpop.f32.mrb[0].mxu0
        %1759 = vmatprep.mubr.bf16.mxu0 0
        %1760 = vmatmul.mubr.bf16.gmra.mrb[0].mxu0 %v1706
        %v1761 = vpop.f32.mrb[0].mxu0
        %v1762 = vadd.f32 0.0, %v1761
        %v1763 = vpop.f32.mrb[0].mxu0
        %v1764 = vpop.f32.mrb[0].mxu0
        %v1765 = vadd.f32 0.0, %v1764
        %v1766 = vpop.f32.mrb[0].mxu0
        %1767 = vmatprep.mubr.bf16.mxu0 0
        %1768 = vmatmul.mubr.bf16.gmra.mrb[0].mxu0 %v1709
        %v1769 = vpop.f32.mrb[0].mxu0
        %v1770 = vadd.f32 0.0, %v1769
        %v1771 = vpop.f32.mrb[0].mxu0
        %v1772 = vpop.f32.mrb[0].mxu0
        %v1773 = vadd.f32 0.0, %v1772
        %v1774 = vpop.f32.mrb[0].mxu0
        %1775 = vdwg.mxu0
        %v1776 = vadd.f32 %v1543, %v1746
        %v1777 = vadd.f32 %v1544, %v1749
        %v1778 = vadd.f32 %v1545, %v1754
        %v1779 = vadd.f32 %v1546, %v1757
        %v1780 = vadd.f32 %v1547, %v1762
        %v1781 = vadd.f32 %v1548, %v1765
        %v1782 = vadd.f32 %v1549, %v1770
        %v1783 = vadd.f32 %v1550, %v1773
        %s1784 = scalar_lea.vmem %s383, 32
        %v1785 = vld [vmem:[%s1784] sm:$0xf]
        %v1786 = vld [vmem:[%s1784 + $0x20] sm:$0xf]
        %v1787 = vld [vmem:[%s1784 + $0x40] sm:$0xf]
        %v1788 = vld [vmem:[%s1784 + $0x60] sm:$0xf]
        %v1789 = vld [vmem:[%s1784 + $0x80] sm:$0xf]
        %v1790 = vld [vmem:[%s1784 + $0xa0] sm:$0xf]
        %v1791 = vld [vmem:[%s1784 + $0xc0] sm:$0xf]
        %v1792 = vld [vmem:[%s1784 + $0xe0] sm:$0xf]
        %v1793 = vld [vmem:[%s1 + $0x40] sm:$0xf]
        %v1794 = vld [vmem:[%s1 + $0x44] sm:$0xf]
        %v1803 = vunpack.c.l.b16 %v1785
        %v1804 = vunpack.c.l.b16 %v1786
        %v1805 = vunpack.c.l.b16 %v1787
        %v1806 = vunpack.c.l.b16 %v1788
        %v1807 = vunpack.c.l.b16 %v1789
        %v1808 = vunpack.c.l.b16 %v1790
        %v1809 = vunpack.c.l.b16 %v1791
        %v1810 = vunpack.c.l.b16 %v1792
        %v1811 = vpack.c.b16 %v1804, %v1803
        %v1812 = vpack.c.b16 %v1806, %v1805
        %v1813 = vpack.c.b16 %v1808, %v1807
        %v1814 = vpack.c.b16 %v1810, %v1809
        %v1817 = vunpack.c.l.b16 %v1793
        %v1818 = vunpack.c.l.b16 %v1794
        %v1819 = vpack.c.b16 %v1818, %v1817
        %v1822 = vsel %vm538, %v1811, 0
        %v1825 = vsel %vm538, %v1812, 0
        %v1828 = vsel %vm538, %v1813, 0
        %v1831 = vsel %vm538, %v1814, 0
        %1833 = vmatprep.subr.bf16.mxu0 0
        %1834 = vmatpush1.bf16.msra.mxu0 %v1819
        %1835 = vmatprep.subr.bf16.mxu0 0
        %1836 = vmatpush1.bf16.msra.mxu0 0
        %1837 = vmatprep.subr.bf16.mxu0 0
        %1838 = vmatpush1.bf16.msra.mxu0 0
        %1839 = vmatprep.subr.bf16.mxu0 0
        %1840 = vmatpush1.bf16.msra.mxu0 0
        %1841 = vmatprep.subr.bf16.mxu0 0
        %1842 = vmatpush1.bf16.msra.mxu0 0
        %1843 = vmatprep.subr.bf16.mxu0 0
        %1844 = vmatpush1.bf16.msra.mxu0 0
        %1845 = vmatprep.subr.bf16.mxu0 0
        %1846 = vmatpush1.bf16.msra.mxu0 0
        %1847 = vmatprep.subr.bf16.mxu0 0
        %1848 = vmatpush1.bf16.msra.mxu0 0
        %1849 = vmatprep.subr.bf16.mxu0 0
        %1850 = vmatpush1.bf16.msra.mxu0 0
        %1851 = vmatprep.subr.bf16.mxu0 0
        %1852 = vmatpush1.bf16.msra.mxu0 0
        %1853 = vmatprep.subr.bf16.mxu0 0
        %1854 = vmatpush1.bf16.msra.mxu0 0
        %1855 = vmatprep.subr.bf16.mxu0 0
        %1856 = vmatpush1.bf16.msra.mxu0 0
        %1857 = vmatprep.subr.bf16.mxu0 0
        %1858 = vmatpush1.bf16.msra.mxu0 0
        %1859 = vmatprep.subr.bf16.mxu0 0
        %1860 = vmatpush1.bf16.msra.mxu0 0
        %1861 = vmatprep.subr.bf16.mxu0 0
        %1862 = vmatpush1.bf16.msra.mxu0 0
        %1863 = vmatprep.subr.bf16.mxu0 0
        %1864 = vmatpush1.bf16.msra.mxu0 0
        %1865 = vmatprep.mubr.bf16.mxu0 0
        %1866 = vmatmul.mubr.bf16.gmra.mrb[0].mxu0 %v1822
        %v1867 = vpop.f32.mrb[0].mxu0
        %v1868 = vadd.f32 0.0, %v1867
        %v1869 = vpop.f32.mrb[0].mxu0
        %v1870 = vpop.f32.mrb[0].mxu0
        %v1871 = vadd.f32 0.0, %v1870
        %v1872 = vpop.f32.mrb[0].mxu0
        %1873 = vmatprep.mubr.bf16.mxu0 0
        %1874 = vmatmul.mubr.bf16.gmra.mrb[0].mxu0 %v1825
        %v1875 = vpop.f32.mrb[0].mxu0
        %v1876 = vadd.f32 0.0, %v1875
        %v1877 = vpop.f32.mrb[0].mxu0
        %v1878 = vpop.f32.mrb[0].mxu0
        %v1879 = vadd.f32 0.0, %v1878
        %v1880 = vpop.f32.mrb[0].mxu0
        %1881 = vmatprep.mubr.bf16.mxu0 0
        %1882 = vmatmul.mubr.bf16.gmra.mrb[0].mxu0 %v1828
        %v1883 = vpop.f32.mrb[0].mxu0
        %v1884 = vadd.f32 0.0, %v1883
        %v1885 = vpop.f32.mrb[0].mxu0
        %v1886 = vpop.f32.mrb[0].mxu0
        %v1887 = vadd.f32 0.0, %v1886
        %v1888 = vpop.f32.mrb[0].mxu0
        %1889 = vmatprep.mubr.bf16.mxu0 0
        %1890 = vmatmul.mubr.bf16.gmra.mrb[0].mxu0 %v1831
        %v1891 = vpop.f32.mrb[0].mxu0
        %v1892 = vadd.f32 0.0, %v1891
        %v1893 = vpop.f32.mrb[0].mxu0
        %v1894 = vpop.f32.mrb[0].mxu0
        %v1895 = vadd.f32 0.0, %v1894
        %v1896 = vpop.f32.mrb[0].mxu0
        %1897 = vdwg.mxu0
        %v1898 = vadd.f32 %v1776, %v1868
        %v1899 = vadd.f32 %v1777, %v1871
        %v1900 = vadd.f32 %v1778, %v1876
        %v1901 = vadd.f32 %v1779, %v1879
        %v1902 = vadd.f32 %v1780, %v1884
        %v1903 = vadd.f32 %v1781, %v1887
        %v1904 = vadd.f32 %v1782, %v1892
        %v1905 = vadd.f32 %v1783, %v1895
        %v1906 = vld [vmem:[%s1784] sm:$0xf]
        %v1907 = vld [vmem:[%s1784 + $0x4] sm:$0x1]
        %v1908 = vld [vmem:[%s1784 + $0x20] sm:$0xf]
        %v1909 = vld [vmem:[%s1784 + $0x24] sm:$0x1]
        %v1910 = vld [vmem:[%s1784 + $0x40] sm:$0xf]
        %v1911 = vld [vmem:[%s1784 + $0x44] sm:$0x1]
        %v1912 = vld [vmem:[%s1784 + $0x60] sm:$0xf]
        %v1913 = vld [vmem:[%s1784 + $0x64] sm:$0x1]
        %v1914 = vld [vmem:[%s1784 + $0x80] sm:$0xf]
        %v1915 = vld [vmem:[%s1784 + $0x84] sm:$0x1]
        %v1916 = vld [vmem:[%s1784 + $0xa0] sm:$0xf]
        %v1917 = vld [vmem:[%s1784 + $0xa4] sm:$0x1]
        %v1918 = vld [vmem:[%s1784 + $0xc0] sm:$0xf]
        %v1919 = vld [vmem:[%s1784 + $0xc4] sm:$0x1]
        %v1920 = vld [vmem:[%s1784 + $0xe0] sm:$0xf]
        %v1921 = vld [vmem:[%s1784 + $0xe4] sm:$0x1]
        %v1923 = vshrl.u32 %v1906, 16
        %v1925 = vrot.slane %v1923, 4
        %v1926 = vshll.u32 %v1906, 16
        %v1928 = vrot.slane %v1926, 5
        %v1929 = vor.u32 %v1925, %v1928
        %v1930 = vrot.slane %v1929, 4
        %v1932 = vshll.u32 %v1907, 16
        %v1934 = vrot.slane %v1932, 5
        %v1935 = vsel %vm405, %v1930, %v1934
        %v1937 = vshrl.u32 %v1908, 16
        %v1939 = vrot.slane %v1937, 4
        %v1940 = vshll.u32 %v1908, 16
        %v1942 = vrot.slane %v1940, 5
        %v1943 = vor.u32 %v1939, %v1942
        %v1944 = vrot.slane %v1943, 4
        %v1946 = vshll.u32 %v1909, 16
        %v1948 = vrot.slane %v1946, 5
        %v1949 = vsel %vm405, %v1944, %v1948
        %v1951 = vshrl.u32 %v1910, 16
        %v1953 = vrot.slane %v1951, 4
        %v1954 = vshll.u32 %v1910, 16
        %v1956 = vrot.slane %v1954, 5
        %v1957 = vor.u32 %v1953, %v1956
        %v1958 = vrot.slane %v1957, 4
        %v1960 = vshll.u32 %v1911, 16
        %v1962 = vrot.slane %v1960, 5
        %v1963 = vsel %vm405, %v1958, %v1962
        %v1965 = vshrl.u32 %v1912, 16
        %v1967 = vrot.slane %v1965, 4
        %v1968 = vshll.u32 %v1912, 16
        %v1970 = vrot.slane %v1968, 5
        %v1971 = vor.u32 %v1967, %v1970
        %v1972 = vrot.slane %v1971, 4
        %v1974 = vshll.u32 %v1913, 16
        %v1976 = vrot.slane %v1974, 5
        %v1977 = vsel %vm405, %v1972, %v1976
        %v1979 = vshrl.u32 %v1914, 16
        %v1981 = vrot.slane %v1979, 4
        %v1982 = vshll.u32 %v1914, 16
        %v1984 = vrot.slane %v1982, 5
        %v1985 = vor.u32 %v1981, %v1984
        %v1986 = vrot.slane %v1985, 4
        %v1988 = vshll.u32 %v1915, 16
        %v1990 = vrot.slane %v1988, 5
        %v1991 = vsel %vm405, %v1986, %v1990
        %v1993 = vshrl.u32 %v1916, 16
        %v1995 = vrot.slane %v1993, 4
        %v1996 = vshll.u32 %v1916, 16
        %v1998 = vrot.slane %v1996, 5
        %v1999 = vor.u32 %v1995, %v1998
        %v2000 = vrot.slane %v1999, 4
        %v2002 = vshll.u32 %v1917, 16
        %v2004 = vrot.slane %v2002, 5
        %v2005 = vsel %vm405, %v2000, %v2004
        %v2007 = vshrl.u32 %v1918, 16
        %v2009 = vrot.slane %v2007, 4
        %v2010 = vshll.u32 %v1918, 16
        %v2012 = vrot.slane %v2010, 5
        %v2013 = vor.u32 %v2009, %v2012
        %v2014 = vrot.slane %v2013, 4
        %v2016 = vshll.u32 %v1919, 16
        %v2018 = vrot.slane %v2016, 5
        %v2019 = vsel %vm405, %v2014, %v2018
        %v2021 = vshrl.u32 %v1920, 16
        %v2023 = vrot.slane %v2021, 4
        %v2024 = vshll.u32 %v1920, 16
        %v2026 = vrot.slane %v2024, 5
        %v2027 = vor.u32 %v2023, %v2026
        %v2028 = vrot.slane %v2027, 4
        %v2030 = vshll.u32 %v1921, 16
        %v2032 = vrot.slane %v2030, 5
        %v2033 = vsel %vm405, %v2028, %v2032
        %v2034 = vld [vmem:[%s1 + $0x48] sm:$0xf]
        %v2035 = vld [vmem:[%s1 + $0x4c] sm:$0xf]
        %v2036 = vunpack.c.l.b16 %v1935
        %v2037 = vunpack.c.l.b16 %v1949
        %v2038 = vunpack.c.l.b16 %v1963
        %v2039 = vunpack.c.l.b16 %v1977
        %v2040 = vunpack.c.l.b16 %v1991
        %v2041 = vunpack.c.l.b16 %v2005
        %v2042 = vunpack.c.l.b16 %v2019
        %v2043 = vunpack.c.l.b16 %v2033
        %v2044 = vpack.c.b16 %v2037, %v2036
        %v2045 = vpack.c.b16 %v2039, %v2038
        %v2046 = vpack.c.b16 %v2041, %v2040
        %v2047 = vpack.c.b16 %v2043, %v2042
        %v2050 = vunpack.c.l.b16 %v2034
        %v2051 = vunpack.c.l.b16 %v2035
        %v2052 = vpack.c.b16 %v2051, %v2050
        %v2055 = vsel %vm538, %v2044, 0
        %v2058 = vsel %vm538, %v2045, 0
        %v2061 = vsel %vm538, %v2046, 0
        %v2064 = vsel %vm538, %v2047, 0
        %2066 = vmatprep.subr.bf16.mxu0 0
        %2067 = vmatpush1.bf16.msra.mxu0 %v2052
        %2068 = vmatprep.subr.bf16.mxu0 0
        %2069 = vmatpush1.bf16.msra.mxu0 0
        %2070 = vmatprep.subr.bf16.mxu0 0
        %2071 = vmatpush1.bf16.msra.mxu0 0
        %2072 = vmatprep.subr.bf16.mxu0 0
        %2073 = vmatpush1.bf16.msra.mxu0 0
        %2074 = vmatprep.subr.bf16.mxu0 0
        %2075 = vmatpush1.bf16.msra.mxu0 0
        %2076 = vmatprep.subr.bf16.mxu0 0
        %2077 = vmatpush1.bf16.msra.mxu0 0
        %2078 = vmatprep.subr.bf16.mxu0 0
        %2079 = vmatpush1.bf16.msra.mxu0 0
        %2080 = vmatprep.subr.bf16.mxu0 0
        %2081 = vmatpush1.bf16.msra.mxu0 0
        %2082 = vmatprep.subr.bf16.mxu0 0
        %2083 = vmatpush1.bf16.msra.mxu0 0
        %2084 = vmatprep.subr.bf16.mxu0 0
        %2085 = vmatpush1.bf16.msra.mxu0 0
        %2086 = vmatprep.subr.bf16.mxu0 0
        %2087 = vmatpush1.bf16.msra.mxu0 0
        %2088 = vmatprep.subr.bf16.mxu0 0
        %2089 = vmatpush1.bf16.msra.mxu0 0
        %2090 = vmatprep.subr.bf16.mxu0 0
        %2091 = vmatpush1.bf16.msra.mxu0 0
        %2092 = vmatprep.subr.bf16.mxu0 0
        %2093 = vmatpush1.bf16.msra.mxu0 0
        %2094 = vmatprep.subr.bf16.mxu0 0
        %2095 = vmatpush1.bf16.msra.mxu0 0
        %2096 = vmatprep.subr.bf16.mxu0 0
        %2097 = vmatpush1.bf16.msra.mxu0 0
        %2098 = vmatprep.mubr.bf16.mxu0 0
        %2099 = vmatmul.mubr.bf16.gmra.mrb[0].mxu0 %v2055
        %v2100 = vpop.f32.mrb[0].mxu0
        %v2101 = vadd.f32 0.0, %v2100
        %v2102 = vpop.f32.mrb[0].mxu0
        %v2103 = vpop.f32.mrb[0].mxu0
        %v2104 = vadd.f32 0.0, %v2103
        %v2105 = vpop.f32.mrb[0].mxu0
        %2106 = vmatprep.mubr.bf16.mxu0 0
        %2107 = vmatmul.mubr.bf16.gmra.mrb[0].mxu0 %v2058
        %v2108 = vpop.f32.mrb[0].mxu0
        %v2109 = vadd.f32 0.0, %v2108
        %v2110 = vpop.f32.mrb[0].mxu0
        %v2111 = vpop.f32.mrb[0].mxu0
        %v2112 = vadd.f32 0.0, %v2111
        %v2113 = vpop.f32.mrb[0].mxu0
        %2114 = vmatprep.mubr.bf16.mxu0 0
        %2115 = vmatmul.mubr.bf16.gmra.mrb[0].mxu0 %v2061
        %v2116 = vpop.f32.mrb[0].mxu0
        %v2117 = vadd.f32 0.0, %v2116
        %v2118 = vpop.f32.mrb[0].mxu0
        %v2119 = vpop.f32.mrb[0].mxu0
        %v2120 = vadd.f32 0.0, %v2119
        %v2121 = vpop.f32.mrb[0].mxu0
        %2122 = vmatprep.mubr.bf16.mxu0 0
        %2123 = vmatmul.mubr.bf16.gmra.mrb[0].mxu0 %v2064
        %v2124 = vpop.f32.mrb[0].mxu0
        %v2125 = vadd.f32 0.0, %v2124
        %v2126 = vpop.f32.mrb[0].mxu0
        %v2127 = vpop.f32.mrb[0].mxu0
        %v2128 = vadd.f32 0.0, %v2127
        %v2129 = vpop.f32.mrb[0].mxu0
        %2130 = vdwg.mxu0
        %v2131 = vadd.f32 %v1898, %v2101
        %v2132 = vadd.f32 %v1899, %v2104
        %v2133 = vadd.f32 %v1900, %v2109
        %v2134 = vadd.f32 %v1901, %v2112
        %v2135 = vadd.f32 %v1902, %v2117
        %v2136 = vadd.f32 %v1903, %v2120
        %v2137 = vadd.f32 %v1904, %v2125
        %v2138 = vadd.f32 %v1905, %v2128
        %s2139 = scalar_lea.vmem %s383, 40
        %v2140 = vld [vmem:[%s2139] sm:$0xf]
        %v2141 = vld [vmem:[%s2139 + $0x20] sm:$0xf]
        %v2142 = vld [vmem:[%s2139 + $0x40] sm:$0xf]
        %v2143 = vld [vmem:[%s2139 + $0x60] sm:$0xf]
        %v2144 = vld [vmem:[%s2139 + $0x80] sm:$0xf]
        %v2145 = vld [vmem:[%s2139 + $0xa0] sm:$0xf]
        %v2146 = vld [vmem:[%s2139 + $0xc0] sm:$0xf]
        %v2147 = vld [vmem:[%s2139 + $0xe0] sm:$0xf]
        %v2148 = vld [vmem:[%s1 + $0x50] sm:$0xf]
        %v2149 = vld [vmem:[%s1 + $0x54] sm:$0xf]
        %v2158 = vunpack.c.l.b16 %v2140
        %v2159 = vunpack.c.l.b16 %v2141
        %v2160 = vunpack.c.l.b16 %v2142
        %v2161 = vunpack.c.l.b16 %v2143
        %v2162 = vunpack.c.l.b16 %v2144
        %v2163 = vunpack.c.l.b16 %v2145
        %v2164 = vunpack.c.l.b16 %v2146
        %v2165 = vunpack.c.l.b16 %v2147
        %v2166 = vpack.c.b16 %v2159, %v2158
        %v2167 = vpack.c.b16 %v2161, %v2160
        %v2168 = vpack.c.b16 %v2163, %v2162
        %v2169 = vpack.c.b16 %v2165, %v2164
        %v2172 = vunpack.c.l.b16 %v2148
        %v2173 = vunpack.c.l.b16 %v2149
        %v2174 = vpack.c.b16 %v2173, %v2172
        %v2177 = vsel %vm538, %v2166, 0
        %v2180 = vsel %vm538, %v2167, 0
        %v2183 = vsel %vm538, %v2168, 0
        %v2186 = vsel %vm538, %v2169, 0
        %2188 = vmatprep.subr.bf16.mxu0 0
        %2189 = vmatpush1.bf16.msra.mxu0 %v2174
        %2190 = vmatprep.subr.bf16.mxu0 0
        %2191 = vmatpush1.bf16.msra.mxu0 0
        %2192 = vmatprep.subr.bf16.mxu0 0
        %2193 = vmatpush1.bf16.msra.mxu0 0
        %2194 = vmatprep.subr.bf16.mxu0 0
        %2195 = vmatpush1.bf16.msra.mxu0 0
        %2196 = vmatprep.subr.bf16.mxu0 0
        %2197 = vmatpush1.bf16.msra.mxu0 0
        %2198 = vmatprep.subr.bf16.mxu0 0
        %2199 = vmatpush1.bf16.msra.mxu0 0
        %2200 = vmatprep.subr.bf16.mxu0 0
        %2201 = vmatpush1.bf16.msra.mxu0 0
        %2202 = vmatprep.subr.bf16.mxu0 0
        %2203 = vmatpush1.bf16.msra.mxu0 0
        %2204 = vmatprep.subr.bf16.mxu0 0
        %2205 = vmatpush1.bf16.msra.mxu0 0
        %2206 = vmatprep.subr.bf16.mxu0 0
        %2207 = vmatpush1.bf16.msra.mxu0 0
        %2208 = vmatprep.subr.bf16.mxu0 0
        %2209 = vmatpush1.bf16.msra.mxu0 0
        %2210 = vmatprep.subr.bf16.mxu0 0
        %2211 = vmatpush1.bf16.msra.mxu0 0
        %2212 = vmatprep.subr.bf16.mxu0 0
        %2213 = vmatpush1.bf16.msra.mxu0 0
        %2214 = vmatprep.subr.bf16.mxu0 0
        %2215 = vmatpush1.bf16.msra.mxu0 0
        %2216 = vmatprep.subr.bf16.mxu0 0
        %2217 = vmatpush1.bf16.msra.mxu0 0
        %2218 = vmatprep.subr.bf16.mxu0 0
        %2219 = vmatpush1.bf16.msra.mxu0 0
        %2220 = vmatprep.mubr.bf16.mxu0 0
        %2221 = vmatmul.mubr.bf16.gmra.mrb[0].mxu0 %v2177
        %v2222 = vpop.f32.mrb[0].mxu0
        %v2223 = vadd.f32 0.0, %v2222
        %v2224 = vpop.f32.mrb[0].mxu0
        %v2225 = vpop.f32.mrb[0].mxu0
        %v2226 = vadd.f32 0.0, %v2225
        %v2227 = vpop.f32.mrb[0].mxu0
        %2228 = vmatprep.mubr.bf16.mxu0 0
        %2229 = vmatmul.mubr.bf16.gmra.mrb[0].mxu0 %v2180
        %v2230 = vpop.f32.mrb[0].mxu0
        %v2231 = vadd.f32 0.0, %v2230
        %v2232 = vpop.f32.mrb[0].mxu0
        %v2233 = vpop.f32.mrb[0].mxu0
        %v2234 = vadd.f32 0.0, %v2233
        %v2235 = vpop.f32.mrb[0].mxu0
        %2236 = vmatprep.mubr.bf16.mxu0 0
        %2237 = vmatmul.mubr.bf16.gmra.mrb[0].mxu0 %v2183
        %v2238 = vpop.f32.mrb[0].mxu0
        %v2239 = vadd.f32 0.0, %v2238
        %v2240 = vpop.f32.mrb[0].mxu0
        %v2241 = vpop.f32.mrb[0].mxu0
        %v2242 = vadd.f32 0.0, %v2241
        %v2243 = vpop.f32.mrb[0].mxu0
        %2244 = vmatprep.mubr.bf16.mxu0 0
        %2245 = vmatmul.mubr.bf16.gmra.mrb[0].mxu0 %v2186
        %v2246 = vpop.f32.mrb[0].mxu0
        %v2247 = vadd.f32 0.0, %v2246
        %v2248 = vpop.f32.mrb[0].mxu0
        %v2249 = vpop.f32.mrb[0].mxu0
        %v2250 = vadd.f32 0.0, %v2249
        %v2251 = vpop.f32.mrb[0].mxu0
        %2252 = vdwg.mxu0
        %v2253 = vadd.f32 %v2131, %v2223
        %v2254 = vadd.f32 %v2132, %v2226
        %v2255 = vadd.f32 %v2133, %v2231
        %v2256 = vadd.f32 %v2134, %v2234
        %v2257 = vadd.f32 %v2135, %v2239
        %v2258 = vadd.f32 %v2136, %v2242
        %v2259 = vadd.f32 %v2137, %v2247
        %v2260 = vadd.f32 %v2138, %v2250
        %v2261 = vld [vmem:[%s2139] sm:$0xf]
        %v2262 = vld [vmem:[%s2139 + $0x4] sm:$0x1]
        %v2263 = vld [vmem:[%s2139 + $0x20] sm:$0xf]
        %v2264 = vld [vmem:[%s2139 + $0x24] sm:$0x1]
        %v2265 = vld [vmem:[%s2139 + $0x40] sm:$0xf]
        %v2266 = vld [vmem:[%s2139 + $0x44] sm:$0x1]
        %v2267 = vld [vmem:[%s2139 + $0x60] sm:$0xf]
        %v2268 = vld [vmem:[%s2139 + $0x64] sm:$0x1]
        %v2269 = vld [vmem:[%s2139 + $0x80] sm:$0xf]
        %v2270 = vld [vmem:[%s2139 + $0x84] sm:$0x1]
        %v2271 = vld [vmem:[%s2139 + $0xa0] sm:$0xf]
        %v2272 = vld [vmem:[%s2139 + $0xa4] sm:$0x1]
        %v2273 = vld [vmem:[%s2139 + $0xc0] sm:$0xf]
        %v2274 = vld [vmem:[%s2139 + $0xc4] sm:$0x1]
        %v2275 = vld [vmem:[%s2139 + $0xe0] sm:$0xf]
        %v2276 = vld [vmem:[%s2139 + $0xe4] sm:$0x1]
        %v2278 = vshrl.u32 %v2261, 16
        %v2280 = vrot.slane %v2278, 4
        %v2281 = vshll.u32 %v2261, 16
        %v2283 = vrot.slane %v2281, 5
        %v2284 = vor.u32 %v2280, %v2283
        %v2285 = vrot.slane %v2284, 4
        %v2287 = vshll.u32 %v2262, 16
        %v2289 = vrot.slane %v2287, 5
        %v2290 = vsel %vm405, %v2285, %v2289
        %v2292 = vshrl.u32 %v2263, 16
        %v2294 = vrot.slane %v2292, 4
        %v2295 = vshll.u32 %v2263, 16
        %v2297 = vrot.slane %v2295, 5
        %v2298 = vor.u32 %v2294, %v2297
        %v2299 = vrot.slane %v2298, 4
        %v2301 = vshll.u32 %v2264, 16
        %v2303 = vrot.slane %v2301, 5
        %v2304 = vsel %vm405, %v2299, %v2303
        %v2306 = vshrl.u32 %v2265, 16
        %v2308 = vrot.slane %v2306, 4
        %v2309 = vshll.u32 %v2265, 16
        %v2311 = vrot.slane %v2309, 5
        %v2312 = vor.u32 %v2308, %v2311
        %v2313 = vrot.slane %v2312, 4
        %v2315 = vshll.u32 %v2266, 16
        %v2317 = vrot.slane %v2315, 5
        %v2318 = vsel %vm405, %v2313, %v2317
        %v2320 = vshrl.u32 %v2267, 16
        %v2322 = vrot.slane %v2320, 4
        %v2323 = vshll.u32 %v2267, 16
        %v2325 = vrot.slane %v2323, 5
        %v2326 = vor.u32 %v2322, %v2325
        %v2327 = vrot.slane %v2326, 4
        %v2329 = vshll.u32 %v2268, 16
        %v2331 = vrot.slane %v2329, 5
        %v2332 = vsel %vm405, %v2327, %v2331
        %v2334 = vshrl.u32 %v2269, 16
        %v2336 = vrot.slane %v2334, 4
        %v2337 = vshll.u32 %v2269, 16
        %v2339 = vrot.slane %v2337, 5
        %v2340 = vor.u32 %v2336, %v2339
        %v2341 = vrot.slane %v2340, 4
        %v2343 = vshll.u32 %v2270, 16
        %v2345 = vrot.slane %v2343, 5
        %v2346 = vsel %vm405, %v2341, %v2345
        %v2348 = vshrl.u32 %v2271, 16
        %v2350 = vrot.slane %v2348, 4
        %v2351 = vshll.u32 %v2271, 16
        %v2353 = vrot.slane %v2351, 5
        %v2354 = vor.u32 %v2350, %v2353
        %v2355 = vrot.slane %v2354, 4
        %v2357 = vshll.u32 %v2272, 16
        %v2359 = vrot.slane %v2357, 5
        %v2360 = vsel %vm405, %v2355, %v2359
        %v2362 = vshrl.u32 %v2273, 16
        %v2364 = vrot.slane %v2362, 4
        %v2365 = vshll.u32 %v2273, 16
        %v2367 = vrot.slane %v2365, 5
        %v2368 = vor.u32 %v2364, %v2367
        %v2369 = vrot.slane %v2368, 4
        %v2371 = vshll.u32 %v2274, 16
        %v2373 = vrot.slane %v2371, 5
        %v2374 = vsel %vm405, %v2369, %v2373
        %v2376 = vshrl.u32 %v2275, 16
        %v2378 = vrot.slane %v2376, 4
        %v2379 = vshll.u32 %v2275, 16
        %v2381 = vrot.slane %v2379, 5
        %v2382 = vor.u32 %v2378, %v2381
        %v2383 = vrot.slane %v2382, 4
        %v2385 = vshll.u32 %v2276, 16
        %v2387 = vrot.slane %v2385, 5
        %v2388 = vsel %vm405, %v2383, %v2387
        %v2389 = vld [vmem:[%s1 + $0x58] sm:$0xf]
        %v2390 = vld [vmem:[%s1 + $0x5c] sm:$0xf]
        %v2391 = vunpack.c.l.b16 %v2290
        %v2392 = vunpack.c.l.b16 %v2304
        %v2393 = vunpack.c.l.b16 %v2318
        %v2394 = vunpack.c.l.b16 %v2332
        %v2395 = vunpack.c.l.b16 %v2346
        %v2396 = vunpack.c.l.b16 %v2360
        %v2397 = vunpack.c.l.b16 %v2374
        %v2398 = vunpack.c.l.b16 %v2388
        %v2399 = vpack.c.b16 %v2392, %v2391
        %v2400 = vpack.c.b16 %v2394, %v2393
        %v2401 = vpack.c.b16 %v2396, %v2395
        %v2402 = vpack.c.b16 %v2398, %v2397
        %v2405 = vunpack.c.l.b16 %v2389
        %v2406 = vunpack.c.l.b16 %v2390
        %v2407 = vpack.c.b16 %v2406, %v2405
        %v2410 = vsel %vm538, %v2399, 0
        %v2413 = vsel %vm538, %v2400, 0
        %v2416 = vsel %vm538, %v2401, 0
        %v2419 = vsel %vm538, %v2402, 0
        %2421 = vmatprep.subr.bf16.mxu0 0
        %2422 = vmatpush1.bf16.msra.mxu0 %v2407
        %2423 = vmatprep.subr.bf16.mxu0 0
        %2424 = vmatpush1.bf16.msra.mxu0 0
        %2425 = vmatprep.subr.bf16.mxu0 0
        %2426 = vmatpush1.bf16.msra.mxu0 0
        %2427 = vmatprep.subr.bf16.mxu0 0
        %2428 = vmatpush1.bf16.msra.mxu0 0
        %2429 = vmatprep.subr.bf16.mxu0 0
        %2430 = vmatpush1.bf16.msra.mxu0 0
        %2431 = vmatprep.subr.bf16.mxu0 0
        %2432 = vmatpush1.bf16.msra.mxu0 0
        %2433 = vmatprep.subr.bf16.mxu0 0
        %2434 = vmatpush1.bf16.msra.mxu0 0
        %2435 = vmatprep.subr.bf16.mxu0 0
        %2436 = vmatpush1.bf16.msra.mxu0 0
        %2437 = vmatprep.subr.bf16.mxu0 0
        %2438 = vmatpush1.bf16.msra.mxu0 0
        %2439 = vmatprep.subr.bf16.mxu0 0
        %2440 = vmatpush1.bf16.msra.mxu0 0
        %2441 = vmatprep.subr.bf16.mxu0 0
        %2442 = vmatpush1.bf16.msra.mxu0 0
        %2443 = vmatprep.subr.bf16.mxu0 0
        %2444 = vmatpush1.bf16.msra.mxu0 0
        %2445 = vmatprep.subr.bf16.mxu0 0
        %2446 = vmatpush1.bf16.msra.mxu0 0
        %2447 = vmatprep.subr.bf16.mxu0 0
        %2448 = vmatpush1.bf16.msra.mxu0 0
        %2449 = vmatprep.subr.bf16.mxu0 0
        %2450 = vmatpush1.bf16.msra.mxu0 0
        %2451 = vmatprep.subr.bf16.mxu0 0
        %2452 = vmatpush1.bf16.msra.mxu0 0
        %2453 = vmatprep.mubr.bf16.mxu0 0
        %2454 = vmatmul.mubr.bf16.gmra.mrb[0].mxu0 %v2410
        %v2455 = vpop.f32.mrb[0].mxu0
        %v2456 = vadd.f32 0.0, %v2455
        %v2457 = vpop.f32.mrb[0].mxu0
        %v2458 = vpop.f32.mrb[0].mxu0
        %v2459 = vadd.f32 0.0, %v2458
        %v2460 = vpop.f32.mrb[0].mxu0
        %2461 = vmatprep.mubr.bf16.mxu0 0
        %2462 = vmatmul.mubr.bf16.gmra.mrb[0].mxu0 %v2413
        %v2463 = vpop.f32.mrb[0].mxu0
        %v2464 = vadd.f32 0.0, %v2463
        %v2465 = vpop.f32.mrb[0].mxu0
        %v2466 = vpop.f32.mrb[0].mxu0
        %v2467 = vadd.f32 0.0, %v2466
        %v2468 = vpop.f32.mrb[0].mxu0
        %2469 = vmatprep.mubr.bf16.mxu0 0
        %2470 = vmatmul.mubr.bf16.gmra.mrb[0].mxu0 %v2416
        %v2471 = vpop.f32.mrb[0].mxu0
        %v2472 = vadd.f32 0.0, %v2471
        %v2473 = vpop.f32.mrb[0].mxu0
        %v2474 = vpop.f32.mrb[0].mxu0
        %v2475 = vadd.f32 0.0, %v2474
        %v2476 = vpop.f32.mrb[0].mxu0
        %2477 = vmatprep.mubr.bf16.mxu0 0
        %2478 = vmatmul.mubr.bf16.gmra.mrb[0].mxu0 %v2419
        %v2479 = vpop.f32.mrb[0].mxu0
        %v2480 = vadd.f32 0.0, %v2479
        %v2481 = vpop.f32.mrb[0].mxu0
        %v2482 = vpop.f32.mrb[0].mxu0
        %v2483 = vadd.f32 0.0, %v2482
        %v2484 = vpop.f32.mrb[0].mxu0
        %2485 = vdwg.mxu0
        %v2486 = vadd.f32 %v2253, %v2456
        %v2487 = vadd.f32 %v2254, %v2459
        %v2488 = vadd.f32 %v2255, %v2464
        %v2489 = vadd.f32 %v2256, %v2467
        %v2490 = vadd.f32 %v2257, %v2472
        %v2491 = vadd.f32 %v2258, %v2475
        %v2492 = vadd.f32 %v2259, %v2480
        %v2493 = vadd.f32 %v2260, %v2483
        %s2494 = scalar_lea.vmem %s383, 48
        %v2495 = vld [vmem:[%s2494] sm:$0xf]
        %v2496 = vld [vmem:[%s2494 + $0x20] sm:$0xf]
        %v2497 = vld [vmem:[%s2494 + $0x40] sm:$0xf]
        %v2498 = vld [vmem:[%s2494 + $0x60] sm:$0xf]
        %v2499 = vld [vmem:[%s2494 + $0x80] sm:$0xf]
        %v2500 = vld [vmem:[%s2494 + $0xa0] sm:$0xf]
        %v2501 = vld [vmem:[%s2494 + $0xc0] sm:$0xf]
        %v2502 = vld [vmem:[%s2494 + $0xe0] sm:$0xf]
        %v2503 = vld [vmem:[%s1 + $0x60] sm:$0xf]
        %v2504 = vld [vmem:[%s1 + $0x64] sm:$0xf]
        %v2513 = vunpack.c.l.b16 %v2495
        %v2514 = vunpack.c.l.b16 %v2496
        %v2515 = vunpack.c.l.b16 %v2497
        %v2516 = vunpack.c.l.b16 %v2498
        %v2517 = vunpack.c.l.b16 %v2499
        %v2518 = vunpack.c.l.b16 %v2500
        %v2519 = vunpack.c.l.b16 %v2501
        %v2520 = vunpack.c.l.b16 %v2502
        %v2521 = vpack.c.b16 %v2514, %v2513
        %v2522 = vpack.c.b16 %v2516, %v2515
        %v2523 = vpack.c.b16 %v2518, %v2517
        %v2524 = vpack.c.b16 %v2520, %v2519
        %v2527 = vunpack.c.l.b16 %v2503
        %v2528 = vunpack.c.l.b16 %v2504
        %v2529 = vpack.c.b16 %v2528, %v2527
        %v2532 = vsel %vm538, %v2521, 0
        %v2535 = vsel %vm538, %v2522, 0
        %v2538 = vsel %vm538, %v2523, 0
        %v2541 = vsel %vm538, %v2524, 0
        %2543 = vmatprep.subr.bf16.mxu0 0
        %2544 = vmatpush1.bf16.msra.mxu0 %v2529
        %2545 = vmatprep.subr.bf16.mxu0 0
        %2546 = vmatpush1.bf16.msra.mxu0 0
        %2547 = vmatprep.subr.bf16.mxu0 0
        %2548 = vmatpush1.bf16.msra.mxu0 0
        %2549 = vmatprep.subr.bf16.mxu0 0
        %2550 = vmatpush1.bf16.msra.mxu0 0
        %2551 = vmatprep.subr.bf16.mxu0 0
        %2552 = vmatpush1.bf16.msra.mxu0 0
        %2553 = vmatprep.subr.bf16.mxu0 0
        %2554 = vmatpush1.bf16.msra.mxu0 0
        %2555 = vmatprep.subr.bf16.mxu0 0
        %2556 = vmatpush1.bf16.msra.mxu0 0
        %2557 = vmatprep.subr.bf16.mxu0 0
        %2558 = vmatpush1.bf16.msra.mxu0 0
        %2559 = vmatprep.subr.bf16.mxu0 0
        %2560 = vmatpush1.bf16.msra.mxu0 0
        %2561 = vmatprep.subr.bf16.mxu0 0
        %2562 = vmatpush1.bf16.msra.mxu0 0
        %2563 = vmatprep.subr.bf16.mxu0 0
        %2564 = vmatpush1.bf16.msra.mxu0 0
        %2565 = vmatprep.subr.bf16.mxu0 0
        %2566 = vmatpush1.bf16.msra.mxu0 0
        %2567 = vmatprep.subr.bf16.mxu0 0
        %2568 = vmatpush1.bf16.msra.mxu0 0
        %2569 = vmatprep.subr.bf16.mxu0 0
        %2570 = vmatpush1.bf16.msra.mxu0 0
        %2571 = vmatprep.subr.bf16.mxu0 0
        %2572 = vmatpush1.bf16.msra.mxu0 0
        %2573 = vmatprep.subr.bf16.mxu0 0
        %2574 = vmatpush1.bf16.msra.mxu0 0
        %2575 = vmatprep.mubr.bf16.mxu0 0
        %2576 = vmatmul.mubr.bf16.gmra.mrb[0].mxu0 %v2532
        %v2577 = vpop.f32.mrb[0].mxu0
        %v2578 = vadd.f32 0.0, %v2577
        %v2579 = vpop.f32.mrb[0].mxu0
        %v2580 = vpop.f32.mrb[0].mxu0
        %v2581 = vadd.f32 0.0, %v2580
        %v2582 = vpop.f32.mrb[0].mxu0
        %2583 = vmatprep.mubr.bf16.mxu0 0
        %2584 = vmatmul.mubr.bf16.gmra.mrb[0].mxu0 %v2535
        %v2585 = vpop.f32.mrb[0].mxu0
        %v2586 = vadd.f32 0.0, %v2585
        %v2587 = vpop.f32.mrb[0].mxu0
        %v2588 = vpop.f32.mrb[0].mxu0
        %v2589 = vadd.f32 0.0, %v2588
        %v2590 = vpop.f32.mrb[0].mxu0
        %2591 = vmatprep.mubr.bf16.mxu0 0
        %2592 = vmatmul.mubr.bf16.gmra.mrb[0].mxu0 %v2538
        %v2593 = vpop.f32.mrb[0].mxu0
        %v2594 = vadd.f32 0.0, %v2593
        %v2595 = vpop.f32.mrb[0].mxu0
        %v2596 = vpop.f32.mrb[0].mxu0
        %v2597 = vadd.f32 0.0, %v2596
        %v2598 = vpop.f32.mrb[0].mxu0
        %2599 = vmatprep.mubr.bf16.mxu0 0
        %2600 = vmatmul.mubr.bf16.gmra.mrb[0].mxu0 %v2541
        %v2601 = vpop.f32.mrb[0].mxu0
        %v2602 = vadd.f32 0.0, %v2601
        %v2603 = vpop.f32.mrb[0].mxu0
        %v2604 = vpop.f32.mrb[0].mxu0
        %v2605 = vadd.f32 0.0, %v2604
        %v2606 = vpop.f32.mrb[0].mxu0
        %2607 = vdwg.mxu0
        %v2608 = vadd.f32 %v2486, %v2578
        %v2609 = vadd.f32 %v2487, %v2581
        %v2610 = vadd.f32 %v2488, %v2586
        %v2611 = vadd.f32 %v2489, %v2589
        %v2612 = vadd.f32 %v2490, %v2594
        %v2613 = vadd.f32 %v2491, %v2597
        %v2614 = vadd.f32 %v2492, %v2602
        %v2615 = vadd.f32 %v2493, %v2605
        %v2616 = vld [vmem:[%s2494] sm:$0xf]
        %v2617 = vld [vmem:[%s2494 + $0x4] sm:$0x1]
        %v2618 = vld [vmem:[%s2494 + $0x20] sm:$0xf]
        %v2619 = vld [vmem:[%s2494 + $0x24] sm:$0x1]
        %v2620 = vld [vmem:[%s2494 + $0x40] sm:$0xf]
        %v2621 = vld [vmem:[%s2494 + $0x44] sm:$0x1]
        %v2622 = vld [vmem:[%s2494 + $0x60] sm:$0xf]
        %v2623 = vld [vmem:[%s2494 + $0x64] sm:$0x1]
        %v2624 = vld [vmem:[%s2494 + $0x80] sm:$0xf]
        %v2625 = vld [vmem:[%s2494 + $0x84] sm:$0x1]
        %v2626 = vld [vmem:[%s2494 + $0xa0] sm:$0xf]
        %v2627 = vld [vmem:[%s2494 + $0xa4] sm:$0x1]
        %v2628 = vld [vmem:[%s2494 + $0xc0] sm:$0xf]
        %v2629 = vld [vmem:[%s2494 + $0xc4] sm:$0x1]
        %v2630 = vld [vmem:[%s2494 + $0xe0] sm:$0xf]
        %v2631 = vld [vmem:[%s2494 + $0xe4] sm:$0x1]
        %v2633 = vshrl.u32 %v2616, 16
        %v2635 = vrot.slane %v2633, 4
        %v2636 = vshll.u32 %v2616, 16
        %v2638 = vrot.slane %v2636, 5
        %v2639 = vor.u32 %v2635, %v2638
        %v2640 = vrot.slane %v2639, 4
        %v2642 = vshll.u32 %v2617, 16
        %v2644 = vrot.slane %v2642, 5
        %v2645 = vsel %vm405, %v2640, %v2644
        %v2647 = vshrl.u32 %v2618, 16
        %v2649 = vrot.slane %v2647, 4
        %v2650 = vshll.u32 %v2618, 16
        %v2652 = vrot.slane %v2650, 5
        %v2653 = vor.u32 %v2649, %v2652
        %v2654 = vrot.slane %v2653, 4
        %v2656 = vshll.u32 %v2619, 16
        %v2658 = vrot.slane %v2656, 5
        %v2659 = vsel %vm405, %v2654, %v2658
        %v2661 = vshrl.u32 %v2620, 16
        %v2663 = vrot.slane %v2661, 4
        %v2664 = vshll.u32 %v2620, 16
        %v2666 = vrot.slane %v2664, 5
        %v2667 = vor.u32 %v2663, %v2666
        %v2668 = vrot.slane %v2667, 4
        %v2670 = vshll.u32 %v2621, 16
        %v2672 = vrot.slane %v2670, 5
        %v2673 = vsel %vm405, %v2668, %v2672
        %v2675 = vshrl.u32 %v2622, 16
        %v2677 = vrot.slane %v2675, 4
        %v2678 = vshll.u32 %v2622, 16
        %v2680 = vrot.slane %v2678, 5
        %v2681 = vor.u32 %v2677, %v2680
        %v2682 = vrot.slane %v2681, 4
        %v2684 = vshll.u32 %v2623, 16
        %v2686 = vrot.slane %v2684, 5
        %v2687 = vsel %vm405, %v2682, %v2686
        %v2689 = vshrl.u32 %v2624, 16
        %v2691 = vrot.slane %v2689, 4
        %v2692 = vshll.u32 %v2624, 16
        %v2694 = vrot.slane %v2692, 5
        %v2695 = vor.u32 %v2691, %v2694
        %v2696 = vrot.slane %v2695, 4
        %v2698 = vshll.u32 %v2625, 16
        %v2700 = vrot.slane %v2698, 5
        %v2701 = vsel %vm405, %v2696, %v2700
        %v2703 = vshrl.u32 %v2626, 16
        %v2705 = vrot.slane %v2703, 4
        %v2706 = vshll.u32 %v2626, 16
        %v2708 = vrot.slane %v2706, 5
        %v2709 = vor.u32 %v2705, %v2708
        %v2710 = vrot.slane %v2709, 4
        %v2712 = vshll.u32 %v2627, 16
        %v2714 = vrot.slane %v2712, 5
        %v2715 = vsel %vm405, %v2710, %v2714
        %v2717 = vshrl.u32 %v2628, 16
        %v2719 = vrot.slane %v2717, 4
        %v2720 = vshll.u32 %v2628, 16
        %v2722 = vrot.slane %v2720, 5
        %v2723 = vor.u32 %v2719, %v2722
        %v2724 = vrot.slane %v2723, 4
        %v2726 = vshll.u32 %v2629, 16
        %v2728 = vrot.slane %v2726, 5
        %v2729 = vsel %vm405, %v2724, %v2728
        %v2731 = vshrl.u32 %v2630, 16
        %v2733 = vrot.slane %v2731, 4
        %v2734 = vshll.u32 %v2630, 16
        %v2736 = vrot.slane %v2734, 5
        %v2737 = vor.u32 %v2733, %v2736
        %v2738 = vrot.slane %v2737, 4
        %v2740 = vshll.u32 %v2631, 16
        %v2742 = vrot.slane %v2740, 5
        %v2743 = vsel %vm405, %v2738, %v2742
        %v2744 = vld [vmem:[%s1 + $0x68] sm:$0xf]
        %v2745 = vld [vmem:[%s1 + $0x6c] sm:$0xf]
        %v2746 = vunpack.c.l.b16 %v2645
        %v2747 = vunpack.c.l.b16 %v2659
        %v2748 = vunpack.c.l.b16 %v2673
        %v2749 = vunpack.c.l.b16 %v2687
        %v2750 = vunpack.c.l.b16 %v2701
        %v2751 = vunpack.c.l.b16 %v2715
        %v2752 = vunpack.c.l.b16 %v2729
        %v2753 = vunpack.c.l.b16 %v2743
        %v2754 = vpack.c.b16 %v2747, %v2746
        %v2755 = vpack.c.b16 %v2749, %v2748
        %v2756 = vpack.c.b16 %v2751, %v2750
        %v2757 = vpack.c.b16 %v2753, %v2752
        %v2760 = vunpack.c.l.b16 %v2744
        %v2761 = vunpack.c.l.b16 %v2745
        %v2762 = vpack.c.b16 %v2761, %v2760
        %v2765 = vsel %vm538, %v2754, 0
        %v2768 = vsel %vm538, %v2755, 0
        %v2771 = vsel %vm538, %v2756, 0
        %v2774 = vsel %vm538, %v2757, 0
        %2776 = vmatprep.subr.bf16.mxu0 0
        %2777 = vmatpush1.bf16.msra.mxu0 %v2762
        %2778 = vmatprep.subr.bf16.mxu0 0
        %2779 = vmatpush1.bf16.msra.mxu0 0
        %2780 = vmatprep.subr.bf16.mxu0 0
        %2781 = vmatpush1.bf16.msra.mxu0 0
        %2782 = vmatprep.subr.bf16.mxu0 0
        %2783 = vmatpush1.bf16.msra.mxu0 0
        %2784 = vmatprep.subr.bf16.mxu0 0
        %2785 = vmatpush1.bf16.msra.mxu0 0
        %2786 = vmatprep.subr.bf16.mxu0 0
        %2787 = vmatpush1.bf16.msra.mxu0 0
        %2788 = vmatprep.subr.bf16.mxu0 0
        %2789 = vmatpush1.bf16.msra.mxu0 0
        %2790 = vmatprep.subr.bf16.mxu0 0
        %2791 = vmatpush1.bf16.msra.mxu0 0
        %2792 = vmatprep.subr.bf16.mxu0 0
        %2793 = vmatpush1.bf16.msra.mxu0 0
        %2794 = vmatprep.subr.bf16.mxu0 0
        %2795 = vmatpush1.bf16.msra.mxu0 0
        %2796 = vmatprep.subr.bf16.mxu0 0
        %2797 = vmatpush1.bf16.msra.mxu0 0
        %2798 = vmatprep.subr.bf16.mxu0 0
        %2799 = vmatpush1.bf16.msra.mxu0 0
        %2800 = vmatprep.subr.bf16.mxu0 0
        %2801 = vmatpush1.bf16.msra.mxu0 0
        %2802 = vmatprep.subr.bf16.mxu0 0
        %2803 = vmatpush1.bf16.msra.mxu0 0
        %2804 = vmatprep.subr.bf16.mxu0 0
        %2805 = vmatpush1.bf16.msra.mxu0 0
        %2806 = vmatprep.subr.bf16.mxu0 0
        %2807 = vmatpush1.bf16.msra.mxu0 0
        %2808 = vmatprep.mubr.bf16.mxu0 0
        %2809 = vmatmul.mubr.bf16.gmra.mrb[0].mxu0 %v2765
        %v2810 = vpop.f32.mrb[0].mxu0
        %v2811 = vadd.f32 0.0, %v2810
        %v2812 = vpop.f32.mrb[0].mxu0
        %v2813 = vpop.f32.mrb[0].mxu0
        %v2814 = vadd.f32 0.0, %v2813
        %v2815 = vpop.f32.mrb[0].mxu0
        %2816 = vmatprep.mubr.bf16.mxu0 0
        %2817 = vmatmul.mubr.bf16.gmra.mrb[0].mxu0 %v2768
        %v2818 = vpop.f32.mrb[0].mxu0
        %v2819 = vadd.f32 0.0, %v2818
        %v2820 = vpop.f32.mrb[0].mxu0
        %v2821 = vpop.f32.mrb[0].mxu0
        %v2822 = vadd.f32 0.0, %v2821
        %v2823 = vpop.f32.mrb[0].mxu0
        %2824 = vmatprep.mubr.bf16.mxu0 0
        %2825 = vmatmul.mubr.bf16.gmra.mrb[0].mxu0 %v2771
        %v2826 = vpop.f32.mrb[0].mxu0
        %v2827 = vadd.f32 0.0, %v2826
        %v2828 = vpop.f32.mrb[0].mxu0
        %v2829 = vpop.f32.mrb[0].mxu0
        %v2830 = vadd.f32 0.0, %v2829
        %v2831 = vpop.f32.mrb[0].mxu0
        %2832 = vmatprep.mubr.bf16.mxu0 0
        %2833 = vmatmul.mubr.bf16.gmra.mrb[0].mxu0 %v2774
        %v2834 = vpop.f32.mrb[0].mxu0
        %v2835 = vadd.f32 0.0, %v2834
        %v2836 = vpop.f32.mrb[0].mxu0
        %v2837 = vpop.f32.mrb[0].mxu0
        %v2838 = vadd.f32 0.0, %v2837
        %v2839 = vpop.f32.mrb[0].mxu0
        %2840 = vdwg.mxu0
        %v2841 = vadd.f32 %v2608, %v2811
        %v2842 = vadd.f32 %v2609, %v2814
        %v2843 = vadd.f32 %v2610, %v2819
        %v2844 = vadd.f32 %v2611, %v2822
        %v2845 = vadd.f32 %v2612, %v2827
        %v2846 = vadd.f32 %v2613, %v2830
        %v2847 = vadd.f32 %v2614, %v2835
        %v2848 = vadd.f32 %v2615, %v2838
        %s2849 = scalar_lea.vmem %s383, 56
        %v2850 = vld [vmem:[%s2849] sm:$0xf]
        %v2851 = vld [vmem:[%s2849 + $0x20] sm:$0xf]
        %v2852 = vld [vmem:[%s2849 + $0x40] sm:$0xf]
        %v2853 = vld [vmem:[%s2849 + $0x60] sm:$0xf]
        %v2854 = vld [vmem:[%s2849 + $0x80] sm:$0xf]
        %v2855 = vld [vmem:[%s2849 + $0xa0] sm:$0xf]
        %v2856 = vld [vmem:[%s2849 + $0xc0] sm:$0xf]
        %v2857 = vld [vmem:[%s2849 + $0xe0] sm:$0xf]
        %v2858 = vld [vmem:[%s1 + $0x70] sm:$0xf]
        %v2859 = vld [vmem:[%s1 + $0x74] sm:$0xf]
        %v2868 = vunpack.c.l.b16 %v2850
        %v2869 = vunpack.c.l.b16 %v2851
        %v2870 = vunpack.c.l.b16 %v2852
        %v2871 = vunpack.c.l.b16 %v2853
        %v2872 = vunpack.c.l.b16 %v2854
        %v2873 = vunpack.c.l.b16 %v2855
        %v2874 = vunpack.c.l.b16 %v2856
        %v2875 = vunpack.c.l.b16 %v2857
        %v2876 = vpack.c.b16 %v2869, %v2868
        %v2877 = vpack.c.b16 %v2871, %v2870
        %v2878 = vpack.c.b16 %v2873, %v2872
        %v2879 = vpack.c.b16 %v2875, %v2874
        %v2882 = vunpack.c.l.b16 %v2858
        %v2883 = vunpack.c.l.b16 %v2859
        %v2884 = vpack.c.b16 %v2883, %v2882
        %v2887 = vsel %vm538, %v2876, 0
        %v2890 = vsel %vm538, %v2877, 0
        %v2893 = vsel %vm538, %v2878, 0
        %v2896 = vsel %vm538, %v2879, 0
        %2898 = vmatprep.subr.bf16.mxu0 0
        %2899 = vmatpush1.bf16.msra.mxu0 %v2884
        %2900 = vmatprep.subr.bf16.mxu0 0
        %2901 = vmatpush1.bf16.msra.mxu0 0
        %2902 = vmatprep.subr.bf16.mxu0 0
        %2903 = vmatpush1.bf16.msra.mxu0 0
        %2904 = vmatprep.subr.bf16.mxu0 0
        %2905 = vmatpush1.bf16.msra.mxu0 0
        %2906 = vmatprep.subr.bf16.mxu0 0
        %2907 = vmatpush1.bf16.msra.mxu0 0
        %2908 = vmatprep.subr.bf16.mxu0 0
        %2909 = vmatpush1.bf16.msra.mxu0 0
        %2910 = vmatprep.subr.bf16.mxu0 0
        %2911 = vmatpush1.bf16.msra.mxu0 0
        %2912 = vmatprep.subr.bf16.mxu0 0
        %2913 = vmatpush1.bf16.msra.mxu0 0
        %2914 = vmatprep.subr.bf16.mxu0 0
        %2915 = vmatpush1.bf16.msra.mxu0 0
        %2916 = vmatprep.subr.bf16.mxu0 0
        %2917 = vmatpush1.bf16.msra.mxu0 0
        %2918 = vmatprep.subr.bf16.mxu0 0
        %2919 = vmatpush1.bf16.msra.mxu0 0
        %2920 = vmatprep.subr.bf16.mxu0 0
        %2921 = vmatpush1.bf16.msra.mxu0 0
        %2922 = vmatprep.subr.bf16.mxu0 0
        %2923 = vmatpush1.bf16.msra.mxu0 0
        %2924 = vmatprep.subr.bf16.mxu0 0
        %2925 = vmatpush1.bf16.msra.mxu0 0
        %2926 = vmatprep.subr.bf16.mxu0 0
        %2927 = vmatpush1.bf16.msra.mxu0 0
        %2928 = vmatprep.subr.bf16.mxu0 0
        %2929 = vmatpush1.bf16.msra.mxu0 0
        %2930 = vmatprep.mubr.bf16.mxu0 0
        %2931 = vmatmul.mubr.bf16.gmra.mrb[0].mxu0 %v2887
        %v2932 = vpop.f32.mrb[0].mxu0
        %v2933 = vadd.f32 0.0, %v2932
        %v2934 = vpop.f32.mrb[0].mxu0
        %v2935 = vpop.f32.mrb[0].mxu0
        %v2936 = vadd.f32 0.0, %v2935
        %v2937 = vpop.f32.mrb[0].mxu0
        %2938 = vmatprep.mubr.bf16.mxu0 0
        %2939 = vmatmul.mubr.bf16.gmra.mrb[0].mxu0 %v2890
        %v2940 = vpop.f32.mrb[0].mxu0
        %v2941 = vadd.f32 0.0, %v2940
        %v2942 = vpop.f32.mrb[0].mxu0
        %v2943 = vpop.f32.mrb[0].mxu0
        %v2944 = vadd.f32 0.0, %v2943
        %v2945 = vpop.f32.mrb[0].mxu0
        %2946 = vmatprep.mubr.bf16.mxu0 0
        %2947 = vmatmul.mubr.bf16.gmra.mrb[0].mxu0 %v2893
        %v2948 = vpop.f32.mrb[0].mxu0
        %v2949 = vadd.f32 0.0, %v2948
        %v2950 = vpop.f32.mrb[0].mxu0
        %v2951 = vpop.f32.mrb[0].mxu0
        %v2952 = vadd.f32 0.0, %v2951
        %v2953 = vpop.f32.mrb[0].mxu0
        %2954 = vmatprep.mubr.bf16.mxu0 0
        %2955 = vmatmul.mubr.bf16.gmra.mrb[0].mxu0 %v2896
        %v2956 = vpop.f32.mrb[0].mxu0
        %v2957 = vadd.f32 0.0, %v2956
        %v2958 = vpop.f32.mrb[0].mxu0
        %v2959 = vpop.f32.mrb[0].mxu0
        %v2960 = vadd.f32 0.0, %v2959
        %v2961 = vpop.f32.mrb[0].mxu0
        %2962 = vdwg.mxu0
        %v2963 = vadd.f32 %v2841, %v2933
        %v2964 = vadd.f32 %v2842, %v2936
        %v2965 = vadd.f32 %v2843, %v2941
        %v2966 = vadd.f32 %v2844, %v2944
        %v2967 = vadd.f32 %v2845, %v2949
        %v2968 = vadd.f32 %v2846, %v2952
        %v2969 = vadd.f32 %v2847, %v2957
        %v2970 = vadd.f32 %v2848, %v2960
        %v2971 = vld [vmem:[%s2849] sm:$0xf]
        %v2972 = vld [vmem:[%s2849 + $0x4] sm:$0x1]
        %v2973 = vld [vmem:[%s2849 + $0x20] sm:$0xf]
        %v2974 = vld [vmem:[%s2849 + $0x24] sm:$0x1]
        %v2975 = vld [vmem:[%s2849 + $0x40] sm:$0xf]
        %v2976 = vld [vmem:[%s2849 + $0x44] sm:$0x1]
        %v2977 = vld [vmem:[%s2849 + $0x60] sm:$0xf]
        %v2978 = vld [vmem:[%s2849 + $0x64] sm:$0x1]
        %v2979 = vld [vmem:[%s2849 + $0x80] sm:$0xf]
        %v2980 = vld [vmem:[%s2849 + $0x84] sm:$0x1]
        %v2981 = vld [vmem:[%s2849 + $0xa0] sm:$0xf]
        %v2982 = vld [vmem:[%s2849 + $0xa4] sm:$0x1]
        %v2983 = vld [vmem:[%s2849 + $0xc0] sm:$0xf]
        %v2984 = vld [vmem:[%s2849 + $0xc4] sm:$0x1]
        %v2985 = vld [vmem:[%s2849 + $0xe0] sm:$0xf]
        %v2986 = vld [vmem:[%s2849 + $0xe4] sm:$0x1]
        %v2988 = vshrl.u32 %v2971, 16
        %v2990 = vrot.slane %v2988, 4
        %v2991 = vshll.u32 %v2971, 16
        %v2993 = vrot.slane %v2991, 5
        %v2994 = vor.u32 %v2990, %v2993
        %v2995 = vrot.slane %v2994, 4
        %v2997 = vshll.u32 %v2972, 16
        %v2999 = vrot.slane %v2997, 5
        %v3000 = vsel %vm405, %v2995, %v2999
        %v3002 = vshrl.u32 %v2973, 16
        %v3004 = vrot.slane %v3002, 4
        %v3005 = vshll.u32 %v2973, 16
        %v3007 = vrot.slane %v3005, 5
        %v3008 = vor.u32 %v3004, %v3007
        %v3009 = vrot.slane %v3008, 4
        %v3011 = vshll.u32 %v2974, 16
        %v3013 = vrot.slane %v3011, 5
        %v3014 = vsel %vm405, %v3009, %v3013
        %v3016 = vshrl.u32 %v2975, 16
        %v3018 = vrot.slane %v3016, 4
        %v3019 = vshll.u32 %v2975, 16
        %v3021 = vrot.slane %v3019, 5
        %v3022 = vor.u32 %v3018, %v3021
        %v3023 = vrot.slane %v3022, 4
        %v3025 = vshll.u32 %v2976, 16
        %v3027 = vrot.slane %v3025, 5
        %v3028 = vsel %vm405, %v3023, %v3027
        %v3030 = vshrl.u32 %v2977, 16
        %v3032 = vrot.slane %v3030, 4
        %v3033 = vshll.u32 %v2977, 16
        %v3035 = vrot.slane %v3033, 5
        %v3036 = vor.u32 %v3032, %v3035
        %v3037 = vrot.slane %v3036, 4
        %v3039 = vshll.u32 %v2978, 16
        %v3041 = vrot.slane %v3039, 5
        %v3042 = vsel %vm405, %v3037, %v3041
        %v3044 = vshrl.u32 %v2979, 16
        %v3046 = vrot.slane %v3044, 4
        %v3047 = vshll.u32 %v2979, 16
        %v3049 = vrot.slane %v3047, 5
        %v3050 = vor.u32 %v3046, %v3049
        %v3051 = vrot.slane %v3050, 4
        %v3053 = vshll.u32 %v2980, 16
        %v3055 = vrot.slane %v3053, 5
        %v3056 = vsel %vm405, %v3051, %v3055
        %v3058 = vshrl.u32 %v2981, 16
        %v3060 = vrot.slane %v3058, 4
        %v3061 = vshll.u32 %v2981, 16
        %v3063 = vrot.slane %v3061, 5
        %v3064 = vor.u32 %v3060, %v3063
        %v3065 = vrot.slane %v3064, 4
        %v3067 = vshll.u32 %v2982, 16
        %v3069 = vrot.slane %v3067, 5
        %v3070 = vsel %vm405, %v3065, %v3069
        %v3072 = vshrl.u32 %v2983, 16
        %v3074 = vrot.slane %v3072, 4
        %v3075 = vshll.u32 %v2983, 16
        %v3077 = vrot.slane %v3075, 5
        %v3078 = vor.u32 %v3074, %v3077
        %v3079 = vrot.slane %v3078, 4
        %v3081 = vshll.u32 %v2984, 16
        %v3083 = vrot.slane %v3081, 5
        %v3084 = vsel %vm405, %v3079, %v3083
        %v3086 = vshrl.u32 %v2985, 16
        %v3088 = vrot.slane %v3086, 4
        %v3089 = vshll.u32 %v2985, 16
        %v3091 = vrot.slane %v3089, 5
        %v3092 = vor.u32 %v3088, %v3091
        %v3093 = vrot.slane %v3092, 4
        %v3095 = vshll.u32 %v2986, 16
        %v3097 = vrot.slane %v3095, 5
        %v3098 = vsel %vm405, %v3093, %v3097
        %v3099 = vld [vmem:[%s1 + $0x78] sm:$0xf]
        %v3100 = vld [vmem:[%s1 + $0x7c] sm:$0xf]
        %v3101 = vunpack.c.l.b16 %v3000
        %v3102 = vunpack.c.l.b16 %v3014
        %v3103 = vunpack.c.l.b16 %v3028
        %v3104 = vunpack.c.l.b16 %v3042
        %v3105 = vunpack.c.l.b16 %v3056
        %v3106 = vunpack.c.l.b16 %v3070
        %v3107 = vunpack.c.l.b16 %v3084
        %v3108 = vunpack.c.l.b16 %v3098
        %v3109 = vpack.c.b16 %v3102, %v3101
        %v3110 = vpack.c.b16 %v3104, %v3103
        %v3111 = vpack.c.b16 %v3106, %v3105
        %v3112 = vpack.c.b16 %v3108, %v3107
        %v3115 = vunpack.c.l.b16 %v3099
        %v3116 = vunpack.c.l.b16 %v3100
        %v3117 = vpack.c.b16 %v3116, %v3115
        %v3120 = vsel %vm538, %v3109, 0
        %v3123 = vsel %vm538, %v3110, 0
        %v3126 = vsel %vm538, %v3111, 0
        %v3129 = vsel %vm538, %v3112, 0
        %3131 = vmatprep.subr.bf16.mxu0 0
        %3132 = vmatpush1.bf16.msra.mxu0 %v3117
        %3133 = vmatprep.subr.bf16.mxu0 0
        %3134 = vmatpush1.bf16.msra.mxu0 0
        %3135 = vmatprep.subr.bf16.mxu0 0
        %3136 = vmatpush1.bf16.msra.mxu0 0
        %3137 = vmatprep.subr.bf16.mxu0 0
        %3138 = vmatpush1.bf16.msra.mxu0 0
        %3139 = vmatprep.subr.bf16.mxu0 0
        %3140 = vmatpush1.bf16.msra.mxu0 0
        %3141 = vmatprep.subr.bf16.mxu0 0
        %3142 = vmatpush1.bf16.msra.mxu0 0
        %3143 = vmatprep.subr.bf16.mxu0 0
        %3144 = vmatpush1.bf16.msra.mxu0 0
        %3145 = vmatprep.subr.bf16.mxu0 0
        %3146 = vmatpush1.bf16.msra.mxu0 0
        %3147 = vmatprep.subr.bf16.mxu0 0
        %3148 = vmatpush1.bf16.msra.mxu0 0
        %3149 = vmatprep.subr.bf16.mxu0 0
        %3150 = vmatpush1.bf16.msra.mxu0 0
        %3151 = vmatprep.subr.bf16.mxu0 0
        %3152 = vmatpush1.bf16.msra.mxu0 0
        %3153 = vmatprep.subr.bf16.mxu0 0
        %3154 = vmatpush1.bf16.msra.mxu0 0
        %3155 = vmatprep.subr.bf16.mxu0 0
        %3156 = vmatpush1.bf16.msra.mxu0 0
        %3157 = vmatprep.subr.bf16.mxu0 0
        %3158 = vmatpush1.bf16.msra.mxu0 0
        %3159 = vmatprep.subr.bf16.mxu0 0
        %3160 = vmatpush1.bf16.msra.mxu0 0
        %3161 = vmatprep.subr.bf16.mxu0 0
        %3162 = vmatpush1.bf16.msra.mxu0 0
        %3163 = vmatprep.mubr.bf16.mxu0 0
        %3164 = vmatmul.mubr.bf16.gmra.mrb[0].mxu0 %v3120
        %v3165 = vpop.f32.mrb[0].mxu0
        %v3166 = vadd.f32 0.0, %v3165
        %v3167 = vpop.f32.mrb[0].mxu0
        %v3168 = vpop.f32.mrb[0].mxu0
        %v3169 = vadd.f32 0.0, %v3168
        %v3170 = vpop.f32.mrb[0].mxu0
        %3171 = vmatprep.mubr.bf16.mxu0 0
        %3172 = vmatmul.mubr.bf16.gmra.mrb[0].mxu0 %v3123
        %v3173 = vpop.f32.mrb[0].mxu0
        %v3174 = vadd.f32 0.0, %v3173
        %v3175 = vpop.f32.mrb[0].mxu0
        %v3176 = vpop.f32.mrb[0].mxu0
        %v3177 = vadd.f32 0.0, %v3176
        %v3178 = vpop.f32.mrb[0].mxu0
        %3179 = vmatprep.mubr.bf16.mxu0 0
        %3180 = vmatmul.mubr.bf16.gmra.mrb[0].mxu0 %v3126
        %v3181 = vpop.f32.mrb[0].mxu0
        %v3182 = vadd.f32 0.0, %v3181
        %v3183 = vpop.f32.mrb[0].mxu0
        %v3184 = vpop.f32.mrb[0].mxu0
        %v3185 = vadd.f32 0.0, %v3184
        %v3186 = vpop.f32.mrb[0].mxu0
        %3187 = vmatprep.mubr.bf16.mxu0 0
        %3188 = vmatmul.mubr.bf16.gmra.mrb[0].mxu0 %v3129
        %v3189 = vpop.f32.mrb[0].mxu0
        %v3190 = vadd.f32 0.0, %v3189
        %v3191 = vpop.f32.mrb[0].mxu0
        %v3192 = vpop.f32.mrb[0].mxu0
        %v3193 = vadd.f32 0.0, %v3192
        %v3194 = vpop.f32.mrb[0].mxu0
        %3195 = vdwg.mxu0
        %v3196 = vadd.f32 %v2963, %v3166
        %v3197 = vadd.f32 %v2964, %v3169
        %v3198 = vadd.f32 %v2965, %v3174
        %v3199 = vadd.f32 %v2966, %v3177
        %v3200 = vadd.f32 %v2967, %v3182
        %v3201 = vadd.f32 %v2968, %v3185
        %v3202 = vadd.f32 %v2969, %v3190
        %v3203 = vadd.f32 %v2970, %v3193
        %v3204 = vld [vmem:[%s2] sm:$0x1]
        %v3206 = vlaneseq
        %v3207 = vshrl.u32 %v3206, 7
        %v3208 = vsub.s32 0, %v3207
        %v3209 = vrot.slane %v3204, %v3208
        %v3211 = vadd.f32 %v3196, %v3209
        %v3212 = vadd.f32 %v3197, %v3209
        %v3213 = vadd.f32 %v3198, %v3209
        %v3214 = vadd.f32 %v3199, %v3209
        %v3215 = vadd.f32 %v3200, %v3209
        %v3216 = vadd.f32 %v3201, %v3209
        %v3217 = vadd.f32 %v3202, %v3209
        %v3218 = vadd.f32 %v3203, %v3209
        %v3219 = vmax.f32 %v3211, 0.0
        %v3220 = vmax.f32 %v3212, 0.0
        %v3221 = vmax.f32 %v3213, 0.0
        %v3222 = vmax.f32 %v3214, 0.0
        %v3223 = vmax.f32 %v3215, 0.0
        %v3224 = vmax.f32 %v3216, 0.0
        %v3225 = vmax.f32 %v3217, 0.0
        %v3226 = vmax.f32 %v3218, 0.0
        %v3227 = vpack.c.bf16 %v3220, %v3219
        %v3228 = vpack.c.bf16 %v3222, %v3221
        %v3229 = vpack.c.bf16 %v3224, %v3223
        %v3230 = vpack.c.bf16 %v3226, %v3225
        %v3235 = vcombine.high %v3227, %v3227
        %v3237 = vunpack.c.l.s4 1966171168
        %v3238 = vunpack.c.0.s8 %v3237
        %v3239 = vlaneseq
        %v3240 = vshrl.u32 %v3239, 7
        %v3241 = vsub.s32 %v3238, %v3240
        %v3242 = vrot.slane %v3227, %v3241
        %v3244 = vunpack.c.l.s4 1966171168
        %v3245 = vunpack.c.0.s8 %v3244
        %v3246 = vlaneseq
        %v3247 = vshrl.u32 %v3246, 7
        %v3248 = vsub.s32 %v3245, %v3247
        %v3249 = vrot.slane %v3235, %v3248
        %v3250 = vcombine.high %v3242, %v3242
        %v3251 = vcombine.high %v3249, %v3249
        %v3253 = vunpack.c.l.s4 1966171168
        %v3254 = vunpack.c.0.s8 %v3253
        %v3255 = vlaneseq
        %v3256 = vshrl.u32 %v3255, 7
        %v3257 = vsub.s32 %v3254, %v3256
        %v3258 = vrot.slane %v3242, %v3257
        %v3260 = vunpack.c.l.s4 1966171168
        %v3261 = vunpack.c.0.s8 %v3260
        %v3262 = vlaneseq
        %v3263 = vshrl.u32 %v3262, 7
        %v3264 = vsub.s32 %v3261, %v3263
        %v3265 = vrot.slane %v3249, %v3264
        %v3267 = vunpack.c.l.s4 1966171168
        %v3268 = vunpack.c.0.s8 %v3267
        %v3269 = vlaneseq
        %v3270 = vshrl.u32 %v3269, 7
        %v3271 = vsub.s32 %v3268, %v3270
        %v3272 = vrot.slane %v3250, %v3271
        %v3274 = vunpack.c.l.s4 1966171168
        %v3275 = vunpack.c.0.s8 %v3274
        %v3276 = vlaneseq
        %v3277 = vshrl.u32 %v3276, 7
        %v3278 = vsub.s32 %v3275, %v3277
        %v3279 = vrot.slane %v3251, %v3278
        %v3280 = vcombine.high %v3258, %v3258
        %v3281 = vcombine.high %v3265, %v3265
        %v3282 = vcombine.high %v3272, %v3272
        %v3283 = vcombine.high %v3279, %v3279
        %v3284 = vcombine.high %v3228, %v3228
        %v3286 = vunpack.c.l.s4 1966171168
        %v3287 = vunpack.c.0.s8 %v3286
        %v3288 = vlaneseq
        %v3289 = vshrl.u32 %v3288, 7
        %v3290 = vsub.s32 %v3287, %v3289
        %v3291 = vrot.slane %v3228, %v3290
        %v3293 = vunpack.c.l.s4 1966171168
        %v3294 = vunpack.c.0.s8 %v3293
        %v3295 = vlaneseq
        %v3296 = vshrl.u32 %v3295, 7
        %v3297 = vsub.s32 %v3294, %v3296
        %v3298 = vrot.slane %v3284, %v3297
        %v3299 = vcombine.high %v3291, %v3291
        %v3300 = vcombine.high %v3298, %v3298
        %v3302 = vunpack.c.l.s4 1966171168
        %v3303 = vunpack.c.0.s8 %v3302
        %v3304 = vlaneseq
        %v3305 = vshrl.u32 %v3304, 7
        %v3306 = vsub.s32 %v3303, %v3305
        %v3307 = vrot.slane %v3291, %v3306
        %v3309 = vunpack.c.l.s4 1966171168
        %v3310 = vunpack.c.0.s8 %v3309
        %v3311 = vlaneseq
        %v3312 = vshrl.u32 %v3311, 7
        %v3313 = vsub.s32 %v3310, %v3312
        %v3314 = vrot.slane %v3298, %v3313
        %v3316 = vunpack.c.l.s4 1966171168
        %v3317 = vunpack.c.0.s8 %v3316
        %v3318 = vlaneseq
        %v3319 = vshrl.u32 %v3318, 7
        %v3320 = vsub.s32 %v3317, %v3319
        %v3321 = vrot.slane %v3299, %v3320
        %v3323 = vunpack.c.l.s4 1966171168
        %v3324 = vunpack.c.0.s8 %v3323
        %v3325 = vlaneseq
        %v3326 = vshrl.u32 %v3325, 7
        %v3327 = vsub.s32 %v3324, %v3326
        %v3328 = vrot.slane %v3300, %v3327
        %v3329 = vcombine.high %v3307, %v3307
        %v3330 = vcombine.high %v3314, %v3314
        %v3331 = vcombine.high %v3321, %v3321
        %v3332 = vcombine.high %v3328, %v3328
        %v3333 = vcombine.high %v3229, %v3229
        %v3335 = vunpack.c.l.s4 1966171168
        %v3336 = vunpack.c.0.s8 %v3335
        %v3337 = vlaneseq
        %v3338 = vshrl.u32 %v3337, 7
        %v3339 = vsub.s32 %v3336, %v3338
        %v3340 = vrot.slane %v3229, %v3339
        %v3342 = vunpack.c.l.s4 1966171168
        %v3343 = vunpack.c.0.s8 %v3342
        %v3344 = vlaneseq
        %v3345 = vshrl.u32 %v3344, 7
        %v3346 = vsub.s32 %v3343, %v3345
        %v3347 = vrot.slane %v3333, %v3346
        %v3348 = vcombine.high %v3340, %v3340
        %v3349 = vcombine.high %v3347, %v3347
        %v3351 = vunpack.c.l.s4 1966171168
        %v3352 = vunpack.c.0.s8 %v3351
        %v3353 = vlaneseq
        %v3354 = vshrl.u32 %v3353, 7
        %v3355 = vsub.s32 %v3352, %v3354
        %v3356 = vrot.slane %v3340, %v3355
        %v3358 = vunpack.c.l.s4 1966171168
        %v3359 = vunpack.c.0.s8 %v3358
        %v3360 = vlaneseq
        %v3361 = vshrl.u32 %v3360, 7
        %v3362 = vsub.s32 %v3359, %v3361
        %v3363 = vrot.slane %v3347, %v3362
        %v3365 = vunpack.c.l.s4 1966171168
        %v3366 = vunpack.c.0.s8 %v3365
        %v3367 = vlaneseq
        %v3368 = vshrl.u32 %v3367, 7
        %v3369 = vsub.s32 %v3366, %v3368
        %v3370 = vrot.slane %v3348, %v3369
        %v3372 = vunpack.c.l.s4 1966171168
        %v3373 = vunpack.c.0.s8 %v3372
        %v3374 = vlaneseq
        %v3375 = vshrl.u32 %v3374, 7
        %v3376 = vsub.s32 %v3373, %v3375
        %v3377 = vrot.slane %v3349, %v3376
        %v3378 = vcombine.high %v3356, %v3356
        %v3379 = vcombine.high %v3363, %v3363
        %v3380 = vcombine.high %v3370, %v3370
        %v3381 = vcombine.high %v3377, %v3377
        %v3382 = vcombine.high %v3230, %v3230
        %v3384 = vunpack.c.l.s4 1966171168
        %v3385 = vunpack.c.0.s8 %v3384
        %v3386 = vlaneseq
        %v3387 = vshrl.u32 %v3386, 7
        %v3388 = vsub.s32 %v3385, %v3387
        %v3389 = vrot.slane %v3230, %v3388
        %v3391 = vunpack.c.l.s4 1966171168
        %v3392 = vunpack.c.0.s8 %v3391
        %v3393 = vlaneseq
        %v3394 = vshrl.u32 %v3393, 7
        %v3395 = vsub.s32 %v3392, %v3394
        %v3396 = vrot.slane %v3382, %v3395
        %v3397 = vcombine.high %v3389, %v3389
        %v3398 = vcombine.high %v3396, %v3396
        %v3400 = vunpack.c.l.s4 1966171168
        %v3401 = vunpack.c.0.s8 %v3400
        %v3402 = vlaneseq
        %v3403 = vshrl.u32 %v3402, 7
        %v3404 = vsub.s32 %v3401, %v3403
        %v3405 = vrot.slane %v3389, %v3404
        %v3407 = vunpack.c.l.s4 1966171168
        %v3408 = vunpack.c.0.s8 %v3407
        %v3409 = vlaneseq
        %v3410 = vshrl.u32 %v3409, 7
        %v3411 = vsub.s32 %v3408, %v3410
        %v3412 = vrot.slane %v3396, %v3411
        %v3414 = vunpack.c.l.s4 1966171168
        %v3415 = vunpack.c.0.s8 %v3414
        %v3416 = vlaneseq
        %v3417 = vshrl.u32 %v3416, 7
        %v3418 = vsub.s32 %v3415, %v3417
        %v3419 = vrot.slane %v3397, %v3418
        %v3421 = vunpack.c.l.s4 1966171168
        %v3422 = vunpack.c.0.s8 %v3421
        %v3423 = vlaneseq
        %v3424 = vshrl.u32 %v3423, 7
        %v3425 = vsub.s32 %v3422, %v3424
        %v3426 = vrot.slane %v3398, %v3425
        %v3427 = vcombine.high %v3405, %v3405
        %v3428 = vcombine.high %v3412, %v3412
        %v3429 = vcombine.high %v3419, %v3419
        %v3430 = vcombine.high %v3426, %v3426
        %vm3463 = vcmask 253952
        %3464 = vst.msk [vmem:[#allocation2] sm:$0x1] %vm3463, %v3258
        %3465 = vst.msk [vmem:[#allocation2 + $0x1] sm:$0x1] %vm3463, %v3272
        %3466 = vst.msk [vmem:[#allocation2 + $0x2] sm:$0x1] %vm3463, %v3280
        %3467 = vst.msk [vmem:[#allocation2 + $0x3] sm:$0x1] %vm3463, %v3282
        %3468 = vst.msk [vmem:[#allocation2 + $0x4] sm:$0x1] %vm3463, %v3265
        %3469 = vst.msk [vmem:[#allocation2 + $0x5] sm:$0x1] %vm3463, %v3279
        %3470 = vst.msk [vmem:[#allocation2 + $0x6] sm:$0x1] %vm3463, %v3281
        %3471 = vst.msk [vmem:[#allocation2 + $0x7] sm:$0x1] %vm3463, %v3283
        %3472 = vst.msk [vmem:[#allocation2 + $0x8] sm:$0x1] %vm3463, %v3307
        %3473 = vst.msk [vmem:[#allocation2 + $0x9] sm:$0x1] %vm3463, %v3321
        %3474 = vst.msk [vmem:[#allocation2 + $0xa] sm:$0x1] %vm3463, %v3329
        %3475 = vst.msk [vmem:[#allocation2 + $0xb] sm:$0x1] %vm3463, %v3331
        %3476 = vst.msk [vmem:[#allocation2 + $0xc] sm:$0x1] %vm3463, %v3314
        %3477 = vst.msk [vmem:[#allocation2 + $0xd] sm:$0x1] %vm3463, %v3328
        %3478 = vst.msk [vmem:[#allocation2 + $0xe] sm:$0x1] %vm3463, %v3330
        %3479 = vst.msk [vmem:[#allocation2 + $0xf] sm:$0x1] %vm3463, %v3332
        %3480 = vst.msk [vmem:[#allocation2 + $0x10] sm:$0x1] %vm3463, %v3356
        %3481 = vst.msk [vmem:[#allocation2 + $0x11] sm:$0x1] %vm3463, %v3370
        %3482 = vst.msk [vmem:[#allocation2 + $0x12] sm:$0x1] %vm3463, %v3378
        %3483 = vst.msk [vmem:[#allocation2 + $0x13] sm:$0x1] %vm3463, %v3380
        %3484 = vst.msk [vmem:[#allocation2 + $0x14] sm:$0x1] %vm3463, %v3363
        %3485 = vst.msk [vmem:[#allocation2 + $0x15] sm:$0x1] %vm3463, %v3377
        %3486 = vst.msk [vmem:[#allocation2 + $0x16] sm:$0x1] %vm3463, %v3379
        %3487 = vst.msk [vmem:[#allocation2 + $0x17] sm:$0x1] %vm3463, %v3381
        %3488 = vst.msk [vmem:[#allocation2 + $0x18] sm:$0x1] %vm3463, %v3405
        %3489 = vst.msk [vmem:[#allocation2 + $0x19] sm:$0x1] %vm3463, %v3419
        %3490 = vst.msk [vmem:[#allocation2 + $0x1a] sm:$0x1] %vm3463, %v3427
        %3491 = vst.msk [vmem:[#allocation2 + $0x1b] sm:$0x1] %vm3463, %v3429
        %3492 = vst.msk [vmem:[#allocation2 + $0x1c] sm:$0x1] %vm3463, %v3412
        %3493 = vst.msk [vmem:[#allocation2 + $0x1d] sm:$0x1] %vm3463, %v3426
        %3494 = vst.msk [vmem:[#allocation2 + $0x1e] sm:$0x1] %vm3463, %v3428
        %3495 = vst.msk [vmem:[#allocation2 + $0x1f] sm:$0x1] %vm3463, %v3430
        %v3496 = vld [vmem:[#allocation2] sm:$0x1]
        %v3497 = vld [vmem:[#allocation2 + $0x1] sm:$0x1]
        %v3498 = vld [vmem:[#allocation2 + $0x2] sm:$0x1]
        %v3499 = vld [vmem:[#allocation2 + $0x8] sm:$0x1]
        %v3500 = vld [vmem:[#allocation2 + $0x9] sm:$0x1]
        %v3501 = vld [vmem:[#allocation2 + $0xa] sm:$0x1]
        %v3502 = vld [vmem:[#allocation2 + $0x10] sm:$0x1]
        %v3503 = vld [vmem:[#allocation2 + $0x11] sm:$0x1]
        %v3504 = vld [vmem:[#allocation2 + $0x12] sm:$0x1]
        %v3505 = vld [vmem:[%s3] sm:$0xf]
        %v3506 = vld [vmem:[%s3 + $0x4] sm:$0xf]
        %v3507 = vld [vmem:[%s3 + $0x8] sm:$0xf]
        %v3508 = vld [vmem:[%s3 + $0xc] sm:$0xf]
        %v3509 = vld [vmem:[%s3 + $0x10] sm:$0xf]
        %v3510 = vld [vmem:[%s3 + $0x14] sm:$0xf]
        %v3511 = vld [vmem:[%s3 + $0x18] sm:$0xf]
        %v3512 = vld [vmem:[%s3 + $0x1c] sm:$0xf]
        %v3523 = vunpack.c.l.s4 1966171168
        %v3524 = vunpack.c.0.s8 %v3523
        %v3525 = vlaneseq
        %v3526 = vshrl.u32 %v3525, 7
        %v3527 = vsub.s32 %v3524, %v3526
        %v3528 = vrot.slane %v3496, %v3527
        %v3530 = vunpack.c.l.s4 1966171168
        %v3531 = vunpack.c.0.s8 %v3530
        %v3532 = vlaneseq
        %v3533 = vshrl.u32 %v3532, 7
        %v3534 = vsub.s32 %v3531, %v3533
        %v3535 = vrot.slane %v3528, %v3534
        %v3537 = vunpack.c.l.s4 1966171168
        %v3538 = vunpack.c.0.s8 %v3537
        %v3539 = vlaneseq
        %v3540 = vshrl.u32 %v3539, 7
        %v3541 = vsub.s32 %v3538, %v3540
        %v3542 = vrot.slane %v3497, %v3541
        %v3544 = vunpack.c.l.s4 1966171168
        %v3545 = vunpack.c.0.s8 %v3544
        %v3546 = vlaneseq
        %v3547 = vshrl.u32 %v3546, 7
        %v3548 = vsub.s32 %v3545, %v3547
        %v3549 = vrot.slane %v3542, %v3548
        %v3551 = vunpack.c.l.s4 1966171168
        %v3552 = vunpack.c.0.s8 %v3551
        %v3553 = vlaneseq
        %v3554 = vshrl.u32 %v3553, 7
        %v3555 = vsub.s32 %v3552, %v3554
        %v3556 = vrot.slane %v3498, %v3555
        %v3558 = vunpack.c.l.s4 1966171168
        %v3559 = vunpack.c.0.s8 %v3558
        %v3560 = vlaneseq
        %v3561 = vshrl.u32 %v3560, 7
        %v3562 = vsub.s32 %v3559, %v3561
        %v3563 = vrot.slane %v3556, %v3562
        %v3565 = vunpack.c.l.s4 1966171168
        %v3566 = vunpack.c.0.s8 %v3565
        %v3567 = vlaneseq
        %v3568 = vshrl.u32 %v3567, 7
        %v3569 = vsub.s32 %v3566, %v3568
        %v3570 = vrot.slane %v3499, %v3569
        %v3572 = vunpack.c.l.s4 1966171168
        %v3573 = vunpack.c.0.s8 %v3572
        %v3574 = vlaneseq
        %v3575 = vshrl.u32 %v3574, 7
        %v3576 = vsub.s32 %v3573, %v3575
        %v3577 = vrot.slane %v3570, %v3576
        %v3579 = vunpack.c.l.s4 1966171168
        %v3580 = vunpack.c.0.s8 %v3579
        %v3581 = vlaneseq
        %v3582 = vshrl.u32 %v3581, 7
        %v3583 = vsub.s32 %v3580, %v3582
        %v3584 = vrot.slane %v3500, %v3583
        %v3586 = vunpack.c.l.s4 1966171168
        %v3587 = vunpack.c.0.s8 %v3586
        %v3588 = vlaneseq
        %v3589 = vshrl.u32 %v3588, 7
        %v3590 = vsub.s32 %v3587, %v3589
        %v3591 = vrot.slane %v3584, %v3590
        %v3593 = vunpack.c.l.s4 1966171168
        %v3594 = vunpack.c.0.s8 %v3593
        %v3595 = vlaneseq
        %v3596 = vshrl.u32 %v3595, 7
        %v3597 = vsub.s32 %v3594, %v3596
        %v3598 = vrot.slane %v3501, %v3597
        %v3600 = vunpack.c.l.s4 1966171168
        %v3601 = vunpack.c.0.s8 %v3600
        %v3602 = vlaneseq
        %v3603 = vshrl.u32 %v3602, 7
        %v3604 = vsub.s32 %v3601, %v3603
        %v3605 = vrot.slane %v3598, %v3604
        %v3607 = vunpack.c.l.s4 1966171168
        %v3608 = vunpack.c.0.s8 %v3607
        %v3609 = vlaneseq
        %v3610 = vshrl.u32 %v3609, 7
        %v3611 = vsub.s32 %v3608, %v3610
        %v3612 = vrot.slane %v3502, %v3611
        %v3614 = vunpack.c.l.s4 1966171168
        %v3615 = vunpack.c.0.s8 %v3614
        %v3616 = vlaneseq
        %v3617 = vshrl.u32 %v3616, 7
        %v3618 = vsub.s32 %v3615, %v3617
        %v3619 = vrot.slane %v3612, %v3618
        %v3621 = vunpack.c.l.s4 1966171168
        %v3622 = vunpack.c.0.s8 %v3621
        %v3623 = vlaneseq
        %v3624 = vshrl.u32 %v3623, 7
        %v3625 = vsub.s32 %v3622, %v3624
        %v3626 = vrot.slane %v3503, %v3625
        %v3628 = vunpack.c.l.s4 1966171168
        %v3629 = vunpack.c.0.s8 %v3628
        %v3630 = vlaneseq
        %v3631 = vshrl.u32 %v3630, 7
        %v3632 = vsub.s32 %v3629, %v3631
        %v3633 = vrot.slane %v3626, %v3632
        %v3635 = vunpack.c.l.s4 1966171168
        %v3636 = vunpack.c.0.s8 %v3635
        %v3637 = vlaneseq
        %v3638 = vshrl.u32 %v3637, 7
        %v3639 = vsub.s32 %v3636, %v3638
        %v3640 = vrot.slane %v3504, %v3639
        %v3642 = vunpack.c.l.s4 1966171168
        %v3643 = vunpack.c.0.s8 %v3642
        %v3644 = vlaneseq
        %v3645 = vshrl.u32 %v3644, 7
        %v3646 = vsub.s32 %v3643, %v3645
        %v3647 = vrot.slane %v3640, %v3646
        %v3648 = vunpack.c.l.b16 %v3535
        %v3649 = vunpack.c.l.b16 %v3549
        %v3650 = vunpack.c.l.b16 %v3563
        %v3651 = vunpack.c.l.b16 %v3577
        %v3652 = vunpack.c.l.b16 %v3591
        %v3653 = vunpack.c.l.b16 %v3605
        %v3654 = vunpack.c.l.b16 %v3619
        %v3655 = vunpack.c.l.b16 %v3633
        %v3656 = vunpack.c.l.b16 %v3647
        %v3657 = vrot.slane %v3648, 1
        %vm3658 = vcmask 1041409
        %v3659 = vsel %vm3658, %v3649, %v3657
        %v3660 = vrot.slane %v3650, 7
        %vm3661 = vcmask 1042434
        %v3662 = vsel %vm3661, %v3660, %v3659
        %v3663 = vrot.slane %v3651, 6
        %vm3664 = vcmask 1043459
        %v3665 = vsel %vm3664, %v3663, %v3662
        %v3666 = vrot.slane %v3652, 5
        %vm3667 = vcmask 1044484
        %v3668 = vsel %vm3667, %v3666, %v3665
        %v3669 = vrot.slane %v3653, 4
        %vm3670 = vcmask 1045509
        %v3671 = vsel %vm3670, %v3669, %v3668
        %v3672 = vrot.slane %v3654, 3
        %vm3673 = vcmask 1046534
        %v3674 = vsel %vm3673, %v3672, %v3671
        %v3675 = vrot.slane %v3655, 2
        %vm3676 = vcmask 1047559
        %v3677 = vsel %vm3676, %v3675, %v3674
        %v3678 = vrot.slane %v3656, 1
        %v3679 = vpack.c.b16 %v3678, %v3677
        %v3684 = vunpack.c.l.b16 %v3509
        %v3685 = vunpack.c.l.b16 %v3510
        %v3686 = vunpack.c.l.b16 %v3511
        %v3687 = vunpack.c.l.b16 %v3512
        %v3688 = vpack.c.b16 %v3685, %v3684
        %v3689 = vpack.c.b16 %v3687, %v3686
        %vm3692 = vcmask 261120
        %v3694 = vsel %vm3692, %v3679, 0
        %3696 = vmatprep.subr.bf16.mxu0 0
        %3697 = vmatpush1.bf16.msra.mxu0 %v3688
        %3698 = vmatprep.subr.bf16.mxu0 0
        %3699 = vmatpush1.bf16.msra.mxu0 %v3689
        %3700 = vmatprep.subr.bf16.mxu0 0
        %3701 = vmatpush1.bf16.msra.mxu0 0
        %3702 = vmatprep.subr.bf16.mxu0 0
        %3703 = vmatpush1.bf16.msra.mxu0 0
        %3704 = vmatprep.subr.bf16.mxu0 0
        %3705 = vmatpush1.bf16.msra.mxu0 0
        %3706 = vmatprep.subr.bf16.mxu0 0
        %3707 = vmatpush1.bf16.msra.mxu0 0
        %3708 = vmatprep.subr.bf16.mxu0 0
        %3709 = vmatpush1.bf16.msra.mxu0 0
        %3710 = vmatprep.subr.bf16.mxu0 0
        %3711 = vmatpush1.bf16.msra.mxu0 0
        %3712 = vmatprep.subr.bf16.mxu0 0
        %3713 = vmatpush1.bf16.msra.mxu0 0
        %3714 = vmatprep.subr.bf16.mxu0 0
        %3715 = vmatpush1.bf16.msra.mxu0 0
        %3716 = vmatprep.subr.bf16.mxu0 0
        %3717 = vmatpush1.bf16.msra.mxu0 0
        %3718 = vmatprep.subr.bf16.mxu0 0
        %3719 = vmatpush1.bf16.msra.mxu0 0
        %3720 = vmatprep.subr.bf16.mxu0 0
        %3721 = vmatpush1.bf16.msra.mxu0 0
        %3722 = vmatprep.subr.bf16.mxu0 0
        %3723 = vmatpush1.bf16.msra.mxu0 0
        %3724 = vmatprep.subr.bf16.mxu0 0
        %3725 = vmatpush1.bf16.msra.mxu0 0
        %3726 = vmatprep.subr.bf16.mxu0 0
        %3727 = vmatpush1.bf16.msra.mxu0 0
        %3728 = vmatprep.mubr.bf16.mxu0 0
        %3729 = vmatmul.mubr.bf16.gmra.mrb[0].mxu0 %v3694
        %v3730 = vpop.f32.mrb[0].mxu0
        %v3731 = vadd.f32 0.0, %v3730
        %v3732 = vpop.f32.mrb[0].mxu0
        %v3733 = vpop.f32.mrb[0].mxu0
        %v3734 = vadd.f32 0.0, %v3733
        %v3735 = vpop.f32.mrb[0].mxu0
        %3736 = vdwg.mxu0
        %v3737 = vrot.slane %v3649, 7
        %v3738 = vsel %vm3658, %v3737, %v3648
        %v3739 = vrot.slane %v3650, 6
        %v3740 = vsel %vm3661, %v3739, %v3738
        %v3741 = vrot.slane %v3651, 5
        %v3742 = vsel %vm3664, %v3741, %v3740
        %v3743 = vrot.slane %v3652, 4
        %v3744 = vsel %vm3667, %v3743, %v3742
        %v3745 = vrot.slane %v3653, 3
        %v3746 = vsel %vm3670, %v3745, %v3744
        %v3747 = vrot.slane %v3654, 2
        %v3748 = vsel %vm3673, %v3747, %v3746
        %v3749 = vrot.slane %v3655, 1
        %v3750 = vsel %vm3676, %v3749, %v3748
        %v3751 = vpack.c.b16 %v3656, %v3750
        %v3756 = vunpack.c.l.b16 %v3505
        %v3757 = vunpack.c.l.b16 %v3506
        %v3758 = vunpack.c.l.b16 %v3507
        %v3759 = vunpack.c.l.b16 %v3508
        %v3760 = vpack.c.b16 %v3757, %v3756
        %v3761 = vpack.c.b16 %v3759, %v3758
        %v3765 = vsel %vm3692, %v3751, 0
        %3767 = vmatprep.subr.bf16.mxu0 0
        %3768 = vmatpush1.bf16.msra.mxu0 %v3760
        %3769 = vmatprep.subr.bf16.mxu0 0
        %3770 = vmatpush1.bf16.msra.mxu0 %v3761
        %3771 = vmatprep.subr.bf16.mxu0 0
        %3772 = vmatpush1.bf16.msra.mxu0 0
        %3773 = vmatprep.subr.bf16.mxu0 0
        %3774 = vmatpush1.bf16.msra.mxu0 0
        %3775 = vmatprep.subr.bf16.mxu0 0
        %3776 = vmatpush1.bf16.msra.mxu0 0
        %3777 = vmatprep.subr.bf16.mxu0 0
        %3778 = vmatpush1.bf16.msra.mxu0 0
        %3779 = vmatprep.subr.bf16.mxu0 0
        %3780 = vmatpush1.bf16.msra.mxu0 0
        %3781 = vmatprep.subr.bf16.mxu0 0
        %3782 = vmatpush1.bf16.msra.mxu0 0
        %3783 = vmatprep.subr.bf16.mxu0 0
        %3784 = vmatpush1.bf16.msra.mxu0 0
        %3785 = vmatprep.subr.bf16.mxu0 0
        %3786 = vmatpush1.bf16.msra.mxu0 0
        %3787 = vmatprep.subr.bf16.mxu0 0
        %3788 = vmatpush1.bf16.msra.mxu0 0
        %3789 = vmatprep.subr.bf16.mxu0 0
        %3790 = vmatpush1.bf16.msra.mxu0 0
        %3791 = vmatprep.subr.bf16.mxu0 0
        %3792 = vmatpush1.bf16.msra.mxu0 0
        %3793 = vmatprep.subr.bf16.mxu0 0
        %3794 = vmatpush1.bf16.msra.mxu0 0
        %3795 = vmatprep.subr.bf16.mxu0 0
        %3796 = vmatpush1.bf16.msra.mxu0 0
        %3797 = vmatprep.subr.bf16.mxu0 0
        %3798 = vmatpush1.bf16.msra.mxu0 0
        %3799 = vmatprep.mubr.bf16.mxu0 0
        %3800 = vmatmul.mubr.bf16.gmra.mrb[0].mxu0 %v3765
        %v3801 = vpop.f32.mrb[0].mxu0
        %v3802 = vadd.f32 %v3731, %v3801
        %v3803 = vpop.f32.mrb[0].mxu0
        %v3804 = vpop.f32.mrb[0].mxu0
        %v3805 = vadd.f32 %v3734, %v3804
        %v3806 = vpop.f32.mrb[0].mxu0
        %3807 = vdwg.mxu0
        %s3808 = scalar_lea.vmem [#allocation2], 1
        %v3809 = vld [vmem:[%s3808] sm:$0x1]
        %v3810 = vld [vmem:[%s3808 + $0x1] sm:$0x1]
        %v3811 = vld [vmem:[%s3808 + $0x2] sm:$0x1]
        %v3812 = vld [vmem:[%s3808 + $0x8] sm:$0x1]
        %v3813 = vld [vmem:[%s3808 + $0x9] sm:$0x1]
        %v3814 = vld [vmem:[%s3808 + $0xa] sm:$0x1]
        %v3815 = vld [vmem:[%s3808 + $0x10] sm:$0x1]
        %v3816 = vld [vmem:[%s3808 + $0x11] sm:$0x1]
        %v3817 = vld [vmem:[%s3808 + $0x12] sm:$0x1]
        %v3818 = vld [vmem:[%s3 + $0x20] sm:$0xf]
        %v3819 = vld [vmem:[%s3 + $0x24] sm:$0xf]
        %v3820 = vld [vmem:[%s3 + $0x28] sm:$0xf]
        %v3821 = vld [vmem:[%s3 + $0x2c] sm:$0xf]
        %v3832 = vunpack.c.l.s4 1966171168
        %v3833 = vunpack.c.0.s8 %v3832
        %v3834 = vlaneseq
        %v3835 = vshrl.u32 %v3834, 7
        %v3836 = vsub.s32 %v3833, %v3835
        %v3837 = vrot.slane %v3809, %v3836
        %v3839 = vunpack.c.l.s4 1966171168
        %v3840 = vunpack.c.0.s8 %v3839
        %v3841 = vlaneseq
        %v3842 = vshrl.u32 %v3841, 7
        %v3843 = vsub.s32 %v3840, %v3842
        %v3844 = vrot.slane %v3837, %v3843
        %v3846 = vunpack.c.l.s4 1966171168
        %v3847 = vunpack.c.0.s8 %v3846
        %v3848 = vlaneseq
        %v3849 = vshrl.u32 %v3848, 7
        %v3850 = vsub.s32 %v3847, %v3849
        %v3851 = vrot.slane %v3810, %v3850
        %v3853 = vunpack.c.l.s4 1966171168
        %v3854 = vunpack.c.0.s8 %v3853
        %v3855 = vlaneseq
        %v3856 = vshrl.u32 %v3855, 7
        %v3857 = vsub.s32 %v3854, %v3856
        %v3858 = vrot.slane %v3851, %v3857
        %v3860 = vunpack.c.l.s4 1966171168
        %v3861 = vunpack.c.0.s8 %v3860
        %v3862 = vlaneseq
        %v3863 = vshrl.u32 %v3862, 7
        %v3864 = vsub.s32 %v3861, %v3863
        %v3865 = vrot.slane %v3811, %v3864
        %v3867 = vunpack.c.l.s4 1966171168
        %v3868 = vunpack.c.0.s8 %v3867
        %v3869 = vlaneseq
        %v3870 = vshrl.u32 %v3869, 7
        %v3871 = vsub.s32 %v3868, %v3870
        %v3872 = vrot.slane %v3865, %v3871
        %v3874 = vunpack.c.l.s4 1966171168
        %v3875 = vunpack.c.0.s8 %v3874
        %v3876 = vlaneseq
        %v3877 = vshrl.u32 %v3876, 7
        %v3878 = vsub.s32 %v3875, %v3877
        %v3879 = vrot.slane %v3812, %v3878
        %v3881 = vunpack.c.l.s4 1966171168
        %v3882 = vunpack.c.0.s8 %v3881
        %v3883 = vlaneseq
        %v3884 = vshrl.u32 %v3883, 7
        %v3885 = vsub.s32 %v3882, %v3884
        %v3886 = vrot.slane %v3879, %v3885
        %v3888 = vunpack.c.l.s4 1966171168
        %v3889 = vunpack.c.0.s8 %v3888
        %v3890 = vlaneseq
        %v3891 = vshrl.u32 %v3890, 7
        %v3892 = vsub.s32 %v3889, %v3891
        %v3893 = vrot.slane %v3813, %v3892
        %v3895 = vunpack.c.l.s4 1966171168
        %v3896 = vunpack.c.0.s8 %v3895
        %v3897 = vlaneseq
        %v3898 = vshrl.u32 %v3897, 7
        %v3899 = vsub.s32 %v3896, %v3898
        %v3900 = vrot.slane %v3893, %v3899
        %v3902 = vunpack.c.l.s4 1966171168
        %v3903 = vunpack.c.0.s8 %v3902
        %v3904 = vlaneseq
        %v3905 = vshrl.u32 %v3904, 7
        %v3906 = vsub.s32 %v3903, %v3905
        %v3907 = vrot.slane %v3814, %v3906
        %v3909 = vunpack.c.l.s4 1966171168
        %v3910 = vunpack.c.0.s8 %v3909
        %v3911 = vlaneseq
        %v3912 = vshrl.u32 %v3911, 7
        %v3913 = vsub.s32 %v3910, %v3912
        %v3914 = vrot.slane %v3907, %v3913
        %v3916 = vunpack.c.l.s4 1966171168
        %v3917 = vunpack.c.0.s8 %v3916
        %v3918 = vlaneseq
        %v3919 = vshrl.u32 %v3918, 7
        %v3920 = vsub.s32 %v3917, %v3919
        %v3921 = vrot.slane %v3815, %v3920
        %v3923 = vunpack.c.l.s4 1966171168
        %v3924 = vunpack.c.0.s8 %v3923
        %v3925 = vlaneseq
        %v3926 = vshrl.u32 %v3925, 7
        %v3927 = vsub.s32 %v3924, %v3926
        %v3928 = vrot.slane %v3921, %v3927
        %v3930 = vunpack.c.l.s4 1966171168
        %v3931 = vunpack.c.0.s8 %v3930
        %v3932 = vlaneseq
        %v3933 = vshrl.u32 %v3932, 7
        %v3934 = vsub.s32 %v3931, %v3933
        %v3935 = vrot.slane %v3816, %v3934
        %v3937 = vunpack.c.l.s4 1966171168
        %v3938 = vunpack.c.0.s8 %v3937
        %v3939 = vlaneseq
        %v3940 = vshrl.u32 %v3939, 7
        %v3941 = vsub.s32 %v3938, %v3940
        %v3942 = vrot.slane %v3935, %v3941
        %v3944 = vunpack.c.l.s4 1966171168
        %v3945 = vunpack.c.0.s8 %v3944
        %v3946 = vlaneseq
        %v3947 = vshrl.u32 %v3946, 7
        %v3948 = vsub.s32 %v3945, %v3947
        %v3949 = vrot.slane %v3817, %v3948
        %v3951 = vunpack.c.l.s4 1966171168
        %v3952 = vunpack.c.0.s8 %v3951
        %v3953 = vlaneseq
        %v3954 = vshrl.u32 %v3953, 7
        %v3955 = vsub.s32 %v3952, %v3954
        %v3956 = vrot.slane %v3949, %v3955
        %v3957 = vunpack.c.l.b16 %v3844
        %v3958 = vunpack.c.l.b16 %v3858
        %v3959 = vunpack.c.l.b16 %v3872
        %v3960 = vunpack.c.l.b16 %v3886
        %v3961 = vunpack.c.l.b16 %v3900
        %v3962 = vunpack.c.l.b16 %v3914
        %v3963 = vunpack.c.l.b16 %v3928
        %v3964 = vunpack.c.l.b16 %v3942
        %v3965 = vunpack.c.l.b16 %v3956
        %v3966 = vrot.slane %v3958, 7
        %v3967 = vsel %vm3658, %v3966, %v3957
        %v3968 = vrot.slane %v3959, 6
        %v3969 = vsel %vm3661, %v3968, %v3967
        %v3970 = vrot.slane %v3960, 5
        %v3971 = vsel %vm3664, %v3970, %v3969
        %v3972 = vrot.slane %v3961, 4
        %v3973 = vsel %vm3667, %v3972, %v3971
        %v3974 = vrot.slane %v3962, 3
        %v3975 = vsel %vm3670, %v3974, %v3973
        %v3976 = vrot.slane %v3963, 2
        %v3977 = vsel %vm3673, %v3976, %v3975
        %v3978 = vrot.slane %v3964, 1
        %v3979 = vsel %vm3676, %v3978, %v3977
        %v3980 = vpack.c.b16 %v3965, %v3979
        %v3985 = vunpack.c.l.b16 %v3818
        %v3986 = vunpack.c.l.b16 %v3819
        %v3987 = vunpack.c.l.b16 %v3820
        %v3988 = vunpack.c.l.b16 %v3821
        %v3989 = vpack.c.b16 %v3986, %v3985
        %v3990 = vpack.c.b16 %v3988, %v3987
        %v3994 = vsel %vm3692, %v3980, 0
        %3996 = vmatprep.subr.bf16.mxu0 0
        %3997 = vmatpush1.bf16.msra.mxu0 %v3989
        %3998 = vmatprep.subr.bf16.mxu0 0
        %3999 = vmatpush1.bf16.msra.mxu0 %v3990
        %4000 = vmatprep.subr.bf16.mxu0 0
        %4001 = vmatpush1.bf16.msra.mxu0 0
        %4002 = vmatprep.subr.bf16.mxu0 0
        %4003 = vmatpush1.bf16.msra.mxu0 0
        %4004 = vmatprep.subr.bf16.mxu0 0
        %4005 = vmatpush1.bf16.msra.mxu0 0
        %4006 = vmatprep.subr.bf16.mxu0 0
        %4007 = vmatpush1.bf16.msra.mxu0 0
        %4008 = vmatprep.subr.bf16.mxu0 0
        %4009 = vmatpush1.bf16.msra.mxu0 0
        %4010 = vmatprep.subr.bf16.mxu0 0
        %4011 = vmatpush1.bf16.msra.mxu0 0
        %4012 = vmatprep.subr.bf16.mxu0 0
        %4013 = vmatpush1.bf16.msra.mxu0 0
        %4014 = vmatprep.subr.bf16.mxu0 0
        %4015 = vmatpush1.bf16.msra.mxu0 0
        %4016 = vmatprep.subr.bf16.mxu0 0
        %4017 = vmatpush1.bf16.msra.mxu0 0
        %4018 = vmatprep.subr.bf16.mxu0 0
        %4019 = vmatpush1.bf16.msra.mxu0 0
        %4020 = vmatprep.subr.bf16.mxu0 0
        %4021 = vmatpush1.bf16.msra.mxu0 0
        %4022 = vmatprep.subr.bf16.mxu0 0
        %4023 = vmatpush1.bf16.msra.mxu0 0
        %4024 = vmatprep.subr.bf16.mxu0 0
        %4025 = vmatpush1.bf16.msra.mxu0 0
        %4026 = vmatprep.subr.bf16.mxu0 0
        %4027 = vmatpush1.bf16.msra.mxu0 0
        %4028 = vmatprep.mubr.bf16.mxu0 0
        %4029 = vmatmul.mubr.bf16.gmra.mrb[0].mxu0 %v3994
        %v4030 = vpop.f32.mrb[0].mxu0
        %v4031 = vadd.f32 0.0, %v4030
        %v4032 = vpop.f32.mrb[0].mxu0
        %v4033 = vpop.f32.mrb[0].mxu0
        %v4034 = vadd.f32 0.0, %v4033
        %v4035 = vpop.f32.mrb[0].mxu0
        %4036 = vdwg.mxu0
        %v4037 = vadd.f32 %v3802, %v4031
        %v4038 = vadd.f32 %v3805, %v4034
        %v4039 = vld [vmem:[%s3808] sm:$0x1]
        %v4040 = vld [vmem:[%s3808 + $0x1] sm:$0x1]
        %v4041 = vld [vmem:[%s3808 + $0x2] sm:$0x1]
        %v4042 = vld [vmem:[%s3808 + $0x8] sm:$0x1]
        %v4043 = vld [vmem:[%s3808 + $0x9] sm:$0x1]
        %v4044 = vld [vmem:[%s3808 + $0xa] sm:$0x1]
        %v4045 = vld [vmem:[%s3808 + $0x10] sm:$0x1]
        %v4046 = vld [vmem:[%s3808 + $0x11] sm:$0x1]
        %v4047 = vld [vmem:[%s3808 + $0x12] sm:$0x1]
        %v4048 = vld [vmem:[%s3 + $0x30] sm:$0xf]
        %v4049 = vld [vmem:[%s3 + $0x34] sm:$0xf]
        %v4050 = vld [vmem:[%s3 + $0x38] sm:$0xf]
        %v4051 = vld [vmem:[%s3 + $0x3c] sm:$0xf]
        %v4062 = vunpack.c.l.s4 1966171168
        %v4063 = vunpack.c.0.s8 %v4062
        %v4064 = vlaneseq
        %v4065 = vshrl.u32 %v4064, 7
        %v4066 = vsub.s32 %v4063, %v4065
        %v4067 = vrot.slane %v4039, %v4066
        %v4069 = vunpack.c.l.s4 1966171168
        %v4070 = vunpack.c.0.s8 %v4069
        %v4071 = vlaneseq
        %v4072 = vshrl.u32 %v4071, 7
        %v4073 = vsub.s32 %v4070, %v4072
        %v4074 = vrot.slane %v4067, %v4073
        %v4076 = vunpack.c.l.s4 1966171168
        %v4077 = vunpack.c.0.s8 %v4076
        %v4078 = vlaneseq
        %v4079 = vshrl.u32 %v4078, 7
        %v4080 = vsub.s32 %v4077, %v4079
        %v4081 = vrot.slane %v4040, %v4080
        %v4083 = vunpack.c.l.s4 1966171168
        %v4084 = vunpack.c.0.s8 %v4083
        %v4085 = vlaneseq
        %v4086 = vshrl.u32 %v4085, 7
        %v4087 = vsub.s32 %v4084, %v4086
        %v4088 = vrot.slane %v4081, %v4087
        %v4090 = vunpack.c.l.s4 1966171168
        %v4091 = vunpack.c.0.s8 %v4090
        %v4092 = vlaneseq
        %v4093 = vshrl.u32 %v4092, 7
        %v4094 = vsub.s32 %v4091, %v4093
        %v4095 = vrot.slane %v4041, %v4094
        %v4097 = vunpack.c.l.s4 1966171168
        %v4098 = vunpack.c.0.s8 %v4097
        %v4099 = vlaneseq
        %v4100 = vshrl.u32 %v4099, 7
        %v4101 = vsub.s32 %v4098, %v4100
        %v4102 = vrot.slane %v4095, %v4101
        %v4104 = vunpack.c.l.s4 1966171168
        %v4105 = vunpack.c.0.s8 %v4104
        %v4106 = vlaneseq
        %v4107 = vshrl.u32 %v4106, 7
        %v4108 = vsub.s32 %v4105, %v4107
        %v4109 = vrot.slane %v4042, %v4108
        %v4111 = vunpack.c.l.s4 1966171168
        %v4112 = vunpack.c.0.s8 %v4111
        %v4113 = vlaneseq
        %v4114 = vshrl.u32 %v4113, 7
        %v4115 = vsub.s32 %v4112, %v4114
        %v4116 = vrot.slane %v4109, %v4115
        %v4118 = vunpack.c.l.s4 1966171168
        %v4119 = vunpack.c.0.s8 %v4118
        %v4120 = vlaneseq
        %v4121 = vshrl.u32 %v4120, 7
        %v4122 = vsub.s32 %v4119, %v4121
        %v4123 = vrot.slane %v4043, %v4122
        %v4125 = vunpack.c.l.s4 1966171168
        %v4126 = vunpack.c.0.s8 %v4125
        %v4127 = vlaneseq
        %v4128 = vshrl.u32 %v4127, 7
        %v4129 = vsub.s32 %v4126, %v4128
        %v4130 = vrot.slane %v4123, %v4129
        %v4132 = vunpack.c.l.s4 1966171168
        %v4133 = vunpack.c.0.s8 %v4132
        %v4134 = vlaneseq
        %v4135 = vshrl.u32 %v4134, 7
        %v4136 = vsub.s32 %v4133, %v4135
        %v4137 = vrot.slane %v4044, %v4136
        %v4139 = vunpack.c.l.s4 1966171168
        %v4140 = vunpack.c.0.s8 %v4139
        %v4141 = vlaneseq
        %v4142 = vshrl.u32 %v4141, 7
        %v4143 = vsub.s32 %v4140, %v4142
        %v4144 = vrot.slane %v4137, %v4143
        %v4146 = vunpack.c.l.s4 1966171168
        %v4147 = vunpack.c.0.s8 %v4146
        %v4148 = vlaneseq
        %v4149 = vshrl.u32 %v4148, 7
        %v4150 = vsub.s32 %v4147, %v4149
        %v4151 = vrot.slane %v4045, %v4150
        %v4153 = vunpack.c.l.s4 1966171168
        %v4154 = vunpack.c.0.s8 %v4153
        %v4155 = vlaneseq
        %v4156 = vshrl.u32 %v4155, 7
        %v4157 = vsub.s32 %v4154, %v4156
        %v4158 = vrot.slane %v4151, %v4157
        %v4160 = vunpack.c.l.s4 1966171168
        %v4161 = vunpack.c.0.s8 %v4160
        %v4162 = vlaneseq
        %v4163 = vshrl.u32 %v4162, 7
        %v4164 = vsub.s32 %v4161, %v4163
        %v4165 = vrot.slane %v4046, %v4164
        %v4167 = vunpack.c.l.s4 1966171168
        %v4168 = vunpack.c.0.s8 %v4167
        %v4169 = vlaneseq
        %v4170 = vshrl.u32 %v4169, 7
        %v4171 = vsub.s32 %v4168, %v4170
        %v4172 = vrot.slane %v4165, %v4171
        %v4174 = vunpack.c.l.s4 1966171168
        %v4175 = vunpack.c.0.s8 %v4174
        %v4176 = vlaneseq
        %v4177 = vshrl.u32 %v4176, 7
        %v4178 = vsub.s32 %v4175, %v4177
        %v4179 = vrot.slane %v4047, %v4178
        %v4181 = vunpack.c.l.s4 1966171168
        %v4182 = vunpack.c.0.s8 %v4181
        %v4183 = vlaneseq
        %v4184 = vshrl.u32 %v4183, 7
        %v4185 = vsub.s32 %v4182, %v4184
        %v4186 = vrot.slane %v4179, %v4185
        %v4187 = vunpack.c.l.b16 %v4074
        %v4188 = vunpack.c.l.b16 %v4088
        %v4189 = vunpack.c.l.b16 %v4102
        %v4190 = vunpack.c.l.b16 %v4116
        %v4191 = vunpack.c.l.b16 %v4130
        %v4192 = vunpack.c.l.b16 %v4144
        %v4193 = vunpack.c.l.b16 %v4158
        %v4194 = vunpack.c.l.b16 %v4172
        %v4195 = vunpack.c.l.b16 %v4186
        %v4196 = vrot.slane %v4187, 1
        %v4197 = vsel %vm3658, %v4188, %v4196
        %v4198 = vrot.slane %v4189, 7
        %v4199 = vsel %vm3661, %v4198, %v4197
        %v4200 = vrot.slane %v4190, 6
        %v4201 = vsel %vm3664, %v4200, %v4199
        %v4202 = vrot.slane %v4191, 5
        %v4203 = vsel %vm3667, %v4202, %v4201
        %v4204 = vrot.slane %v4192, 4
        %v4205 = vsel %vm3670, %v4204, %v4203
        %v4206 = vrot.slane %v4193, 3
        %v4207 = vsel %vm3673, %v4206, %v4205
        %v4208 = vrot.slane %v4194, 2
        %v4209 = vsel %vm3676, %v4208, %v4207
        %v4210 = vrot.slane %v4195, 1
        %v4211 = vpack.c.b16 %v4210, %v4209
        %v4216 = vunpack.c.l.b16 %v4048
        %v4217 = vunpack.c.l.b16 %v4049
        %v4218 = vunpack.c.l.b16 %v4050
        %v4219 = vunpack.c.l.b16 %v4051
        %v4220 = vpack.c.b16 %v4217, %v4216
        %v4221 = vpack.c.b16 %v4219, %v4218
        %v4225 = vsel %vm3692, %v4211, 0
        %4227 = vmatprep.subr.bf16.mxu0 0
        %4228 = vmatpush1.bf16.msra.mxu0 %v4220
        %4229 = vmatprep.subr.bf16.mxu0 0
        %4230 = vmatpush1.bf16.msra.mxu0 %v4221
        %4231 = vmatprep.subr.bf16.mxu0 0
        %4232 = vmatpush1.bf16.msra.mxu0 0
        %4233 = vmatprep.subr.bf16.mxu0 0
        %4234 = vmatpush1.bf16.msra.mxu0 0
        %4235 = vmatprep.subr.bf16.mxu0 0
        %4236 = vmatpush1.bf16.msra.mxu0 0
        %4237 = vmatprep.subr.bf16.mxu0 0
        %4238 = vmatpush1.bf16.msra.mxu0 0
        %4239 = vmatprep.subr.bf16.mxu0 0
        %4240 = vmatpush1.bf16.msra.mxu0 0
        %4241 = vmatprep.subr.bf16.mxu0 0
        %4242 = vmatpush1.bf16.msra.mxu0 0
        %4243 = vmatprep.subr.bf16.mxu0 0
        %4244 = vmatpush1.bf16.msra.mxu0 0
        %4245 = vmatprep.subr.bf16.mxu0 0
        %4246 = vmatpush1.bf16.msra.mxu0 0
        %4247 = vmatprep.subr.bf16.mxu0 0
        %4248 = vmatpush1.bf16.msra.mxu0 0
        %4249 = vmatprep.subr.bf16.mxu0 0
        %4250 = vmatpush1.bf16.msra.mxu0 0
        %4251 = vmatprep.subr.bf16.mxu0 0
        %4252 = vmatpush1.bf16.msra.mxu0 0
        %4253 = vmatprep.subr.bf16.mxu0 0
        %4254 = vmatpush1.bf16.msra.mxu0 0
        %4255 = vmatprep.subr.bf16.mxu0 0
        %4256 = vmatpush1.bf16.msra.mxu0 0
        %4257 = vmatprep.subr.bf16.mxu0 0
        %4258 = vmatpush1.bf16.msra.mxu0 0
        %4259 = vmatprep.mubr.bf16.mxu0 0
        %4260 = vmatmul.mubr.bf16.gmra.mrb[0].mxu0 %v4225
        %v4261 = vpop.f32.mrb[0].mxu0
        %v4262 = vadd.f32 0.0, %v4261
        %v4263 = vpop.f32.mrb[0].mxu0
        %v4264 = vpop.f32.mrb[0].mxu0
        %v4265 = vadd.f32 0.0, %v4264
        %v4266 = vpop.f32.mrb[0].mxu0
        %4267 = vdwg.mxu0
        %v4268 = vadd.f32 %v4037, %v4262
        %v4269 = vadd.f32 %v4038, %v4265
        %s4270 = scalar_lea.vmem [#allocation2], 4
        %v4271 = vld [vmem:[%s4270] sm:$0x1]
        %v4272 = vld [vmem:[%s4270 + $0x1] sm:$0x1]
        %v4273 = vld [vmem:[%s4270 + $0x2] sm:$0x1]
        %v4274 = vld [vmem:[%s4270 + $0x8] sm:$0x1]
        %v4275 = vld [vmem:[%s4270 + $0x9] sm:$0x1]
        %v4276 = vld [vmem:[%s4270 + $0xa] sm:$0x1]
        %v4277 = vld [vmem:[%s4270 + $0x10] sm:$0x1]
        %v4278 = vld [vmem:[%s4270 + $0x11] sm:$0x1]
        %v4279 = vld [vmem:[%s4270 + $0x12] sm:$0x1]
        %v4280 = vld [vmem:[%s3 + $0x40] sm:$0xf]
        %v4281 = vld [vmem:[%s3 + $0x44] sm:$0xf]
        %v4282 = vld [vmem:[%s3 + $0x48] sm:$0xf]
        %v4283 = vld [vmem:[%s3 + $0x4c] sm:$0xf]
        %v4294 = vunpack.c.l.s4 1966171168
        %v4295 = vunpack.c.0.s8 %v4294
        %v4296 = vlaneseq
        %v4297 = vshrl.u32 %v4296, 7
        %v4298 = vsub.s32 %v4295, %v4297
        %v4299 = vrot.slane %v4271, %v4298
        %v4301 = vunpack.c.l.s4 1966171168
        %v4302 = vunpack.c.0.s8 %v4301
        %v4303 = vlaneseq
        %v4304 = vshrl.u32 %v4303, 7
        %v4305 = vsub.s32 %v4302, %v4304
        %v4306 = vrot.slane %v4299, %v4305
        %v4308 = vunpack.c.l.s4 1966171168
        %v4309 = vunpack.c.0.s8 %v4308
        %v4310 = vlaneseq
        %v4311 = vshrl.u32 %v4310, 7
        %v4312 = vsub.s32 %v4309, %v4311
        %v4313 = vrot.slane %v4272, %v4312
        %v4315 = vunpack.c.l.s4 1966171168
        %v4316 = vunpack.c.0.s8 %v4315
        %v4317 = vlaneseq
        %v4318 = vshrl.u32 %v4317, 7
        %v4319 = vsub.s32 %v4316, %v4318
        %v4320 = vrot.slane %v4313, %v4319
        %v4322 = vunpack.c.l.s4 1966171168
        %v4323 = vunpack.c.0.s8 %v4322
        %v4324 = vlaneseq
        %v4325 = vshrl.u32 %v4324, 7
        %v4326 = vsub.s32 %v4323, %v4325
        %v4327 = vrot.slane %v4273, %v4326
        %v4329 = vunpack.c.l.s4 1966171168
        %v4330 = vunpack.c.0.s8 %v4329
        %v4331 = vlaneseq
        %v4332 = vshrl.u32 %v4331, 7
        %v4333 = vsub.s32 %v4330, %v4332
        %v4334 = vrot.slane %v4327, %v4333
        %v4336 = vunpack.c.l.s4 1966171168
        %v4337 = vunpack.c.0.s8 %v4336
        %v4338 = vlaneseq
        %v4339 = vshrl.u32 %v4338, 7
        %v4340 = vsub.s32 %v4337, %v4339
        %v4341 = vrot.slane %v4274, %v4340
        %v4343 = vunpack.c.l.s4 1966171168
        %v4344 = vunpack.c.0.s8 %v4343
        %v4345 = vlaneseq
        %v4346 = vshrl.u32 %v4345, 7
        %v4347 = vsub.s32 %v4344, %v4346
        %v4348 = vrot.slane %v4341, %v4347
        %v4350 = vunpack.c.l.s4 1966171168
        %v4351 = vunpack.c.0.s8 %v4350
        %v4352 = vlaneseq
        %v4353 = vshrl.u32 %v4352, 7
        %v4354 = vsub.s32 %v4351, %v4353
        %v4355 = vrot.slane %v4275, %v4354
        %v4357 = vunpack.c.l.s4 1966171168
        %v4358 = vunpack.c.0.s8 %v4357
        %v4359 = vlaneseq
        %v4360 = vshrl.u32 %v4359, 7
        %v4361 = vsub.s32 %v4358, %v4360
        %v4362 = vrot.slane %v4355, %v4361
        %v4364 = vunpack.c.l.s4 1966171168
        %v4365 = vunpack.c.0.s8 %v4364
        %v4366 = vlaneseq
        %v4367 = vshrl.u32 %v4366, 7
        %v4368 = vsub.s32 %v4365, %v4367
        %v4369 = vrot.slane %v4276, %v4368
        %v4371 = vunpack.c.l.s4 1966171168
        %v4372 = vunpack.c.0.s8 %v4371
        %v4373 = vlaneseq
        %v4374 = vshrl.u32 %v4373, 7
        %v4375 = vsub.s32 %v4372, %v4374
        %v4376 = vrot.slane %v4369, %v4375
        %v4378 = vunpack.c.l.s4 1966171168
        %v4379 = vunpack.c.0.s8 %v4378
        %v4380 = vlaneseq
        %v4381 = vshrl.u32 %v4380, 7
        %v4382 = vsub.s32 %v4379, %v4381
        %v4383 = vrot.slane %v4277, %v4382
        %v4385 = vunpack.c.l.s4 1966171168
        %v4386 = vunpack.c.0.s8 %v4385
        %v4387 = vlaneseq
        %v4388 = vshrl.u32 %v4387, 7
        %v4389 = vsub.s32 %v4386, %v4388
        %v4390 = vrot.slane %v4383, %v4389
        %v4392 = vunpack.c.l.s4 1966171168
        %v4393 = vunpack.c.0.s8 %v4392
        %v4394 = vlaneseq
        %v4395 = vshrl.u32 %v4394, 7
        %v4396 = vsub.s32 %v4393, %v4395
        %v4397 = vrot.slane %v4278, %v4396
        %v4399 = vunpack.c.l.s4 1966171168
        %v4400 = vunpack.c.0.s8 %v4399
        %v4401 = vlaneseq
        %v4402 = vshrl.u32 %v4401, 7
        %v4403 = vsub.s32 %v4400, %v4402
        %v4404 = vrot.slane %v4397, %v4403
        %v4406 = vunpack.c.l.s4 1966171168
        %v4407 = vunpack.c.0.s8 %v4406
        %v4408 = vlaneseq
        %v4409 = vshrl.u32 %v4408, 7
        %v4410 = vsub.s32 %v4407, %v4409
        %v4411 = vrot.slane %v4279, %v4410
        %v4413 = vunpack.c.l.s4 1966171168
        %v4414 = vunpack.c.0.s8 %v4413
        %v4415 = vlaneseq
        %v4416 = vshrl.u32 %v4415, 7
        %v4417 = vsub.s32 %v4414, %v4416
        %v4418 = vrot.slane %v4411, %v4417
        %v4419 = vunpack.c.l.b16 %v4306
        %v4420 = vunpack.c.l.b16 %v4320
        %v4421 = vunpack.c.l.b16 %v4334
        %v4422 = vunpack.c.l.b16 %v4348
        %v4423 = vunpack.c.l.b16 %v4362
        %v4424 = vunpack.c.l.b16 %v4376
        %v4425 = vunpack.c.l.b16 %v4390
        %v4426 = vunpack.c.l.b16 %v4404
        %v4427 = vunpack.c.l.b16 %v4418
        %v4428 = vrot.slane %v4420, 7
        %v4429 = vsel %vm3658, %v4428, %v4419
        %v4430 = vrot.slane %v4421, 6
        %v4431 = vsel %vm3661, %v4430, %v4429
        %v4432 = vrot.slane %v4422, 5
        %v4433 = vsel %vm3664, %v4432, %v4431
        %v4434 = vrot.slane %v4423, 4
        %v4435 = vsel %vm3667, %v4434, %v4433
        %v4436 = vrot.slane %v4424, 3
        %v4437 = vsel %vm3670, %v4436, %v4435
        %v4438 = vrot.slane %v4425, 2
        %v4439 = vsel %vm3673, %v4438, %v4437
        %v4440 = vrot.slane %v4426, 1
        %v4441 = vsel %vm3676, %v4440, %v4439
        %v4442 = vpack.c.b16 %v4427, %v4441
        %v4447 = vunpack.c.l.b16 %v4280
        %v4448 = vunpack.c.l.b16 %v4281
        %v4449 = vunpack.c.l.b16 %v4282
        %v4450 = vunpack.c.l.b16 %v4283
        %v4451 = vpack.c.b16 %v4448, %v4447
        %v4452 = vpack.c.b16 %v4450, %v4449
        %v4456 = vsel %vm3692, %v4442, 0
        %4458 = vmatprep.subr.bf16.mxu0 0
        %4459 = vmatpush1.bf16.msra.mxu0 %v4451
        %4460 = vmatprep.subr.bf16.mxu0 0
        %4461 = vmatpush1.bf16.msra.mxu0 %v4452
        %4462 = vmatprep.subr.bf16.mxu0 0
        %4463 = vmatpush1.bf16.msra.mxu0 0
        %4464 = vmatprep.subr.bf16.mxu0 0
        %4465 = vmatpush1.bf16.msra.mxu0 0
        %4466 = vmatprep.subr.bf16.mxu0 0
        %4467 = vmatpush1.bf16.msra.mxu0 0
        %4468 = vmatprep.subr.bf16.mxu0 0
        %4469 = vmatpush1.bf16.msra.mxu0 0
        %4470 = vmatprep.subr.bf16.mxu0 0
        %4471 = vmatpush1.bf16.msra.mxu0 0
        %4472 = vmatprep.subr.bf16.mxu0 0
        %4473 = vmatpush1.bf16.msra.mxu0 0
        %4474 = vmatprep.subr.bf16.mxu0 0
        %4475 = vmatpush1.bf16.msra.mxu0 0
        %4476 = vmatprep.subr.bf16.mxu0 0
        %4477 = vmatpush1.bf16.msra.mxu0 0
        %4478 = vmatprep.subr.bf16.mxu0 0
        %4479 = vmatpush1.bf16.msra.mxu0 0
        %4480 = vmatprep.subr.bf16.mxu0 0
        %4481 = vmatpush1.bf16.msra.mxu0 0
        %4482 = vmatprep.subr.bf16.mxu0 0
        %4483 = vmatpush1.bf16.msra.mxu0 0
        %4484 = vmatprep.subr.bf16.mxu0 0
        %4485 = vmatpush1.bf16.msra.mxu0 0
        %4486 = vmatprep.subr.bf16.mxu0 0
        %4487 = vmatpush1.bf16.msra.mxu0 0
        %4488 = vmatprep.subr.bf16.mxu0 0
        %4489 = vmatpush1.bf16.msra.mxu0 0
        %4490 = vmatprep.mubr.bf16.mxu0 0
        %4491 = vmatmul.mubr.bf16.gmra.mrb[0].mxu0 %v4456
        %v4492 = vpop.f32.mrb[0].mxu0
        %v4493 = vadd.f32 0.0, %v4492
        %v4494 = vpop.f32.mrb[0].mxu0
        %v4495 = vpop.f32.mrb[0].mxu0
        %v4496 = vadd.f32 0.0, %v4495
        %v4497 = vpop.f32.mrb[0].mxu0
        %4498 = vdwg.mxu0
        %v4499 = vadd.f32 %v4268, %v4493
        %v4500 = vadd.f32 %v4269, %v4496
        %v4501 = vld [vmem:[%s4270] sm:$0x1]
        %v4502 = vld [vmem:[%s4270 + $0x1] sm:$0x1]
        %v4503 = vld [vmem:[%s4270 + $0x2] sm:$0x1]
        %v4504 = vld [vmem:[%s4270 + $0x8] sm:$0x1]
        %v4505 = vld [vmem:[%s4270 + $0x9] sm:$0x1]
        %v4506 = vld [vmem:[%s4270 + $0xa] sm:$0x1]
        %v4507 = vld [vmem:[%s4270 + $0x10] sm:$0x1]
        %v4508 = vld [vmem:[%s4270 + $0x11] sm:$0x1]
        %v4509 = vld [vmem:[%s4270 + $0x12] sm:$0x1]
        %v4510 = vld [vmem:[%s3 + $0x50] sm:$0xf]
        %v4511 = vld [vmem:[%s3 + $0x54] sm:$0xf]
        %v4512 = vld [vmem:[%s3 + $0x58] sm:$0xf]
        %v4513 = vld [vmem:[%s3 + $0x5c] sm:$0xf]
        %v4524 = vunpack.c.l.s4 1966171168
        %v4525 = vunpack.c.0.s8 %v4524
        %v4526 = vlaneseq
        %v4527 = vshrl.u32 %v4526, 7
        %v4528 = vsub.s32 %v4525, %v4527
        %v4529 = vrot.slane %v4501, %v4528
        %v4531 = vunpack.c.l.s4 1966171168
        %v4532 = vunpack.c.0.s8 %v4531
        %v4533 = vlaneseq
        %v4534 = vshrl.u32 %v4533, 7
        %v4535 = vsub.s32 %v4532, %v4534
        %v4536 = vrot.slane %v4529, %v4535
        %v4538 = vunpack.c.l.s4 1966171168
        %v4539 = vunpack.c.0.s8 %v4538
        %v4540 = vlaneseq
        %v4541 = vshrl.u32 %v4540, 7
        %v4542 = vsub.s32 %v4539, %v4541
        %v4543 = vrot.slane %v4502, %v4542
        %v4545 = vunpack.c.l.s4 1966171168
        %v4546 = vunpack.c.0.s8 %v4545
        %v4547 = vlaneseq
        %v4548 = vshrl.u32 %v4547, 7
        %v4549 = vsub.s32 %v4546, %v4548
        %v4550 = vrot.slane %v4543, %v4549
        %v4552 = vunpack.c.l.s4 1966171168
        %v4553 = vunpack.c.0.s8 %v4552
        %v4554 = vlaneseq
        %v4555 = vshrl.u32 %v4554, 7
        %v4556 = vsub.s32 %v4553, %v4555
        %v4557 = vrot.slane %v4503, %v4556
        %v4559 = vunpack.c.l.s4 1966171168
        %v4560 = vunpack.c.0.s8 %v4559
        %v4561 = vlaneseq
        %v4562 = vshrl.u32 %v4561, 7
        %v4563 = vsub.s32 %v4560, %v4562
        %v4564 = vrot.slane %v4557, %v4563
        %v4566 = vunpack.c.l.s4 1966171168
        %v4567 = vunpack.c.0.s8 %v4566
        %v4568 = vlaneseq
        %v4569 = vshrl.u32 %v4568, 7
        %v4570 = vsub.s32 %v4567, %v4569
        %v4571 = vrot.slane %v4504, %v4570
        %v4573 = vunpack.c.l.s4 1966171168
        %v4574 = vunpack.c.0.s8 %v4573
        %v4575 = vlaneseq
        %v4576 = vshrl.u32 %v4575, 7
        %v4577 = vsub.s32 %v4574, %v4576
        %v4578 = vrot.slane %v4571, %v4577
        %v4580 = vunpack.c.l.s4 1966171168
        %v4581 = vunpack.c.0.s8 %v4580
        %v4582 = vlaneseq
        %v4583 = vshrl.u32 %v4582, 7
        %v4584 = vsub.s32 %v4581, %v4583
        %v4585 = vrot.slane %v4505, %v4584
        %v4587 = vunpack.c.l.s4 1966171168
        %v4588 = vunpack.c.0.s8 %v4587
        %v4589 = vlaneseq
        %v4590 = vshrl.u32 %v4589, 7
        %v4591 = vsub.s32 %v4588, %v4590
        %v4592 = vrot.slane %v4585, %v4591
        %v4594 = vunpack.c.l.s4 1966171168
        %v4595 = vunpack.c.0.s8 %v4594
        %v4596 = vlaneseq
        %v4597 = vshrl.u32 %v4596, 7
        %v4598 = vsub.s32 %v4595, %v4597
        %v4599 = vrot.slane %v4506, %v4598
        %v4601 = vunpack.c.l.s4 1966171168
        %v4602 = vunpack.c.0.s8 %v4601
        %v4603 = vlaneseq
        %v4604 = vshrl.u32 %v4603, 7
        %v4605 = vsub.s32 %v4602, %v4604
        %v4606 = vrot.slane %v4599, %v4605
        %v4608 = vunpack.c.l.s4 1966171168
        %v4609 = vunpack.c.0.s8 %v4608
        %v4610 = vlaneseq
        %v4611 = vshrl.u32 %v4610, 7
        %v4612 = vsub.s32 %v4609, %v4611
        %v4613 = vrot.slane %v4507, %v4612
        %v4615 = vunpack.c.l.s4 1966171168
        %v4616 = vunpack.c.0.s8 %v4615
        %v4617 = vlaneseq
        %v4618 = vshrl.u32 %v4617, 7
        %v4619 = vsub.s32 %v4616, %v4618
        %v4620 = vrot.slane %v4613, %v4619
        %v4622 = vunpack.c.l.s4 1966171168
        %v4623 = vunpack.c.0.s8 %v4622
        %v4624 = vlaneseq
        %v4625 = vshrl.u32 %v4624, 7
        %v4626 = vsub.s32 %v4623, %v4625
        %v4627 = vrot.slane %v4508, %v4626
        %v4629 = vunpack.c.l.s4 1966171168
        %v4630 = vunpack.c.0.s8 %v4629
        %v4631 = vlaneseq
        %v4632 = vshrl.u32 %v4631, 7
        %v4633 = vsub.s32 %v4630, %v4632
        %v4634 = vrot.slane %v4627, %v4633
        %v4636 = vunpack.c.l.s4 1966171168
        %v4637 = vunpack.c.0.s8 %v4636
        %v4638 = vlaneseq
        %v4639 = vshrl.u32 %v4638, 7
        %v4640 = vsub.s32 %v4637, %v4639
        %v4641 = vrot.slane %v4509, %v4640
        %v4643 = vunpack.c.l.s4 1966171168
        %v4644 = vunpack.c.0.s8 %v4643
        %v4645 = vlaneseq
        %v4646 = vshrl.u32 %v4645, 7
        %v4647 = vsub.s32 %v4644, %v4646
        %v4648 = vrot.slane %v4641, %v4647
        %v4649 = vunpack.c.l.b16 %v4536
        %v4650 = vunpack.c.l.b16 %v4550
        %v4651 = vunpack.c.l.b16 %v4564
        %v4652 = vunpack.c.l.b16 %v4578
        %v4653 = vunpack.c.l.b16 %v4592
        %v4654 = vunpack.c.l.b16 %v4606
        %v4655 = vunpack.c.l.b16 %v4620
        %v4656 = vunpack.c.l.b16 %v4634
        %v4657 = vunpack.c.l.b16 %v4648
        %v4658 = vrot.slane %v4649, 1
        %v4659 = vsel %vm3658, %v4650, %v4658
        %v4660 = vrot.slane %v4651, 7
        %v4661 = vsel %vm3661, %v4660, %v4659
        %v4662 = vrot.slane %v4652, 6
        %v4663 = vsel %vm3664, %v4662, %v4661
        %v4664 = vrot.slane %v4653, 5
        %v4665 = vsel %vm3667, %v4664, %v4663
        %v4666 = vrot.slane %v4654, 4
        %v4667 = vsel %vm3670, %v4666, %v4665
        %v4668 = vrot.slane %v4655, 3
        %v4669 = vsel %vm3673, %v4668, %v4667
        %v4670 = vrot.slane %v4656, 2
        %v4671 = vsel %vm3676, %v4670, %v4669
        %v4672 = vrot.slane %v4657, 1
        %v4673 = vpack.c.b16 %v4672, %v4671
        %v4678 = vunpack.c.l.b16 %v4510
        %v4679 = vunpack.c.l.b16 %v4511
        %v4680 = vunpack.c.l.b16 %v4512
        %v4681 = vunpack.c.l.b16 %v4513
        %v4682 = vpack.c.b16 %v4679, %v4678
        %v4683 = vpack.c.b16 %v4681, %v4680
        %v4687 = vsel %vm3692, %v4673, 0
        %4689 = vmatprep.subr.bf16.mxu0 0
        %4690 = vmatpush1.bf16.msra.mxu0 %v4682
        %4691 = vmatprep.subr.bf16.mxu0 0
        %4692 = vmatpush1.bf16.msra.mxu0 %v4683
        %4693 = vmatprep.subr.bf16.mxu0 0
        %4694 = vmatpush1.bf16.msra.mxu0 0
        %4695 = vmatprep.subr.bf16.mxu0 0
        %4696 = vmatpush1.bf16.msra.mxu0 0
        %4697 = vmatprep.subr.bf16.mxu0 0
        %4698 = vmatpush1.bf16.msra.mxu0 0
        %4699 = vmatprep.subr.bf16.mxu0 0
        %4700 = vmatpush1.bf16.msra.mxu0 0
        %4701 = vmatprep.subr.bf16.mxu0 0
        %4702 = vmatpush1.bf16.msra.mxu0 0
        %4703 = vmatprep.subr.bf16.mxu0 0
        %4704 = vmatpush1.bf16.msra.mxu0 0
        %4705 = vmatprep.subr.bf16.mxu0 0
        %4706 = vmatpush1.bf16.msra.mxu0 0
        %4707 = vmatprep.subr.bf16.mxu0 0
        %4708 = vmatpush1.bf16.msra.mxu0 0
        %4709 = vmatprep.subr.bf16.mxu0 0
        %4710 = vmatpush1.bf16.msra.mxu0 0
        %4711 = vmatprep.subr.bf16.mxu0 0
        %4712 = vmatpush1.bf16.msra.mxu0 0
        %4713 = vmatprep.subr.bf16.mxu0 0
        %4714 = vmatpush1.bf16.msra.mxu0 0
        %4715 = vmatprep.subr.bf16.mxu0 0
        %4716 = vmatpush1.bf16.msra.mxu0 0
        %4717 = vmatprep.subr.bf16.mxu0 0
        %4718 = vmatpush1.bf16.msra.mxu0 0
        %4719 = vmatprep.subr.bf16.mxu0 0
        %4720 = vmatpush1.bf16.msra.mxu0 0
        %4721 = vmatprep.mubr.bf16.mxu0 0
        %4722 = vmatmul.mubr.bf16.gmra.mrb[0].mxu0 %v4687
        %v4723 = vpop.f32.mrb[0].mxu0
        %v4724 = vadd.f32 0.0, %v4723
        %v4725 = vpop.f32.mrb[0].mxu0
        %v4726 = vpop.f32.mrb[0].mxu0
        %v4727 = vadd.f32 0.0, %v4726
        %v4728 = vpop.f32.mrb[0].mxu0
        %4729 = vdwg.mxu0
        %v4730 = vadd.f32 %v4499, %v4724
        %v4731 = vadd.f32 %v4500, %v4727
        %s4732 = scalar_lea.vmem [#allocation2], 5
        %v4733 = vld [vmem:[%s4732] sm:$0x1]
        %v4734 = vld [vmem:[%s4732 + $0x1] sm:$0x1]
        %v4735 = vld [vmem:[%s4732 + $0x2] sm:$0x1]
        %v4736 = vld [vmem:[%s4732 + $0x8] sm:$0x1]
        %v4737 = vld [vmem:[%s4732 + $0x9] sm:$0x1]
        %v4738 = vld [vmem:[%s4732 + $0xa] sm:$0x1]
        %v4739 = vld [vmem:[%s4732 + $0x10] sm:$0x1]
        %v4740 = vld [vmem:[%s4732 + $0x11] sm:$0x1]
        %v4741 = vld [vmem:[%s4732 + $0x12] sm:$0x1]
        %v4742 = vld [vmem:[%s3 + $0x60] sm:$0xf]
        %v4743 = vld [vmem:[%s3 + $0x64] sm:$0xf]
        %v4744 = vld [vmem:[%s3 + $0x68] sm:$0xf]
        %v4745 = vld [vmem:[%s3 + $0x6c] sm:$0xf]
        %v4756 = vunpack.c.l.s4 1966171168
        %v4757 = vunpack.c.0.s8 %v4756
        %v4758 = vlaneseq
        %v4759 = vshrl.u32 %v4758, 7
        %v4760 = vsub.s32 %v4757, %v4759
        %v4761 = vrot.slane %v4733, %v4760
        %v4763 = vunpack.c.l.s4 1966171168
        %v4764 = vunpack.c.0.s8 %v4763
        %v4765 = vlaneseq
        %v4766 = vshrl.u32 %v4765, 7
        %v4767 = vsub.s32 %v4764, %v4766
        %v4768 = vrot.slane %v4761, %v4767
        %v4770 = vunpack.c.l.s4 1966171168
        %v4771 = vunpack.c.0.s8 %v4770
        %v4772 = vlaneseq
        %v4773 = vshrl.u32 %v4772, 7
        %v4774 = vsub.s32 %v4771, %v4773
        %v4775 = vrot.slane %v4734, %v4774
        %v4777 = vunpack.c.l.s4 1966171168
        %v4778 = vunpack.c.0.s8 %v4777
        %v4779 = vlaneseq
        %v4780 = vshrl.u32 %v4779, 7
        %v4781 = vsub.s32 %v4778, %v4780
        %v4782 = vrot.slane %v4775, %v4781
        %v4784 = vunpack.c.l.s4 1966171168
        %v4785 = vunpack.c.0.s8 %v4784
        %v4786 = vlaneseq
        %v4787 = vshrl.u32 %v4786, 7
        %v4788 = vsub.s32 %v4785, %v4787
        %v4789 = vrot.slane %v4735, %v4788
        %v4791 = vunpack.c.l.s4 1966171168
        %v4792 = vunpack.c.0.s8 %v4791
        %v4793 = vlaneseq
        %v4794 = vshrl.u32 %v4793, 7
        %v4795 = vsub.s32 %v4792, %v4794
        %v4796 = vrot.slane %v4789, %v4795
        %v4798 = vunpack.c.l.s4 1966171168
        %v4799 = vunpack.c.0.s8 %v4798
        %v4800 = vlaneseq
        %v4801 = vshrl.u32 %v4800, 7
        %v4802 = vsub.s32 %v4799, %v4801
        %v4803 = vrot.slane %v4736, %v4802
        %v4805 = vunpack.c.l.s4 1966171168
        %v4806 = vunpack.c.0.s8 %v4805
        %v4807 = vlaneseq
        %v4808 = vshrl.u32 %v4807, 7
        %v4809 = vsub.s32 %v4806, %v4808
        %v4810 = vrot.slane %v4803, %v4809
        %v4812 = vunpack.c.l.s4 1966171168
        %v4813 = vunpack.c.0.s8 %v4812
        %v4814 = vlaneseq
        %v4815 = vshrl.u32 %v4814, 7
        %v4816 = vsub.s32 %v4813, %v4815
        %v4817 = vrot.slane %v4737, %v4816
        %v4819 = vunpack.c.l.s4 1966171168
        %v4820 = vunpack.c.0.s8 %v4819
        %v4821 = vlaneseq
        %v4822 = vshrl.u32 %v4821, 7
        %v4823 = vsub.s32 %v4820, %v4822
        %v4824 = vrot.slane %v4817, %v4823
        %v4826 = vunpack.c.l.s4 1966171168
        %v4827 = vunpack.c.0.s8 %v4826
        %v4828 = vlaneseq
        %v4829 = vshrl.u32 %v4828, 7
        %v4830 = vsub.s32 %v4827, %v4829
        %v4831 = vrot.slane %v4738, %v4830
        %v4833 = vunpack.c.l.s4 1966171168
        %v4834 = vunpack.c.0.s8 %v4833
        %v4835 = vlaneseq
        %v4836 = vshrl.u32 %v4835, 7
        %v4837 = vsub.s32 %v4834, %v4836
        %v4838 = vrot.slane %v4831, %v4837
        %v4840 = vunpack.c.l.s4 1966171168
        %v4841 = vunpack.c.0.s8 %v4840
        %v4842 = vlaneseq
        %v4843 = vshrl.u32 %v4842, 7
        %v4844 = vsub.s32 %v4841, %v4843
        %v4845 = vrot.slane %v4739, %v4844
        %v4847 = vunpack.c.l.s4 1966171168
        %v4848 = vunpack.c.0.s8 %v4847
        %v4849 = vlaneseq
        %v4850 = vshrl.u32 %v4849, 7
        %v4851 = vsub.s32 %v4848, %v4850
        %v4852 = vrot.slane %v4845, %v4851
        %v4854 = vunpack.c.l.s4 1966171168
        %v4855 = vunpack.c.0.s8 %v4854
        %v4856 = vlaneseq
        %v4857 = vshrl.u32 %v4856, 7
        %v4858 = vsub.s32 %v4855, %v4857
        %v4859 = vrot.slane %v4740, %v4858
        %v4861 = vunpack.c.l.s4 1966171168
        %v4862 = vunpack.c.0.s8 %v4861
        %v4863 = vlaneseq
        %v4864 = vshrl.u32 %v4863, 7
        %v4865 = vsub.s32 %v4862, %v4864
        %v4866 = vrot.slane %v4859, %v4865
        %v4868 = vunpack.c.l.s4 1966171168
        %v4869 = vunpack.c.0.s8 %v4868
        %v4870 = vlaneseq
        %v4871 = vshrl.u32 %v4870, 7
        %v4872 = vsub.s32 %v4869, %v4871
        %v4873 = vrot.slane %v4741, %v4872
        %v4875 = vunpack.c.l.s4 1966171168
        %v4876 = vunpack.c.0.s8 %v4875
        %v4877 = vlaneseq
        %v4878 = vshrl.u32 %v4877, 7
        %v4879 = vsub.s32 %v4876, %v4878
        %v4880 = vrot.slane %v4873, %v4879
        %v4881 = vunpack.c.l.b16 %v4768
        %v4882 = vunpack.c.l.b16 %v4782
        %v4883 = vunpack.c.l.b16 %v4796
        %v4884 = vunpack.c.l.b16 %v4810
        %v4885 = vunpack.c.l.b16 %v4824
        %v4886 = vunpack.c.l.b16 %v4838
        %v4887 = vunpack.c.l.b16 %v4852
        %v4888 = vunpack.c.l.b16 %v4866
        %v4889 = vunpack.c.l.b16 %v4880
        %v4890 = vrot.slane %v4882, 7
        %v4891 = vsel %vm3658, %v4890, %v4881
        %v4892 = vrot.slane %v4883, 6
        %v4893 = vsel %vm3661, %v4892, %v4891
        %v4894 = vrot.slane %v4884, 5
        %v4895 = vsel %vm3664, %v4894, %v4893
        %v4896 = vrot.slane %v4885, 4
        %v4897 = vsel %vm3667, %v4896, %v4895
        %v4898 = vrot.slane %v4886, 3
        %v4899 = vsel %vm3670, %v4898, %v4897
        %v4900 = vrot.slane %v4887, 2
        %v4901 = vsel %vm3673, %v4900, %v4899
        %v4902 = vrot.slane %v4888, 1
        %v4903 = vsel %vm3676, %v4902, %v4901
        %v4904 = vpack.c.b16 %v4889, %v4903
        %v4909 = vunpack.c.l.b16 %v4742
        %v4910 = vunpack.c.l.b16 %v4743
        %v4911 = vunpack.c.l.b16 %v4744
        %v4912 = vunpack.c.l.b16 %v4745
        %v4913 = vpack.c.b16 %v4910, %v4909
        %v4914 = vpack.c.b16 %v4912, %v4911
        %v4918 = vsel %vm3692, %v4904, 0
        %4920 = vmatprep.subr.bf16.mxu0 0
        %4921 = vmatpush1.bf16.msra.mxu0 %v4913
        %4922 = vmatprep.subr.bf16.mxu0 0
        %4923 = vmatpush1.bf16.msra.mxu0 %v4914
        %4924 = vmatprep.subr.bf16.mxu0 0
        %4925 = vmatpush1.bf16.msra.mxu0 0
        %4926 = vmatprep.subr.bf16.mxu0 0
        %4927 = vmatpush1.bf16.msra.mxu0 0
        %4928 = vmatprep.subr.bf16.mxu0 0
        %4929 = vmatpush1.bf16.msra.mxu0 0
        %4930 = vmatprep.subr.bf16.mxu0 0
        %4931 = vmatpush1.bf16.msra.mxu0 0
        %4932 = vmatprep.subr.bf16.mxu0 0
        %4933 = vmatpush1.bf16.msra.mxu0 0
        %4934 = vmatprep.subr.bf16.mxu0 0
        %4935 = vmatpush1.bf16.msra.mxu0 0
        %4936 = vmatprep.subr.bf16.mxu0 0
        %4937 = vmatpush1.bf16.msra.mxu0 0
        %4938 = vmatprep.subr.bf16.mxu0 0
        %4939 = vmatpush1.bf16.msra.mxu0 0
        %4940 = vmatprep.subr.bf16.mxu0 0
        %4941 = vmatpush1.bf16.msra.mxu0 0
        %4942 = vmatprep.subr.bf16.mxu0 0
        %4943 = vmatpush1.bf16.msra.mxu0 0
        %4944 = vmatprep.subr.bf16.mxu0 0
        %4945 = vmatpush1.bf16.msra.mxu0 0
        %4946 = vmatprep.subr.bf16.mxu0 0
        %4947 = vmatpush1.bf16.msra.mxu0 0
        %4948 = vmatprep.subr.bf16.mxu0 0
        %4949 = vmatpush1.bf16.msra.mxu0 0
        %4950 = vmatprep.subr.bf16.mxu0 0
        %4951 = vmatpush1.bf16.msra.mxu0 0
        %4952 = vmatprep.mubr.bf16.mxu0 0
        %4953 = vmatmul.mubr.bf16.gmra.mrb[0].mxu0 %v4918
        %v4954 = vpop.f32.mrb[0].mxu0
        %v4955 = vadd.f32 0.0, %v4954
        %v4956 = vpop.f32.mrb[0].mxu0
        %v4957 = vpop.f32.mrb[0].mxu0
        %v4958 = vadd.f32 0.0, %v4957
        %v4959 = vpop.f32.mrb[0].mxu0
        %4960 = vdwg.mxu0
        %v4961 = vadd.f32 %v4730, %v4955
        %v4962 = vadd.f32 %v4731, %v4958
        %v4963 = vld [vmem:[%s4732] sm:$0x1]
        %v4964 = vld [vmem:[%s4732 + $0x1] sm:$0x1]
        %v4965 = vld [vmem:[%s4732 + $0x2] sm:$0x1]
        %v4966 = vld [vmem:[%s4732 + $0x8] sm:$0x1]
        %v4967 = vld [vmem:[%s4732 + $0x9] sm:$0x1]
        %v4968 = vld [vmem:[%s4732 + $0xa] sm:$0x1]
        %v4969 = vld [vmem:[%s4732 + $0x10] sm:$0x1]
        %v4970 = vld [vmem:[%s4732 + $0x11] sm:$0x1]
        %v4971 = vld [vmem:[%s4732 + $0x12] sm:$0x1]
        %v4972 = vld [vmem:[%s3 + $0x70] sm:$0xf]
        %v4973 = vld [vmem:[%s3 + $0x74] sm:$0xf]
        %v4974 = vld [vmem:[%s3 + $0x78] sm:$0xf]
        %v4975 = vld [vmem:[%s3 + $0x7c] sm:$0xf]
        %v4986 = vunpack.c.l.s4 1966171168
        %v4987 = vunpack.c.0.s8 %v4986
        %v4988 = vlaneseq
        %v4989 = vshrl.u32 %v4988, 7
        %v4990 = vsub.s32 %v4987, %v4989
        %v4991 = vrot.slane %v4963, %v4990
        %v4993 = vunpack.c.l.s4 1966171168
        %v4994 = vunpack.c.0.s8 %v4993
        %v4995 = vlaneseq
        %v4996 = vshrl.u32 %v4995, 7
        %v4997 = vsub.s32 %v4994, %v4996
        %v4998 = vrot.slane %v4991, %v4997
        %v5000 = vunpack.c.l.s4 1966171168
        %v5001 = vunpack.c.0.s8 %v5000
        %v5002 = vlaneseq
        %v5003 = vshrl.u32 %v5002, 7
        %v5004 = vsub.s32 %v5001, %v5003
        %v5005 = vrot.slane %v4964, %v5004
        %v5007 = vunpack.c.l.s4 1966171168
        %v5008 = vunpack.c.0.s8 %v5007
        %v5009 = vlaneseq
        %v5010 = vshrl.u32 %v5009, 7
        %v5011 = vsub.s32 %v5008, %v5010
        %v5012 = vrot.slane %v5005, %v5011
        %v5014 = vunpack.c.l.s4 1966171168
        %v5015 = vunpack.c.0.s8 %v5014
        %v5016 = vlaneseq
        %v5017 = vshrl.u32 %v5016, 7
        %v5018 = vsub.s32 %v5015, %v5017
        %v5019 = vrot.slane %v4965, %v5018
        %v5021 = vunpack.c.l.s4 1966171168
        %v5022 = vunpack.c.0.s8 %v5021
        %v5023 = vlaneseq
        %v5024 = vshrl.u32 %v5023, 7
        %v5025 = vsub.s32 %v5022, %v5024
        %v5026 = vrot.slane %v5019, %v5025
        %v5028 = vunpack.c.l.s4 1966171168
        %v5029 = vunpack.c.0.s8 %v5028
        %v5030 = vlaneseq
        %v5031 = vshrl.u32 %v5030, 7
        %v5032 = vsub.s32 %v5029, %v5031
        %v5033 = vrot.slane %v4966, %v5032
        %v5035 = vunpack.c.l.s4 1966171168
        %v5036 = vunpack.c.0.s8 %v5035
        %v5037 = vlaneseq
        %v5038 = vshrl.u32 %v5037, 7
        %v5039 = vsub.s32 %v5036, %v5038
        %v5040 = vrot.slane %v5033, %v5039
        %v5042 = vunpack.c.l.s4 1966171168
        %v5043 = vunpack.c.0.s8 %v5042
        %v5044 = vlaneseq
        %v5045 = vshrl.u32 %v5044, 7
        %v5046 = vsub.s32 %v5043, %v5045
        %v5047 = vrot.slane %v4967, %v5046
        %v5049 = vunpack.c.l.s4 1966171168
        %v5050 = vunpack.c.0.s8 %v5049
        %v5051 = vlaneseq
        %v5052 = vshrl.u32 %v5051, 7
        %v5053 = vsub.s32 %v5050, %v5052
        %v5054 = vrot.slane %v5047, %v5053
        %v5056 = vunpack.c.l.s4 1966171168
        %v5057 = vunpack.c.0.s8 %v5056
        %v5058 = vlaneseq
        %v5059 = vshrl.u32 %v5058, 7
        %v5060 = vsub.s32 %v5057, %v5059
        %v5061 = vrot.slane %v4968, %v5060
        %v5063 = vunpack.c.l.s4 1966171168
        %v5064 = vunpack.c.0.s8 %v5063
        %v5065 = vlaneseq
        %v5066 = vshrl.u32 %v5065, 7
        %v5067 = vsub.s32 %v5064, %v5066
        %v5068 = vrot.slane %v5061, %v5067
        %v5070 = vunpack.c.l.s4 1966171168
        %v5071 = vunpack.c.0.s8 %v5070
        %v5072 = vlaneseq
        %v5073 = vshrl.u32 %v5072, 7
        %v5074 = vsub.s32 %v5071, %v5073
        %v5075 = vrot.slane %v4969, %v5074
        %v5077 = vunpack.c.l.s4 1966171168
        %v5078 = vunpack.c.0.s8 %v5077
        %v5079 = vlaneseq
        %v5080 = vshrl.u32 %v5079, 7
        %v5081 = vsub.s32 %v5078, %v5080
        %v5082 = vrot.slane %v5075, %v5081
        %v5084 = vunpack.c.l.s4 1966171168
        %v5085 = vunpack.c.0.s8 %v5084
        %v5086 = vlaneseq
        %v5087 = vshrl.u32 %v5086, 7
        %v5088 = vsub.s32 %v5085, %v5087
        %v5089 = vrot.slane %v4970, %v5088
        %v5091 = vunpack.c.l.s4 1966171168
        %v5092 = vunpack.c.0.s8 %v5091
        %v5093 = vlaneseq
        %v5094 = vshrl.u32 %v5093, 7
        %v5095 = vsub.s32 %v5092, %v5094
        %v5096 = vrot.slane %v5089, %v5095
        %v5098 = vunpack.c.l.s4 1966171168
        %v5099 = vunpack.c.0.s8 %v5098
        %v5100 = vlaneseq
        %v5101 = vshrl.u32 %v5100, 7
        %v5102 = vsub.s32 %v5099, %v5101
        %v5103 = vrot.slane %v4971, %v5102
        %v5105 = vunpack.c.l.s4 1966171168
        %v5106 = vunpack.c.0.s8 %v5105
        %v5107 = vlaneseq
        %v5108 = vshrl.u32 %v5107, 7
        %v5109 = vsub.s32 %v5106, %v5108
        %v5110 = vrot.slane %v5103, %v5109
        %v5111 = vunpack.c.l.b16 %v4998
        %v5112 = vunpack.c.l.b16 %v5012
        %v5113 = vunpack.c.l.b16 %v5026
        %v5114 = vunpack.c.l.b16 %v5040
        %v5115 = vunpack.c.l.b16 %v5054
        %v5116 = vunpack.c.l.b16 %v5068
        %v5117 = vunpack.c.l.b16 %v5082
        %v5118 = vunpack.c.l.b16 %v5096
        %v5119 = vunpack.c.l.b16 %v5110
        %v5120 = vrot.slane %v5111, 1
        %v5121 = vsel %vm3658, %v5112, %v5120
        %v5122 = vrot.slane %v5113, 7
        %v5123 = vsel %vm3661, %v5122, %v5121
        %v5124 = vrot.slane %v5114, 6
        %v5125 = vsel %vm3664, %v5124, %v5123
        %v5126 = vrot.slane %v5115, 5
        %v5127 = vsel %vm3667, %v5126, %v5125
        %v5128 = vrot.slane %v5116, 4
        %v5129 = vsel %vm3670, %v5128, %v5127
        %v5130 = vrot.slane %v5117, 3
        %v5131 = vsel %vm3673, %v5130, %v5129
        %v5132 = vrot.slane %v5118, 2
        %v5133 = vsel %vm3676, %v5132, %v5131
        %v5134 = vrot.slane %v5119, 1
        %v5135 = vpack.c.b16 %v5134, %v5133
        %v5140 = vunpack.c.l.b16 %v4972
        %v5141 = vunpack.c.l.b16 %v4973
        %v5142 = vunpack.c.l.b16 %v4974
        %v5143 = vunpack.c.l.b16 %v4975
        %v5144 = vpack.c.b16 %v5141, %v5140
        %v5145 = vpack.c.b16 %v5143, %v5142
        %v5149 = vsel %vm3692, %v5135, 0
        %5151 = vmatprep.subr.bf16.mxu0 0
        %5152 = vmatpush1.bf16.msra.mxu0 %v5144
        %5153 = vmatprep.subr.bf16.mxu0 0
        %5154 = vmatpush1.bf16.msra.mxu0 %v5145
        %5155 = vmatprep.subr.bf16.mxu0 0
        %5156 = vmatpush1.bf16.msra.mxu0 0
        %5157 = vmatprep.subr.bf16.mxu0 0
        %5158 = vmatpush1.bf16.msra.mxu0 0
        %5159 = vmatprep.subr.bf16.mxu0 0
        %5160 = vmatpush1.bf16.msra.mxu0 0
        %5161 = vmatprep.subr.bf16.mxu0 0
        %5162 = vmatpush1.bf16.msra.mxu0 0
        %5163 = vmatprep.subr.bf16.mxu0 0
        %5164 = vmatpush1.bf16.msra.mxu0 0
        %5165 = vmatprep.subr.bf16.mxu0 0
        %5166 = vmatpush1.bf16.msra.mxu0 0
        %5167 = vmatprep.subr.bf16.mxu0 0
        %5168 = vmatpush1.bf16.msra.mxu0 0
        %5169 = vmatprep.subr.bf16.mxu0 0
        %5170 = vmatpush1.bf16.msra.mxu0 0
        %5171 = vmatprep.subr.bf16.mxu0 0
        %5172 = vmatpush1.bf16.msra.mxu0 0
        %5173 = vmatprep.subr.bf16.mxu0 0
        %5174 = vmatpush1.bf16.msra.mxu0 0
        %5175 = vmatprep.subr.bf16.mxu0 0
        %5176 = vmatpush1.bf16.msra.mxu0 0
        %5177 = vmatprep.subr.bf16.mxu0 0
        %5178 = vmatpush1.bf16.msra.mxu0 0
        %5179 = vmatprep.subr.bf16.mxu0 0
        %5180 = vmatpush1.bf16.msra.mxu0 0
        %5181 = vmatprep.subr.bf16.mxu0 0
        %5182 = vmatpush1.bf16.msra.mxu0 0
        %5183 = vmatprep.mubr.bf16.mxu0 0
        %5184 = vmatmul.mubr.bf16.gmra.mrb[0].mxu0 %v5149
        %v5185 = vpop.f32.mrb[0].mxu0
        %v5186 = vadd.f32 0.0, %v5185
        %v5187 = vpop.f32.mrb[0].mxu0
        %v5188 = vpop.f32.mrb[0].mxu0
        %v5189 = vadd.f32 0.0, %v5188
        %v5190 = vpop.f32.mrb[0].mxu0
        %5191 = vdwg.mxu0
        %v5192 = vadd.f32 %v4961, %v5186
        %v5193 = vadd.f32 %v4962, %v5189
        %s5194 = scalar_lea.vmem [#allocation2], 8
        %v5195 = vld [vmem:[%s5194] sm:$0x1]
        %v5196 = vld [vmem:[%s5194 + $0x1] sm:$0x1]
        %v5197 = vld [vmem:[%s5194 + $0x2] sm:$0x1]
        %v5198 = vld [vmem:[%s5194 + $0x8] sm:$0x1]
        %v5199 = vld [vmem:[%s5194 + $0x9] sm:$0x1]
        %v5200 = vld [vmem:[%s5194 + $0xa] sm:$0x1]
        %v5201 = vld [vmem:[%s5194 + $0x10] sm:$0x1]
        %v5202 = vld [vmem:[%s5194 + $0x11] sm:$0x1]
        %v5203 = vld [vmem:[%s5194 + $0x12] sm:$0x1]
        %v5204 = vld [vmem:[%s3 + $0x80] sm:$0xf]
        %v5205 = vld [vmem:[%s3 + $0x84] sm:$0xf]
        %v5206 = vld [vmem:[%s3 + $0x88] sm:$0xf]
        %v5207 = vld [vmem:[%s3 + $0x8c] sm:$0xf]
        %v5218 = vunpack.c.l.s4 1966171168
        %v5219 = vunpack.c.0.s8 %v5218
        %v5220 = vlaneseq
        %v5221 = vshrl.u32 %v5220, 7
        %v5222 = vsub.s32 %v5219, %v5221
        %v5223 = vrot.slane %v5195, %v5222
        %v5225 = vunpack.c.l.s4 1966171168
        %v5226 = vunpack.c.0.s8 %v5225
        %v5227 = vlaneseq
        %v5228 = vshrl.u32 %v5227, 7
        %v5229 = vsub.s32 %v5226, %v5228
        %v5230 = vrot.slane %v5223, %v5229
        %v5232 = vunpack.c.l.s4 1966171168
        %v5233 = vunpack.c.0.s8 %v5232
        %v5234 = vlaneseq
        %v5235 = vshrl.u32 %v5234, 7
        %v5236 = vsub.s32 %v5233, %v5235
        %v5237 = vrot.slane %v5196, %v5236
        %v5239 = vunpack.c.l.s4 1966171168
        %v5240 = vunpack.c.0.s8 %v5239
        %v5241 = vlaneseq
        %v5242 = vshrl.u32 %v5241, 7
        %v5243 = vsub.s32 %v5240, %v5242
        %v5244 = vrot.slane %v5237, %v5243
        %v5246 = vunpack.c.l.s4 1966171168
        %v5247 = vunpack.c.0.s8 %v5246
        %v5248 = vlaneseq
        %v5249 = vshrl.u32 %v5248, 7
        %v5250 = vsub.s32 %v5247, %v5249
        %v5251 = vrot.slane %v5197, %v5250
        %v5253 = vunpack.c.l.s4 1966171168
        %v5254 = vunpack.c.0.s8 %v5253
        %v5255 = vlaneseq
        %v5256 = vshrl.u32 %v5255, 7
        %v5257 = vsub.s32 %v5254, %v5256
        %v5258 = vrot.slane %v5251, %v5257
        %v5260 = vunpack.c.l.s4 1966171168
        %v5261 = vunpack.c.0.s8 %v5260
        %v5262 = vlaneseq
        %v5263 = vshrl.u32 %v5262, 7
        %v5264 = vsub.s32 %v5261, %v5263
        %v5265 = vrot.slane %v5198, %v5264
        %v5267 = vunpack.c.l.s4 1966171168
        %v5268 = vunpack.c.0.s8 %v5267
        %v5269 = vlaneseq
        %v5270 = vshrl.u32 %v5269, 7
        %v5271 = vsub.s32 %v5268, %v5270
        %v5272 = vrot.slane %v5265, %v5271
        %v5274 = vunpack.c.l.s4 1966171168
        %v5275 = vunpack.c.0.s8 %v5274
        %v5276 = vlaneseq
        %v5277 = vshrl.u32 %v5276, 7
        %v5278 = vsub.s32 %v5275, %v5277
        %v5279 = vrot.slane %v5199, %v5278
        %v5281 = vunpack.c.l.s4 1966171168
        %v5282 = vunpack.c.0.s8 %v5281
        %v5283 = vlaneseq
        %v5284 = vshrl.u32 %v5283, 7
        %v5285 = vsub.s32 %v5282, %v5284
        %v5286 = vrot.slane %v5279, %v5285
        %v5288 = vunpack.c.l.s4 1966171168
        %v5289 = vunpack.c.0.s8 %v5288
        %v5290 = vlaneseq
        %v5291 = vshrl.u32 %v5290, 7
        %v5292 = vsub.s32 %v5289, %v5291
        %v5293 = vrot.slane %v5200, %v5292
        %v5295 = vunpack.c.l.s4 1966171168
        %v5296 = vunpack.c.0.s8 %v5295
        %v5297 = vlaneseq
        %v5298 = vshrl.u32 %v5297, 7
        %v5299 = vsub.s32 %v5296, %v5298
        %v5300 = vrot.slane %v5293, %v5299
        %v5302 = vunpack.c.l.s4 1966171168
        %v5303 = vunpack.c.0.s8 %v5302
        %v5304 = vlaneseq
        %v5305 = vshrl.u32 %v5304, 7
        %v5306 = vsub.s32 %v5303, %v5305
        %v5307 = vrot.slane %v5201, %v5306
        %v5309 = vunpack.c.l.s4 1966171168
        %v5310 = vunpack.c.0.s8 %v5309
        %v5311 = vlaneseq
        %v5312 = vshrl.u32 %v5311, 7
        %v5313 = vsub.s32 %v5310, %v5312
        %v5314 = vrot.slane %v5307, %v5313
        %v5316 = vunpack.c.l.s4 1966171168
        %v5317 = vunpack.c.0.s8 %v5316
        %v5318 = vlaneseq
        %v5319 = vshrl.u32 %v5318, 7
        %v5320 = vsub.s32 %v5317, %v5319
        %v5321 = vrot.slane %v5202, %v5320
        %v5323 = vunpack.c.l.s4 1966171168
        %v5324 = vunpack.c.0.s8 %v5323
        %v5325 = vlaneseq
        %v5326 = vshrl.u32 %v5325, 7
        %v5327 = vsub.s32 %v5324, %v5326
        %v5328 = vrot.slane %v5321, %v5327
        %v5330 = vunpack.c.l.s4 1966171168
        %v5331 = vunpack.c.0.s8 %v5330
        %v5332 = vlaneseq
        %v5333 = vshrl.u32 %v5332, 7
        %v5334 = vsub.s32 %v5331, %v5333
        %v5335 = vrot.slane %v5203, %v5334
        %v5337 = vunpack.c.l.s4 1966171168
        %v5338 = vunpack.c.0.s8 %v5337
        %v5339 = vlaneseq
        %v5340 = vshrl.u32 %v5339, 7
        %v5341 = vsub.s32 %v5338, %v5340
        %v5342 = vrot.slane %v5335, %v5341
        %v5343 = vunpack.c.l.b16 %v5230
        %v5344 = vunpack.c.l.b16 %v5244
        %v5345 = vunpack.c.l.b16 %v5258
        %v5346 = vunpack.c.l.b16 %v5272
        %v5347 = vunpack.c.l.b16 %v5286
        %v5348 = vunpack.c.l.b16 %v5300
        %v5349 = vunpack.c.l.b16 %v5314
        %v5350 = vunpack.c.l.b16 %v5328
        %v5351 = vunpack.c.l.b16 %v5342
        %v5352 = vrot.slane %v5344, 7
        %v5353 = vsel %vm3658, %v5352, %v5343
        %v5354 = vrot.slane %v5345, 6
        %v5355 = vsel %vm3661, %v5354, %v5353
        %v5356 = vrot.slane %v5346, 5
        %v5357 = vsel %vm3664, %v5356, %v5355
        %v5358 = vrot.slane %v5347, 4
        %v5359 = vsel %vm3667, %v5358, %v5357
        %v5360 = vrot.slane %v5348, 3
        %v5361 = vsel %vm3670, %v5360, %v5359
        %v5362 = vrot.slane %v5349, 2
        %v5363 = vsel %vm3673, %v5362, %v5361
        %v5364 = vrot.slane %v5350, 1
        %v5365 = vsel %vm3676, %v5364, %v5363
        %v5366 = vpack.c.b16 %v5351, %v5365
        %v5371 = vunpack.c.l.b16 %v5204
        %v5372 = vunpack.c.l.b16 %v5205
        %v5373 = vunpack.c.l.b16 %v5206
        %v5374 = vunpack.c.l.b16 %v5207
        %v5375 = vpack.c.b16 %v5372, %v5371
        %v5376 = vpack.c.b16 %v5374, %v5373
        %v5380 = vsel %vm3692, %v5366, 0
        %5382 = vmatprep.subr.bf16.mxu0 0
        %5383 = vmatpush1.bf16.msra.mxu0 %v5375
        %5384 = vmatprep.subr.bf16.mxu0 0
        %5385 = vmatpush1.bf16.msra.mxu0 %v5376
        %5386 = vmatprep.subr.bf16.mxu0 0
        %5387 = vmatpush1.bf16.msra.mxu0 0
        %5388 = vmatprep.subr.bf16.mxu0 0
        %5389 = vmatpush1.bf16.msra.mxu0 0
        %5390 = vmatprep.subr.bf16.mxu0 0
        %5391 = vmatpush1.bf16.msra.mxu0 0
        %5392 = vmatprep.subr.bf16.mxu0 0
        %5393 = vmatpush1.bf16.msra.mxu0 0
        %5394 = vmatprep.subr.bf16.mxu0 0
        %5395 = vmatpush1.bf16.msra.mxu0 0
        %5396 = vmatprep.subr.bf16.mxu0 0
        %5397 = vmatpush1.bf16.msra.mxu0 0
        %5398 = vmatprep.subr.bf16.mxu0 0
        %5399 = vmatpush1.bf16.msra.mxu0 0
        %5400 = vmatprep.subr.bf16.mxu0 0
        %5401 = vmatpush1.bf16.msra.mxu0 0
        %5402 = vmatprep.subr.bf16.mxu0 0
        %5403 = vmatpush1.bf16.msra.mxu0 0
        %5404 = vmatprep.subr.bf16.mxu0 0
        %5405 = vmatpush1.bf16.msra.mxu0 0
        %5406 = vmatprep.subr.bf16.mxu0 0
        %5407 = vmatpush1.bf16.msra.mxu0 0
        %5408 = vmatprep.subr.bf16.mxu0 0
        %5409 = vmatpush1.bf16.msra.mxu0 0
        %5410 = vmatprep.subr.bf16.mxu0 0
        %5411 = vmatpush1.bf16.msra.mxu0 0
        %5412 = vmatprep.subr.bf16.mxu0 0
        %5413 = vmatpush1.bf16.msra.mxu0 0
        %5414 = vmatprep.mubr.bf16.mxu0 0
        %5415 = vmatmul.mubr.bf16.gmra.mrb[0].mxu0 %v5380
        %v5416 = vpop.f32.mrb[0].mxu0
        %v5417 = vadd.f32 0.0, %v5416
        %v5418 = vpop.f32.mrb[0].mxu0
        %v5419 = vpop.f32.mrb[0].mxu0
        %v5420 = vadd.f32 0.0, %v5419
        %v5421 = vpop.f32.mrb[0].mxu0
        %5422 = vdwg.mxu0
        %v5423 = vadd.f32 %v5192, %v5417
        %v5424 = vadd.f32 %v5193, %v5420
        %v5425 = vld [vmem:[%s5194] sm:$0x1]
        %v5426 = vld [vmem:[%s5194 + $0x1] sm:$0x1]
        %v5427 = vld [vmem:[%s5194 + $0x2] sm:$0x1]
        %v5428 = vld [vmem:[%s5194 + $0x8] sm:$0x1]
        %v5429 = vld [vmem:[%s5194 + $0x9] sm:$0x1]
        %v5430 = vld [vmem:[%s5194 + $0xa] sm:$0x1]
        %v5431 = vld [vmem:[%s5194 + $0x10] sm:$0x1]
        %v5432 = vld [vmem:[%s5194 + $0x11] sm:$0x1]
        %v5433 = vld [vmem:[%s5194 + $0x12] sm:$0x1]
        %v5434 = vld [vmem:[%s3 + $0x90] sm:$0xf]
        %v5435 = vld [vmem:[%s3 + $0x94] sm:$0xf]
        %v5436 = vld [vmem:[%s3 + $0x98] sm:$0xf]
        %v5437 = vld [vmem:[%s3 + $0x9c] sm:$0xf]
        %v5448 = vunpack.c.l.s4 1966171168
        %v5449 = vunpack.c.0.s8 %v5448
        %v5450 = vlaneseq
        %v5451 = vshrl.u32 %v5450, 7
        %v5452 = vsub.s32 %v5449, %v5451
        %v5453 = vrot.slane %v5425, %v5452
        %v5455 = vunpack.c.l.s4 1966171168
        %v5456 = vunpack.c.0.s8 %v5455
        %v5457 = vlaneseq
        %v5458 = vshrl.u32 %v5457, 7
        %v5459 = vsub.s32 %v5456, %v5458
        %v5460 = vrot.slane %v5453, %v5459
        %v5462 = vunpack.c.l.s4 1966171168
        %v5463 = vunpack.c.0.s8 %v5462
        %v5464 = vlaneseq
        %v5465 = vshrl.u32 %v5464, 7
        %v5466 = vsub.s32 %v5463, %v5465
        %v5467 = vrot.slane %v5426, %v5466
        %v5469 = vunpack.c.l.s4 1966171168
        %v5470 = vunpack.c.0.s8 %v5469
        %v5471 = vlaneseq
        %v5472 = vshrl.u32 %v5471, 7
        %v5473 = vsub.s32 %v5470, %v5472
        %v5474 = vrot.slane %v5467, %v5473
        %v5476 = vunpack.c.l.s4 1966171168
        %v5477 = vunpack.c.0.s8 %v5476
        %v5478 = vlaneseq
        %v5479 = vshrl.u32 %v5478, 7
        %v5480 = vsub.s32 %v5477, %v5479
        %v5481 = vrot.slane %v5427, %v5480
        %v5483 = vunpack.c.l.s4 1966171168
        %v5484 = vunpack.c.0.s8 %v5483
        %v5485 = vlaneseq
        %v5486 = vshrl.u32 %v5485, 7
        %v5487 = vsub.s32 %v5484, %v5486
        %v5488 = vrot.slane %v5481, %v5487
        %v5490 = vunpack.c.l.s4 1966171168
        %v5491 = vunpack.c.0.s8 %v5490
        %v5492 = vlaneseq
        %v5493 = vshrl.u32 %v5492, 7
        %v5494 = vsub.s32 %v5491, %v5493
        %v5495 = vrot.slane %v5428, %v5494
        %v5497 = vunpack.c.l.s4 1966171168
        %v5498 = vunpack.c.0.s8 %v5497
        %v5499 = vlaneseq
        %v5500 = vshrl.u32 %v5499, 7
        %v5501 = vsub.s32 %v5498, %v5500
        %v5502 = vrot.slane %v5495, %v5501
        %v5504 = vunpack.c.l.s4 1966171168
        %v5505 = vunpack.c.0.s8 %v5504
        %v5506 = vlaneseq
        %v5507 = vshrl.u32 %v5506, 7
        %v5508 = vsub.s32 %v5505, %v5507
        %v5509 = vrot.slane %v5429, %v5508
        %v5511 = vunpack.c.l.s4 1966171168
        %v5512 = vunpack.c.0.s8 %v5511
        %v5513 = vlaneseq
        %v5514 = vshrl.u32 %v5513, 7
        %v5515 = vsub.s32 %v5512, %v5514
        %v5516 = vrot.slane %v5509, %v5515
        %v5518 = vunpack.c.l.s4 1966171168
        %v5519 = vunpack.c.0.s8 %v5518
        %v5520 = vlaneseq
        %v5521 = vshrl.u32 %v5520, 7
        %v5522 = vsub.s32 %v5519, %v5521
        %v5523 = vrot.slane %v5430, %v5522
        %v5525 = vunpack.c.l.s4 1966171168
        %v5526 = vunpack.c.0.s8 %v5525
        %v5527 = vlaneseq
        %v5528 = vshrl.u32 %v5527, 7
        %v5529 = vsub.s32 %v5526, %v5528
        %v5530 = vrot.slane %v5523, %v5529
        %v5532 = vunpack.c.l.s4 1966171168
        %v5533 = vunpack.c.0.s8 %v5532
        %v5534 = vlaneseq
        %v5535 = vshrl.u32 %v5534, 7
        %v5536 = vsub.s32 %v5533, %v5535
        %v5537 = vrot.slane %v5431, %v5536
        %v5539 = vunpack.c.l.s4 1966171168
        %v5540 = vunpack.c.0.s8 %v5539
        %v5541 = vlaneseq
        %v5542 = vshrl.u32 %v5541, 7
        %v5543 = vsub.s32 %v5540, %v5542
        %v5544 = vrot.slane %v5537, %v5543
        %v5546 = vunpack.c.l.s4 1966171168
        %v5547 = vunpack.c.0.s8 %v5546
        %v5548 = vlaneseq
        %v5549 = vshrl.u32 %v5548, 7
        %v5550 = vsub.s32 %v5547, %v5549
        %v5551 = vrot.slane %v5432, %v5550
        %v5553 = vunpack.c.l.s4 1966171168
        %v5554 = vunpack.c.0.s8 %v5553
        %v5555 = vlaneseq
        %v5556 = vshrl.u32 %v5555, 7
        %v5557 = vsub.s32 %v5554, %v5556
        %v5558 = vrot.slane %v5551, %v5557
        %v5560 = vunpack.c.l.s4 1966171168
        %v5561 = vunpack.c.0.s8 %v5560
        %v5562 = vlaneseq
        %v5563 = vshrl.u32 %v5562, 7
        %v5564 = vsub.s32 %v5561, %v5563
        %v5565 = vrot.slane %v5433, %v5564
        %v5567 = vunpack.c.l.s4 1966171168
        %v5568 = vunpack.c.0.s8 %v5567
        %v5569 = vlaneseq
        %v5570 = vshrl.u32 %v5569, 7
        %v5571 = vsub.s32 %v5568, %v5570
        %v5572 = vrot.slane %v5565, %v5571
        %v5573 = vunpack.c.l.b16 %v5460
        %v5574 = vunpack.c.l.b16 %v5474
        %v5575 = vunpack.c.l.b16 %v5488
        %v5576 = vunpack.c.l.b16 %v5502
        %v5577 = vunpack.c.l.b16 %v5516
        %v5578 = vunpack.c.l.b16 %v5530
        %v5579 = vunpack.c.l.b16 %v5544
        %v5580 = vunpack.c.l.b16 %v5558
        %v5581 = vunpack.c.l.b16 %v5572
        %v5582 = vrot.slane %v5573, 1
        %v5583 = vsel %vm3658, %v5574, %v5582
        %v5584 = vrot.slane %v5575, 7
        %v5585 = vsel %vm3661, %v5584, %v5583
        %v5586 = vrot.slane %v5576, 6
        %v5587 = vsel %vm3664, %v5586, %v5585
        %v5588 = vrot.slane %v5577, 5
        %v5589 = vsel %vm3667, %v5588, %v5587
        %v5590 = vrot.slane %v5578, 4
        %v5591 = vsel %vm3670, %v5590, %v5589
        %v5592 = vrot.slane %v5579, 3
        %v5593 = vsel %vm3673, %v5592, %v5591
        %v5594 = vrot.slane %v5580, 2
        %v5595 = vsel %vm3676, %v5594, %v5593
        %v5596 = vrot.slane %v5581, 1
        %v5597 = vpack.c.b16 %v5596, %v5595
        %v5602 = vunpack.c.l.b16 %v5434
        %v5603 = vunpack.c.l.b16 %v5435
        %v5604 = vunpack.c.l.b16 %v5436
        %v5605 = vunpack.c.l.b16 %v5437
        %v5606 = vpack.c.b16 %v5603, %v5602
        %v5607 = vpack.c.b16 %v5605, %v5604
        %v5611 = vsel %vm3692, %v5597, 0
        %5613 = vmatprep.subr.bf16.mxu0 0
        %5614 = vmatpush1.bf16.msra.mxu0 %v5606
        %5615 = vmatprep.subr.bf16.mxu0 0
        %5616 = vmatpush1.bf16.msra.mxu0 %v5607
        %5617 = vmatprep.subr.bf16.mxu0 0
        %5618 = vmatpush1.bf16.msra.mxu0 0
        %5619 = vmatprep.subr.bf16.mxu0 0
        %5620 = vmatpush1.bf16.msra.mxu0 0
        %5621 = vmatprep.subr.bf16.mxu0 0
        %5622 = vmatpush1.bf16.msra.mxu0 0
        %5623 = vmatprep.subr.bf16.mxu0 0
        %5624 = vmatpush1.bf16.msra.mxu0 0
        %5625 = vmatprep.subr.bf16.mxu0 0
        %5626 = vmatpush1.bf16.msra.mxu0 0
        %5627 = vmatprep.subr.bf16.mxu0 0
        %5628 = vmatpush1.bf16.msra.mxu0 0
        %5629 = vmatprep.subr.bf16.mxu0 0
        %5630 = vmatpush1.bf16.msra.mxu0 0
        %5631 = vmatprep.subr.bf16.mxu0 0
        %5632 = vmatpush1.bf16.msra.mxu0 0
        %5633 = vmatprep.subr.bf16.mxu0 0
        %5634 = vmatpush1.bf16.msra.mxu0 0
        %5635 = vmatprep.subr.bf16.mxu0 0
        %5636 = vmatpush1.bf16.msra.mxu0 0
        %5637 = vmatprep.subr.bf16.mxu0 0
        %5638 = vmatpush1.bf16.msra.mxu0 0
        %5639 = vmatprep.subr.bf16.mxu0 0
        %5640 = vmatpush1.bf16.msra.mxu0 0
        %5641 = vmatprep.subr.bf16.mxu0 0
        %5642 = vmatpush1.bf16.msra.mxu0 0
        %5643 = vmatprep.subr.bf16.mxu0 0
        %5644 = vmatpush1.bf16.msra.mxu0 0
        %5645 = vmatprep.mubr.bf16.mxu0 0
        %5646 = vmatmul.mubr.bf16.gmra.mrb[0].mxu0 %v5611
        %v5647 = vpop.f32.mrb[0].mxu0
        %v5648 = vadd.f32 0.0, %v5647
        %v5649 = vpop.f32.mrb[0].mxu0
        %v5650 = vpop.f32.mrb[0].mxu0
        %v5651 = vadd.f32 0.0, %v5650
        %v5652 = vpop.f32.mrb[0].mxu0
        %5653 = vdwg.mxu0
        %v5654 = vadd.f32 %v5423, %v5648
        %v5655 = vadd.f32 %v5424, %v5651
        %s5656 = scalar_lea.vmem [#allocation2], 9
        %v5657 = vld [vmem:[%s5656] sm:$0x1]
        %v5658 = vld [vmem:[%s5656 + $0x1] sm:$0x1]
        %v5659 = vld [vmem:[%s5656 + $0x2] sm:$0x1]
        %v5660 = vld [vmem:[%s5656 + $0x8] sm:$0x1]
        %v5661 = vld [vmem:[%s5656 + $0x9] sm:$0x1]
        %v5662 = vld [vmem:[%s5656 + $0xa] sm:$0x1]
        %v5663 = vld [vmem:[%s5656 + $0x10] sm:$0x1]
        %v5664 = vld [vmem:[%s5656 + $0x11] sm:$0x1]
        %v5665 = vld [vmem:[%s5656 + $0x12] sm:$0x1]
        %v5666 = vld [vmem:[%s3 + $0xa0] sm:$0xf]
        %v5667 = vld [vmem:[%s3 + $0xa4] sm:$0xf]
        %v5668 = vld [vmem:[%s3 + $0xa8] sm:$0xf]
        %v5669 = vld [vmem:[%s3 + $0xac] sm:$0xf]
        %v5680 = vunpack.c.l.s4 1966171168
        %v5681 = vunpack.c.0.s8 %v5680
        %v5682 = vlaneseq
        %v5683 = vshrl.u32 %v5682, 7
        %v5684 = vsub.s32 %v5681, %v5683
        %v5685 = vrot.slane %v5657, %v5684
        %v5687 = vunpack.c.l.s4 1966171168
        %v5688 = vunpack.c.0.s8 %v5687
        %v5689 = vlaneseq
        %v5690 = vshrl.u32 %v5689, 7
        %v5691 = vsub.s32 %v5688, %v5690
        %v5692 = vrot.slane %v5685, %v5691
        %v5694 = vunpack.c.l.s4 1966171168
        %v5695 = vunpack.c.0.s8 %v5694
        %v5696 = vlaneseq
        %v5697 = vshrl.u32 %v5696, 7
        %v5698 = vsub.s32 %v5695, %v5697
        %v5699 = vrot.slane %v5658, %v5698
        %v5701 = vunpack.c.l.s4 1966171168
        %v5702 = vunpack.c.0.s8 %v5701
        %v5703 = vlaneseq
        %v5704 = vshrl.u32 %v5703, 7
        %v5705 = vsub.s32 %v5702, %v5704
        %v5706 = vrot.slane %v5699, %v5705
        %v5708 = vunpack.c.l.s4 1966171168
        %v5709 = vunpack.c.0.s8 %v5708
        %v5710 = vlaneseq
        %v5711 = vshrl.u32 %v5710, 7
        %v5712 = vsub.s32 %v5709, %v5711
        %v5713 = vrot.slane %v5659, %v5712
        %v5715 = vunpack.c.l.s4 1966171168
        %v5716 = vunpack.c.0.s8 %v5715
        %v5717 = vlaneseq
        %v5718 = vshrl.u32 %v5717, 7
        %v5719 = vsub.s32 %v5716, %v5718
        %v5720 = vrot.slane %v5713, %v5719
        %v5722 = vunpack.c.l.s4 1966171168
        %v5723 = vunpack.c.0.s8 %v5722
        %v5724 = vlaneseq
        %v5725 = vshrl.u32 %v5724, 7
        %v5726 = vsub.s32 %v5723, %v5725
        %v5727 = vrot.slane %v5660, %v5726
        %v5729 = vunpack.c.l.s4 1966171168
        %v5730 = vunpack.c.0.s8 %v5729
        %v5731 = vlaneseq
        %v5732 = vshrl.u32 %v5731, 7
        %v5733 = vsub.s32 %v5730, %v5732
        %v5734 = vrot.slane %v5727, %v5733
        %v5736 = vunpack.c.l.s4 1966171168
        %v5737 = vunpack.c.0.s8 %v5736
        %v5738 = vlaneseq
        %v5739 = vshrl.u32 %v5738, 7
        %v5740 = vsub.s32 %v5737, %v5739
        %v5741 = vrot.slane %v5661, %v5740
        %v5743 = vunpack.c.l.s4 1966171168
        %v5744 = vunpack.c.0.s8 %v5743
        %v5745 = vlaneseq
        %v5746 = vshrl.u32 %v5745, 7
        %v5747 = vsub.s32 %v5744, %v5746
        %v5748 = vrot.slane %v5741, %v5747
        %v5750 = vunpack.c.l.s4 1966171168
        %v5751 = vunpack.c.0.s8 %v5750
        %v5752 = vlaneseq
        %v5753 = vshrl.u32 %v5752, 7
        %v5754 = vsub.s32 %v5751, %v5753
        %v5755 = vrot.slane %v5662, %v5754
        %v5757 = vunpack.c.l.s4 1966171168
        %v5758 = vunpack.c.0.s8 %v5757
        %v5759 = vlaneseq
        %v5760 = vshrl.u32 %v5759, 7
        %v5761 = vsub.s32 %v5758, %v5760
        %v5762 = vrot.slane %v5755, %v5761
        %v5764 = vunpack.c.l.s4 1966171168
        %v5765 = vunpack.c.0.s8 %v5764
        %v5766 = vlaneseq
        %v5767 = vshrl.u32 %v5766, 7
        %v5768 = vsub.s32 %v5765, %v5767
        %v5769 = vrot.slane %v5663, %v5768
        %v5771 = vunpack.c.l.s4 1966171168
        %v5772 = vunpack.c.0.s8 %v5771
        %v5773 = vlaneseq
        %v5774 = vshrl.u32 %v5773, 7
        %v5775 = vsub.s32 %v5772, %v5774
        %v5776 = vrot.slane %v5769, %v5775
        %v5778 = vunpack.c.l.s4 1966171168
        %v5779 = vunpack.c.0.s8 %v5778
        %v5780 = vlaneseq
        %v5781 = vshrl.u32 %v5780, 7
        %v5782 = vsub.s32 %v5779, %v5781
        %v5783 = vrot.slane %v5664, %v5782
        %v5785 = vunpack.c.l.s4 1966171168
        %v5786 = vunpack.c.0.s8 %v5785
        %v5787 = vlaneseq
        %v5788 = vshrl.u32 %v5787, 7
        %v5789 = vsub.s32 %v5786, %v5788
        %v5790 = vrot.slane %v5783, %v5789
        %v5792 = vunpack.c.l.s4 1966171168
        %v5793 = vunpack.c.0.s8 %v5792
        %v5794 = vlaneseq
        %v5795 = vshrl.u32 %v5794, 7
        %v5796 = vsub.s32 %v5793, %v5795
        %v5797 = vrot.slane %v5665, %v5796
        %v5799 = vunpack.c.l.s4 1966171168
        %v5800 = vunpack.c.0.s8 %v5799
        %v5801 = vlaneseq
        %v5802 = vshrl.u32 %v5801, 7
        %v5803 = vsub.s32 %v5800, %v5802
        %v5804 = vrot.slane %v5797, %v5803
        %v5805 = vunpack.c.l.b16 %v5692
        %v5806 = vunpack.c.l.b16 %v5706
        %v5807 = vunpack.c.l.b16 %v5720
        %v5808 = vunpack.c.l.b16 %v5734
        %v5809 = vunpack.c.l.b16 %v5748
        %v5810 = vunpack.c.l.b16 %v5762
        %v5811 = vunpack.c.l.b16 %v5776
        %v5812 = vunpack.c.l.b16 %v5790
        %v5813 = vunpack.c.l.b16 %v5804
        %v5814 = vrot.slane %v5806, 7
        %v5815 = vsel %vm3658, %v5814, %v5805
        %v5816 = vrot.slane %v5807, 6
        %v5817 = vsel %vm3661, %v5816, %v5815
        %v5818 = vrot.slane %v5808, 5
        %v5819 = vsel %vm3664, %v5818, %v5817
        %v5820 = vrot.slane %v5809, 4
        %v5821 = vsel %vm3667, %v5820, %v5819
        %v5822 = vrot.slane %v5810, 3
        %v5823 = vsel %vm3670, %v5822, %v5821
        %v5824 = vrot.slane %v5811, 2
        %v5825 = vsel %vm3673, %v5824, %v5823
        %v5826 = vrot.slane %v5812, 1
        %v5827 = vsel %vm3676, %v5826, %v5825
        %v5828 = vpack.c.b16 %v5813, %v5827
        %v5833 = vunpack.c.l.b16 %v5666
        %v5834 = vunpack.c.l.b16 %v5667
        %v5835 = vunpack.c.l.b16 %v5668
        %v5836 = vunpack.c.l.b16 %v5669
        %v5837 = vpack.c.b16 %v5834, %v5833
        %v5838 = vpack.c.b16 %v5836, %v5835
        %v5842 = vsel %vm3692, %v5828, 0
        %5844 = vmatprep.subr.bf16.mxu0 0
        %5845 = vmatpush1.bf16.msra.mxu0 %v5837
        %5846 = vmatprep.subr.bf16.mxu0 0
        %5847 = vmatpush1.bf16.msra.mxu0 %v5838
        %5848 = vmatprep.subr.bf16.mxu0 0
        %5849 = vmatpush1.bf16.msra.mxu0 0
        %5850 = vmatprep.subr.bf16.mxu0 0
        %5851 = vmatpush1.bf16.msra.mxu0 0
        %5852 = vmatprep.subr.bf16.mxu0 0
        %5853 = vmatpush1.bf16.msra.mxu0 0
        %5854 = vmatprep.subr.bf16.mxu0 0
        %5855 = vmatpush1.bf16.msra.mxu0 0
        %5856 = vmatprep.subr.bf16.mxu0 0
        %5857 = vmatpush1.bf16.msra.mxu0 0
        %5858 = vmatprep.subr.bf16.mxu0 0
        %5859 = vmatpush1.bf16.msra.mxu0 0
        %5860 = vmatprep.subr.bf16.mxu0 0
        %5861 = vmatpush1.bf16.msra.mxu0 0
        %5862 = vmatprep.subr.bf16.mxu0 0
        %5863 = vmatpush1.bf16.msra.mxu0 0
        %5864 = vmatprep.subr.bf16.mxu0 0
        %5865 = vmatpush1.bf16.msra.mxu0 0
        %5866 = vmatprep.subr.bf16.mxu0 0
        %5867 = vmatpush1.bf16.msra.mxu0 0
        %5868 = vmatprep.subr.bf16.mxu0 0
        %5869 = vmatpush1.bf16.msra.mxu0 0
        %5870 = vmatprep.subr.bf16.mxu0 0
        %5871 = vmatpush1.bf16.msra.mxu0 0
        %5872 = vmatprep.subr.bf16.mxu0 0
        %5873 = vmatpush1.bf16.msra.mxu0 0
        %5874 = vmatprep.subr.bf16.mxu0 0
        %5875 = vmatpush1.bf16.msra.mxu0 0
        %5876 = vmatprep.mubr.bf16.mxu0 0
        %5877 = vmatmul.mubr.bf16.gmra.mrb[0].mxu0 %v5842
        %v5878 = vpop.f32.mrb[0].mxu0
        %v5879 = vadd.f32 0.0, %v5878
        %v5880 = vpop.f32.mrb[0].mxu0
        %v5881 = vpop.f32.mrb[0].mxu0
        %v5882 = vadd.f32 0.0, %v5881
        %v5883 = vpop.f32.mrb[0].mxu0
        %5884 = vdwg.mxu0
        %v5885 = vadd.f32 %v5654, %v5879
        %v5886 = vadd.f32 %v5655, %v5882
        %v5887 = vld [vmem:[%s5656] sm:$0x1]
        %v5888 = vld [vmem:[%s5656 + $0x1] sm:$0x1]
        %v5889 = vld [vmem:[%s5656 + $0x2] sm:$0x1]
        %v5890 = vld [vmem:[%s5656 + $0x8] sm:$0x1]
        %v5891 = vld [vmem:[%s5656 + $0x9] sm:$0x1]
        %v5892 = vld [vmem:[%s5656 + $0xa] sm:$0x1]
        %v5893 = vld [vmem:[%s5656 + $0x10] sm:$0x1]
        %v5894 = vld [vmem:[%s5656 + $0x11] sm:$0x1]
        %v5895 = vld [vmem:[%s5656 + $0x12] sm:$0x1]
        %v5896 = vld [vmem:[%s3 + $0xb0] sm:$0xf]
        %v5897 = vld [vmem:[%s3 + $0xb4] sm:$0xf]
        %v5898 = vld [vmem:[%s3 + $0xb8] sm:$0xf]
        %v5899 = vld [vmem:[%s3 + $0xbc] sm:$0xf]
        %v5910 = vunpack.c.l.s4 1966171168
        %v5911 = vunpack.c.0.s8 %v5910
        %v5912 = vlaneseq
        %v5913 = vshrl.u32 %v5912, 7
        %v5914 = vsub.s32 %v5911, %v5913
        %v5915 = vrot.slane %v5887, %v5914
        %v5917 = vunpack.c.l.s4 1966171168
        %v5918 = vunpack.c.0.s8 %v5917
        %v5919 = vlaneseq
        %v5920 = vshrl.u32 %v5919, 7
        %v5921 = vsub.s32 %v5918, %v5920
        %v5922 = vrot.slane %v5915, %v5921
        %v5924 = vunpack.c.l.s4 1966171168
        %v5925 = vunpack.c.0.s8 %v5924
        %v5926 = vlaneseq
        %v5927 = vshrl.u32 %v5926, 7
        %v5928 = vsub.s32 %v5925, %v5927
        %v5929 = vrot.slane %v5888, %v5928
        %v5931 = vunpack.c.l.s4 1966171168
        %v5932 = vunpack.c.0.s8 %v5931
        %v5933 = vlaneseq
        %v5934 = vshrl.u32 %v5933, 7
        %v5935 = vsub.s32 %v5932, %v5934
        %v5936 = vrot.slane %v5929, %v5935
        %v5938 = vunpack.c.l.s4 1966171168
        %v5939 = vunpack.c.0.s8 %v5938
        %v5940 = vlaneseq
        %v5941 = vshrl.u32 %v5940, 7
        %v5942 = vsub.s32 %v5939, %v5941
        %v5943 = vrot.slane %v5889, %v5942
        %v5945 = vunpack.c.l.s4 1966171168
        %v5946 = vunpack.c.0.s8 %v5945
        %v5947 = vlaneseq
        %v5948 = vshrl.u32 %v5947, 7
        %v5949 = vsub.s32 %v5946, %v5948
        %v5950 = vrot.slane %v5943, %v5949
        %v5952 = vunpack.c.l.s4 1966171168
        %v5953 = vunpack.c.0.s8 %v5952
        %v5954 = vlaneseq
        %v5955 = vshrl.u32 %v5954, 7
        %v5956 = vsub.s32 %v5953, %v5955
        %v5957 = vrot.slane %v5890, %v5956
        %v5959 = vunpack.c.l.s4 1966171168
        %v5960 = vunpack.c.0.s8 %v5959
        %v5961 = vlaneseq
        %v5962 = vshrl.u32 %v5961, 7
        %v5963 = vsub.s32 %v5960, %v5962
        %v5964 = vrot.slane %v5957, %v5963
        %v5966 = vunpack.c.l.s4 1966171168
        %v5967 = vunpack.c.0.s8 %v5966
        %v5968 = vlaneseq
        %v5969 = vshrl.u32 %v5968, 7
        %v5970 = vsub.s32 %v5967, %v5969
        %v5971 = vrot.slane %v5891, %v5970
        %v5973 = vunpack.c.l.s4 1966171168
        %v5974 = vunpack.c.0.s8 %v5973
        %v5975 = vlaneseq
        %v5976 = vshrl.u32 %v5975, 7
        %v5977 = vsub.s32 %v5974, %v5976
        %v5978 = vrot.slane %v5971, %v5977
        %v5980 = vunpack.c.l.s4 1966171168
        %v5981 = vunpack.c.0.s8 %v5980
        %v5982 = vlaneseq
        %v5983 = vshrl.u32 %v5982, 7
        %v5984 = vsub.s32 %v5981, %v5983
        %v5985 = vrot.slane %v5892, %v5984
        %v5987 = vunpack.c.l.s4 1966171168
        %v5988 = vunpack.c.0.s8 %v5987
        %v5989 = vlaneseq
        %v5990 = vshrl.u32 %v5989, 7
        %v5991 = vsub.s32 %v5988, %v5990
        %v5992 = vrot.slane %v5985, %v5991
        %v5994 = vunpack.c.l.s4 1966171168
        %v5995 = vunpack.c.0.s8 %v5994
        %v5996 = vlaneseq
        %v5997 = vshrl.u32 %v5996, 7
        %v5998 = vsub.s32 %v5995, %v5997
        %v5999 = vrot.slane %v5893, %v5998
        %v6001 = vunpack.c.l.s4 1966171168
        %v6002 = vunpack.c.0.s8 %v6001
        %v6003 = vlaneseq
        %v6004 = vshrl.u32 %v6003, 7
        %v6005 = vsub.s32 %v6002, %v6004
        %v6006 = vrot.slane %v5999, %v6005
        %v6008 = vunpack.c.l.s4 1966171168
        %v6009 = vunpack.c.0.s8 %v6008
        %v6010 = vlaneseq
        %v6011 = vshrl.u32 %v6010, 7
        %v6012 = vsub.s32 %v6009, %v6011
        %v6013 = vrot.slane %v5894, %v6012
        %v6015 = vunpack.c.l.s4 1966171168
        %v6016 = vunpack.c.0.s8 %v6015
        %v6017 = vlaneseq
        %v6018 = vshrl.u32 %v6017, 7
        %v6019 = vsub.s32 %v6016, %v6018
        %v6020 = vrot.slane %v6013, %v6019
        %v6022 = vunpack.c.l.s4 1966171168
        %v6023 = vunpack.c.0.s8 %v6022
        %v6024 = vlaneseq
        %v6025 = vshrl.u32 %v6024, 7
        %v6026 = vsub.s32 %v6023, %v6025
        %v6027 = vrot.slane %v5895, %v6026
        %v6029 = vunpack.c.l.s4 1966171168
        %v6030 = vunpack.c.0.s8 %v6029
        %v6031 = vlaneseq
        %v6032 = vshrl.u32 %v6031, 7
        %v6033 = vsub.s32 %v6030, %v6032
        %v6034 = vrot.slane %v6027, %v6033
        %v6035 = vunpack.c.l.b16 %v5922
        %v6036 = vunpack.c.l.b16 %v5936
        %v6037 = vunpack.c.l.b16 %v5950
        %v6038 = vunpack.c.l.b16 %v5964
        %v6039 = vunpack.c.l.b16 %v5978
        %v6040 = vunpack.c.l.b16 %v5992
        %v6041 = vunpack.c.l.b16 %v6006
        %v6042 = vunpack.c.l.b16 %v6020
        %v6043 = vunpack.c.l.b16 %v6034
        %v6044 = vrot.slane %v6035, 1
        %v6045 = vsel %vm3658, %v6036, %v6044
        %v6046 = vrot.slane %v6037, 7
        %v6047 = vsel %vm3661, %v6046, %v6045
        %v6048 = vrot.slane %v6038, 6
        %v6049 = vsel %vm3664, %v6048, %v6047
        %v6050 = vrot.slane %v6039, 5
        %v6051 = vsel %vm3667, %v6050, %v6049
        %v6052 = vrot.slane %v6040, 4
        %v6053 = vsel %vm3670, %v6052, %v6051
        %v6054 = vrot.slane %v6041, 3
        %v6055 = vsel %vm3673, %v6054, %v6053
        %v6056 = vrot.slane %v6042, 2
        %v6057 = vsel %vm3676, %v6056, %v6055
        %v6058 = vrot.slane %v6043, 1
        %v6059 = vpack.c.b16 %v6058, %v6057
        %v6064 = vunpack.c.l.b16 %v5896
        %v6065 = vunpack.c.l.b16 %v5897
        %v6066 = vunpack.c.l.b16 %v5898
        %v6067 = vunpack.c.l.b16 %v5899
        %v6068 = vpack.c.b16 %v6065, %v6064
        %v6069 = vpack.c.b16 %v6067, %v6066
        %v6073 = vsel %vm3692, %v6059, 0
        %6075 = vmatprep.subr.bf16.mxu0 0
        %6076 = vmatpush1.bf16.msra.mxu0 %v6068
        %6077 = vmatprep.subr.bf16.mxu0 0
        %6078 = vmatpush1.bf16.msra.mxu0 %v6069
        %6079 = vmatprep.subr.bf16.mxu0 0
        %6080 = vmatpush1.bf16.msra.mxu0 0
        %6081 = vmatprep.subr.bf16.mxu0 0
        %6082 = vmatpush1.bf16.msra.mxu0 0
        %6083 = vmatprep.subr.bf16.mxu0 0
        %6084 = vmatpush1.bf16.msra.mxu0 0
        %6085 = vmatprep.subr.bf16.mxu0 0
        %6086 = vmatpush1.bf16.msra.mxu0 0
        %6087 = vmatprep.subr.bf16.mxu0 0
        %6088 = vmatpush1.bf16.msra.mxu0 0
        %6089 = vmatprep.subr.bf16.mxu0 0
        %6090 = vmatpush1.bf16.msra.mxu0 0
        %6091 = vmatprep.subr.bf16.mxu0 0
        %6092 = vmatpush1.bf16.msra.mxu0 0
        %6093 = vmatprep.subr.bf16.mxu0 0
        %6094 = vmatpush1.bf16.msra.mxu0 0
        %6095 = vmatprep.subr.bf16.mxu0 0
        %6096 = vmatpush1.bf16.msra.mxu0 0
        %6097 = vmatprep.subr.bf16.mxu0 0
        %6098 = vmatpush1.bf16.msra.mxu0 0
        %6099 = vmatprep.subr.bf16.mxu0 0
        %6100 = vmatpush1.bf16.msra.mxu0 0
        %6101 = vmatprep.subr.bf16.mxu0 0
        %6102 = vmatpush1.bf16.msra.mxu0 0
        %6103 = vmatprep.subr.bf16.mxu0 0
        %6104 = vmatpush1.bf16.msra.mxu0 0
        %6105 = vmatprep.subr.bf16.mxu0 0
        %6106 = vmatpush1.bf16.msra.mxu0 0
        %6107 = vmatprep.mubr.bf16.mxu0 0
        %6108 = vmatmul.mubr.bf16.gmra.mrb[0].mxu0 %v6073
        %v6109 = vpop.f32.mrb[0].mxu0
        %v6110 = vadd.f32 0.0, %v6109
        %v6111 = vpop.f32.mrb[0].mxu0
        %v6112 = vpop.f32.mrb[0].mxu0
        %v6113 = vadd.f32 0.0, %v6112
        %v6114 = vpop.f32.mrb[0].mxu0
        %6115 = vdwg.mxu0
        %v6116 = vadd.f32 %v5885, %v6110
        %v6117 = vadd.f32 %v5886, %v6113
        %s6118 = scalar_lea.vmem [#allocation2], 12
        %v6119 = vld [vmem:[%s6118] sm:$0x1]
        %v6120 = vld [vmem:[%s6118 + $0x1] sm:$0x1]
        %v6121 = vld [vmem:[%s6118 + $0x2] sm:$0x1]
        %v6122 = vld [vmem:[%s6118 + $0x8] sm:$0x1]
        %v6123 = vld [vmem:[%s6118 + $0x9] sm:$0x1]
        %v6124 = vld [vmem:[%s6118 + $0xa] sm:$0x1]
        %v6125 = vld [vmem:[%s6118 + $0x10] sm:$0x1]
        %v6126 = vld [vmem:[%s6118 + $0x11] sm:$0x1]
        %v6127 = vld [vmem:[%s6118 + $0x12] sm:$0x1]
        %v6128 = vld [vmem:[%s3 + $0xc0] sm:$0xf]
        %v6129 = vld [vmem:[%s3 + $0xc4] sm:$0xf]
        %v6130 = vld [vmem:[%s3 + $0xc8] sm:$0xf]
        %v6131 = vld [vmem:[%s3 + $0xcc] sm:$0xf]
        %v6142 = vunpack.c.l.s4 1966171168
        %v6143 = vunpack.c.0.s8 %v6142
        %v6144 = vlaneseq
        %v6145 = vshrl.u32 %v6144, 7
        %v6146 = vsub.s32 %v6143, %v6145
        %v6147 = vrot.slane %v6119, %v6146
        %v6149 = vunpack.c.l.s4 1966171168
        %v6150 = vunpack.c.0.s8 %v6149
        %v6151 = vlaneseq
        %v6152 = vshrl.u32 %v6151, 7
        %v6153 = vsub.s32 %v6150, %v6152
        %v6154 = vrot.slane %v6147, %v6153
        %v6156 = vunpack.c.l.s4 1966171168
        %v6157 = vunpack.c.0.s8 %v6156
        %v6158 = vlaneseq
        %v6159 = vshrl.u32 %v6158, 7
        %v6160 = vsub.s32 %v6157, %v6159
        %v6161 = vrot.slane %v6120, %v6160
        %v6163 = vunpack.c.l.s4 1966171168
        %v6164 = vunpack.c.0.s8 %v6163
        %v6165 = vlaneseq
        %v6166 = vshrl.u32 %v6165, 7
        %v6167 = vsub.s32 %v6164, %v6166
        %v6168 = vrot.slane %v6161, %v6167
        %v6170 = vunpack.c.l.s4 1966171168
        %v6171 = vunpack.c.0.s8 %v6170
        %v6172 = vlaneseq
        %v6173 = vshrl.u32 %v6172, 7
        %v6174 = vsub.s32 %v6171, %v6173
        %v6175 = vrot.slane %v6121, %v6174
        %v6177 = vunpack.c.l.s4 1966171168
        %v6178 = vunpack.c.0.s8 %v6177
        %v6179 = vlaneseq
        %v6180 = vshrl.u32 %v6179, 7
        %v6181 = vsub.s32 %v6178, %v6180
        %v6182 = vrot.slane %v6175, %v6181
        %v6184 = vunpack.c.l.s4 1966171168
        %v6185 = vunpack.c.0.s8 %v6184
        %v6186 = vlaneseq
        %v6187 = vshrl.u32 %v6186, 7
        %v6188 = vsub.s32 %v6185, %v6187
        %v6189 = vrot.slane %v6122, %v6188
        %v6191 = vunpack.c.l.s4 1966171168
        %v6192 = vunpack.c.0.s8 %v6191
        %v6193 = vlaneseq
        %v6194 = vshrl.u32 %v6193, 7
        %v6195 = vsub.s32 %v6192, %v6194
        %v6196 = vrot.slane %v6189, %v6195
        %v6198 = vunpack.c.l.s4 1966171168
        %v6199 = vunpack.c.0.s8 %v6198
        %v6200 = vlaneseq
        %v6201 = vshrl.u32 %v6200, 7
        %v6202 = vsub.s32 %v6199, %v6201
        %v6203 = vrot.slane %v6123, %v6202
        %v6205 = vunpack.c.l.s4 1966171168
        %v6206 = vunpack.c.0.s8 %v6205
        %v6207 = vlaneseq
        %v6208 = vshrl.u32 %v6207, 7
        %v6209 = vsub.s32 %v6206, %v6208
        %v6210 = vrot.slane %v6203, %v6209
        %v6212 = vunpack.c.l.s4 1966171168
        %v6213 = vunpack.c.0.s8 %v6212
        %v6214 = vlaneseq
        %v6215 = vshrl.u32 %v6214, 7
        %v6216 = vsub.s32 %v6213, %v6215
        %v6217 = vrot.slane %v6124, %v6216
        %v6219 = vunpack.c.l.s4 1966171168
        %v6220 = vunpack.c.0.s8 %v6219
        %v6221 = vlaneseq
        %v6222 = vshrl.u32 %v6221, 7
        %v6223 = vsub.s32 %v6220, %v6222
        %v6224 = vrot.slane %v6217, %v6223
        %v6226 = vunpack.c.l.s4 1966171168
        %v6227 = vunpack.c.0.s8 %v6226
        %v6228 = vlaneseq
        %v6229 = vshrl.u32 %v6228, 7
        %v6230 = vsub.s32 %v6227, %v6229
        %v6231 = vrot.slane %v6125, %v6230
        %v6233 = vunpack.c.l.s4 1966171168
        %v6234 = vunpack.c.0.s8 %v6233
        %v6235 = vlaneseq
        %v6236 = vshrl.u32 %v6235, 7
        %v6237 = vsub.s32 %v6234, %v6236
        %v6238 = vrot.slane %v6231, %v6237
        %v6240 = vunpack.c.l.s4 1966171168
        %v6241 = vunpack.c.0.s8 %v6240
        %v6242 = vlaneseq
        %v6243 = vshrl.u32 %v6242, 7
        %v6244 = vsub.s32 %v6241, %v6243
        %v6245 = vrot.slane %v6126, %v6244
        %v6247 = vunpack.c.l.s4 1966171168
        %v6248 = vunpack.c.0.s8 %v6247
        %v6249 = vlaneseq
        %v6250 = vshrl.u32 %v6249, 7
        %v6251 = vsub.s32 %v6248, %v6250
        %v6252 = vrot.slane %v6245, %v6251
        %v6254 = vunpack.c.l.s4 1966171168
        %v6255 = vunpack.c.0.s8 %v6254
        %v6256 = vlaneseq
        %v6257 = vshrl.u32 %v6256, 7
        %v6258 = vsub.s32 %v6255, %v6257
        %v6259 = vrot.slane %v6127, %v6258
        %v6261 = vunpack.c.l.s4 1966171168
        %v6262 = vunpack.c.0.s8 %v6261
        %v6263 = vlaneseq
        %v6264 = vshrl.u32 %v6263, 7
        %v6265 = vsub.s32 %v6262, %v6264
        %v6266 = vrot.slane %v6259, %v6265
        %v6267 = vunpack.c.l.b16 %v6154
        %v6268 = vunpack.c.l.b16 %v6168
        %v6269 = vunpack.c.l.b16 %v6182
        %v6270 = vunpack.c.l.b16 %v6196
        %v6271 = vunpack.c.l.b16 %v6210
        %v6272 = vunpack.c.l.b16 %v6224
        %v6273 = vunpack.c.l.b16 %v6238
        %v6274 = vunpack.c.l.b16 %v6252
        %v6275 = vunpack.c.l.b16 %v6266
        %v6276 = vrot.slane %v6268, 7
        %v6277 = vsel %vm3658, %v6276, %v6267
        %v6278 = vrot.slane %v6269, 6
        %v6279 = vsel %vm3661, %v6278, %v6277
        %v6280 = vrot.slane %v6270, 5
        %v6281 = vsel %vm3664, %v6280, %v6279
        %v6282 = vrot.slane %v6271, 4
        %v6283 = vsel %vm3667, %v6282, %v6281
        %v6284 = vrot.slane %v6272, 3
        %v6285 = vsel %vm3670, %v6284, %v6283
        %v6286 = vrot.slane %v6273, 2
        %v6287 = vsel %vm3673, %v6286, %v6285
        %v6288 = vrot.slane %v6274, 1
        %v6289 = vsel %vm3676, %v6288, %v6287
        %v6290 = vpack.c.b16 %v6275, %v6289
        %v6295 = vunpack.c.l.b16 %v6128
        %v6296 = vunpack.c.l.b16 %v6129
        %v6297 = vunpack.c.l.b16 %v6130
        %v6298 = vunpack.c.l.b16 %v6131
        %v6299 = vpack.c.b16 %v6296, %v6295
        %v6300 = vpack.c.b16 %v6298, %v6297
        %v6304 = vsel %vm3692, %v6290, 0
        %6306 = vmatprep.subr.bf16.mxu0 0
        %6307 = vmatpush1.bf16.msra.mxu0 %v6299
        %6308 = vmatprep.subr.bf16.mxu0 0
        %6309 = vmatpush1.bf16.msra.mxu0 %v6300
        %6310 = vmatprep.subr.bf16.mxu0 0
        %6311 = vmatpush1.bf16.msra.mxu0 0
        %6312 = vmatprep.subr.bf16.mxu0 0
        %6313 = vmatpush1.bf16.msra.mxu0 0
        %6314 = vmatprep.subr.bf16.mxu0 0
        %6315 = vmatpush1.bf16.msra.mxu0 0
        %6316 = vmatprep.subr.bf16.mxu0 0
        %6317 = vmatpush1.bf16.msra.mxu0 0
        %6318 = vmatprep.subr.bf16.mxu0 0
        %6319 = vmatpush1.bf16.msra.mxu0 0
        %6320 = vmatprep.subr.bf16.mxu0 0
        %6321 = vmatpush1.bf16.msra.mxu0 0
        %6322 = vmatprep.subr.bf16.mxu0 0
        %6323 = vmatpush1.bf16.msra.mxu0 0
        %6324 = vmatprep.subr.bf16.mxu0 0
        %6325 = vmatpush1.bf16.msra.mxu0 0
        %6326 = vmatprep.subr.bf16.mxu0 0
        %6327 = vmatpush1.bf16.msra.mxu0 0
        %6328 = vmatprep.subr.bf16.mxu0 0
        %6329 = vmatpush1.bf16.msra.mxu0 0
        %6330 = vmatprep.subr.bf16.mxu0 0
        %6331 = vmatpush1.bf16.msra.mxu0 0
        %6332 = vmatprep.subr.bf16.mxu0 0
        %6333 = vmatpush1.bf16.msra.mxu0 0
        %6334 = vmatprep.subr.bf16.mxu0 0
        %6335 = vmatpush1.bf16.msra.mxu0 0
        %6336 = vmatprep.subr.bf16.mxu0 0
        %6337 = vmatpush1.bf16.msra.mxu0 0
        %6338 = vmatprep.mubr.bf16.mxu0 0
        %6339 = vmatmul.mubr.bf16.gmra.mrb[0].mxu0 %v6304
        %v6340 = vpop.f32.mrb[0].mxu0
        %v6341 = vadd.f32 0.0, %v6340
        %v6342 = vpop.f32.mrb[0].mxu0
        %v6343 = vpop.f32.mrb[0].mxu0
        %v6344 = vadd.f32 0.0, %v6343
        %v6345 = vpop.f32.mrb[0].mxu0
        %6346 = vdwg.mxu0
        %v6347 = vadd.f32 %v6116, %v6341
        %v6348 = vadd.f32 %v6117, %v6344
        %v6349 = vld [vmem:[%s6118] sm:$0x1]
        %v6350 = vld [vmem:[%s6118 + $0x1] sm:$0x1]
        %v6351 = vld [vmem:[%s6118 + $0x2] sm:$0x1]
        %v6352 = vld [vmem:[%s6118 + $0x8] sm:$0x1]
        %v6353 = vld [vmem:[%s6118 + $0x9] sm:$0x1]
        %v6354 = vld [vmem:[%s6118 + $0xa] sm:$0x1]
        %v6355 = vld [vmem:[%s6118 + $0x10] sm:$0x1]
        %v6356 = vld [vmem:[%s6118 + $0x11] sm:$0x1]
        %v6357 = vld [vmem:[%s6118 + $0x12] sm:$0x1]
        %v6358 = vld [vmem:[%s3 + $0xd0] sm:$0xf]
        %v6359 = vld [vmem:[%s3 + $0xd4] sm:$0xf]
        %v6360 = vld [vmem:[%s3 + $0xd8] sm:$0xf]
        %v6361 = vld [vmem:[%s3 + $0xdc] sm:$0xf]
        %v6372 = vunpack.c.l.s4 1966171168
        %v6373 = vunpack.c.0.s8 %v6372
        %v6374 = vlaneseq
        %v6375 = vshrl.u32 %v6374, 7
        %v6376 = vsub.s32 %v6373, %v6375
        %v6377 = vrot.slane %v6349, %v6376
        %v6379 = vunpack.c.l.s4 1966171168
        %v6380 = vunpack.c.0.s8 %v6379
        %v6381 = vlaneseq
        %v6382 = vshrl.u32 %v6381, 7
        %v6383 = vsub.s32 %v6380, %v6382
        %v6384 = vrot.slane %v6377, %v6383
        %v6386 = vunpack.c.l.s4 1966171168
        %v6387 = vunpack.c.0.s8 %v6386
        %v6388 = vlaneseq
        %v6389 = vshrl.u32 %v6388, 7
        %v6390 = vsub.s32 %v6387, %v6389
        %v6391 = vrot.slane %v6350, %v6390
        %v6393 = vunpack.c.l.s4 1966171168
        %v6394 = vunpack.c.0.s8 %v6393
        %v6395 = vlaneseq
        %v6396 = vshrl.u32 %v6395, 7
        %v6397 = vsub.s32 %v6394, %v6396
        %v6398 = vrot.slane %v6391, %v6397
        %v6400 = vunpack.c.l.s4 1966171168
        %v6401 = vunpack.c.0.s8 %v6400
        %v6402 = vlaneseq
        %v6403 = vshrl.u32 %v6402, 7
        %v6404 = vsub.s32 %v6401, %v6403
        %v6405 = vrot.slane %v6351, %v6404
        %v6407 = vunpack.c.l.s4 1966171168
        %v6408 = vunpack.c.0.s8 %v6407
        %v6409 = vlaneseq
        %v6410 = vshrl.u32 %v6409, 7
        %v6411 = vsub.s32 %v6408, %v6410
        %v6412 = vrot.slane %v6405, %v6411
        %v6414 = vunpack.c.l.s4 1966171168
        %v6415 = vunpack.c.0.s8 %v6414
        %v6416 = vlaneseq
        %v6417 = vshrl.u32 %v6416, 7
        %v6418 = vsub.s32 %v6415, %v6417
        %v6419 = vrot.slane %v6352, %v6418
        %v6421 = vunpack.c.l.s4 1966171168
        %v6422 = vunpack.c.0.s8 %v6421
        %v6423 = vlaneseq
        %v6424 = vshrl.u32 %v6423, 7
        %v6425 = vsub.s32 %v6422, %v6424
        %v6426 = vrot.slane %v6419, %v6425
        %v6428 = vunpack.c.l.s4 1966171168
        %v6429 = vunpack.c.0.s8 %v6428
        %v6430 = vlaneseq
        %v6431 = vshrl.u32 %v6430, 7
        %v6432 = vsub.s32 %v6429, %v6431
        %v6433 = vrot.slane %v6353, %v6432
        %v6435 = vunpack.c.l.s4 1966171168
        %v6436 = vunpack.c.0.s8 %v6435
        %v6437 = vlaneseq
        %v6438 = vshrl.u32 %v6437, 7
        %v6439 = vsub.s32 %v6436, %v6438
        %v6440 = vrot.slane %v6433, %v6439
        %v6442 = vunpack.c.l.s4 1966171168
        %v6443 = vunpack.c.0.s8 %v6442
        %v6444 = vlaneseq
        %v6445 = vshrl.u32 %v6444, 7
        %v6446 = vsub.s32 %v6443, %v6445
        %v6447 = vrot.slane %v6354, %v6446
        %v6449 = vunpack.c.l.s4 1966171168
        %v6450 = vunpack.c.0.s8 %v6449
        %v6451 = vlaneseq
        %v6452 = vshrl.u32 %v6451, 7
        %v6453 = vsub.s32 %v6450, %v6452
        %v6454 = vrot.slane %v6447, %v6453
        %v6456 = vunpack.c.l.s4 1966171168
        %v6457 = vunpack.c.0.s8 %v6456
        %v6458 = vlaneseq
        %v6459 = vshrl.u32 %v6458, 7
        %v6460 = vsub.s32 %v6457, %v6459
        %v6461 = vrot.slane %v6355, %v6460
        %v6463 = vunpack.c.l.s4 1966171168
        %v6464 = vunpack.c.0.s8 %v6463
        %v6465 = vlaneseq
        %v6466 = vshrl.u32 %v6465, 7
        %v6467 = vsub.s32 %v6464, %v6466
        %v6468 = vrot.slane %v6461, %v6467
        %v6470 = vunpack.c.l.s4 1966171168
        %v6471 = vunpack.c.0.s8 %v6470
        %v6472 = vlaneseq
        %v6473 = vshrl.u32 %v6472, 7
        %v6474 = vsub.s32 %v6471, %v6473
        %v6475 = vrot.slane %v6356, %v6474
        %v6477 = vunpack.c.l.s4 1966171168
        %v6478 = vunpack.c.0.s8 %v6477
        %v6479 = vlaneseq
        %v6480 = vshrl.u32 %v6479, 7
        %v6481 = vsub.s32 %v6478, %v6480
        %v6482 = vrot.slane %v6475, %v6481
        %v6484 = vunpack.c.l.s4 1966171168
        %v6485 = vunpack.c.0.s8 %v6484
        %v6486 = vlaneseq
        %v6487 = vshrl.u32 %v6486, 7
        %v6488 = vsub.s32 %v6485, %v6487
        %v6489 = vrot.slane %v6357, %v6488
        %v6491 = vunpack.c.l.s4 1966171168
        %v6492 = vunpack.c.0.s8 %v6491
        %v6493 = vlaneseq
        %v6494 = vshrl.u32 %v6493, 7
        %v6495 = vsub.s32 %v6492, %v6494
        %v6496 = vrot.slane %v6489, %v6495
        %v6497 = vunpack.c.l.b16 %v6384
        %v6498 = vunpack.c.l.b16 %v6398
        %v6499 = vunpack.c.l.b16 %v6412
        %v6500 = vunpack.c.l.b16 %v6426
        %v6501 = vunpack.c.l.b16 %v6440
        %v6502 = vunpack.c.l.b16 %v6454
        %v6503 = vunpack.c.l.b16 %v6468
        %v6504 = vunpack.c.l.b16 %v6482
        %v6505 = vunpack.c.l.b16 %v6496
        %v6506 = vrot.slane %v6497, 1
        %v6507 = vsel %vm3658, %v6498, %v6506
        %v6508 = vrot.slane %v6499, 7
        %v6509 = vsel %vm3661, %v6508, %v6507
        %v6510 = vrot.slane %v6500, 6
        %v6511 = vsel %vm3664, %v6510, %v6509
        %v6512 = vrot.slane %v6501, 5
        %v6513 = vsel %vm3667, %v6512, %v6511
        %v6514 = vrot.slane %v6502, 4
        %v6515 = vsel %vm3670, %v6514, %v6513
        %v6516 = vrot.slane %v6503, 3
        %v6517 = vsel %vm3673, %v6516, %v6515
        %v6518 = vrot.slane %v6504, 2
        %v6519 = vsel %vm3676, %v6518, %v6517
        %v6520 = vrot.slane %v6505, 1
        %v6521 = vpack.c.b16 %v6520, %v6519
        %v6526 = vunpack.c.l.b16 %v6358
        %v6527 = vunpack.c.l.b16 %v6359
        %v6528 = vunpack.c.l.b16 %v6360
        %v6529 = vunpack.c.l.b16 %v6361
        %v6530 = vpack.c.b16 %v6527, %v6526
        %v6531 = vpack.c.b16 %v6529, %v6528
        %v6535 = vsel %vm3692, %v6521, 0
        %6537 = vmatprep.subr.bf16.mxu0 0
        %6538 = vmatpush1.bf16.msra.mxu0 %v6530
        %6539 = vmatprep.subr.bf16.mxu0 0
        %6540 = vmatpush1.bf16.msra.mxu0 %v6531
        %6541 = vmatprep.subr.bf16.mxu0 0
        %6542 = vmatpush1.bf16.msra.mxu0 0
        %6543 = vmatprep.subr.bf16.mxu0 0
        %6544 = vmatpush1.bf16.msra.mxu0 0
        %6545 = vmatprep.subr.bf16.mxu0 0
        %6546 = vmatpush1.bf16.msra.mxu0 0
        %6547 = vmatprep.subr.bf16.mxu0 0
        %6548 = vmatpush1.bf16.msra.mxu0 0
        %6549 = vmatprep.subr.bf16.mxu0 0
        %6550 = vmatpush1.bf16.msra.mxu0 0
        %6551 = vmatprep.subr.bf16.mxu0 0
        %6552 = vmatpush1.bf16.msra.mxu0 0
        %6553 = vmatprep.subr.bf16.mxu0 0
        %6554 = vmatpush1.bf16.msra.mxu0 0
        %6555 = vmatprep.subr.bf16.mxu0 0
        %6556 = vmatpush1.bf16.msra.mxu0 0
        %6557 = vmatprep.subr.bf16.mxu0 0
        %6558 = vmatpush1.bf16.msra.mxu0 0
        %6559 = vmatprep.subr.bf16.mxu0 0
        %6560 = vmatpush1.bf16.msra.mxu0 0
        %6561 = vmatprep.subr.bf16.mxu0 0
        %6562 = vmatpush1.bf16.msra.mxu0 0
        %6563 = vmatprep.subr.bf16.mxu0 0
        %6564 = vmatpush1.bf16.msra.mxu0 0
        %6565 = vmatprep.subr.bf16.mxu0 0
        %6566 = vmatpush1.bf16.msra.mxu0 0
        %6567 = vmatprep.subr.bf16.mxu0 0
        %6568 = vmatpush1.bf16.msra.mxu0 0
        %6569 = vmatprep.mubr.bf16.mxu0 0
        %6570 = vmatmul.mubr.bf16.gmra.mrb[0].mxu0 %v6535
        %v6571 = vpop.f32.mrb[0].mxu0
        %v6572 = vadd.f32 0.0, %v6571
        %v6573 = vpop.f32.mrb[0].mxu0
        %v6574 = vpop.f32.mrb[0].mxu0
        %v6575 = vadd.f32 0.0, %v6574
        %v6576 = vpop.f32.mrb[0].mxu0
        %6577 = vdwg.mxu0
        %v6578 = vadd.f32 %v6347, %v6572
        %v6579 = vadd.f32 %v6348, %v6575
        %s6580 = scalar_lea.vmem [#allocation2], 13
        %v6581 = vld [vmem:[%s6580] sm:$0x1]
        %v6582 = vld [vmem:[%s6580 + $0x1] sm:$0x1]
        %v6583 = vld [vmem:[%s6580 + $0x2] sm:$0x1]
        %v6584 = vld [vmem:[%s6580 + $0x8] sm:$0x1]
        %v6585 = vld [vmem:[%s6580 + $0x9] sm:$0x1]
        %v6586 = vld [vmem:[%s6580 + $0xa] sm:$0x1]
        %v6587 = vld [vmem:[%s6580 + $0x10] sm:$0x1]
        %v6588 = vld [vmem:[%s6580 + $0x11] sm:$0x1]
        %v6589 = vld [vmem:[%s6580 + $0x12] sm:$0x1]
        %v6590 = vld [vmem:[%s3 + $0xe0] sm:$0xf]
        %v6591 = vld [vmem:[%s3 + $0xe4] sm:$0xf]
        %v6592 = vld [vmem:[%s3 + $0xe8] sm:$0xf]
        %v6593 = vld [vmem:[%s3 + $0xec] sm:$0xf]
        %v6604 = vunpack.c.l.s4 1966171168
        %v6605 = vunpack.c.0.s8 %v6604
        %v6606 = vlaneseq
        %v6607 = vshrl.u32 %v6606, 7
        %v6608 = vsub.s32 %v6605, %v6607
        %v6609 = vrot.slane %v6581, %v6608
        %v6611 = vunpack.c.l.s4 1966171168
        %v6612 = vunpack.c.0.s8 %v6611
        %v6613 = vlaneseq
        %v6614 = vshrl.u32 %v6613, 7
        %v6615 = vsub.s32 %v6612, %v6614
        %v6616 = vrot.slane %v6609, %v6615
        %v6618 = vunpack.c.l.s4 1966171168
        %v6619 = vunpack.c.0.s8 %v6618
        %v6620 = vlaneseq
        %v6621 = vshrl.u32 %v6620, 7
        %v6622 = vsub.s32 %v6619, %v6621
        %v6623 = vrot.slane %v6582, %v6622
        %v6625 = vunpack.c.l.s4 1966171168
        %v6626 = vunpack.c.0.s8 %v6625
        %v6627 = vlaneseq
        %v6628 = vshrl.u32 %v6627, 7
        %v6629 = vsub.s32 %v6626, %v6628
        %v6630 = vrot.slane %v6623, %v6629
        %v6632 = vunpack.c.l.s4 1966171168
        %v6633 = vunpack.c.0.s8 %v6632
        %v6634 = vlaneseq
        %v6635 = vshrl.u32 %v6634, 7
        %v6636 = vsub.s32 %v6633, %v6635
        %v6637 = vrot.slane %v6583, %v6636
        %v6639 = vunpack.c.l.s4 1966171168
        %v6640 = vunpack.c.0.s8 %v6639
        %v6641 = vlaneseq
        %v6642 = vshrl.u32 %v6641, 7
        %v6643 = vsub.s32 %v6640, %v6642
        %v6644 = vrot.slane %v6637, %v6643
        %v6646 = vunpack.c.l.s4 1966171168
        %v6647 = vunpack.c.0.s8 %v6646
        %v6648 = vlaneseq
        %v6649 = vshrl.u32 %v6648, 7
        %v6650 = vsub.s32 %v6647, %v6649
        %v6651 = vrot.slane %v6584, %v6650
        %v6653 = vunpack.c.l.s4 1966171168
        %v6654 = vunpack.c.0.s8 %v6653
        %v6655 = vlaneseq
        %v6656 = vshrl.u32 %v6655, 7
        %v6657 = vsub.s32 %v6654, %v6656
        %v6658 = vrot.slane %v6651, %v6657
        %v6660 = vunpack.c.l.s4 1966171168
        %v6661 = vunpack.c.0.s8 %v6660
        %v6662 = vlaneseq
        %v6663 = vshrl.u32 %v6662, 7
        %v6664 = vsub.s32 %v6661, %v6663
        %v6665 = vrot.slane %v6585, %v6664
        %v6667 = vunpack.c.l.s4 1966171168
        %v6668 = vunpack.c.0.s8 %v6667
        %v6669 = vlaneseq
        %v6670 = vshrl.u32 %v6669, 7
        %v6671 = vsub.s32 %v6668, %v6670
        %v6672 = vrot.slane %v6665, %v6671
        %v6674 = vunpack.c.l.s4 1966171168
        %v6675 = vunpack.c.0.s8 %v6674
        %v6676 = vlaneseq
        %v6677 = vshrl.u32 %v6676, 7
        %v6678 = vsub.s32 %v6675, %v6677
        %v6679 = vrot.slane %v6586, %v6678
        %v6681 = vunpack.c.l.s4 1966171168
        %v6682 = vunpack.c.0.s8 %v6681
        %v6683 = vlaneseq
        %v6684 = vshrl.u32 %v6683, 7
        %v6685 = vsub.s32 %v6682, %v6684
        %v6686 = vrot.slane %v6679, %v6685
        %v6688 = vunpack.c.l.s4 1966171168
        %v6689 = vunpack.c.0.s8 %v6688
        %v6690 = vlaneseq
        %v6691 = vshrl.u32 %v6690, 7
        %v6692 = vsub.s32 %v6689, %v6691
        %v6693 = vrot.slane %v6587, %v6692
        %v6695 = vunpack.c.l.s4 1966171168
        %v6696 = vunpack.c.0.s8 %v6695
        %v6697 = vlaneseq
        %v6698 = vshrl.u32 %v6697, 7
        %v6699 = vsub.s32 %v6696, %v6698
        %v6700 = vrot.slane %v6693, %v6699
        %v6702 = vunpack.c.l.s4 1966171168
        %v6703 = vunpack.c.0.s8 %v6702
        %v6704 = vlaneseq
        %v6705 = vshrl.u32 %v6704, 7
        %v6706 = vsub.s32 %v6703, %v6705
        %v6707 = vrot.slane %v6588, %v6706
        %v6709 = vunpack.c.l.s4 1966171168
        %v6710 = vunpack.c.0.s8 %v6709
        %v6711 = vlaneseq
        %v6712 = vshrl.u32 %v6711, 7
        %v6713 = vsub.s32 %v6710, %v6712
        %v6714 = vrot.slane %v6707, %v6713
        %v6716 = vunpack.c.l.s4 1966171168
        %v6717 = vunpack.c.0.s8 %v6716
        %v6718 = vlaneseq
        %v6719 = vshrl.u32 %v6718, 7
        %v6720 = vsub.s32 %v6717, %v6719
        %v6721 = vrot.slane %v6589, %v6720
        %v6723 = vunpack.c.l.s4 1966171168
        %v6724 = vunpack.c.0.s8 %v6723
        %v6725 = vlaneseq
        %v6726 = vshrl.u32 %v6725, 7
        %v6727 = vsub.s32 %v6724, %v6726
        %v6728 = vrot.slane %v6721, %v6727
        %v6729 = vunpack.c.l.b16 %v6616
        %v6730 = vunpack.c.l.b16 %v6630
        %v6731 = vunpack.c.l.b16 %v6644
        %v6732 = vunpack.c.l.b16 %v6658
        %v6733 = vunpack.c.l.b16 %v6672
        %v6734 = vunpack.c.l.b16 %v6686
        %v6735 = vunpack.c.l.b16 %v6700
        %v6736 = vunpack.c.l.b16 %v6714
        %v6737 = vunpack.c.l.b16 %v6728
        %v6738 = vrot.slane %v6730, 7
        %v6739 = vsel %vm3658, %v6738, %v6729
        %v6740 = vrot.slane %v6731, 6
        %v6741 = vsel %vm3661, %v6740, %v6739
        %v6742 = vrot.slane %v6732, 5
        %v6743 = vsel %vm3664, %v6742, %v6741
        %v6744 = vrot.slane %v6733, 4
        %v6745 = vsel %vm3667, %v6744, %v6743
        %v6746 = vrot.slane %v6734, 3
        %v6747 = vsel %vm3670, %v6746, %v6745
        %v6748 = vrot.slane %v6735, 2
        %v6749 = vsel %vm3673, %v6748, %v6747
        %v6750 = vrot.slane %v6736, 1
        %v6751 = vsel %vm3676, %v6750, %v6749
        %v6752 = vpack.c.b16 %v6737, %v6751
        %v6757 = vunpack.c.l.b16 %v6590
        %v6758 = vunpack.c.l.b16 %v6591
        %v6759 = vunpack.c.l.b16 %v6592
        %v6760 = vunpack.c.l.b16 %v6593
        %v6761 = vpack.c.b16 %v6758, %v6757
        %v6762 = vpack.c.b16 %v6760, %v6759
        %v6766 = vsel %vm3692, %v6752, 0
        %6768 = vmatprep.subr.bf16.mxu0 0
        %6769 = vmatpush1.bf16.msra.mxu0 %v6761
        %6770 = vmatprep.subr.bf16.mxu0 0
        %6771 = vmatpush1.bf16.msra.mxu0 %v6762
        %6772 = vmatprep.subr.bf16.mxu0 0
        %6773 = vmatpush1.bf16.msra.mxu0 0
        %6774 = vmatprep.subr.bf16.mxu0 0
        %6775 = vmatpush1.bf16.msra.mxu0 0
        %6776 = vmatprep.subr.bf16.mxu0 0
        %6777 = vmatpush1.bf16.msra.mxu0 0
        %6778 = vmatprep.subr.bf16.mxu0 0
        %6779 = vmatpush1.bf16.msra.mxu0 0
        %6780 = vmatprep.subr.bf16.mxu0 0
        %6781 = vmatpush1.bf16.msra.mxu0 0
        %6782 = vmatprep.subr.bf16.mxu0 0
        %6783 = vmatpush1.bf16.msra.mxu0 0
        %6784 = vmatprep.subr.bf16.mxu0 0
        %6785 = vmatpush1.bf16.msra.mxu0 0
        %6786 = vmatprep.subr.bf16.mxu0 0
        %6787 = vmatpush1.bf16.msra.mxu0 0
        %6788 = vmatprep.subr.bf16.mxu0 0
        %6789 = vmatpush1.bf16.msra.mxu0 0
        %6790 = vmatprep.subr.bf16.mxu0 0
        %6791 = vmatpush1.bf16.msra.mxu0 0
        %6792 = vmatprep.subr.bf16.mxu0 0
        %6793 = vmatpush1.bf16.msra.mxu0 0
        %6794 = vmatprep.subr.bf16.mxu0 0
        %6795 = vmatpush1.bf16.msra.mxu0 0
        %6796 = vmatprep.subr.bf16.mxu0 0
        %6797 = vmatpush1.bf16.msra.mxu0 0
        %6798 = vmatprep.subr.bf16.mxu0 0
        %6799 = vmatpush1.bf16.msra.mxu0 0
        %6800 = vmatprep.mubr.bf16.mxu0 0
        %6801 = vmatmul.mubr.bf16.gmra.mrb[0].mxu0 %v6766
        %v6802 = vpop.f32.mrb[0].mxu0
        %v6803 = vadd.f32 0.0, %v6802
        %v6804 = vpop.f32.mrb[0].mxu0
        %v6805 = vpop.f32.mrb[0].mxu0
        %v6806 = vadd.f32 0.0, %v6805
        %v6807 = vpop.f32.mrb[0].mxu0
        %6808 = vdwg.mxu0
        %v6809 = vadd.f32 %v6578, %v6803
        %v6810 = vadd.f32 %v6579, %v6806
        %v6811 = vld [vmem:[%s6580] sm:$0x1]
        %v6812 = vld [vmem:[%s6580 + $0x1] sm:$0x1]
        %v6813 = vld [vmem:[%s6580 + $0x2] sm:$0x1]
        %v6814 = vld [vmem:[%s6580 + $0x8] sm:$0x1]
        %v6815 = vld [vmem:[%s6580 + $0x9] sm:$0x1]
        %v6816 = vld [vmem:[%s6580 + $0xa] sm:$0x1]
        %v6817 = vld [vmem:[%s6580 + $0x10] sm:$0x1]
        %v6818 = vld [vmem:[%s6580 + $0x11] sm:$0x1]
        %v6819 = vld [vmem:[%s6580 + $0x12] sm:$0x1]
        %v6820 = vld [vmem:[%s3 + $0xf0] sm:$0xf]
        %v6821 = vld [vmem:[%s3 + $0xf4] sm:$0xf]
        %v6822 = vld [vmem:[%s3 + $0xf8] sm:$0xf]
        %v6823 = vld [vmem:[%s3 + $0xfc] sm:$0xf]
        %v6834 = vunpack.c.l.s4 1966171168
        %v6835 = vunpack.c.0.s8 %v6834
        %v6836 = vlaneseq
        %v6837 = vshrl.u32 %v6836, 7
        %v6838 = vsub.s32 %v6835, %v6837
        %v6839 = vrot.slane %v6811, %v6838
        %v6841 = vunpack.c.l.s4 1966171168
        %v6842 = vunpack.c.0.s8 %v6841
        %v6843 = vlaneseq
        %v6844 = vshrl.u32 %v6843, 7
        %v6845 = vsub.s32 %v6842, %v6844
        %v6846 = vrot.slane %v6839, %v6845
        %v6848 = vunpack.c.l.s4 1966171168
        %v6849 = vunpack.c.0.s8 %v6848
        %v6850 = vlaneseq
        %v6851 = vshrl.u32 %v6850, 7
        %v6852 = vsub.s32 %v6849, %v6851
        %v6853 = vrot.slane %v6812, %v6852
        %v6855 = vunpack.c.l.s4 1966171168
        %v6856 = vunpack.c.0.s8 %v6855
        %v6857 = vlaneseq
        %v6858 = vshrl.u32 %v6857, 7
        %v6859 = vsub.s32 %v6856, %v6858
        %v6860 = vrot.slane %v6853, %v6859
        %v6862 = vunpack.c.l.s4 1966171168
        %v6863 = vunpack.c.0.s8 %v6862
        %v6864 = vlaneseq
        %v6865 = vshrl.u32 %v6864, 7
        %v6866 = vsub.s32 %v6863, %v6865
        %v6867 = vrot.slane %v6813, %v6866
        %v6869 = vunpack.c.l.s4 1966171168
        %v6870 = vunpack.c.0.s8 %v6869
        %v6871 = vlaneseq
        %v6872 = vshrl.u32 %v6871, 7
        %v6873 = vsub.s32 %v6870, %v6872
        %v6874 = vrot.slane %v6867, %v6873
        %v6876 = vunpack.c.l.s4 1966171168
        %v6877 = vunpack.c.0.s8 %v6876
        %v6878 = vlaneseq
        %v6879 = vshrl.u32 %v6878, 7
        %v6880 = vsub.s32 %v6877, %v6879
        %v6881 = vrot.slane %v6814, %v6880
        %v6883 = vunpack.c.l.s4 1966171168
        %v6884 = vunpack.c.0.s8 %v6883
        %v6885 = vlaneseq
        %v6886 = vshrl.u32 %v6885, 7
        %v6887 = vsub.s32 %v6884, %v6886
        %v6888 = vrot.slane %v6881, %v6887
        %v6890 = vunpack.c.l.s4 1966171168
        %v6891 = vunpack.c.0.s8 %v6890
        %v6892 = vlaneseq
        %v6893 = vshrl.u32 %v6892, 7
        %v6894 = vsub.s32 %v6891, %v6893
        %v6895 = vrot.slane %v6815, %v6894
        %v6897 = vunpack.c.l.s4 1966171168
        %v6898 = vunpack.c.0.s8 %v6897
        %v6899 = vlaneseq
        %v6900 = vshrl.u32 %v6899, 7
        %v6901 = vsub.s32 %v6898, %v6900
        %v6902 = vrot.slane %v6895, %v6901
        %v6904 = vunpack.c.l.s4 1966171168
        %v6905 = vunpack.c.0.s8 %v6904
        %v6906 = vlaneseq
        %v6907 = vshrl.u32 %v6906, 7
        %v6908 = vsub.s32 %v6905, %v6907
        %v6909 = vrot.slane %v6816, %v6908
        %v6911 = vunpack.c.l.s4 1966171168
        %v6912 = vunpack.c.0.s8 %v6911
        %v6913 = vlaneseq
        %v6914 = vshrl.u32 %v6913, 7
        %v6915 = vsub.s32 %v6912, %v6914
        %v6916 = vrot.slane %v6909, %v6915
        %v6918 = vunpack.c.l.s4 1966171168
        %v6919 = vunpack.c.0.s8 %v6918
        %v6920 = vlaneseq
        %v6921 = vshrl.u32 %v6920, 7
        %v6922 = vsub.s32 %v6919, %v6921
        %v6923 = vrot.slane %v6817, %v6922
        %v6925 = vunpack.c.l.s4 1966171168
        %v6926 = vunpack.c.0.s8 %v6925
        %v6927 = vlaneseq
        %v6928 = vshrl.u32 %v6927, 7
        %v6929 = vsub.s32 %v6926, %v6928
        %v6930 = vrot.slane %v6923, %v6929
        %v6932 = vunpack.c.l.s4 1966171168
        %v6933 = vunpack.c.0.s8 %v6932
        %v6934 = vlaneseq
        %v6935 = vshrl.u32 %v6934, 7
        %v6936 = vsub.s32 %v6933, %v6935
        %v6937 = vrot.slane %v6818, %v6936
        %v6939 = vunpack.c.l.s4 1966171168
        %v6940 = vunpack.c.0.s8 %v6939
        %v6941 = vlaneseq
        %v6942 = vshrl.u32 %v6941, 7
        %v6943 = vsub.s32 %v6940, %v6942
        %v6944 = vrot.slane %v6937, %v6943
        %v6946 = vunpack.c.l.s4 1966171168
        %v6947 = vunpack.c.0.s8 %v6946
        %v6948 = vlaneseq
        %v6949 = vshrl.u32 %v6948, 7
        %v6950 = vsub.s32 %v6947, %v6949
        %v6951 = vrot.slane %v6819, %v6950
        %v6953 = vunpack.c.l.s4 1966171168
        %v6954 = vunpack.c.0.s8 %v6953
        %v6955 = vlaneseq
        %v6956 = vshrl.u32 %v6955, 7
        %v6957 = vsub.s32 %v6954, %v6956
        %v6958 = vrot.slane %v6951, %v6957
        %v6959 = vunpack.c.l.b16 %v6846
        %v6960 = vunpack.c.l.b16 %v6860
        %v6961 = vunpack.c.l.b16 %v6874
        %v6962 = vunpack.c.l.b16 %v6888
        %v6963 = vunpack.c.l.b16 %v6902
        %v6964 = vunpack.c.l.b16 %v6916
        %v6965 = vunpack.c.l.b16 %v6930
        %v6966 = vunpack.c.l.b16 %v6944
        %v6967 = vunpack.c.l.b16 %v6958
        %v6968 = vrot.slane %v6959, 1
        %v6969 = vsel %vm3658, %v6960, %v6968
        %v6970 = vrot.slane %v6961, 7
        %v6971 = vsel %vm3661, %v6970, %v6969
        %v6972 = vrot.slane %v6962, 6
        %v6973 = vsel %vm3664, %v6972, %v6971
        %v6974 = vrot.slane %v6963, 5
        %v6975 = vsel %vm3667, %v6974, %v6973
        %v6976 = vrot.slane %v6964, 4
        %v6977 = vsel %vm3670, %v6976, %v6975
        %v6978 = vrot.slane %v6965, 3
        %v6979 = vsel %vm3673, %v6978, %v6977
        %v6980 = vrot.slane %v6966, 2
        %v6981 = vsel %vm3676, %v6980, %v6979
        %v6982 = vrot.slane %v6967, 1
        %v6983 = vpack.c.b16 %v6982, %v6981
        %v6988 = vunpack.c.l.b16 %v6820
        %v6989 = vunpack.c.l.b16 %v6821
        %v6990 = vunpack.c.l.b16 %v6822
        %v6991 = vunpack.c.l.b16 %v6823
        %v6992 = vpack.c.b16 %v6989, %v6988
        %v6993 = vpack.c.b16 %v6991, %v6990
        %v6997 = vsel %vm3692, %v6983, 0
        %6999 = vmatprep.subr.bf16.mxu0 0
        %7000 = vmatpush1.bf16.msra.mxu0 %v6992
        %7001 = vmatprep.subr.bf16.mxu0 0
        %7002 = vmatpush1.bf16.msra.mxu0 %v6993
        %7003 = vmatprep.subr.bf16.mxu0 0
        %7004 = vmatpush1.bf16.msra.mxu0 0
        %7005 = vmatprep.subr.bf16.mxu0 0
        %7006 = vmatpush1.bf16.msra.mxu0 0
        %7007 = vmatprep.subr.bf16.mxu0 0
        %7008 = vmatpush1.bf16.msra.mxu0 0
        %7009 = vmatprep.subr.bf16.mxu0 0
        %7010 = vmatpush1.bf16.msra.mxu0 0
        %7011 = vmatprep.subr.bf16.mxu0 0
        %7012 = vmatpush1.bf16.msra.mxu0 0
        %7013 = vmatprep.subr.bf16.mxu0 0
        %7014 = vmatpush1.bf16.msra.mxu0 0
        %7015 = vmatprep.subr.bf16.mxu0 0
        %7016 = vmatpush1.bf16.msra.mxu0 0
        %7017 = vmatprep.subr.bf16.mxu0 0
        %7018 = vmatpush1.bf16.msra.mxu0 0
        %7019 = vmatprep.subr.bf16.mxu0 0
        %7020 = vmatpush1.bf16.msra.mxu0 0
        %7021 = vmatprep.subr.bf16.mxu0 0
        %7022 = vmatpush1.bf16.msra.mxu0 0
        %7023 = vmatprep.subr.bf16.mxu0 0
        %7024 = vmatpush1.bf16.msra.mxu0 0
        %7025 = vmatprep.subr.bf16.mxu0 0
        %7026 = vmatpush1.bf16.msra.mxu0 0
        %7027 = vmatprep.subr.bf16.mxu0 0
        %7028 = vmatpush1.bf16.msra.mxu0 0
        %7029 = vmatprep.subr.bf16.mxu0 0
        %7030 = vmatpush1.bf16.msra.mxu0 0
        %7031 = vmatprep.mubr.bf16.mxu0 0
        %7032 = vmatmul.mubr.bf16.gmra.mrb[0].mxu0 %v6997
        %v7033 = vpop.f32.mrb[0].mxu0
        %v7034 = vadd.f32 0.0, %v7033
        %v7035 = vpop.f32.mrb[0].mxu0
        %v7036 = vpop.f32.mrb[0].mxu0
        %v7037 = vadd.f32 0.0, %v7036
        %v7038 = vpop.f32.mrb[0].mxu0
        %7039 = vdwg.mxu0
        %v7040 = vadd.f32 %v6809, %v7034
        %v7041 = vadd.f32 %v6810, %v7037
        %v7042 = vld [vmem:[%s4] sm:$0x1]
        %v7044 = vlaneseq
        %v7045 = vshrl.u32 %v7044, 7
        %v7046 = vsub.s32 0, %v7045
        %v7047 = vrot.slane %v7042, %v7046
        %v7049 = vadd.f32 %v7040, %v7047
        %v7050 = vadd.f32 %v7041, %v7047
        %v7051 = vmax.f32 %v7049, 0.0
        %v7052 = vmax.f32 %v7050, 0.0
        %v7053 = vpack.c.bf16 %v7052, %v7051
        %v7055 = vcombine.high %v7053, %v7053
        %v7057 = vunpack.c.l.s4 1966171168
        %v7058 = vunpack.c.0.s8 %v7057
        %v7059 = vlaneseq
        %v7060 = vshrl.u32 %v7059, 7
        %v7061 = vsub.s32 %v7058, %v7060
        %v7062 = vrot.slane %v7053, %v7061
        %v7064 = vunpack.c.l.s4 1966171168
        %v7065 = vunpack.c.0.s8 %v7064
        %v7066 = vlaneseq
        %v7067 = vshrl.u32 %v7066, 7
        %v7068 = vsub.s32 %v7065, %v7067
        %v7069 = vrot.slane %v7055, %v7068
        %v7070 = vcombine.high %v7062, %v7062
        %v7072 = vunpack.c.l.s4 1966171168
        %v7073 = vunpack.c.0.s8 %v7072
        %v7074 = vlaneseq
        %v7075 = vshrl.u32 %v7074, 7
        %v7076 = vsub.s32 %v7073, %v7075
        %v7077 = vrot.slane %v7062, %v7076
        %v7079 = vunpack.c.l.s4 1966171168
        %v7080 = vunpack.c.0.s8 %v7079
        %v7081 = vlaneseq
        %v7082 = vshrl.u32 %v7081, 7
        %v7083 = vsub.s32 %v7080, %v7082
        %v7084 = vrot.slane %v7069, %v7083
        %v7086 = vunpack.c.l.s4 1966171168
        %v7087 = vunpack.c.0.s8 %v7086
        %v7088 = vlaneseq
        %v7089 = vshrl.u32 %v7088, 7
        %v7090 = vsub.s32 %v7087, %v7089
        %v7091 = vrot.slane %v7070, %v7090
        %v7092 = vcombine.high %v7077, %v7077
        %v7093 = vcombine.high %v7091, %v7091
        %v7094 = vunpack.i.l.s16 %v7077
        %v7095 = vunpack.i.h.s16 %v7077
        %v7096 = vunpack.i.l.s16 %v7091
        %v7097 = vunpack.i.h.s16 %v7091
        %v7098 = vunpack.i.l.s16 %v7092
        %v7099 = vunpack.i.h.s16 %v7092
        %v7100 = vunpack.i.l.s16 %v7093
        %v7101 = vunpack.i.h.s16 %v7093
        %v7102 = vunpack.i.l.s16 %v7084
        %v7103 = vpack.i.b16 %v7095, %v7094
        %v7105 = vpack.i.b16 %v7098, %v7097
        %v7107 = vpack.i.b16 %v7101, %v7100
        %v7109 = vcombine.low %v7103, %v7096
        %v7111 = vunpack.c.l.s4 1935823168
        %v7112 = vunpack.c.0.s8 %v7111
        %v7113 = vlaneseq
        %v7114 = vshrl.u32 %v7113, 7
        %v7115 = vsub.s32 %v7112, %v7114
        %v7116 = vrot.slane %v7109, %v7115
        %v7117 = vcombine.low %v7105, %v7099
        %v7119 = vunpack.c.l.s4 1935823168
        %v7120 = vunpack.c.0.s8 %v7119
        %v7121 = vlaneseq
        %v7122 = vshrl.u32 %v7121, 7
        %v7123 = vsub.s32 %v7120, %v7122
        %v7124 = vrot.slane %v7117, %v7123
        %v7125 = vcombine.low %v7107, %v7102
        %v7127 = vunpack.c.l.s4 1935823168
        %v7128 = vunpack.c.0.s8 %v7127
        %v7129 = vlaneseq
        %v7130 = vshrl.u32 %v7129, 7
        %v7131 = vsub.s32 %v7128, %v7130
        %v7132 = vrot.slane %v7125, %v7131
        %vm7136 = vcmask 517120
        %vm7137 = vsmask.f32 1280
        %vm7138 = vmand %vm7136, %vm7137
        %v7139 = vld [vmem:[#allocation3] sm:$0x3]
        %v7140 = vsel %vm7138, %v7116, %v7139
        %7141 = vst [vmem:[#allocation3] sm:$0x3] %v7140
        %v7142 = vld [vmem:[#allocation3 + $0x2] sm:$0x3]
        %v7143 = vsel %vm7138, %v7124, %v7142
        %7144 = vst [vmem:[#allocation3 + $0x2] sm:$0x3] %v7143
        %v7145 = vld [vmem:[#allocation3 + $0x4] sm:$0x3]
        %v7146 = vsel %vm7138, %v7132, %v7145
        %7147 = vst [vmem:[#allocation3 + $0x4] sm:$0x3] %v7146
        %v7148 = vld [vmem:[#allocation3] sm:$0x1]
        %v7149 = vld [vmem:[%s5] sm:$0xf]
        %v7150 = vld [vmem:[%s5 + $0x4] sm:$0xf]
        %v7151 = vld [vmem:[%s5 + $0x8] sm:$0xf]
        %v7152 = vld [vmem:[%s5 + $0xc] sm:$0xf]
        %v7153 = vld [vmem:[%s5 + $0x10] sm:$0xf]
        %v7154 = vld [vmem:[%s5 + $0x14] sm:$0xf]
        %v7155 = vld [vmem:[%s5 + $0x18] sm:$0xf]
        %v7156 = vld [vmem:[%s5 + $0x1c] sm:$0xf]
        %v7157 = vld [vmem:[%s5 + $0x20] sm:$0xf]
        %v7158 = vld [vmem:[%s5 + $0x24] sm:$0xf]
        %v7159 = vld [vmem:[%s5 + $0x28] sm:$0xf]
        %v7160 = vld [vmem:[%s5 + $0x2c] sm:$0xf]
        %v7161 = vld [vmem:[%s5 + $0x30] sm:$0xf]
        %v7162 = vld [vmem:[%s5 + $0x34] sm:$0xf]
        %v7163 = vld [vmem:[%s5 + $0x38] sm:$0xf]
        %v7164 = vld [vmem:[%s5 + $0x3c] sm:$0xf]
        %v7167 = vunpack.c.l.s4 1983009808
        %v7168 = vunpack.c.0.s8 %v7167
        %v7169 = vlaneseq
        %v7170 = vshrl.u32 %v7169, 7
        %v7171 = vsub.s32 %v7168, %v7170
        %v7172 = vrot.slane %v7148, %v7171
        %v7174 = vshrl.u32 %v7172, 16
        %v7184 = vunpack.c.l.b16 %v7157
        %v7185 = vunpack.c.l.b16 %v7158
        %v7186 = vunpack.c.l.b16 %v7159
        %v7187 = vunpack.c.l.b16 %v7160
        %v7188 = vunpack.c.l.b16 %v7161
        %v7189 = vunpack.c.l.b16 %v7162
        %v7190 = vunpack.c.l.b16 %v7163
        %v7191 = vunpack.c.l.b16 %v7164
        %v7192 = vpack.c.b16 %v7185, %v7184
        %v7193 = vpack.c.b16 %v7187, %v7186
        %v7194 = vpack.c.b16 %v7189, %v7188
        %v7195 = vpack.c.b16 %v7191, %v7190
        %vm7200 = vcmask 523264
        %v7202 = vsel %vm7200, %v7174, 0
        %7204 = vmatprep.subr.bf16.mxu0 0
        %7205 = vmatpush1.bf16.msra.mxu0 %v7192
        %7206 = vmatprep.subr.bf16.mxu0 0
        %7207 = vmatpush1.bf16.msra.mxu0 %v7193
        %7208 = vmatprep.subr.bf16.mxu0 0
        %7209 = vmatpush1.bf16.msra.mxu0 %v7194
        %7210 = vmatprep.subr.bf16.mxu0 0
        %7211 = vmatpush1.bf16.msra.mxu0 %v7195
        %7212 = vmatprep.subr.bf16.mxu0 0
        %7213 = vmatpush1.bf16.msra.mxu0 0
        %7214 = vmatprep.subr.bf16.mxu0 0
        %7215 = vmatpush1.bf16.msra.mxu0 0
        %7216 = vmatprep.subr.bf16.mxu0 0
        %7217 = vmatpush1.bf16.msra.mxu0 0
        %7218 = vmatprep.subr.bf16.mxu0 0
        %7219 = vmatpush1.bf16.msra.mxu0 0
        %7220 = vmatprep.subr.bf16.mxu0 0
        %7221 = vmatpush1.bf16.msra.mxu0 0
        %7222 = vmatprep.subr.bf16.mxu0 0
        %7223 = vmatpush1.bf16.msra.mxu0 0
        %7224 = vmatprep.subr.bf16.mxu0 0
        %7225 = vmatpush1.bf16.msra.mxu0 0
        %7226 = vmatprep.subr.bf16.mxu0 0
        %7227 = vmatpush1.bf16.msra.mxu0 0
        %7228 = vmatprep.subr.bf16.mxu0 0
        %7229 = vmatpush1.bf16.msra.mxu0 0
        %7230 = vmatprep.subr.bf16.mxu0 0
        %7231 = vmatpush1.bf16.msra.mxu0 0
        %7232 = vmatprep.subr.bf16.mxu0 0
        %7233 = vmatpush1.bf16.msra.mxu0 0
        %7234 = vmatprep.subr.bf16.mxu0 0
        %7235 = vmatpush1.bf16.msra.mxu0 0
        %7236 = vmatprep.mubr.bf16.mxu0 0
        %7237 = vmatmul.mubr.bf16.gmra.mrb[0].mxu0 %v7202
        %v7238 = vpop.f32.mrb[0].mxu0
        %v7239 = vadd.f32 0.0, %v7238
        %v7240 = vpop.f32.mrb[0].mxu0
        %v7241 = vpop.f32.mrb[0].mxu0
        %v7242 = vpop.f32.mrb[0].mxu0
        %7243 = vdwg.mxu0
        %v7252 = vunpack.c.l.b16 %v7149
        %v7253 = vunpack.c.l.b16 %v7150
        %v7254 = vunpack.c.l.b16 %v7151
        %v7255 = vunpack.c.l.b16 %v7152
        %v7256 = vunpack.c.l.b16 %v7153
        %v7257 = vunpack.c.l.b16 %v7154
        %v7258 = vunpack.c.l.b16 %v7155
        %v7259 = vunpack.c.l.b16 %v7156
        %v7260 = vpack.c.b16 %v7253, %v7252
        %v7261 = vpack.c.b16 %v7255, %v7254
        %v7262 = vpack.c.b16 %v7257, %v7256
        %v7263 = vpack.c.b16 %v7259, %v7258
        %v7269 = vsel %vm7200, %v7148, 0
        %7271 = vmatprep.subr.bf16.mxu0 0
        %7272 = vmatpush1.bf16.msra.mxu0 %v7260
        %7273 = vmatprep.subr.bf16.mxu0 0
        %7274 = vmatpush1.bf16.msra.mxu0 %v7261
        %7275 = vmatprep.subr.bf16.mxu0 0
        %7276 = vmatpush1.bf16.msra.mxu0 %v7262
        %7277 = vmatprep.subr.bf16.mxu0 0
        %7278 = vmatpush1.bf16.msra.mxu0 %v7263
        %7279 = vmatprep.subr.bf16.mxu0 0
        %7280 = vmatpush1.bf16.msra.mxu0 0
        %7281 = vmatprep.subr.bf16.mxu0 0
        %7282 = vmatpush1.bf16.msra.mxu0 0
        %7283 = vmatprep.subr.bf16.mxu0 0
        %7284 = vmatpush1.bf16.msra.mxu0 0
        %7285 = vmatprep.subr.bf16.mxu0 0
        %7286 = vmatpush1.bf16.msra.mxu0 0
        %7287 = vmatprep.subr.bf16.mxu0 0
        %7288 = vmatpush1.bf16.msra.mxu0 0
        %7289 = vmatprep.subr.bf16.mxu0 0
        %7290 = vmatpush1.bf16.msra.mxu0 0
        %7291 = vmatprep.subr.bf16.mxu0 0
        %7292 = vmatpush1.bf16.msra.mxu0 0
        %7293 = vmatprep.subr.bf16.mxu0 0
        %7294 = vmatpush1.bf16.msra.mxu0 0
        %7295 = vmatprep.subr.bf16.mxu0 0
        %7296 = vmatpush1.bf16.msra.mxu0 0
        %7297 = vmatprep.subr.bf16.mxu0 0
        %7298 = vmatpush1.bf16.msra.mxu0 0
        %7299 = vmatprep.subr.bf16.mxu0 0
        %7300 = vmatpush1.bf16.msra.mxu0 0
        %7301 = vmatprep.subr.bf16.mxu0 0
        %7302 = vmatpush1.bf16.msra.mxu0 0
        %7303 = vmatprep.mubr.bf16.mxu0 0
        %7304 = vmatmul.mubr.bf16.gmra.mrb[0].mxu0 %v7269
        %v7305 = vpop.f32.mrb[0].mxu0
        %v7306 = vadd.f32 %v7239, %v7305
        %v7307 = vpop.f32.mrb[0].mxu0
        %v7308 = vpop.f32.mrb[0].mxu0
        %v7309 = vpop.f32.mrb[0].mxu0
        %7310 = vdwg.mxu0
        %v7311 = vld [vmem:[#allocation3] sm:$0x2]
        %v7312 = vld [vmem:[%s5 + $0x40] sm:$0xf]
        %v7313 = vld [vmem:[%s5 + $0x44] sm:$0xf]
        %v7314 = vld [vmem:[%s5 + $0x48] sm:$0xf]
        %v7315 = vld [vmem:[%s5 + $0x4c] sm:$0xf]
        %v7316 = vld [vmem:[%s5 + $0x50] sm:$0xf]
        %v7317 = vld [vmem:[%s5 + $0x54] sm:$0xf]
        %v7318 = vld [vmem:[%s5 + $0x58] sm:$0xf]
        %v7319 = vld [vmem:[%s5 + $0x5c] sm:$0xf]
        %v7322 = vunpack.c.l.s4 1983009808
        %v7323 = vunpack.c.0.s8 %v7322
        %v7324 = vlaneseq
        %v7325 = vshrl.u32 %v7324, 7
        %v7326 = vsub.s32 %v7323, %v7325
        %v7327 = vrot.slane %v7311, %v7326
        %v7328 = vrot.slane %v7327, 1
        %v7337 = vunpack.c.l.b16 %v7312
        %v7338 = vunpack.c.l.b16 %v7313
        %v7339 = vunpack.c.l.b16 %v7314
        %v7340 = vunpack.c.l.b16 %v7315
        %v7341 = vunpack.c.l.b16 %v7316
        %v7342 = vunpack.c.l.b16 %v7317
        %v7343 = vunpack.c.l.b16 %v7318
        %v7344 = vunpack.c.l.b16 %v7319
        %v7345 = vpack.c.b16 %v7338, %v7337
        %v7346 = vpack.c.b16 %v7340, %v7339
        %v7347 = vpack.c.b16 %v7342, %v7341
        %v7348 = vpack.c.b16 %v7344, %v7343
        %v7354 = vsel %vm7200, %v7328, 0
        %7356 = vmatprep.subr.bf16.mxu0 0
        %7357 = vmatpush1.bf16.msra.mxu0 %v7345
        %7358 = vmatprep.subr.bf16.mxu0 0
        %7359 = vmatpush1.bf16.msra.mxu0 %v7346
        %7360 = vmatprep.subr.bf16.mxu0 0
        %7361 = vmatpush1.bf16.msra.mxu0 %v7347
        %7362 = vmatprep.subr.bf16.mxu0 0
        %7363 = vmatpush1.bf16.msra.mxu0 %v7348
        %7364 = vmatprep.subr.bf16.mxu0 0
        %7365 = vmatpush1.bf16.msra.mxu0 0
        %7366 = vmatprep.subr.bf16.mxu0 0
        %7367 = vmatpush1.bf16.msra.mxu0 0
        %7368 = vmatprep.subr.bf16.mxu0 0
        %7369 = vmatpush1.bf16.msra.mxu0 0
        %7370 = vmatprep.subr.bf16.mxu0 0
        %7371 = vmatpush1.bf16.msra.mxu0 0
        %7372 = vmatprep.subr.bf16.mxu0 0
        %7373 = vmatpush1.bf16.msra.mxu0 0
        %7374 = vmatprep.subr.bf16.mxu0 0
        %7375 = vmatpush1.bf16.msra.mxu0 0
        %7376 = vmatprep.subr.bf16.mxu0 0
        %7377 = vmatpush1.bf16.msra.mxu0 0
        %7378 = vmatprep.subr.bf16.mxu0 0
        %7379 = vmatpush1.bf16.msra.mxu0 0
        %7380 = vmatprep.subr.bf16.mxu0 0
        %7381 = vmatpush1.bf16.msra.mxu0 0
        %7382 = vmatprep.subr.bf16.mxu0 0
        %7383 = vmatpush1.bf16.msra.mxu0 0
        %7384 = vmatprep.subr.bf16.mxu0 0
        %7385 = vmatpush1.bf16.msra.mxu0 0
        %7386 = vmatprep.subr.bf16.mxu0 0
        %7387 = vmatpush1.bf16.msra.mxu0 0
        %7388 = vmatprep.mubr.bf16.mxu0 0
        %7389 = vmatmul.mubr.bf16.gmra.mrb[0].mxu0 %v7354
        %v7390 = vpop.f32.mrb[0].mxu0
        %v7391 = vadd.f32 0.0, %v7390
        %v7392 = vpop.f32.mrb[0].mxu0
        %v7393 = vpop.f32.mrb[0].mxu0
        %v7394 = vpop.f32.mrb[0].mxu0
        %7395 = vdwg.mxu0
        %v7396 = vadd.f32 %v7306, %v7391
        %s7397 = scalar_lea.vmem [#allocation3], 2
        %v7398 = vld [vmem:[%s7397] sm:$0x1]
        %v7399 = vld [vmem:[%s5 + $0x60] sm:$0xf]
        %v7400 = vld [vmem:[%s5 + $0x64] sm:$0xf]
        %v7401 = vld [vmem:[%s5 + $0x68] sm:$0xf]
        %v7402 = vld [vmem:[%s5 + $0x6c] sm:$0xf]
        %v7403 = vld [vmem:[%s5 + $0x70] sm:$0xf]
        %v7404 = vld [vmem:[%s5 + $0x74] sm:$0xf]
        %v7405 = vld [vmem:[%s5 + $0x78] sm:$0xf]
        %v7406 = vld [vmem:[%s5 + $0x7c] sm:$0xf]
        %v7415 = vunpack.c.l.b16 %v7399
        %v7416 = vunpack.c.l.b16 %v7400
        %v7417 = vunpack.c.l.b16 %v7401
        %v7418 = vunpack.c.l.b16 %v7402
        %v7419 = vunpack.c.l.b16 %v7403
        %v7420 = vunpack.c.l.b16 %v7404
        %v7421 = vunpack.c.l.b16 %v7405
        %v7422 = vunpack.c.l.b16 %v7406
        %v7423 = vpack.c.b16 %v7416, %v7415
        %v7424 = vpack.c.b16 %v7418, %v7417
        %v7425 = vpack.c.b16 %v7420, %v7419
        %v7426 = vpack.c.b16 %v7422, %v7421
        %v7432 = vsel %vm7200, %v7398, 0
        %7434 = vmatprep.subr.bf16.mxu0 0
        %7435 = vmatpush1.bf16.msra.mxu0 %v7423
        %7436 = vmatprep.subr.bf16.mxu0 0
        %7437 = vmatpush1.bf16.msra.mxu0 %v7424
        %7438 = vmatprep.subr.bf16.mxu0 0
        %7439 = vmatpush1.bf16.msra.mxu0 %v7425
        %7440 = vmatprep.subr.bf16.mxu0 0
        %7441 = vmatpush1.bf16.msra.mxu0 %v7426
        %7442 = vmatprep.subr.bf16.mxu0 0
        %7443 = vmatpush1.bf16.msra.mxu0 0
        %7444 = vmatprep.subr.bf16.mxu0 0
        %7445 = vmatpush1.bf16.msra.mxu0 0
        %7446 = vmatprep.subr.bf16.mxu0 0
        %7447 = vmatpush1.bf16.msra.mxu0 0
        %7448 = vmatprep.subr.bf16.mxu0 0
        %7449 = vmatpush1.bf16.msra.mxu0 0
        %7450 = vmatprep.subr.bf16.mxu0 0
        %7451 = vmatpush1.bf16.msra.mxu0 0
        %7452 = vmatprep.subr.bf16.mxu0 0
        %7453 = vmatpush1.bf16.msra.mxu0 0
        %7454 = vmatprep.subr.bf16.mxu0 0
        %7455 = vmatpush1.bf16.msra.mxu0 0
        %7456 = vmatprep.subr.bf16.mxu0 0
        %7457 = vmatpush1.bf16.msra.mxu0 0
        %7458 = vmatprep.subr.bf16.mxu0 0
        %7459 = vmatpush1.bf16.msra.mxu0 0
        %7460 = vmatprep.subr.bf16.mxu0 0
        %7461 = vmatpush1.bf16.msra.mxu0 0
        %7462 = vmatprep.subr.bf16.mxu0 0
        %7463 = vmatpush1.bf16.msra.mxu0 0
        %7464 = vmatprep.subr.bf16.mxu0 0
        %7465 = vmatpush1.bf16.msra.mxu0 0
        %7466 = vmatprep.mubr.bf16.mxu0 0
        %7467 = vmatmul.mubr.bf16.gmra.mrb[0].mxu0 %v7432
        %v7468 = vpop.f32.mrb[0].mxu0
        %v7469 = vadd.f32 0.0, %v7468
        %v7470 = vpop.f32.mrb[0].mxu0
        %v7471 = vpop.f32.mrb[0].mxu0
        %v7472 = vpop.f32.mrb[0].mxu0
        %7473 = vdwg.mxu0
        %v7474 = vadd.f32 %v7396, %v7469
        %v7475 = vld [vmem:[%s5 + $0x80] sm:$0xf]
        %v7476 = vld [vmem:[%s5 + $0x84] sm:$0xf]
        %v7477 = vld [vmem:[%s5 + $0x88] sm:$0xf]
        %v7478 = vld [vmem:[%s5 + $0x8c] sm:$0xf]
        %v7479 = vld [vmem:[%s5 + $0x90] sm:$0xf]
        %v7480 = vld [vmem:[%s5 + $0x94] sm:$0xf]
        %v7481 = vld [vmem:[%s5 + $0x98] sm:$0xf]
        %v7482 = vld [vmem:[%s5 + $0x9c] sm:$0xf]
        %v7485 = vunpack.c.l.s4 1983009808
        %v7486 = vunpack.c.0.s8 %v7485
        %v7487 = vlaneseq
        %v7488 = vshrl.u32 %v7487, 7
        %v7489 = vsub.s32 %v7486, %v7488
        %v7490 = vrot.slane %v7398, %v7489
        %v7492 = vshrl.u32 %v7490, 16
        %v7502 = vunpack.c.l.b16 %v7475
        %v7503 = vunpack.c.l.b16 %v7476
        %v7504 = vunpack.c.l.b16 %v7477
        %v7505 = vunpack.c.l.b16 %v7478
        %v7506 = vunpack.c.l.b16 %v7479
        %v7507 = vunpack.c.l.b16 %v7480
        %v7508 = vunpack.c.l.b16 %v7481
        %v7509 = vunpack.c.l.b16 %v7482
        %v7510 = vpack.c.b16 %v7503, %v7502
        %v7511 = vpack.c.b16 %v7505, %v7504
        %v7512 = vpack.c.b16 %v7507, %v7506
        %v7513 = vpack.c.b16 %v7509, %v7508
        %v7519 = vsel %vm7200, %v7492, 0
        %7521 = vmatprep.subr.bf16.mxu0 0
        %7522 = vmatpush1.bf16.msra.mxu0 %v7510
        %7523 = vmatprep.subr.bf16.mxu0 0
        %7524 = vmatpush1.bf16.msra.mxu0 %v7511
        %7525 = vmatprep.subr.bf16.mxu0 0
        %7526 = vmatpush1.bf16.msra.mxu0 %v7512
        %7527 = vmatprep.subr.bf16.mxu0 0
        %7528 = vmatpush1.bf16.msra.mxu0 %v7513
        %7529 = vmatprep.subr.bf16.mxu0 0
        %7530 = vmatpush1.bf16.msra.mxu0 0
        %7531 = vmatprep.subr.bf16.mxu0 0
        %7532 = vmatpush1.bf16.msra.mxu0 0
        %7533 = vmatprep.subr.bf16.mxu0 0
        %7534 = vmatpush1.bf16.msra.mxu0 0
        %7535 = vmatprep.subr.bf16.mxu0 0
        %7536 = vmatpush1.bf16.msra.mxu0 0
        %7537 = vmatprep.subr.bf16.mxu0 0
        %7538 = vmatpush1.bf16.msra.mxu0 0
        %7539 = vmatprep.subr.bf16.mxu0 0
        %7540 = vmatpush1.bf16.msra.mxu0 0
        %7541 = vmatprep.subr.bf16.mxu0 0
        %7542 = vmatpush1.bf16.msra.mxu0 0
        %7543 = vmatprep.subr.bf16.mxu0 0
        %7544 = vmatpush1.bf16.msra.mxu0 0
        %7545 = vmatprep.subr.bf16.mxu0 0
        %7546 = vmatpush1.bf16.msra.mxu0 0
        %7547 = vmatprep.subr.bf16.mxu0 0
        %7548 = vmatpush1.bf16.msra.mxu0 0
        %7549 = vmatprep.subr.bf16.mxu0 0
        %7550 = vmatpush1.bf16.msra.mxu0 0
        %7551 = vmatprep.subr.bf16.mxu0 0
        %7552 = vmatpush1.bf16.msra.mxu0 0
        %7553 = vmatprep.mubr.bf16.mxu0 0
        %7554 = vmatmul.mubr.bf16.gmra.mrb[0].mxu0 %v7519
        %v7555 = vpop.f32.mrb[0].mxu0
        %v7556 = vadd.f32 0.0, %v7555
        %v7557 = vpop.f32.mrb[0].mxu0
        %v7558 = vpop.f32.mrb[0].mxu0
        %v7559 = vpop.f32.mrb[0].mxu0
        %7560 = vdwg.mxu0
        %v7561 = vadd.f32 %v7474, %v7556
        %v7562 = vld [vmem:[%s7397] sm:$0x2]
        %v7563 = vld [vmem:[%s5 + $0xa0] sm:$0xf]
        %v7564 = vld [vmem:[%s5 + $0xa4] sm:$0xf]
        %v7565 = vld [vmem:[%s5 + $0xa8] sm:$0xf]
        %v7566 = vld [vmem:[%s5 + $0xac] sm:$0xf]
        %v7567 = vld [vmem:[%s5 + $0xb0] sm:$0xf]
        %v7568 = vld [vmem:[%s5 + $0xb4] sm:$0xf]
        %v7569 = vld [vmem:[%s5 + $0xb8] sm:$0xf]
        %v7570 = vld [vmem:[%s5 + $0xbc] sm:$0xf]
        %v7573 = vunpack.c.l.s4 1983009808
        %v7574 = vunpack.c.0.s8 %v7573
        %v7575 = vlaneseq
        %v7576 = vshrl.u32 %v7575, 7
        %v7577 = vsub.s32 %v7574, %v7576
        %v7578 = vrot.slane %v7562, %v7577
        %v7579 = vrot.slane %v7578, 1
        %v7588 = vunpack.c.l.b16 %v7563
        %v7589 = vunpack.c.l.b16 %v7564
        %v7590 = vunpack.c.l.b16 %v7565
        %v7591 = vunpack.c.l.b16 %v7566
        %v7592 = vunpack.c.l.b16 %v7567
        %v7593 = vunpack.c.l.b16 %v7568
        %v7594 = vunpack.c.l.b16 %v7569
        %v7595 = vunpack.c.l.b16 %v7570
        %v7596 = vpack.c.b16 %v7589, %v7588
        %v7597 = vpack.c.b16 %v7591, %v7590
        %v7598 = vpack.c.b16 %v7593, %v7592
        %v7599 = vpack.c.b16 %v7595, %v7594
        %v7605 = vsel %vm7200, %v7579, 0
        %7607 = vmatprep.subr.bf16.mxu0 0
        %7608 = vmatpush1.bf16.msra.mxu0 %v7596
        %7609 = vmatprep.subr.bf16.mxu0 0
        %7610 = vmatpush1.bf16.msra.mxu0 %v7597
        %7611 = vmatprep.subr.bf16.mxu0 0
        %7612 = vmatpush1.bf16.msra.mxu0 %v7598
        %7613 = vmatprep.subr.bf16.mxu0 0
        %7614 = vmatpush1.bf16.msra.mxu0 %v7599
        %7615 = vmatprep.subr.bf16.mxu0 0
        %7616 = vmatpush1.bf16.msra.mxu0 0
        %7617 = vmatprep.subr.bf16.mxu0 0
        %7618 = vmatpush1.bf16.msra.mxu0 0
        %7619 = vmatprep.subr.bf16.mxu0 0
        %7620 = vmatpush1.bf16.msra.mxu0 0
        %7621 = vmatprep.subr.bf16.mxu0 0
        %7622 = vmatpush1.bf16.msra.mxu0 0
        %7623 = vmatprep.subr.bf16.mxu0 0
        %7624 = vmatpush1.bf16.msra.mxu0 0
        %7625 = vmatprep.subr.bf16.mxu0 0
        %7626 = vmatpush1.bf16.msra.mxu0 0
        %7627 = vmatprep.subr.bf16.mxu0 0
        %7628 = vmatpush1.bf16.msra.mxu0 0
        %7629 = vmatprep.subr.bf16.mxu0 0
        %7630 = vmatpush1.bf16.msra.mxu0 0
        %7631 = vmatprep.subr.bf16.mxu0 0
        %7632 = vmatpush1.bf16.msra.mxu0 0
        %7633 = vmatprep.subr.bf16.mxu0 0
        %7634 = vmatpush1.bf16.msra.mxu0 0
        %7635 = vmatprep.subr.bf16.mxu0 0
        %7636 = vmatpush1.bf16.msra.mxu0 0
        %7637 = vmatprep.subr.bf16.mxu0 0
        %7638 = vmatpush1.bf16.msra.mxu0 0
        %7639 = vmatprep.mubr.bf16.mxu0 0
        %7640 = vmatmul.mubr.bf16.gmra.mrb[0].mxu0 %v7605
        %v7641 = vpop.f32.mrb[0].mxu0
        %v7642 = vadd.f32 0.0, %v7641
        %v7643 = vpop.f32.mrb[0].mxu0
        %v7644 = vpop.f32.mrb[0].mxu0
        %v7645 = vpop.f32.mrb[0].mxu0
        %7646 = vdwg.mxu0
        %v7647 = vadd.f32 %v7561, %v7642
        %s7648 = scalar_lea.vmem [#allocation3], 4
        %v7649 = vld [vmem:[%s7648] sm:$0x1]
        %v7650 = vld [vmem:[%s5 + $0xc0] sm:$0xf]
        %v7651 = vld [vmem:[%s5 + $0xc4] sm:$0xf]
        %v7652 = vld [vmem:[%s5 + $0xc8] sm:$0xf]
        %v7653 = vld [vmem:[%s5 + $0xcc] sm:$0xf]
        %v7654 = vld [vmem:[%s5 + $0xd0] sm:$0xf]
        %v7655 = vld [vmem:[%s5 + $0xd4] sm:$0xf]
        %v7656 = vld [vmem:[%s5 + $0xd8] sm:$0xf]
        %v7657 = vld [vmem:[%s5 + $0xdc] sm:$0xf]
        %v7666 = vunpack.c.l.b16 %v7650
        %v7667 = vunpack.c.l.b16 %v7651
        %v7668 = vunpack.c.l.b16 %v7652
        %v7669 = vunpack.c.l.b16 %v7653
        %v7670 = vunpack.c.l.b16 %v7654
        %v7671 = vunpack.c.l.b16 %v7655
        %v7672 = vunpack.c.l.b16 %v7656
        %v7673 = vunpack.c.l.b16 %v7657
        %v7674 = vpack.c.b16 %v7667, %v7666
        %v7675 = vpack.c.b16 %v7669, %v7668
        %v7676 = vpack.c.b16 %v7671, %v7670
        %v7677 = vpack.c.b16 %v7673, %v7672
        %v7683 = vsel %vm7200, %v7649, 0
        %7685 = vmatprep.subr.bf16.mxu0 0
        %7686 = vmatpush1.bf16.msra.mxu0 %v7674
        %7687 = vmatprep.subr.bf16.mxu0 0
        %7688 = vmatpush1.bf16.msra.mxu0 %v7675
        %7689 = vmatprep.subr.bf16.mxu0 0
        %7690 = vmatpush1.bf16.msra.mxu0 %v7676
        %7691 = vmatprep.subr.bf16.mxu0 0
        %7692 = vmatpush1.bf16.msra.mxu0 %v7677
        %7693 = vmatprep.subr.bf16.mxu0 0
        %7694 = vmatpush1.bf16.msra.mxu0 0
        %7695 = vmatprep.subr.bf16.mxu0 0
        %7696 = vmatpush1.bf16.msra.mxu0 0
        %7697 = vmatprep.subr.bf16.mxu0 0
        %7698 = vmatpush1.bf16.msra.mxu0 0
        %7699 = vmatprep.subr.bf16.mxu0 0
        %7700 = vmatpush1.bf16.msra.mxu0 0
        %7701 = vmatprep.subr.bf16.mxu0 0
        %7702 = vmatpush1.bf16.msra.mxu0 0
        %7703 = vmatprep.subr.bf16.mxu0 0
        %7704 = vmatpush1.bf16.msra.mxu0 0
        %7705 = vmatprep.subr.bf16.mxu0 0
        %7706 = vmatpush1.bf16.msra.mxu0 0
        %7707 = vmatprep.subr.bf16.mxu0 0
        %7708 = vmatpush1.bf16.msra.mxu0 0
        %7709 = vmatprep.subr.bf16.mxu0 0
        %7710 = vmatpush1.bf16.msra.mxu0 0
        %7711 = vmatprep.subr.bf16.mxu0 0
        %7712 = vmatpush1.bf16.msra.mxu0 0
        %7713 = vmatprep.subr.bf16.mxu0 0
        %7714 = vmatpush1.bf16.msra.mxu0 0
        %7715 = vmatprep.subr.bf16.mxu0 0
        %7716 = vmatpush1.bf16.msra.mxu0 0
        %7717 = vmatprep.mubr.bf16.mxu0 0
        %7718 = vmatmul.mubr.bf16.gmra.mrb[0].mxu0 %v7683
        %v7719 = vpop.f32.mrb[0].mxu0
        %v7720 = vadd.f32 0.0, %v7719
        %v7721 = vpop.f32.mrb[0].mxu0
        %v7722 = vpop.f32.mrb[0].mxu0
        %v7723 = vpop.f32.mrb[0].mxu0
        %7724 = vdwg.mxu0
        %v7725 = vadd.f32 %v7647, %v7720
        %v7726 = vld [vmem:[%s5 + $0xe0] sm:$0xf]
        %v7727 = vld [vmem:[%s5 + $0xe4] sm:$0xf]
        %v7728 = vld [vmem:[%s5 + $0xe8] sm:$0xf]
        %v7729 = vld [vmem:[%s5 + $0xec] sm:$0xf]
        %v7730 = vld [vmem:[%s5 + $0xf0] sm:$0xf]
        %v7731 = vld [vmem:[%s5 + $0xf4] sm:$0xf]
        %v7732 = vld [vmem:[%s5 + $0xf8] sm:$0xf]
        %v7733 = vld [vmem:[%s5 + $0xfc] sm:$0xf]
        %v7736 = vunpack.c.l.s4 1983009808
        %v7737 = vunpack.c.0.s8 %v7736
        %v7738 = vlaneseq
        %v7739 = vshrl.u32 %v7738, 7
        %v7740 = vsub.s32 %v7737, %v7739
        %v7741 = vrot.slane %v7649, %v7740
        %v7743 = vshrl.u32 %v7741, 16
        %v7753 = vunpack.c.l.b16 %v7726
        %v7754 = vunpack.c.l.b16 %v7727
        %v7755 = vunpack.c.l.b16 %v7728
        %v7756 = vunpack.c.l.b16 %v7729
        %v7757 = vunpack.c.l.b16 %v7730
        %v7758 = vunpack.c.l.b16 %v7731
        %v7759 = vunpack.c.l.b16 %v7732
        %v7760 = vunpack.c.l.b16 %v7733
        %v7761 = vpack.c.b16 %v7754, %v7753
        %v7762 = vpack.c.b16 %v7756, %v7755
        %v7763 = vpack.c.b16 %v7758, %v7757
        %v7764 = vpack.c.b16 %v7760, %v7759
        %v7770 = vsel %vm7200, %v7743, 0
        %7772 = vmatprep.subr.bf16.mxu0 0
        %7773 = vmatpush1.bf16.msra.mxu0 %v7761
        %7774 = vmatprep.subr.bf16.mxu0 0
        %7775 = vmatpush1.bf16.msra.mxu0 %v7762
        %7776 = vmatprep.subr.bf16.mxu0 0
        %7777 = vmatpush1.bf16.msra.mxu0 %v7763
        %7778 = vmatprep.subr.bf16.mxu0 0
        %7779 = vmatpush1.bf16.msra.mxu0 %v7764
        %7780 = vmatprep.subr.bf16.mxu0 0
        %7781 = vmatpush1.bf16.msra.mxu0 0
        %7782 = vmatprep.subr.bf16.mxu0 0
        %7783 = vmatpush1.bf16.msra.mxu0 0
        %7784 = vmatprep.subr.bf16.mxu0 0
        %7785 = vmatpush1.bf16.msra.mxu0 0
        %7786 = vmatprep.subr.bf16.mxu0 0
        %7787 = vmatpush1.bf16.msra.mxu0 0
        %7788 = vmatprep.subr.bf16.mxu0 0
        %7789 = vmatpush1.bf16.msra.mxu0 0
        %7790 = vmatprep.subr.bf16.mxu0 0
        %7791 = vmatpush1.bf16.msra.mxu0 0
        %7792 = vmatprep.subr.bf16.mxu0 0
        %7793 = vmatpush1.bf16.msra.mxu0 0
        %7794 = vmatprep.subr.bf16.mxu0 0
        %7795 = vmatpush1.bf16.msra.mxu0 0
        %7796 = vmatprep.subr.bf16.mxu0 0
        %7797 = vmatpush1.bf16.msra.mxu0 0
        %7798 = vmatprep.subr.bf16.mxu0 0
        %7799 = vmatpush1.bf16.msra.mxu0 0
        %7800 = vmatprep.subr.bf16.mxu0 0
        %7801 = vmatpush1.bf16.msra.mxu0 0
        %7802 = vmatprep.subr.bf16.mxu0 0
        %7803 = vmatpush1.bf16.msra.mxu0 0
        %7804 = vmatprep.mubr.bf16.mxu0 0
        %7805 = vmatmul.mubr.bf16.gmra.mrb[0].mxu0 %v7770
        %v7806 = vpop.f32.mrb[0].mxu0
        %v7807 = vadd.f32 0.0, %v7806
        %v7808 = vpop.f32.mrb[0].mxu0
        %v7809 = vpop.f32.mrb[0].mxu0
        %v7810 = vpop.f32.mrb[0].mxu0
        %7811 = vdwg.mxu0
        %v7812 = vadd.f32 %v7725, %v7807
        %v7813 = vld [vmem:[%s7648] sm:$0x2]
        %v7814 = vld [vmem:[%s5 + $0x100] sm:$0xf]
        %v7815 = vld [vmem:[%s5 + $0x104] sm:$0xf]
        %v7816 = vld [vmem:[%s5 + $0x108] sm:$0xf]
        %v7817 = vld [vmem:[%s5 + $0x10c] sm:$0xf]
        %v7818 = vld [vmem:[%s5 + $0x110] sm:$0xf]
        %v7819 = vld [vmem:[%s5 + $0x114] sm:$0xf]
        %v7820 = vld [vmem:[%s5 + $0x118] sm:$0xf]
        %v7821 = vld [vmem:[%s5 + $0x11c] sm:$0xf]
        %v7824 = vunpack.c.l.s4 1983009808
        %v7825 = vunpack.c.0.s8 %v7824
        %v7826 = vlaneseq
        %v7827 = vshrl.u32 %v7826, 7
        %v7828 = vsub.s32 %v7825, %v7827
        %v7829 = vrot.slane %v7813, %v7828
        %v7830 = vrot.slane %v7829, 1
        %v7839 = vunpack.c.l.b16 %v7814
        %v7840 = vunpack.c.l.b16 %v7815
        %v7841 = vunpack.c.l.b16 %v7816
        %v7842 = vunpack.c.l.b16 %v7817
        %v7843 = vunpack.c.l.b16 %v7818
        %v7844 = vunpack.c.l.b16 %v7819
        %v7845 = vunpack.c.l.b16 %v7820
        %v7846 = vunpack.c.l.b16 %v7821
        %v7847 = vpack.c.b16 %v7840, %v7839
        %v7848 = vpack.c.b16 %v7842, %v7841
        %v7849 = vpack.c.b16 %v7844, %v7843
        %v7850 = vpack.c.b16 %v7846, %v7845
        %v7856 = vsel %vm7200, %v7830, 0
        %7858 = vmatprep.subr.bf16.mxu0 0
        %7859 = vmatpush1.bf16.msra.mxu0 %v7847
        %7860 = vmatprep.subr.bf16.mxu0 0
        %7861 = vmatpush1.bf16.msra.mxu0 %v7848
        %7862 = vmatprep.subr.bf16.mxu0 0
        %7863 = vmatpush1.bf16.msra.mxu0 %v7849
        %7864 = vmatprep.subr.bf16.mxu0 0
        %7865 = vmatpush1.bf16.msra.mxu0 %v7850
        %7866 = vmatprep.subr.bf16.mxu0 0
        %7867 = vmatpush1.bf16.msra.mxu0 0
        %7868 = vmatprep.subr.bf16.mxu0 0
        %7869 = vmatpush1.bf16.msra.mxu0 0
        %7870 = vmatprep.subr.bf16.mxu0 0
        %7871 = vmatpush1.bf16.msra.mxu0 0
        %7872 = vmatprep.subr.bf16.mxu0 0
        %7873 = vmatpush1.bf16.msra.mxu0 0
        %7874 = vmatprep.subr.bf16.mxu0 0
        %7875 = vmatpush1.bf16.msra.mxu0 0
        %7876 = vmatprep.subr.bf16.mxu0 0
        %7877 = vmatpush1.bf16.msra.mxu0 0
        %7878 = vmatprep.subr.bf16.mxu0 0
        %7879 = vmatpush1.bf16.msra.mxu0 0
        %7880 = vmatprep.subr.bf16.mxu0 0
        %7881 = vmatpush1.bf16.msra.mxu0 0
        %7882 = vmatprep.subr.bf16.mxu0 0
        %7883 = vmatpush1.bf16.msra.mxu0 0
        %7884 = vmatprep.subr.bf16.mxu0 0
        %7885 = vmatpush1.bf16.msra.mxu0 0
        %7886 = vmatprep.subr.bf16.mxu0 0
        %7887 = vmatpush1.bf16.msra.mxu0 0
        %7888 = vmatprep.subr.bf16.mxu0 0
        %7889 = vmatpush1.bf16.msra.mxu0 0
        %7890 = vmatprep.mubr.bf16.mxu0 0
        %7891 = vmatmul.mubr.bf16.gmra.mrb[0].mxu0 %v7856
        %v7892 = vpop.f32.mrb[0].mxu0
        %v7893 = vadd.f32 0.0, %v7892
        %v7894 = vpop.f32.mrb[0].mxu0
        %v7895 = vpop.f32.mrb[0].mxu0
        %v7896 = vpop.f32.mrb[0].mxu0
        %7897 = vdwg.mxu0
        %v7898 = vadd.f32 %v7812, %v7893
        %v7899 = vld [vmem:[%s6] sm:$0x1]
        %v7900 = vadd.f32 %v7898, %v7899
        %v7901 = vmax.f32 %v7900, 0.0
        %v7902 = vpack.c.bf16 %v7901, %v7901
        %v7903 = vld [vmem:[%s8] sm:$0xf]
        %v7904 = vld [vmem:[%s7] sm:$0xff]
        %v7905 = vld [vmem:[%s7 + $0x8] sm:$0xff]
        %v7906 = vld [vmem:[%s7 + $0x10] sm:$0xff]
        %v7907 = vld [vmem:[%s7 + $0x18] sm:$0xff]
        %v7908 = vld [vmem:[%s7 + $0x20] sm:$0xff]
        %v7909 = vld [vmem:[%s7 + $0x28] sm:$0xff]
        %v7910 = vld [vmem:[%s7 + $0x30] sm:$0xff]
        %v7911 = vld [vmem:[%s7 + $0x38] sm:$0xff]
        %v7912 = vld [vmem:[%s7 + $0x40] sm:$0xff]
        %v7913 = vld [vmem:[%s7 + $0x48] sm:$0xff]
        %v7914 = vld [vmem:[%s7 + $0x50] sm:$0xff]
        %v7915 = vld [vmem:[%s7 + $0x58] sm:$0xff]
        %v7916 = vld [vmem:[%s7 + $0x60] sm:$0xff]
        %v7917 = vld [vmem:[%s7 + $0x68] sm:$0xff]
        %v7918 = vld [vmem:[%s7 + $0x70] sm:$0xff]
        %v7919 = vld [vmem:[%s7 + $0x78] sm:$0xff]
        %v7936 = vunpack.c.l.b16 %v7904
        %v7937 = vunpack.c.h.b16 %v7904
        %v7938 = vunpack.c.l.b16 %v7905
        %v7939 = vunpack.c.h.b16 %v7905
        %v7940 = vunpack.c.l.b16 %v7906
        %v7941 = vunpack.c.h.b16 %v7906
        %v7942 = vunpack.c.l.b16 %v7907
        %v7943 = vunpack.c.h.b16 %v7907
        %v7944 = vunpack.c.l.b16 %v7908
        %v7945 = vunpack.c.h.b16 %v7908
        %v7946 = vunpack.c.l.b16 %v7909
        %v7947 = vunpack.c.h.b16 %v7909
        %v7948 = vunpack.c.l.b16 %v7910
        %v7949 = vunpack.c.h.b16 %v7910
        %v7950 = vunpack.c.l.b16 %v7911
        %v7951 = vunpack.c.h.b16 %v7911
        %v7952 = vunpack.c.l.b16 %v7912
        %v7953 = vunpack.c.h.b16 %v7912
        %v7954 = vunpack.c.l.b16 %v7913
        %v7955 = vunpack.c.h.b16 %v7913
        %v7956 = vunpack.c.l.b16 %v7914
        %v7957 = vunpack.c.h.b16 %v7914
        %v7958 = vunpack.c.l.b16 %v7915
        %v7959 = vunpack.c.h.b16 %v7915
        %v7960 = vunpack.c.l.b16 %v7916
        %v7961 = vunpack.c.h.b16 %v7916
        %v7962 = vunpack.c.l.b16 %v7917
        %v7963 = vunpack.c.h.b16 %v7917
        %v7964 = vunpack.c.l.b16 %v7918
        %v7965 = vunpack.c.h.b16 %v7918
        %v7966 = vunpack.c.l.b16 %v7919
        %v7967 = vunpack.c.h.b16 %v7919
        %v7968 = vpack.c.b16 %v7940, %v7936
        %v7969 = vpack.c.b16 %v7941, %v7937
        %v7970 = vpack.c.b16 %v7942, %v7938
        %v7971 = vpack.c.b16 %v7943, %v7939
        %v7972 = vpack.c.b16 %v7948, %v7944
        %v7973 = vpack.c.b16 %v7949, %v7945
        %v7974 = vpack.c.b16 %v7950, %v7946
        %v7975 = vpack.c.b16 %v7951, %v7947
        %v7976 = vpack.c.b16 %v7956, %v7952
        %v7977 = vpack.c.b16 %v7957, %v7953
        %v7978 = vpack.c.b16 %v7958, %v7954
        %v7979 = vpack.c.b16 %v7959, %v7955
        %v7980 = vpack.c.b16 %v7964, %v7960
        %v7981 = vpack.c.b16 %v7965, %v7961
        %v7982 = vpack.c.b16 %v7966, %v7962
        %v7983 = vpack.c.b16 %v7967, %v7963
        %v8001 = vsel %vm7200, %v7902, 0
        %8003 = vmatprep.subr.bf16.mxu0 %v7969
        %8004 = vmatpush1.bf16.msra.mxu0 %v7968
        %8005 = vmatprep.subr.bf16.mxu0 %v7973
        %8006 = vmatpush1.bf16.msra.mxu0 %v7972
        %8007 = vmatprep.subr.bf16.mxu0 %v7977
        %8008 = vmatpush1.bf16.msra.mxu0 %v7976
        %8009 = vmatprep.subr.bf16.mxu0 %v7981
        %8010 = vmatpush1.bf16.msra.mxu0 %v7980
        %8011 = vmatprep.subr.bf16.mxu0 0
        %8012 = vmatpush1.bf16.msra.mxu0 0
        %8013 = vmatprep.subr.bf16.mxu0 0
        %8014 = vmatpush1.bf16.msra.mxu0 0
        %8015 = vmatprep.subr.bf16.mxu0 0
        %8016 = vmatpush1.bf16.msra.mxu0 0
        %8017 = vmatprep.subr.bf16.mxu0 0
        %8018 = vmatpush1.bf16.msra.mxu0 0
        %8019 = vmatprep.subr.bf16.mxu0 0
        %8020 = vmatpush1.bf16.msra.mxu0 0
        %8021 = vmatprep.subr.bf16.mxu0 0
        %8022 = vmatpush1.bf16.msra.mxu0 0
        %8023 = vmatprep.subr.bf16.mxu0 0
        %8024 = vmatpush1.bf16.msra.mxu0 0
        %8025 = vmatprep.subr.bf16.mxu0 0
        %8026 = vmatpush1.bf16.msra.mxu0 0
        %8027 = vmatprep.subr.bf16.mxu0 0
        %8028 = vmatpush1.bf16.msra.mxu0 0
        %8029 = vmatprep.subr.bf16.mxu0 0
        %8030 = vmatpush1.bf16.msra.mxu0 0
        %8031 = vmatprep.subr.bf16.mxu0 0
        %8032 = vmatpush1.bf16.msra.mxu0 0
        %8033 = vmatprep.subr.bf16.mxu0 0
        %8034 = vmatpush1.bf16.msra.mxu0 0
        %8035 = vmatprep.mubr.bf16.mxu0 0
        %8036 = vmatmul.mubr.bf16.gmra.mrb[0].mxu0 %v8001
        %v8037 = vpop.f32.mrb[0].mxu0
        %v8038 = vadd.f32 0.0, %v8037
        %v8039 = vpop.f32.mrb[0].mxu0
        %v8040 = vadd.f32 0.0, %v8039
        %v8041 = vpop.f32.mrb[0].mxu0
        %v8042 = vpop.f32.mrb[0].mxu0
        %8043 = vdwg.mxu0
        %8044 = vmatprep.subr.bf16.mxu0 %v7971
        %8045 = vmatpush1.bf16.msra.mxu0 %v7970
        %8046 = vmatprep.subr.bf16.mxu0 %v7975
        %8047 = vmatpush1.bf16.msra.mxu0 %v7974
        %8048 = vmatprep.subr.bf16.mxu0 %v7979
        %8049 = vmatpush1.bf16.msra.mxu0 %v7978
        %8050 = vmatprep.subr.bf16.mxu0 %v7983
        %8051 = vmatpush1.bf16.msra.mxu0 %v7982
        %8052 = vmatprep.subr.bf16.mxu0 0
        %8053 = vmatpush1.bf16.msra.mxu0 0
        %8054 = vmatprep.subr.bf16.mxu0 0
        %8055 = vmatpush1.bf16.msra.mxu0 0
        %8056 = vmatprep.subr.bf16.mxu0 0
        %8057 = vmatpush1.bf16.msra.mxu0 0
        %8058 = vmatprep.subr.bf16.mxu0 0
        %8059 = vmatpush1.bf16.msra.mxu0 0
        %8060 = vmatprep.subr.bf16.mxu0 0
        %8061 = vmatpush1.bf16.msra.mxu0 0
        %8062 = vmatprep.subr.bf16.mxu0 0
        %8063 = vmatpush1.bf16.msra.mxu0 0
        %8064 = vmatprep.subr.bf16.mxu0 0
        %8065 = vmatpush1.bf16.msra.mxu0 0
        %8066 = vmatprep.subr.bf16.mxu0 0
        %8067 = vmatpush1.bf16.msra.mxu0 0
        %8068 = vmatprep.subr.bf16.mxu0 0
        %8069 = vmatpush1.bf16.msra.mxu0 0
        %8070 = vmatprep.subr.bf16.mxu0 0
        %8071 = vmatpush1.bf16.msra.mxu0 0
        %8072 = vmatprep.subr.bf16.mxu0 0
        %8073 = vmatpush1.bf16.msra.mxu0 0
        %8074 = vmatprep.subr.bf16.mxu0 0
        %8075 = vmatpush1.bf16.msra.mxu0 0
        %8076 = vmatprep.mubr.bf16.mxu0 0
        %8077 = vmatmul.mubr.bf16.gmra.mrb[0].mxu0 %v8001
        %v8078 = vpop.f32.mrb[0].mxu0
        %v8079 = vadd.f32 0.0, %v8078
        %v8080 = vpop.f32.mrb[0].mxu0
        %v8081 = vadd.f32 0.0, %v8080
        %v8082 = vpop.f32.mrb[0].mxu0
        %v8083 = vpop.f32.mrb[0].mxu0
        %8084 = vdwg.mxu0
        %v8089 = vcombine.low %v8038, %v8040
        %v8090 = vcombine.low %v8079, %v8081
        %v8092 = vunpack.c.l.s4 1966171168
        %v8093 = vunpack.c.0.s8 %v8092
        %v8094 = vlaneseq
        %v8095 = vshrl.u32 %v8094, 7
        %v8096 = vsub.s32 %v8093, %v8095
        %v8097 = vrot.slane %v8089, %v8096
        %v8099 = vunpack.c.l.s4 1966171168
        %v8100 = vunpack.c.0.s8 %v8099
        %v8101 = vlaneseq
        %v8102 = vshrl.u32 %v8101, 7
        %v8103 = vsub.s32 %v8100, %v8102
        %v8104 = vrot.slane %v8090, %v8103
        %v8105 = vcombine.low %v8097, %v8104
        %v8107 = vunpack.c.l.s4 1966171168
        %v8108 = vunpack.c.0.s8 %v8107
        %v8109 = vlaneseq
        %v8110 = vshrl.u32 %v8109, 7
        %v8111 = vsub.s32 %v8108, %v8110
        %v8112 = vrot.slane %v8105, %v8111
        %v8114 = vadd.f32 %v7903, %v8112
        %v8115 = vmax.f32 %v8114, 0.0
        %v8117 = vlaneseq
        %v8118 = vshrl.u32 %v8117, 7
        %v8119 = vsub.s32 0, %v8118
        %v8120 = vrot.slane %v8115, %v8119
        %v8121 = vlaneseq
        %v8122 = vshrl.u32 %v8121, 7
        %v8123 = vsub.s32 1, %v8122
        %v8124 = vrot.slane %v8115, %v8123
        %v8125 = vlaneseq
        %v8126 = vshrl.u32 %v8125, 7
        %v8127 = vsub.s32 2, %v8126
        %v8128 = vrot.slane %v8115, %v8127
        %v8129 = vlaneseq
        %v8130 = vshrl.u32 %v8129, 7
        %v8131 = vsub.s32 3, %v8130
        %v8132 = vrot.slane %v8115, %v8131
        %v8137 = vpack.c.bf16 %v8120, %v8120
        %v8138 = vpack.c.bf16 %v8124, %v8124
        %v8139 = vpack.c.bf16 %v8128, %v8128
        %v8140 = vpack.c.bf16 %v8132, %v8132
        %v8141 = vld [vmem:[%s9] sm:$0xf]
        %v8142 = vld [vmem:[%s9 + $0x4] sm:$0xf]
        %v8143 = vld [vmem:[%s9 + $0x8] sm:$0xf]
        %v8144 = vld [vmem:[%s9 + $0xc] sm:$0xf]
        %v8145 = vld [vmem:[%s9 + $0x10] sm:$0xf]
        %v8146 = vld [vmem:[%s9 + $0x14] sm:$0xf]
        %v8147 = vld [vmem:[%s9 + $0x18] sm:$0xf]
        %v8148 = vld [vmem:[%s9 + $0x1c] sm:$0xf]
        %v8149 = vld [vmem:[%s9 + $0x20] sm:$0xf]
        %v8150 = vld [vmem:[%s9 + $0x24] sm:$0xf]
        %v8151 = vld [vmem:[%s9 + $0x28] sm:$0xf]
        %v8152 = vld [vmem:[%s9 + $0x2c] sm:$0xf]
        %v8153 = vld [vmem:[%s9 + $0x30] sm:$0xf]
        %v8154 = vld [vmem:[%s9 + $0x34] sm:$0xf]
        %v8155 = vld [vmem:[%s9 + $0x38] sm:$0xf]
        %v8156 = vld [vmem:[%s9 + $0x3c] sm:$0xf]
        %v8157 = vld [vmem:[%s9 + $0x40] sm:$0xf]
        %v8158 = vld [vmem:[%s9 + $0x44] sm:$0xf]
        %v8159 = vld [vmem:[%s9 + $0x48] sm:$0xf]
        %v8160 = vld [vmem:[%s9 + $0x4c] sm:$0xf]
        %v8161 = vld [vmem:[%s9 + $0x50] sm:$0xf]
        %v8162 = vld [vmem:[%s9 + $0x54] sm:$0xf]
        %v8163 = vld [vmem:[%s9 + $0x58] sm:$0xf]
        %v8164 = vld [vmem:[%s9 + $0x5c] sm:$0xf]
        %v8165 = vld [vmem:[%s9 + $0x60] sm:$0xf]
        %v8166 = vld [vmem:[%s9 + $0x64] sm:$0xf]
        %v8167 = vld [vmem:[%s9 + $0x68] sm:$0xf]
        %v8168 = vld [vmem:[%s9 + $0x6c] sm:$0xf]
        %v8169 = vld [vmem:[%s9 + $0x70] sm:$0xf]
        %v8170 = vld [vmem:[%s9 + $0x74] sm:$0xf]
        %v8171 = vld [vmem:[%s9 + $0x78] sm:$0xf]
        %v8172 = vld [vmem:[%s9 + $0x7c] sm:$0xf]
        %v8173 = vld [vmem:[%s9 + $0x80] sm:$0xf]
        %v8174 = vld [vmem:[%s9 + $0x84] sm:$0xf]
        %v8175 = vld [vmem:[%s9 + $0x88] sm:$0xf]
        %v8176 = vld [vmem:[%s9 + $0x8c] sm:$0xf]
        %v8177 = vld [vmem:[%s9 + $0x90] sm:$0xf]
        %v8178 = vld [vmem:[%s9 + $0x94] sm:$0xf]
        %v8179 = vld [vmem:[%s9 + $0x98] sm:$0xf]
        %v8180 = vld [vmem:[%s9 + $0x9c] sm:$0xf]
        %v8181 = vld [vmem:[%s9 + $0xa0] sm:$0xf]
        %v8182 = vld [vmem:[%s9 + $0xa4] sm:$0xf]
        %v8183 = vld [vmem:[%s9 + $0xa8] sm:$0xf]
        %v8184 = vld [vmem:[%s9 + $0xac] sm:$0xf]
        %v8185 = vld [vmem:[%s9 + $0xb0] sm:$0xf]
        %v8186 = vld [vmem:[%s9 + $0xb4] sm:$0xf]
        %v8187 = vld [vmem:[%s9 + $0xb8] sm:$0xf]
        %v8188 = vld [vmem:[%s9 + $0xbc] sm:$0xf]
        %v8189 = vld [vmem:[%s9 + $0xc0] sm:$0xf]
        %v8190 = vld [vmem:[%s9 + $0xc4] sm:$0xf]
        %v8191 = vld [vmem:[%s9 + $0xc8] sm:$0xf]
        %v8192 = vld [vmem:[%s9 + $0xcc] sm:$0xf]
        %v8193 = vld [vmem:[%s9 + $0xd0] sm:$0xf]
        %v8194 = vld [vmem:[%s9 + $0xd4] sm:$0xf]
        %v8195 = vld [vmem:[%s9 + $0xd8] sm:$0xf]
        %v8196 = vld [vmem:[%s9 + $0xdc] sm:$0xf]
        %v8197 = vld [vmem:[%s9 + $0xe0] sm:$0xf]
        %v8198 = vld [vmem:[%s9 + $0xe4] sm:$0xf]
        %v8199 = vld [vmem:[%s9 + $0xe8] sm:$0xf]
        %v8200 = vld [vmem:[%s9 + $0xec] sm:$0xf]
        %v8201 = vld [vmem:[%s9 + $0xf0] sm:$0xf]
        %v8202 = vld [vmem:[%s9 + $0xf4] sm:$0xf]
        %v8203 = vld [vmem:[%s9 + $0xf8] sm:$0xf]
        %v8204 = vld [vmem:[%s9 + $0xfc] sm:$0xf]
        %v8205 = vld [vmem:[%s10] sm:$0x1]
        %v8270 = vunpack.c.l.b16 %v8141
        %v8271 = vunpack.c.l.b16 %v8142
        %v8272 = vunpack.c.l.b16 %v8143
        %v8273 = vunpack.c.l.b16 %v8144
        %v8274 = vunpack.c.l.b16 %v8145
        %v8275 = vunpack.c.l.b16 %v8146
        %v8276 = vunpack.c.l.b16 %v8147
        %v8277 = vunpack.c.l.b16 %v8148
        %v8278 = vunpack.c.l.b16 %v8149
        %v8279 = vunpack.c.l.b16 %v8150
        %v8280 = vunpack.c.l.b16 %v8151
        %v8281 = vunpack.c.l.b16 %v8152
        %v8282 = vunpack.c.l.b16 %v8153
        %v8283 = vunpack.c.l.b16 %v8154
        %v8284 = vunpack.c.l.b16 %v8155
        %v8285 = vunpack.c.l.b16 %v8156
        %v8286 = vunpack.c.l.b16 %v8157
        %v8287 = vunpack.c.l.b16 %v8158
        %v8288 = vunpack.c.l.b16 %v8159
        %v8289 = vunpack.c.l.b16 %v8160
        %v8290 = vunpack.c.l.b16 %v8161
        %v8291 = vunpack.c.l.b16 %v8162
        %v8292 = vunpack.c.l.b16 %v8163
        %v8293 = vunpack.c.l.b16 %v8164
        %v8294 = vunpack.c.l.b16 %v8165
        %v8295 = vunpack.c.l.b16 %v8166
        %v8296 = vunpack.c.l.b16 %v8167
        %v8297 = vunpack.c.l.b16 %v8168
        %v8298 = vunpack.c.l.b16 %v8169
        %v8299 = vunpack.c.l.b16 %v8170
        %v8300 = vunpack.c.l.b16 %v8171
        %v8301 = vunpack.c.l.b16 %v8172
        %v8302 = vunpack.c.l.b16 %v8173
        %v8303 = vunpack.c.l.b16 %v8174
        %v8304 = vunpack.c.l.b16 %v8175
        %v8305 = vunpack.c.l.b16 %v8176
        %v8306 = vunpack.c.l.b16 %v8177
        %v8307 = vunpack.c.l.b16 %v8178
        %v8308 = vunpack.c.l.b16 %v8179
        %v8309 = vunpack.c.l.b16 %v8180
        %v8310 = vunpack.c.l.b16 %v8181
        %v8311 = vunpack.c.l.b16 %v8182
        %v8312 = vunpack.c.l.b16 %v8183
        %v8313 = vunpack.c.l.b16 %v8184
        %v8314 = vunpack.c.l.b16 %v8185
        %v8315 = vunpack.c.l.b16 %v8186
        %v8316 = vunpack.c.l.b16 %v8187
        %v8317 = vunpack.c.l.b16 %v8188
        %v8318 = vunpack.c.l.b16 %v8189
        %v8319 = vunpack.c.l.b16 %v8190
        %v8320 = vunpack.c.l.b16 %v8191
        %v8321 = vunpack.c.l.b16 %v8192
        %v8322 = vunpack.c.l.b16 %v8193
        %v8323 = vunpack.c.l.b16 %v8194
        %v8324 = vunpack.c.l.b16 %v8195
        %v8325 = vunpack.c.l.b16 %v8196
        %v8326 = vunpack.c.l.b16 %v8197
        %v8327 = vunpack.c.l.b16 %v8198
        %v8328 = vunpack.c.l.b16 %v8199
        %v8329 = vunpack.c.l.b16 %v8200
        %v8330 = vunpack.c.l.b16 %v8201
        %v8331 = vunpack.c.l.b16 %v8202
        %v8332 = vunpack.c.l.b16 %v8203
        %v8333 = vunpack.c.l.b16 %v8204
        %v8334 = vpack.c.b16 %v8271, %v8270
        %v8335 = vpack.c.b16 %v8273, %v8272
        %v8336 = vpack.c.b16 %v8275, %v8274
        %v8337 = vpack.c.b16 %v8277, %v8276
        %v8338 = vpack.c.b16 %v8279, %v8278
        %v8339 = vpack.c.b16 %v8281, %v8280
        %v8340 = vpack.c.b16 %v8283, %v8282
        %v8341 = vpack.c.b16 %v8285, %v8284
        %v8342 = vpack.c.b16 %v8287, %v8286
        %v8343 = vpack.c.b16 %v8289, %v8288
        %v8344 = vpack.c.b16 %v8291, %v8290
        %v8345 = vpack.c.b16 %v8293, %v8292
        %v8346 = vpack.c.b16 %v8295, %v8294
        %v8347 = vpack.c.b16 %v8297, %v8296
        %v8348 = vpack.c.b16 %v8299, %v8298
        %v8349 = vpack.c.b16 %v8301, %v8300
        %v8350 = vpack.c.b16 %v8303, %v8302
        %v8351 = vpack.c.b16 %v8305, %v8304
        %v8352 = vpack.c.b16 %v8307, %v8306
        %v8353 = vpack.c.b16 %v8309, %v8308
        %v8354 = vpack.c.b16 %v8311, %v8310
        %v8355 = vpack.c.b16 %v8313, %v8312
        %v8356 = vpack.c.b16 %v8315, %v8314
        %v8357 = vpack.c.b16 %v8317, %v8316
        %v8358 = vpack.c.b16 %v8319, %v8318
        %v8359 = vpack.c.b16 %v8321, %v8320
        %v8360 = vpack.c.b16 %v8323, %v8322
        %v8361 = vpack.c.b16 %v8325, %v8324
        %v8362 = vpack.c.b16 %v8327, %v8326
        %v8363 = vpack.c.b16 %v8329, %v8328
        %v8364 = vpack.c.b16 %v8331, %v8330
        %v8365 = vpack.c.b16 %v8333, %v8332
        %8398 = vmatprep.subr.bf16.mxu0 0
        %8399 = vmatpush1.bf16.msra.mxu0 %v8334
        %8400 = vmatprep.subr.bf16.mxu0 0
        %8401 = vmatpush1.bf16.msra.mxu0 %v8335
        %8402 = vmatprep.subr.bf16.mxu0 0
        %8403 = vmatpush1.bf16.msra.mxu0 %v8336
        %8404 = vmatprep.subr.bf16.mxu0 0
        %8405 = vmatpush1.bf16.msra.mxu0 %v8337
        %8406 = vmatprep.subr.bf16.mxu0 0
        %8407 = vmatpush1.bf16.msra.mxu0 %v8338
        %8408 = vmatprep.subr.bf16.mxu0 0
        %8409 = vmatpush1.bf16.msra.mxu0 %v8339
        %8410 = vmatprep.subr.bf16.mxu0 0
        %8411 = vmatpush1.bf16.msra.mxu0 %v8340
        %8412 = vmatprep.subr.bf16.mxu0 0
        %8413 = vmatpush1.bf16.msra.mxu0 %v8341
        %8414 = vmatprep.subr.bf16.mxu0 0
        %8415 = vmatpush1.bf16.msra.mxu0 %v8342
        %8416 = vmatprep.subr.bf16.mxu0 0
        %8417 = vmatpush1.bf16.msra.mxu0 %v8343
        %8418 = vmatprep.subr.bf16.mxu0 0
        %8419 = vmatpush1.bf16.msra.mxu0 %v8344
        %8420 = vmatprep.subr.bf16.mxu0 0
        %8421 = vmatpush1.bf16.msra.mxu0 %v8345
        %8422 = vmatprep.subr.bf16.mxu0 0
        %8423 = vmatpush1.bf16.msra.mxu0 %v8346
        %8424 = vmatprep.subr.bf16.mxu0 0
        %8425 = vmatpush1.bf16.msra.mxu0 %v8347
        %8426 = vmatprep.subr.bf16.mxu0 0
        %8427 = vmatpush1.bf16.msra.mxu0 %v8348
        %8428 = vmatprep.subr.bf16.mxu0 0
        %8429 = vmatpush1.bf16.msra.mxu0 %v8349
        %8430 = vmatprep.mubr.bf16.mxu0 %v8138
        %8431 = vmatmul.mubr.bf16.gmra.mrb[0].mxu0 %v8137
        %v8432 = vpop.f32.mrb[0].mxu0
        %v8433 = vadd.f32 %v8205, %v8432
        %v8434 = vpop.f32.mrb[0].mxu0
        %v8435 = vpop.f32.mrb[0].mxu0
        %v8436 = vpop.f32.mrb[0].mxu0
        %8437 = vdwg.mxu0
        %8438 = vmatprep.subr.bf16.mxu0 0
        %8439 = vmatpush1.bf16.msra.mxu0 %v8350
        %8440 = vmatprep.subr.bf16.mxu0 0
        %8441 = vmatpush1.bf16.msra.mxu0 %v8351
        %8442 = vmatprep.subr.bf16.mxu0 0
        %8443 = vmatpush1.bf16.msra.mxu0 %v8352
        %8444 = vmatprep.subr.bf16.mxu0 0
        %8445 = vmatpush1.bf16.msra.mxu0 %v8353
        %8446 = vmatprep.subr.bf16.mxu0 0
        %8447 = vmatpush1.bf16.msra.mxu0 %v8354
        %8448 = vmatprep.subr.bf16.mxu0 0
        %8449 = vmatpush1.bf16.msra.mxu0 %v8355
        %8450 = vmatprep.subr.bf16.mxu0 0
        %8451 = vmatpush1.bf16.msra.mxu0 %v8356
        %8452 = vmatprep.subr.bf16.mxu0 0
        %8453 = vmatpush1.bf16.msra.mxu0 %v8357
        %8454 = vmatprep.subr.bf16.mxu0 0
        %8455 = vmatpush1.bf16.msra.mxu0 %v8358
        %8456 = vmatprep.subr.bf16.mxu0 0
        %8457 = vmatpush1.bf16.msra.mxu0 %v8359
        %8458 = vmatprep.subr.bf16.mxu0 0
        %8459 = vmatpush1.bf16.msra.mxu0 %v8360
        %8460 = vmatprep.subr.bf16.mxu0 0
        %8461 = vmatpush1.bf16.msra.mxu0 %v8361
        %8462 = vmatprep.subr.bf16.mxu0 0
        %8463 = vmatpush1.bf16.msra.mxu0 %v8362
        %8464 = vmatprep.subr.bf16.mxu0 0
        %8465 = vmatpush1.bf16.msra.mxu0 %v8363
        %8466 = vmatprep.subr.bf16.mxu0 0
        %8467 = vmatpush1.bf16.msra.mxu0 %v8364
        %8468 = vmatprep.subr.bf16.mxu0 0
        %8469 = vmatpush1.bf16.msra.mxu0 %v8365
        %8470 = vmatprep.mubr.bf16.mxu0 %v8140
        %8471 = vmatmul.mubr.bf16.gmra.mrb[0].mxu0 %v8139
        %v8472 = vpop.f32.mrb[0].mxu0
        %v8473 = vadd.f32 %v8433, %v8472
        %v8474 = vpop.f32.mrb[0].mxu0
        %v8475 = vpop.f32.mrb[0].mxu0
        %v8476 = vpop.f32.mrb[0].mxu0
        %8477 = vdwg.mxu0
        %8478 = vst [vmem:[%s378] sm:$0x1] %v8473
        %s8479 = sand.u32 %s269, 1
        %s8480 = scalar_lea.sflag [#allocation5], %s8479
        %s8481 = sand.u32 %s269, 1
        %s8482 = scalar_lea.vmem [#allocation4], %s8481
        // Predicated region
        $region65: #{dqn_forward.1} parent=63 // pred_check
          %p8483 = pneg %p279
        $region66: #{dqn_forward.1} parent=63 // pred_check_branch
          %8485 = sbr.rel (%p8483) target = $region68
        $region67: #{dqn_forward.1} parent=63 // pred_region
          %s8487 = ssub.s32 16, 16
          %8488 = vsyncadd %s8480, %s8487
          %s8489 = smul.addr %s25, 16
          %s8490 = scalar_lea.hbm %s11, %s8489
          %s8492 = sshll.u32 %s8482, 4
          %s8493 = int_to_ptr.vmem [resolvable:$true] %s8492
          %8495 = dma.vmem_to_hbm [thread:$0]  %s8493, 16, %s8490, %s8480
        $region68: #{dqn_forward.1} parent=63 // pred_fallthru
          _
      $region64: #{dqn_forward.1} parent=5 // pred_fallthru
        _
      %p8496 = scmp.le.s32.totalorder 2, %s20
      // Predicated region
      $region69: #{dqn_forward.1} parent=5 // pred_check
        %p8497 = pneg %p8496
      $region70: #{dqn_forward.1} parent=5 // pred_check_branch
        %8499 = sbr.rel (%p8497) target = $region72
      $region71: #{dqn_forward.1} parent=5 // pred_region
        %s8500 = ssub.s32 %s20, 2
        // Predicated region
        $region73: #{dqn_forward.1} parent=71 // pred_check
          %p8501 = pneg %p285
        $region74: #{dqn_forward.1} parent=71 // pred_check_branch
          %8503 = sbr.rel (%p8501) target = $region76
        $region75: #{dqn_forward.1} parent=71 // pred_region
          %s8504 = sand.u32 %s270, 1
          %s8505 = scalar_lea.sflag [#allocation5], %s8504
          %s8506 = sand.u32 %s270, 1
          %s8507 = scalar_lea.vmem [#allocation4], %s8506
          %8508 = dma.done %s8505, 16
        $region76: #{dqn_forward.1} parent=71 // pred_fallthru
          _
      $region72: #{dqn_forward.1} parent=5 // pred_fallthru
        _
    $region6: #{dqn_forward.1} parent=1 // loop_footer
      %s24 = sadd.s32 1, %s20
    $region7: #{dqn_forward.1} parent=1 // loop_footer_branch
      %19 = sbr.rel target = $region3
    $region8: #{dqn_forward.1} parent=1 // loop_exit
      _
    %8509 = vsyncpa [#allocation5], 1
    %s8510 = scalar_lea.sflag [#allocation5], 1
    %8511 = vsyncpa %s8510, 1

</llo_original>
